<compile_context>
chip_gen: v6e
topology: v6e:2x2x1
jax: 0.10.0
libtpu: 0.0.40
codegen_flags: <defaults>
</compile_context>

<pallas_src>
import jax
import jax.numpy as jnp
from jax import lax
from jax.experimental import pallas as pl
from jax.experimental.pallas import tpu as pltpu


# ----------------------------------------------------------------------------
# Small helpers
# ----------------------------------------------------------------------------
def _round_up(x, m):
    return (x + m - 1) // m * m


def _compiler_params(working_set_bytes):
    # Double-buffered working set + headroom, clamped to a range that is valid on
    # every generation (v5e's 16 MiB scoped default is too small; v7x has only
    # 64 MiB physical VMEM, so cap well below that).
    limit = int(min(max(2 * working_set_bytes + (4 << 20), 16 << 20), 48 << 20))
    return pltpu.CompilerParams(
        dimension_semantics=("parallel",), vmem_limit_bytes=limit)


def _fold_bn(w, gamma, beta, mean, var, eps=1e-5, cin_pad=None):
    """Fold eval-mode BN into the conv weights.

    Returns per-tap bf16 weights (KH*KW, Cin_p, Cout_p), f32 bias (1, Cout_p) and
    Cout_p.  Cin/Cout are zero-padded so consumers never need a channel slice:
    padded input channels hit zero weight rows, padded output channels get zero
    scale + zero bias -> ReLU(0) = 0."""
    kh, kw, cin, cout = w.shape
    cin_p = cin if cin_pad is None else cin_pad
    cout_p = _round_up(cout, 128)
    scale = gamma / jnp.sqrt(var + eps)
    wm = (w * scale).reshape(kh * kw, cin, cout)
    wm = jnp.pad(wm, ((0, 0), (0, cin_p - cin), (0, cout_p - cout)))
    bias = jnp.pad(beta - mean * scale, (0, cout_p - cout)).reshape(1, cout_p)
    return wm.astype(jnp.bfloat16), bias.astype(jnp.float32), cout_p


def _phase_split(x_nhwc):
    """Even/odd space-to-depth phases of an NHWC tensor, flattened per phase.

    Returns 4 arrays [(pi, pj) for pi in (0,1) for pj in (0,1)], each of shape
    (N, Hp*Wp + 1, C) (one trailing zero row so every stride-2 tap slice of
    length Ho*Wp fits), plus (Hp, Wp).  This is a single 1x permutation pass of
    the input (vs. the old 2.25x-9x im2col materialization)."""
    n, h, w, c = x_nhwc.shape
    hp, wp = (h + 1) // 2, (w + 1) // 2
    xp = jnp.pad(x_nhwc, ((0, 0), (0, 2 * hp - h), (0, 2 * wp - w), (0, 0)))
    phases = []
    for pi in range(2):
        for pj in range(2):
            ph = xp[:, pi::2, pj::2, :].reshape(n, hp * wp, c)
            phases.append(jnp.pad(ph, ((0, 0), (0, 1), (0, 0))))
    return phases, hp, wp


# ----------------------------------------------------------------------------
# Pallas kernels
# ----------------------------------------------------------------------------
def _make_stack_front_kernel(h, w, off):
    """Fused: 1x1 conv+BN+ReLU -> 3x3 pad-1 conv+BN+ReLU, one image per step.

    The 1x1 result is written into a zeroed VMEM halo buffer at row offset
    `off`; the 3x3/pad-1 conv is then 9 shifted contiguous slices of that flat
    buffer (left/right edge columns masked) matmul'd against per-tap weights."""
    hw = h * w

    def kernel(x_ref, w1_ref, b1_ref, w2_ref, b2_ref, o_ref, buf):
        # ---- s1: 1x1 conv + BN + ReLU; never leaves VMEM --------------------
        s1 = jnp.dot(x_ref[0], w1_ref[0], preferred_element_type=jnp.float32)
        s1 = jnp.maximum(s1 + b1_ref[...], 0.0).astype(jnp.bfloat16)

        # ---- place s1 inside a zeroed halo buffer (implements padding=1) ----
        buf[...] = jnp.zeros_like(buf)
        buf[off:off + hw, :] = s1

        # Column masks kill the horizontal wrap-around values at the edges.
        col = lax.broadcasted_iota(jnp.int32, (hw, 1), 0) % w
        not_first = col != 0
        not_last = col != (w - 1)

        # ---- s2: 3x3 / pad 1 conv as 9 shifted matmuls ----------------------
        acc = jnp.zeros((hw, o_ref.shape[-1]), jnp.float32)
        for t in range(9):
            ki, kj = t // 3, t % 3
            start = off + (ki - 1) * w + (kj - 1)
            tap = buf[start:start + hw, :]
            if kj == 0:
                tap = jnp.where(not_first, tap, jnp.zeros_like(tap))
            elif kj == 2:
                tap = jnp.where(not_last, tap, jnp.zeros_like(tap))
            acc = acc + jnp.dot(tap, w2_ref[t],
                                preferred_element_type=jnp.float32)
        o_ref[0] = jnp.maximum(acc + b2_ref[...], 0.0).astype(o_ref.dtype)

    return kernel


def _make_s2d_conv_kernel(wp, l_out, with_pool):
    """3x3 / stride-2 conv+BN+ReLU from 4 even/odd phases, one image per step.

    Tap (ki, kj) of the stride-2 conv reads phase (ki%2, kj%2) at flat row
    offset (ki//2)*Wp + (kj//2): a contiguous slice of length Ho*Wp.  The last
    column of every output row is a don't-care (dropped by the caller).  When
    `with_pool` is set, the 3x3/s2 max-pool of the same input is emitted from
    the same (raw, un-cast) taps."""

    def kernel(*refs):
        if with_pool:
            p00, p01, p10, p11, w_ref, b_ref, oc_ref, op_ref = refs
        else:
            p00, p01, p10, p11, w_ref, b_ref, oc_ref = refs
        phase = ((p00, p01), (p10, p11))

        acc = jnp.zeros((l_out, oc_ref.shape[-1]), jnp.float32)
        pool = None
        for t in range(9):
            ki, kj = t // 3, t % 3
            start = (ki // 2) * wp + (kj // 2)
            tap = phase[ki % 2][kj % 2][0, start:start + l_out, :]
            acc = acc + jnp.dot(tap.astype(jnp.bfloat16), w_ref[t],
                                preferred_element_type=jnp.float32)
            if with_pool:
                pool = tap if pool is None else jnp.maximum(pool, tap)
        oc_ref[0] = jnp.maximum(acc + b_ref[...], 0.0).astype(oc_ref.dtype)
        if with_pool:
            op_ref[0] = pool.astype(op_ref.dtype)

    return kernel


# ----------------------------------------------------------------------------
# Wrappers
# ----------------------------------------------------------------------------
def stack_front(x_nhwc, p1, p2, eps=1e-5):
    """BasicConv2d(Cin, 64, k=1) -> BasicConv2d(64, 96, k=3, pad=1), fused.

    Returns the second conv's output flattened over space, channels padded to
    128, in bf16: (N, H*W, 128).  No im2col and no 64-channel intermediate in
    HBM."""
    n, h, w, cin = x_nhwc.shape
    w1m, b1, c1p = _fold_bn(*p1, eps=eps)
    w2m, b2, c2p = _fold_bn(*p2, eps=eps, cin_pad=c1p)
    hw = h * w
    off = _round_up(w + 1, 16)          # bf16 packs 16 sublanes per vreg
    sz = _round_up(off + hw + w + 1, 16)

    x_flat = x_nhwc.astype(jnp.bfloat16).reshape(n, hw, cin)

    ws = (hw * cin * 2 + cin * c1p * 2 + 9 * c1p * c2p * 2 + 2 * c2p * 4
          + hw * c2p * 2 + sz * c1p * 2 + hw * c2p * 4)

    return pl.pallas_call(
        _make_stack_front_kernel(h, w, off),
        out_shape=jax.ShapeDtypeStruct((n, hw, c2p), jnp.bfloat16),
        grid=(n,),
        in_specs=[
            pl.BlockSpec((1, hw, cin), lambda i: (i, 0, 0)),
            pl.BlockSpec((1, cin, c1p), lambda i: (0, 0, 0)),
            pl.BlockSpec((1, c1p), lambda i: (0, 0)),
            pl.BlockSpec((9, c1p, c2p), lambda i: (0, 0, 0)),
            pl.BlockSpec((1, c2p), lambda i: (0, 0)),
        ],
        out_specs=pl.BlockSpec((1, hw, c2p), lambda i: (i, 0, 0)),
        scratch_shapes=[pltpu.VMEM((sz, c1p), jnp.bfloat16)],
        compiler_params=_compiler_params(ws),
    )(x_flat, w1m, b1, w2m, b2)


def s2d_conv_bn_relu(phases, wp, ho, conv_params, with_pool, out_dtype,
                     eps=1e-5):
    """3x3 / stride-2 conv + BN + ReLU from even/odd phases; optionally also the
    fused 3x3 / stride-2 max-pool of the same input.

    Outputs have Wp columns per output row; the last column is a don't-care and
    is sliced off (fused into the final transpose) by the caller."""
    n, lp, cin_k = phases[0].shape
    w9, bias, cout_p = _fold_bn(*conv_params, eps=eps, cin_pad=cin_k)
    l_out = ho * wp

    in_specs = [pl.BlockSpec((1, lp, cin_k), lambda i: (i, 0, 0))] * 4 + [
        pl.BlockSpec((9, cin_k, cout_p), lambda i: (0, 0, 0)),
        pl.BlockSpec((1, cout_p), lambda i: (0, 0)),
    ]
    conv_sds = jax.ShapeDtypeStruct((n, l_out, cout_p), out_dtype)
    conv_spec = pl.BlockSpec((1, l_out, cout_p), lambda i: (i, 0, 0))

    in_item = jnp.dtype(phases[0].dtype).itemsize
    out_item = jnp.dtype(out_dtype).itemsize
    ws = (4 * lp * cin_k * in_item + 9 * cin_k * cout_p * 2 + cout_p * 4
          + l_out * cout_p * (4 + out_item)
          + (l_out * cin_k * out_item if with_pool else 0))

    if with_pool:
        out_shape = (conv_sds,
                     jax.ShapeDtypeStruct((n, l_out, cin_k), out_dtype))
        out_specs = (conv_spec,
                     pl.BlockSpec((1, l_out, cin_k), lambda i: (i, 0, 0)))
    else:
        out_shape = conv_sds
        out_specs = conv_spec

    return pl.pallas_call(
        _make_s2d_conv_kernel(wp, l_out, with_pool),
        out_shape=out_shape,
        grid=(n,),
        in_specs=in_specs,
        out_specs=out_specs,
        compiler_params=_compiler_params(ws),
    )(*phases, w9, bias)


# ----------------------------------------------------------------------------
# Parameter init (deterministic, synthetic)
# ----------------------------------------------------------------------------
def _init_conv_bn(key, kh, kw, cin, cout):
    kw_, kg, kb, km, kv = jax.random.split(key, 5)
    w = 0.1 * jax.random.normal(kw_, (kh, kw, cin, cout), jnp.float32)
    gamma = jax.random.uniform(kg, (cout,), jnp.float32, 0.5, 1.5)
    beta = 0.1 * jax.random.normal(kb, (cout,), jnp.float32)
    mean = 0.1 * jax.random.normal(km, (cout,), jnp.float32)
    var = jax.random.uniform(kv, (cout,), jnp.float32, 0.5, 1.5)
    return (w, gamma, beta, mean, var)


def init_inception_b_params(key, input_channels):
    k1, k2, k3, k4 = jax.random.split(key, 4)
    return {
        "b3x3": _init_conv_bn(k1, 3, 3, input_channels, 384),   # 3x3 stride 2
        "s1": _init_conv_bn(k2, 1, 1, input_channels, 64),      # 1x1
        "s2": _init_conv_bn(k3, 3, 3, 64, 96),                  # 3x3 pad 1
        "s3": _init_conv_bn(k4, 3, 3, 96, 96),                  # 3x3 stride 2
    }


# ----------------------------------------------------------------------------
# InceptionB forward
# ----------------------------------------------------------------------------
@jax.jit
def inception_b_forward(x_nchw, params):
    n, cin, h, w = x_nchw.shape
    ho, wo = (h - 3) // 2 + 1, (w - 3) // 2 + 1
    x = jnp.transpose(x_nchw, (0, 2, 3, 1))                     # NCHW -> NHWC

    # branch3x3 (conv 3x3/s2 + BN + ReLU) and branchpool (maxpool 3x3/s2) share
    # one f32 phase split of x and one fused kernel; pool is exact (f32 values).
    phases_x, _, wp = _phase_split(x)
    conv_b3, pool = s2d_conv_bn_relu(
        phases_x, wp, ho, params["b3x3"], with_pool=True, out_dtype=x.dtype)

    # Stack branch: fused 1x1 -> 3x3/pad1 (bf16, channel-padded intermediate),
    # then 3x3/s2 from phases of that intermediate (padded channels consumed by
    # zero weight rows -> no un-pad slice in HBM).
    s2_flat = stack_front(x, params["s1"], params["s2"])        # (N, H*W, 128) bf16
    phases_s2, _, _ = _phase_split(s2_flat.reshape(n, h, w, -1))
    conv_s3 = s2d_conv_bn_relu(
        phases_s2, wp, ho, params["s3"], with_pool=False, out_dtype=x.dtype)

    # Drop the one don't-care column per row, de-pad channels once, concat and
    # go back to NCHW.  XLA fuses these with the final transpose pass.
    b3 = conv_b3.reshape(n, ho, wp, -1)[:, :, :wo, :384]
    s3 = conv_s3.reshape(n, ho, wp, -1)[:, :, :wo, :96]
    pp = pool.reshape(n, ho, wp, -1)[:, :, :wo, :]
    out = jnp.concatenate([b3, s3, pp], axis=-1)
    return jnp.transpose(out, (0, 3, 1, 2))                     # NHWC -> NCHW


# ----------------------------------------------------------------------------
# Pure-JAX reference (for correctness checking only)
# ----------------------------------------------------------------------------
def _ref_conv_bn_relu(x, w, gamma, beta, mean, var, stride, padding, eps=1e-5):
    y = jax.lax.conv_general_dilated(
        x, w, window_strides=(stride, stride),
        padding=[(padding, padding), (padding, padding)],
        dimension_numbers=("NHWC", "HWIO", "NHWC"))
    scale = gamma / jnp.sqrt(var + eps)
    return jnp.maximum(y * scale + (beta - mean * scale), 0.0)


def _ref_forward(x_nchw, params):
    x = jnp.transpose(x_nchw, (0, 2, 3, 1))
    b1 = _ref_conv_bn_relu(x, *params["b3x3"], stride=2, padding=0)
    s = _ref_conv_bn_relu(x, *params["s1"], stride=1, padding=0)
    s = _ref_conv_bn_relu(s, *params["s2"], stride=1, padding=1)
    s = _ref_conv_bn_relu(s, *params["s3"], stride=2, padding=0)
    p = jax.lax.reduce_window(x, -jnp.inf, jax.lax.max,
                              (1, 3, 3, 1), (1, 2, 2, 1), "VALID")
    out = jnp.concatenate([b1, s, p], axis=-1)
    return jnp.transpose(out, (0, 3, 1, 2))


# ----------------------------------------------------------------------------
if __name__ == "__main__":
    key = jax.random.PRNGKey(0)
    kx, kp = jax.random.split(key)

    N, C, H, W = 2, 4, 16, 16
    x = jax.random.normal(kx, (N, C, H, W), jnp.float32)
    params = init_inception_b_params(kp, C)

    out = inception_b_forward(x, params)
    out = jax.block_until_ready(out)

    expected_shape = (N, 384 + 96 + C, (H - 3) // 2 + 1, (W - 3) // 2 + 1)
    assert out.shape == expected_shape, (out.shape, expected_shape)

    ref = _ref_forward(x, params)
    max_err = float(jnp.max(jnp.abs(out - ref)))
    # bf16 matmul operands (f32 accumulation) -> slightly looser tolerance.
    assert jnp.allclose(out, ref, atol=3e-2, rtol=3e-2), max_err

    print("KERNEL_OK")
</pallas_src>

<mosaic_0001>
module attributes {stable_mosaic.version = 11 : i64} {
  func.func @kernel(%arg0: i32, %arg1: memref<1x256x4xbf16, #tpu.memory_space<vmem>>, %arg2: memref<1x4x128xbf16, #tpu.memory_space<vmem>>, %arg3: memref<1x128xf32, #tpu.memory_space<vmem>>, %arg4: memref<9x128x128xbf16, #tpu.memory_space<vmem>>, %arg5: memref<1x128xf32, #tpu.memory_space<vmem>>, %arg6: memref<1x256x128xbf16, #tpu.memory_space<vmem>>, %arg7: memref<320x128xbf16, #tpu.memory_space<vmem>>) attributes {dimension_semantics = [#tpu.dimension_semantics<parallel>], iteration_bounds = array<i64: 2>, scalar_prefetch = 0 : i64, scratch_operands = 1 : i64, tpu.core_type = #tpu.core_type<tc>, window_params = [{transform_indices = @transform_0, window_bounds = array<i64: 1, 256, 4>}, {pipeline_mode = #tpu.pipeline_mode<synchronous>, transform_indices = @transform_1, window_bounds = array<i64: 1, 4, 128>}, {pipeline_mode = #tpu.pipeline_mode<synchronous>, transform_indices = @transform_2, window_bounds = array<i64: 1, 128>}, {pipeline_mode = #tpu.pipeline_mode<synchronous>, transform_indices = @transform_3, window_bounds = array<i64: 9, 128, 128>}, {pipeline_mode = #tpu.pipeline_mode<synchronous>, transform_indices = @transform_4, window_bounds = array<i64: 1, 128>}, {transform_indices = @transform_5, window_bounds = array<i64: 1, 256, 128>}]} {
    %c0 = arith.constant 0 : index
    %c0_0 = arith.constant 0 : index
    %c0_1 = arith.constant 0 : index
    %0 = vector.load %arg1[%c0, %c0_0, %c0_1] : memref<1x256x4xbf16, #tpu.memory_space<vmem>>, vector<1x256x4xbf16>
    %1 = vector.shape_cast %0 : vector<1x256x4xbf16> to vector<256x4xbf16>
    %c0_2 = arith.constant 0 : index
    %c0_3 = arith.constant 0 : index
    %c0_4 = arith.constant 0 : index
    %2 = vector.load %arg2[%c0_2, %c0_3, %c0_4] : memref<1x4x128xbf16, #tpu.memory_space<vmem>>, vector<1x4x128xbf16>
    %3 = vector.shape_cast %2 : vector<1x4x128xbf16> to vector<4x128xbf16>
    %cst = arith.constant dense<0.000000e+00> : vector<256x128xf32>
    %4 = tpu.matmul %1, %3, %cst {dimension_numbers = #tpu.dot_dimension_numbers<[1], [0], [0], [1], [0, 0, 1, 1], [], []>} : vector<256x4xbf16>, vector<4x128xbf16>, vector<256x128xf32> -> vector<256x128xf32>
    %c0_5 = arith.constant 0 : index
    %c0_6 = arith.constant 0 : index
    %5 = vector.load %arg3[%c0_5, %c0_6] : memref<1x128xf32, #tpu.memory_space<vmem>>, vector<1x128xf32>
    %6 = vector.broadcast %5 : vector<1x128xf32> to vector<256x128xf32>
    %7 = arith.addf %4, %6 : vector<256x128xf32>
    %cst_7 = arith.constant 0.000000e+00 : f32
    %8 = vector.broadcast %cst_7 : f32 to vector<256x128xf32>
    %9 = arith.maximumf %7, %8 : vector<256x128xf32>
    %10 = arith.truncf %9 : vector<256x128xf32> to vector<256x128xbf16>
    %cst_8 = arith.constant 0.000000e+00 : bf16
    %11 = vector.broadcast %cst_8 : bf16 to vector<320x128xbf16>
    %c0_9 = arith.constant 0 : index
    %c0_10 = arith.constant 0 : index
    %12 = vector.load %arg7[%c0_9, %c0_10] : memref<320x128xbf16, #tpu.memory_space<vmem>>, vector<320x128xbf16>
    tpu.vector_store %arg7[%c0_9, %c0_10], %11 {strides = array<i32>} : memref<320x128xbf16, #tpu.memory_space<vmem>>, vector<320x128xbf16>,
    %c32 = arith.constant 32 : index
    %c0_11 = arith.constant 0 : index
    %13 = vector.load %arg7[%c32, %c0_11] : memref<320x128xbf16, #tpu.memory_space<vmem>>, vector<256x128xbf16>
    tpu.vector_store %arg7[%c32, %c0_11], %10 {strides = array<i32>} : memref<320x128xbf16, #tpu.memory_space<vmem>>, vector<256x128xbf16>,
    %14 = tpu.iota {dimensions = array<i32: 0>} : vector<256x1xi32>
    %c16_i32 = arith.constant 16 : i32
    %c0_i32 = arith.constant 0 : i32
    %15 = arith.cmpi eq, %c16_i32, %c0_i32 : i32
    %c1_i32 = arith.constant 1 : i32
    %16 = arith.select %15, %c1_i32, %c16_i32 : i32
    %17 = vector.broadcast %16 : i32 to vector<256x1xi32>
    %18 = arith.remsi %14, %17 : vector<256x1xi32>
    %c0_i32_12 = arith.constant 0 : i32
    %19 = vector.broadcast %c0_i32_12 : i32 to vector<256x1xi32>
    %20 = arith.cmpi ne, %18, %19 : vector<256x1xi32>
    %c0_i32_13 = arith.constant 0 : i32
    %21 = vector.broadcast %c0_i32_13 : i32 to vector<256x1xi32>
    %22 = arith.cmpi slt, %18, %21 : vector<256x1xi32>
    %c0_i32_14 = arith.constant 0 : i32
    %23 = arith.cmpi slt, %16, %c0_i32_14 : i32
    %24 = vector.broadcast %23 : i1 to vector<256x1xi1>
    %25 = vector.broadcast %24 : vector<256x1xi1> to vector<256x1xi1>
    %26 = arith.xori %22, %25 : vector<256x1xi1>
    %27 = arith.andi %26, %20 : vector<256x1xi1>
    %28 = vector.broadcast %16 : i32 to vector<256x1xi32>
    %29 = arith.addi %18, %28 : vector<256x1xi32>
    %30 = arith.select %27, %29, %18 : vector<256x1xi1>, vector<256x1xi32>
    %c0_i32_15 = arith.constant 0 : i32
    %31 = vector.broadcast %c0_i32_15 : i32 to vector<256x1xi32>
    %32 = arith.cmpi ne, %30, %31 : vector<256x1xi32>
    %c15_i32 = arith.constant 15 : i32
    %33 = vector.broadcast %c15_i32 : i32 to vector<256x1xi32>
    %34 = arith.cmpi ne, %30, %33 : vector<256x1xi32>
    %cst_16 = arith.constant 0.000000e+00 : f32
    %35 = vector.broadcast %cst_16 : f32 to vector<256x128xf32>
    %c15 = arith.constant 15 : index
    %c0_17 = arith.constant 0 : index
    %36 = vector.load %arg7[%c15, %c0_17] : memref<320x128xbf16, #tpu.memory_space<vmem>>, vector<256x128xbf16>
    %cst_18 = arith.constant 0.000000e+00 : bf16
    %37 = vector.broadcast %cst_18 : bf16 to vector<256x128xbf16>
    %38 = vector.shape_cast %32 : vector<256x1xi1> to vector<256x1xi1>
    %39 = vector.broadcast %38 : vector<256x1xi1> to vector<256x128xi1>
    %40 = arith.select %39, %36, %37 : vector<256x128xi1>, vector<256x128xbf16>
    %c0_19 = arith.constant 0 : index
    %c0_20 = arith.constant 0 : index
    %c0_21 = arith.constant 0 : index
    %41 = vector.load %arg4[%c0_19, %c0_20, %c0_21] : memref<9x128x128xbf16, #tpu.memory_space<vmem>>, vector<1x128x128xbf16>
    %42 = vector.shape_cast %41 : vector<1x128x128xbf16> to vector<128x128xbf16>
    %cst_22 = arith.constant dense<0.000000e+00> : vector<256x128xf32>
    %43 = tpu.matmul %40, %42, %cst_22 {dimension_numbers = #tpu.dot_dimension_numbers<[1], [0], [0], [1], [0, 0, 1, 1], [], []>} : vector<256x128xbf16>, vector<128x128xbf16>, vector<256x128xf32> -> vector<256x128xf32>
    %44 = arith.addf %35, %43 : vector<256x128xf32>
    %c16 = arith.constant 16 : index
    %c0_23 = arith.constant 0 : index
    %45 = vector.load %arg7[%c16, %c0_23] : memref<320x128xbf16, #tpu.memory_space<vmem>>, vector<256x128xbf16>
    %c1 = arith.constant 1 : index
    %c0_24 = arith.constant 0 : index
    %c0_25 = arith.constant 0 : index
    %46 = vector.load %arg4[%c1, %c0_24, %c0_25] : memref<9x128x128xbf16, #tpu.memory_space<vmem>>, vector<1x128x128xbf16>
    %47 = vector.shape_cast %46 : vector<1x128x128xbf16> to vector<128x128xbf16>
    %cst_26 = arith.constant dense<0.000000e+00> : vector<256x128xf32>
    %48 = tpu.matmul %45, %47, %cst_26 {dimension_numbers = #tpu.dot_dimension_numbers<[1], [0], [0], [1], [0, 0, 1, 1], [], []>} : vector<256x128xbf16>, vector<128x128xbf16>, vector<256x128xf32> -> vector<256x128xf32>
    %49 = arith.addf %44, %48 : vector<256x128xf32>
    %c17 = arith.constant 17 : index
    %c0_27 = arith.constant 0 : index
    %50 = vector.load %arg7[%c17, %c0_27] : memref<320x128xbf16, #tpu.memory_space<vmem>>, vector<256x128xbf16>
    %cst_28 = arith.constant 0.000000e+00 : bf16
    %51 = vector.broadcast %cst_28 : bf16 to vector<256x128xbf16>
    %52 = vector.shape_cast %34 : vector<256x1xi1> to vector<256x1xi1>
    %53 = vector.broadcast %52 : vector<256x1xi1> to vector<256x128xi1>
    %54 = arith.select %53, %50, %51 : vector<256x128xi1>, vector<256x128xbf16>
    %c2 = arith.constant 2 : index
    %c0_29 = arith.constant 0 : index
    %c0_30 = arith.constant 0 : index
    %55 = vector.load %arg4[%c2, %c0_29, %c0_30] : memref<9x128x128xbf16, #tpu.memory_space<vmem>>, vector<1x128x128xbf16>
    %56 = vector.shape_cast %55 : vector<1x128x128xbf16> to vector<128x128xbf16>
    %cst_31 = arith.constant dense<0.000000e+00> : vector<256x128xf32>
    %57 = tpu.matmul %54, %56, %cst_31 {dimension_numbers = #tpu.dot_dimension_numbers<[1], [0], [0], [1], [0, 0, 1, 1], [], []>} : vector<256x128xbf16>, vector<128x128xbf16>, vector<256x128xf32> -> vector<256x128xf32>
    %58 = arith.addf %49, %57 : vector<256x128xf32>
    %c31 = arith.constant 31 : index
    %c0_32 = arith.constant 0 : index
    %59 = vector.load %arg7[%c31, %c0_32] : memref<320x128xbf16, #tpu.memory_space<vmem>>, vector<256x128xbf16>
    %cst_33 = arith.constant 0.000000e+00 : bf16
    %60 = vector.broadcast %cst_33 : bf16 to vector<256x128xbf16>
    %61 = vector.shape_cast %32 : vector<256x1xi1> to vector<256x1xi1>
    %62 = vector.broadcast %61 : vector<256x1xi1> to vector<256x128xi1>
    %63 = arith.select %62, %59, %60 : vector<256x128xi1>, vector<256x128xbf16>
    %c3 = arith.constant 3 : index
    %c0_34 = arith.constant 0 : index
    %c0_35 = arith.constant 0 : index
    %64 = vector.load %arg4[%c3, %c0_34, %c0_35] : memref<9x128x128xbf16, #tpu.memory_space<vmem>>, vector<1x128x128xbf16>
    %65 = vector.shape_cast %64 : vector<1x128x128xbf16> to vector<128x128xbf16>
    %cst_36 = arith.constant dense<0.000000e+00> : vector<256x128xf32>
    %66 = tpu.matmul %63, %65, %cst_36 {dimension_numbers = #tpu.dot_dimension_numbers<[1], [0], [0], [1], [0, 0, 1, 1], [], []>} : vector<256x128xbf16>, vector<128x128xbf16>, vector<256x128xf32> -> vector<256x128xf32>
    %67 = arith.addf %58, %66 : vector<256x128xf32>
    %c32_37 = arith.constant 32 : index
    %c0_38 = arith.constant 0 : index
    %68 = vector.load %arg7[%c32_37, %c0_38] : memref<320x128xbf16, #tpu.memory_space<vmem>>, vector<256x128xbf16>
    %c4 = arith.constant 4 : index
    %c0_39 = arith.constant 0 : index
    %c0_40 = arith.constant 0 : index
    %69 = vector.load %arg4[%c4, %c0_39, %c0_40] : memref<9x128x128xbf16, #tpu.memory_space<vmem>>, vector<1x128x128xbf16>
    %70 = vector.shape_cast %69 : vector<1x128x128xbf16> to vector<128x128xbf16>
    %cst_41 = arith.constant dense<0.000000e+00> : vector<256x128xf32>
    %71 = tpu.matmul %68, %70, %cst_41 {dimension_numbers = #tpu.dot_dimension_numbers<[1], [0], [0], [1], [0, 0, 1, 1], [], []>} : vector<256x128xbf16>, vector<128x128xbf16>, vector<256x128xf32> -> vector<256x128xf32>
    %72 = arith.addf %67, %71 : vector<256x128xf32>
    %c33 = arith.constant 33 : index
    %c0_42 = arith.constant 0 : index
    %73 = vector.load %arg7[%c33, %c0_42] : memref<320x128xbf16, #tpu.memory_space<vmem>>, vector<256x128xbf16>
    %cst_43 = arith.constant 0.000000e+00 : bf16
    %74 = vector.broadcast %cst_43 : bf16 to vector<256x128xbf16>
    %75 = vector.shape_cast %34 : vector<256x1xi1> to vector<256x1xi1>
    %76 = vector.broadcast %75 : vector<256x1xi1> to vector<256x128xi1>
    %77 = arith.select %76, %73, %74 : vector<256x128xi1>, vector<256x128xbf16>
    %c5 = arith.constant 5 : index
    %c0_44 = arith.constant 0 : index
    %c0_45 = arith.constant 0 : index
    %78 = vector.load %arg4[%c5, %c0_44, %c0_45] : memref<9x128x128xbf16, #tpu.memory_space<vmem>>, vector<1x128x128xbf16>
    %79 = vector.shape_cast %78 : vector<1x128x128xbf16> to vector<128x128xbf16>
    %cst_46 = arith.constant dense<0.000000e+00> : vector<256x128xf32>
    %80 = tpu.matmul %77, %79, %cst_46 {dimension_numbers = #tpu.dot_dimension_numbers<[1], [0], [0], [1], [0, 0, 1, 1], [], []>} : vector<256x128xbf16>, vector<128x128xbf16>, vector<256x128xf32> -> vector<256x128xf32>
    %81 = arith.addf %72, %80 : vector<256x128xf32>
    %c47 = arith.constant 47 : index
    %c0_47 = arith.constant 0 : index
    %82 = vector.load %arg7[%c47, %c0_47] : memref<320x128xbf16, #tpu.memory_space<vmem>>, vector<256x128xbf16>
    %cst_48 = arith.constant 0.000000e+00 : bf16
    %83 = vector.broadcast %cst_48 : bf16 to vector<256x128xbf16>
    %84 = vector.shape_cast %32 : vector<256x1xi1> to vector<256x1xi1>
    %85 = vector.broadcast %84 : vector<256x1xi1> to vector<256x128xi1>
    %86 = arith.select %85, %82, %83 : vector<256x128xi1>, vector<256x128xbf16>
    %c6 = arith.constant 6 : index
    %c0_49 = arith.constant 0 : index
    %c0_50 = arith.constant 0 : index
    %87 = vector.load %arg4[%c6, %c0_49, %c0_50] : memref<9x128x128xbf16, #tpu.memory_space<vmem>>, vector<1x128x128xbf16>
    %88 = vector.shape_cast %87 : vector<1x128x128xbf16> to vector<128x128xbf16>
    %cst_51 = arith.constant dense<0.000000e+00> : vector<256x128xf32>
    %89 = tpu.matmul %86, %88, %cst_51 {dimension_numbers = #tpu.dot_dimension_numbers<[1], [0], [0], [1], [0, 0, 1, 1], [], []>} : vector<256x128xbf16>, vector<128x128xbf16>, vector<256x128xf32> -> vector<256x128xf32>
    %90 = arith.addf %81, %89 : vector<256x128xf32>
    %c48 = arith.constant 48 : index
    %c0_52 = arith.constant 0 : index
    %91 = vector.load %arg7[%c48, %c0_52] : memref<320x128xbf16, #tpu.memory_space<vmem>>, vector<256x128xbf16>
    %c7 = arith.constant 7 : index
    %c0_53 = arith.constant 0 : index
    %c0_54 = arith.constant 0 : index
    %92 = vector.load %arg4[%c7, %c0_53, %c0_54] : memref<9x128x128xbf16, #tpu.memory_space<vmem>>, vector<1x128x128xbf16>
    %93 = vector.shape_cast %92 : vector<1x128x128xbf16> to vector<128x128xbf16>
    %cst_55 = arith.constant dense<0.000000e+00> : vector<256x128xf32>
    %94 = tpu.matmul %91, %93, %cst_55 {dimension_numbers = #tpu.dot_dimension_numbers<[1], [0], [0], [1], [0, 0, 1, 1], [], []>} : vector<256x128xbf16>, vector<128x128xbf16>, vector<256x128xf32> -> vector<256x128xf32>
    %95 = arith.addf %90, %94 : vector<256x128xf32>
    %c49 = arith.constant 49 : index
    %c0_56 = arith.constant 0 : index
    %96 = vector.load %arg7[%c49, %c0_56] : memref<320x128xbf16, #tpu.memory_space<vmem>>, vector<256x128xbf16>
    %cst_57 = arith.constant 0.000000e+00 : bf16
    %97 = vector.broadcast %cst_57 : bf16 to vector<256x128xbf16>
    %98 = vector.shape_cast %34 : vector<256x1xi1> to vector<256x1xi1>
    %99 = vector.broadcast %98 : vector<256x1xi1> to vector<256x128xi1>
    %100 = arith.select %99, %96, %97 : vector<256x128xi1>, vector<256x128xbf16>
    %c8 = arith.constant 8 : index
    %c0_58 = arith.constant 0 : index
    %c0_59 = arith.constant 0 : index
    %101 = vector.load %arg4[%c8, %c0_58, %c0_59] : memref<9x128x128xbf16, #tpu.memory_space<vmem>>, vector<1x128x128xbf16>
    %102 = vector.shape_cast %101 : vector<1x128x128xbf16> to vector<128x128xbf16>
    %cst_60 = arith.constant dense<0.000000e+00> : vector<256x128xf32>
    %103 = tpu.matmul %100, %102, %cst_60 {dimension_numbers = #tpu.dot_dimension_numbers<[1], [0], [0], [1], [0, 0, 1, 1], [], []>} : vector<256x128xbf16>, vector<128x128xbf16>, vector<256x128xf32> -> vector<256x128xf32>
    %104 = arith.addf %95, %103 : vector<256x128xf32>
    %c0_61 = arith.constant 0 : index
    %c0_62 = arith.constant 0 : index
    %105 = vector.load %arg5[%c0_61, %c0_62] : memref<1x128xf32, #tpu.memory_space<vmem>>, vector<1x128xf32>
    %106 = vector.broadcast %105 : vector<1x128xf32> to vector<256x128xf32>
    %107 = arith.addf %104, %106 : vector<256x128xf32>
    %cst_63 = arith.constant 0.000000e+00 : f32
    %108 = vector.broadcast %cst_63 : f32 to vector<256x128xf32>
    %109 = arith.maximumf %107, %108 : vector<256x128xf32>
    %110 = arith.truncf %109 : vector<256x128xf32> to vector<256x128xbf16>
    %c0_64 = arith.constant 0 : index
    %c0_65 = arith.constant 0 : index
    %c0_66 = arith.constant 0 : index
    %111 = vector.load %arg6[%c0_64, %c0_65, %c0_66] : memref<1x256x128xbf16, #tpu.memory_space<vmem>>, vector<1x256x128xbf16>
    %112 = vector.shape_cast %111 : vector<1x256x128xbf16> to vector<256x128xbf16>
    %113 = vector.shape_cast %110 : vector<256x128xbf16> to vector<1x256x128xbf16>
    tpu.vector_store %arg6[%c0_64, %c0_65, %c0_66], %113 {strides = array<i32>} : memref<1x256x128xbf16, #tpu.memory_space<vmem>>, vector<1x256x128xbf16>,
    return
  }
  func.func @transform_0(%arg0: i32) -> (i32, i32, i32) {
    %c0_i32 = arith.constant 0 : i32
    %c0_i32_0 = arith.constant 0 : i32
    %c0_i32_1 = arith.constant 0 : i32
    return %arg0, %c0_i32, %c0_i32_0 : i32, i32, i32
  }
  func.func @transform_1(%arg0: i32) -> (i32, i32, i32) {
    %c0_i32 = arith.constant 0 : i32
    %c0_i32_0 = arith.constant 0 : i32
    %c0_i32_1 = arith.constant 0 : i32
    %c0_i32_2 = arith.constant 0 : i32
    return %c0_i32, %c0_i32_0, %c0_i32_1 : i32, i32, i32
  }
  func.func @transform_2(%arg0: i32) -> (i32, i32) {
    %c0_i32 = arith.constant 0 : i32
    %c0_i32_0 = arith.constant 0 : i32
    %c0_i32_1 = arith.constant 0 : i32
    return %c0_i32, %c0_i32_0 : i32, i32
  }
  func.func @transform_3(%arg0: i32) -> (i32, i32, i32) {
    %c0_i32 = arith.constant 0 : i32
    %c0_i32_0 = arith.constant 0 : i32
    %c0_i32_1 = arith.constant 0 : i32
    %c0_i32_2 = arith.constant 0 : i32
    return %c0_i32, %c0_i32_0, %c0_i32_1 : i32, i32, i32
  }
  func.func @transform_4(%arg0: i32) -> (i32, i32) {
    %c0_i32 = arith.constant 0 : i32
    %c0_i32_0 = arith.constant 0 : i32
    %c0_i32_1 = arith.constant 0 : i32
    return %c0_i32, %c0_i32_0 : i32, i32
  }
  func.func @transform_5(%arg0: i32) -> (i32, i32, i32) {
    %c0_i32 = arith.constant 0 : i32
    %c0_i32_0 = arith.constant 0 : i32
    %c0_i32_1 = arith.constant 0 : i32
    return %arg0, %c0_i32, %c0_i32_0 : i32, i32, i32
  }
}

module attributes {stable_mosaic.version = 11 : i64} {
  func.func @kernel(%arg0: i32, %arg1: memref<1x65x128xbf16, #tpu.memory_space<vmem>>, %arg2: memref<1x65x128xbf16, #tpu.memory_space<vmem>>, %arg3: memref<1x65x128xbf16, #tpu.memory_space<vmem>>, %arg4: memref<1x65x128xbf16, #tpu.memory_space<vmem>>, %arg5: memref<9x128x128xbf16, #tpu.memory_space<vmem>>, %arg6: memref<1x128xf32, #tpu.memory_space<vmem>>, %arg7: memref<1x56x128xf32, #tpu.memory_space<vmem>>) attributes {dimension_semantics = [#tpu.dimension_semantics<parallel>], iteration_bounds = array<i64: 2>, scalar_prefetch = 0 : i64, scratch_operands = 0 : i64, tpu.core_type = #tpu.core_type<tc>, window_params = [{transform_indices = @transform_0, window_bounds = array<i64: 1, 65, 128>}, {transform_indices = @transform_1, window_bounds = array<i64: 1, 65, 128>}, {transform_indices = @transform_2, window_bounds = array<i64: 1, 65, 128>}, {transform_indices = @transform_3, window_bounds = array<i64: 1, 65, 128>}, {pipeline_mode = #tpu.pipeline_mode<synchronous>, transform_indices = @transform_4, window_bounds = array<i64: 9, 128, 128>}, {pipeline_mode = #tpu.pipeline_mode<synchronous>, transform_indices = @transform_5, window_bounds = array<i64: 1, 128>}, {transform_indices = @transform_6, window_bounds = array<i64: 1, 56, 128>}]} {
    %cst = arith.constant 0.000000e+00 : f32
    %0 = vector.broadcast %cst : f32 to vector<56x128xf32>
    %c0 = arith.constant 0 : index
    %c0_0 = arith.constant 0 : index
    %c0_1 = arith.constant 0 : index
    %1 = vector.load %arg1[%c0, %c0_0, %c0_1] : memref<1x65x128xbf16, #tpu.memory_space<vmem>>, vector<1x56x128xbf16>
    %2 = vector.shape_cast %1 : vector<1x56x128xbf16> to vector<56x128xbf16>
    %c0_2 = arith.constant 0 : index
    %c0_3 = arith.constant 0 : index
    %c0_4 = arith.constant 0 : index
    %3 = vector.load %arg5[%c0_2, %c0_3, %c0_4] : memref<9x128x128xbf16, #tpu.memory_space<vmem>>, vector<1x128x128xbf16>
    %4 = vector.shape_cast %3 : vector<1x128x128xbf16> to vector<128x128xbf16>
    %cst_5 = arith.constant dense<0.000000e+00> : vector<56x128xf32>
    %5 = tpu.matmul %2, %4, %cst_5 {dimension_numbers = #tpu.dot_dimension_numbers<[1], [0], [0], [1], [0, 0, 1, 1], [], []>} : vector<56x128xbf16>, vector<128x128xbf16>, vector<56x128xf32> -> vector<56x128xf32>
    %6 = arith.addf %0, %5 : vector<56x128xf32>
    %c0_6 = arith.constant 0 : index
    %c0_7 = arith.constant 0 : index
    %c0_8 = arith.constant 0 : index
    %7 = vector.load %arg2[%c0_6, %c0_7, %c0_8] : memref<1x65x128xbf16, #tpu.memory_space<vmem>>, vector<1x56x128xbf16>
    %8 = vector.shape_cast %7 : vector<1x56x128xbf16> to vector<56x128xbf16>
    %c1 = arith.constant 1 : index
    %c0_9 = arith.constant 0 : index
    %c0_10 = arith.constant 0 : index
    %9 = vector.load %arg5[%c1, %c0_9, %c0_10] : memref<9x128x128xbf16, #tpu.memory_space<vmem>>, vector<1x128x128xbf16>
    %10 = vector.shape_cast %9 : vector<1x128x128xbf16> to vector<128x128xbf16>
    %cst_11 = arith.constant dense<0.000000e+00> : vector<56x128xf32>
    %11 = tpu.matmul %8, %10, %cst_11 {dimension_numbers = #tpu.dot_dimension_numbers<[1], [0], [0], [1], [0, 0, 1, 1], [], []>} : vector<56x128xbf16>, vector<128x128xbf16>, vector<56x128xf32> -> vector<56x128xf32>
    %12 = arith.addf %6, %11 : vector<56x128xf32>
    %c0_12 = arith.constant 0 : index
    %c1_13 = arith.constant 1 : index
    %c0_14 = arith.constant 0 : index
    %13 = vector.load %arg1[%c0_12, %c1_13, %c0_14] : memref<1x65x128xbf16, #tpu.memory_space<vmem>>, vector<1x56x128xbf16>
    %14 = vector.shape_cast %13 : vector<1x56x128xbf16> to vector<56x128xbf16>
    %c2 = arith.constant 2 : index
    %c0_15 = arith.constant 0 : index
    %c0_16 = arith.constant 0 : index
    %15 = vector.load %arg5[%c2, %c0_15, %c0_16] : memref<9x128x128xbf16, #tpu.memory_space<vmem>>, vector<1x128x128xbf16>
    %16 = vector.shape_cast %15 : vector<1x128x128xbf16> to vector<128x128xbf16>
    %cst_17 = arith.constant dense<0.000000e+00> : vector<56x128xf32>
    %17 = tpu.matmul %14, %16, %cst_17 {dimension_numbers = #tpu.dot_dimension_numbers<[1], [0], [0], [1], [0, 0, 1, 1], [], []>} : vector<56x128xbf16>, vector<128x128xbf16>, vector<56x128xf32> -> vector<56x128xf32>
    %18 = arith.addf %12, %17 : vector<56x128xf32>
    %c0_18 = arith.constant 0 : index
    %c0_19 = arith.constant 0 : index
    %c0_20 = arith.constant 0 : index
    %19 = vector.load %arg3[%c0_18, %c0_19, %c0_20] : memref<1x65x128xbf16, #tpu.memory_space<vmem>>, vector<1x56x128xbf16>
    %20 = vector.shape_cast %19 : vector<1x56x128xbf16> to vector<56x128xbf16>
    %c3 = arith.constant 3 : index
    %c0_21 = arith.constant 0 : index
    %c0_22 = arith.constant 0 : index
    %21 = vector.load %arg5[%c3, %c0_21, %c0_22] : memref<9x128x128xbf16, #tpu.memory_space<vmem>>, vector<1x128x128xbf16>
    %22 = vector.shape_cast %21 : vector<1x128x128xbf16> to vector<128x128xbf16>
    %cst_23 = arith.constant dense<0.000000e+00> : vector<56x128xf32>
    %23 = tpu.matmul %20, %22, %cst_23 {dimension_numbers = #tpu.dot_dimension_numbers<[1], [0], [0], [1], [0, 0, 1, 1], [], []>} : vector<56x128xbf16>, vector<128x128xbf16>, vector<56x128xf32> -> vector<56x128xf32>
    %24 = arith.addf %18, %23 : vector<56x128xf32>
    %c0_24 = arith.constant 0 : index
    %c0_25 = arith.constant 0 : index
    %c0_26 = arith.constant 0 : index
    %25 = vector.load %arg4[%c0_24, %c0_25, %c0_26] : memref<1x65x128xbf16, #tpu.memory_space<vmem>>, vector<1x56x128xbf16>
    %26 = vector.shape_cast %25 : vector<1x56x128xbf16> to vector<56x128xbf16>
    %c4 = arith.constant 4 : index
    %c0_27 = arith.constant 0 : index
    %c0_28 = arith.constant 0 : index
    %27 = vector.load %arg5[%c4, %c0_27, %c0_28] : memref<9x128x128xbf16, #tpu.memory_space<vmem>>, vector<1x128x128xbf16>
    %28 = vector.shape_cast %27 : vector<1x128x128xbf16> to vector<128x128xbf16>
    %cst_29 = arith.constant dense<0.000000e+00> : vector<56x128xf32>
    %29 = tpu.matmul %26, %28, %cst_29 {dimension_numbers = #tpu.dot_dimension_numbers<[1], [0], [0], [1], [0, 0, 1, 1], [], []>} : vector<56x128xbf16>, vector<128x128xbf16>, vector<56x128xf32> -> vector<56x128xf32>
    %30 = arith.addf %24, %29 : vector<56x128xf32>
    %c0_30 = arith.constant 0 : index
    %c1_31 = arith.constant 1 : index
    %c0_32 = arith.constant 0 : index
    %31 = vector.load %arg3[%c0_30, %c1_31, %c0_32] : memref<1x65x128xbf16, #tpu.memory_space<vmem>>, vector<1x56x128xbf16>
    %32 = vector.shape_cast %31 : vector<1x56x128xbf16> to vector<56x128xbf16>
    %c5 = arith.constant 5 : index
    %c0_33 = arith.constant 0 : index
    %c0_34 = arith.constant 0 : index
    %33 = vector.load %arg5[%c5, %c0_33, %c0_34] : memref<9x128x128xbf16, #tpu.memory_space<vmem>>, vector<1x128x128xbf16>
    %34 = vector.shape_cast %33 : vector<1x128x128xbf16> to vector<128x128xbf16>
    %cst_35 = arith.constant dense<0.000000e+00> : vector<56x128xf32>
    %35 = tpu.matmul %32, %34, %cst_35 {dimension_numbers = #tpu.dot_dimension_numbers<[1], [0], [0], [1], [0, 0, 1, 1], [], []>} : vector<56x128xbf16>, vector<128x128xbf16>, vector<56x128xf32> -> vector<56x128xf32>
    %36 = arith.addf %30, %35 : vector<56x128xf32>
    %c0_36 = arith.constant 0 : index
    %c8 = arith.constant 8 : index
    %c0_37 = arith.constant 0 : index
    %37 = vector.load %arg1[%c0_36, %c8, %c0_37] : memref<1x65x128xbf16, #tpu.memory_space<vmem>>, vector<1x56x128xbf16>
    %38 = vector.shape_cast %37 : vector<1x56x128xbf16> to vector<56x128xbf16>
    %c6 = arith.constant 6 : index
    %c0_38 = arith.constant 0 : index
    %c0_39 = arith.constant 0 : index
    %39 = vector.load %arg5[%c6, %c0_38, %c0_39] : memref<9x128x128xbf16, #tpu.memory_space<vmem>>, vector<1x128x128xbf16>
    %40 = vector.shape_cast %39 : vector<1x128x128xbf16> to vector<128x128xbf16>
    %cst_40 = arith.constant dense<0.000000e+00> : vector<56x128xf32>
    %41 = tpu.matmul %38, %40, %cst_40 {dimension_numbers = #tpu.dot_dimension_numbers<[1], [0], [0], [1], [0, 0, 1, 1], [], []>} : vector<56x128xbf16>, vector<128x128xbf16>, vector<56x128xf32> -> vector<56x128xf32>
    %42 = arith.addf %36, %41 : vector<56x128xf32>
    %c0_41 = arith.constant 0 : index
    %c8_42 = arith.constant 8 : index
    %c0_43 = arith.constant 0 : index
    %43 = vector.load %arg2[%c0_41, %c8_42, %c0_43] : memref<1x65x128xbf16, #tpu.memory_space<vmem>>, vector<1x56x128xbf16>
    %44 = vector.shape_cast %43 : vector<1x56x128xbf16> to vector<56x128xbf16>
    %c7 = arith.constant 7 : index
    %c0_44 = arith.constant 0 : index
    %c0_45 = arith.constant 0 : index
    %45 = vector.load %arg5[%c7, %c0_44, %c0_45] : memref<9x128x128xbf16, #tpu.memory_space<vmem>>, vector<1x128x128xbf16>
    %46 = vector.shape_cast %45 : vector<1x128x128xbf16> to vector<128x128xbf16>
    %cst_46 = arith.constant dense<0.000000e+00> : vector<56x128xf32>
    %47 = tpu.matmul %44, %46, %cst_46 {dimension_numbers = #tpu.dot_dimension_numbers<[1], [0], [0], [1], [0, 0, 1, 1], [], []>} : vector<56x128xbf16>, vector<128x128xbf16>, vector<56x128xf32> -> vector<56x128xf32>
    %48 = arith.addf %42, %47 : vector<56x128xf32>
    %c0_47 = arith.constant 0 : index
    %c9 = arith.constant 9 : index
    %c0_48 = arith.constant 0 : index
    %49 = vector.load %arg1[%c0_47, %c9, %c0_48] : memref<1x65x128xbf16, #tpu.memory_space<vmem>>, vector<1x56x128xbf16>
    %50 = vector.shape_cast %49 : vector<1x56x128xbf16> to vector<56x128xbf16>
    %c8_49 = arith.constant 8 : index
    %c0_50 = arith.constant 0 : index
    %c0_51 = arith.constant 0 : index
    %51 = vector.load %arg5[%c8_49, %c0_50, %c0_51] : memref<9x128x128xbf16, #tpu.memory_space<vmem>>, vector<1x128x128xbf16>
    %52 = vector.shape_cast %51 : vector<1x128x128xbf16> to vector<128x128xbf16>
    %cst_52 = arith.constant dense<0.000000e+00> : vector<56x128xf32>
    %53 = tpu.matmul %50, %52, %cst_52 {dimension_numbers = #tpu.dot_dimension_numbers<[1], [0], [0], [1], [0, 0, 1, 1], [], []>} : vector<56x128xbf16>, vector<128x128xbf16>, vector<56x128xf32> -> vector<56x128xf32>
    %54 = arith.addf %48, %53 : vector<56x128xf32>
    %c0_53 = arith.constant 0 : index
    %c0_54 = arith.constant 0 : index
    %55 = vector.load %arg6[%c0_53, %c0_54] : memref<1x128xf32, #tpu.memory_space<vmem>>, vector<1x128xf32>
    %56 = vector.broadcast %55 : vector<1x128xf32> to vector<56x128xf32>
    %57 = arith.addf %54, %56 : vector<56x128xf32>
    %cst_55 = arith.constant 0.000000e+00 : f32
    %58 = vector.broadcast %cst_55 : f32 to vector<56x128xf32>
    %59 = arith.maximumf %57, %58 : vector<56x128xf32>
    %c0_56 = arith.constant 0 : index
    %c0_57 = arith.constant 0 : index
    %c0_58 = arith.constant 0 : index
    %60 = vector.load %arg7[%c0_56, %c0_57, %c0_58] : memref<1x56x128xf32, #tpu.memory_space<vmem>>, vector<1x56x128xf32>
    %61 = vector.shape_cast %60 : vector<1x56x128xf32> to vector<56x128xf32>
    %62 = vector.shape_cast %59 : vector<56x128xf32> to vector<1x56x128xf32>
    tpu.vector_store %arg7[%c0_56, %c0_57, %c0_58], %62 {strides = array<i32>} : memref<1x56x128xf32, #tpu.memory_space<vmem>>, vector<1x56x128xf32>,
    return
  }
  func.func @transform_0(%arg0: i32) -> (i32, i32, i32) {
    %c0_i32 = arith.constant 0 : i32
    %c0_i32_0 = arith.constant 0 : i32
    %c0_i32_1 = arith.constant 0 : i32
    return %arg0, %c0_i32, %c0_i32_0 : i32, i32, i32
  }
  func.func @transform_1(%arg0: i32) -> (i32, i32, i32) {
    %c0_i32 = arith.constant 0 : i32
    %c0_i32_0 = arith.constant 0 : i32
    %c0_i32_1 = arith.constant 0 : i32
    return %arg0, %c0_i32, %c0_i32_0 : i32, i32, i32
  }
  func.func @transform_2(%arg0: i32) -> (i32, i32, i32) {
    %c0_i32 = arith.constant 0 : i32
    %c0_i32_0 = arith.constant 0 : i32
    %c0_i32_1 = arith.constant 0 : i32
    return %arg0, %c0_i32, %c0_i32_0 : i32, i32, i32
  }
  func.func @transform_3(%arg0: i32) -> (i32, i32, i32) {
    %c0_i32 = arith.constant 0 : i32
    %c0_i32_0 = arith.constant 0 : i32
    %c0_i32_1 = arith.constant 0 : i32
    return %arg0, %c0_i32, %c0_i32_0 : i32, i32, i32
  }
  func.func @transform_4(%arg0: i32) -> (i32, i32, i32) {
    %c0_i32 = arith.constant 0 : i32
    %c0_i32_0 = arith.constant 0 : i32
    %c0_i32_1 = arith.constant 0 : i32
    %c0_i32_2 = arith.constant 0 : i32
    return %c0_i32, %c0_i32_0, %c0_i32_1 : i32, i32, i32
  }
  func.func @transform_5(%arg0: i32) -> (i32, i32) {
    %c0_i32 = arith.constant 0 : i32
    %c0_i32_0 = arith.constant 0 : i32
    %c0_i32_1 = arith.constant 0 : i32
    return %c0_i32, %c0_i32_0 : i32, i32
  }
  func.func @transform_6(%arg0: i32) -> (i32, i32, i32) {
    %c0_i32 = arith.constant 0 : i32
    %c0_i32_0 = arith.constant 0 : i32
    %c0_i32_1 = arith.constant 0 : i32
    return %arg0, %c0_i32, %c0_i32_0 : i32, i32, i32
  }
}

module attributes {stable_mosaic.version = 11 : i64} {
  func.func @kernel(%arg0: i32, %arg1: memref<1x65x4xf32, #tpu.memory_space<vmem>>, %arg2: memref<1x65x4xf32, #tpu.memory_space<vmem>>, %arg3: memref<1x65x4xf32, #tpu.memory_space<vmem>>, %arg4: memref<1x65x4xf32, #tpu.memory_space<vmem>>, %arg5: memref<9x4x384xbf16, #tpu.memory_space<vmem>>, %arg6: memref<1x384xf32, #tpu.memory_space<vmem>>, %arg7: memref<1x56x384xf32, #tpu.memory_space<vmem>>, %arg8: memref<1x56x4xf32, #tpu.memory_space<vmem>>) attributes {dimension_semantics = [#tpu.dimension_semantics<parallel>], iteration_bounds = array<i64: 2>, scalar_prefetch = 0 : i64, scratch_operands = 0 : i64, tpu.core_type = #tpu.core_type<tc>, window_params = [{transform_indices = @transform_0, window_bounds = array<i64: 1, 65, 4>}, {transform_indices = @transform_1, window_bounds = array<i64: 1, 65, 4>}, {transform_indices = @transform_2, window_bounds = array<i64: 1, 65, 4>}, {transform_indices = @transform_3, window_bounds = array<i64: 1, 65, 4>}, {pipeline_mode = #tpu.pipeline_mode<synchronous>, transform_indices = @transform_4, window_bounds = array<i64: 9, 4, 384>}, {pipeline_mode = #tpu.pipeline_mode<synchronous>, transform_indices = @transform_5, window_bounds = array<i64: 1, 384>}, {transform_indices = @transform_6, window_bounds = array<i64: 1, 56, 384>}, {transform_indices = @transform_7, window_bounds = array<i64: 1, 56, 4>}]} {
    %cst = arith.constant 0.000000e+00 : f32
    %0 = vector.broadcast %cst : f32 to vector<56x384xf32>
    %c0 = arith.constant 0 : index
    %c0_0 = arith.constant 0 : index
    %c0_1 = arith.constant 0 : index
    %1 = vector.load %arg1[%c0, %c0_0, %c0_1] : memref<1x65x4xf32, #tpu.memory_space<vmem>>, vector<1x56x4xf32>
    %2 = vector.shape_cast %1 : vector<1x56x4xf32> to vector<56x4xf32>
    %3 = arith.truncf %2 : vector<56x4xf32> to vector<56x4xbf16>
    %c0_2 = arith.constant 0 : index
    %c0_3 = arith.constant 0 : index
    %c0_4 = arith.constant 0 : index
    %4 = vector.load %arg5[%c0_2, %c0_3, %c0_4] : memref<9x4x384xbf16, #tpu.memory_space<vmem>>, vector<1x4x384xbf16>
    %5 = vector.shape_cast %4 : vector<1x4x384xbf16> to vector<4x384xbf16>
    %cst_5 = arith.constant dense<0.000000e+00> : vector<56x384xf32>
    %6 = tpu.matmul %3, %5, %cst_5 {dimension_numbers = #tpu.dot_dimension_numbers<[1], [0], [0], [1], [0, 0, 1, 1], [], []>} : vector<56x4xbf16>, vector<4x384xbf16>, vector<56x384xf32> -> vector<56x384xf32>
    %7 = arith.addf %0, %6 : vector<56x384xf32>
    %c0_6 = arith.constant 0 : index
    %c0_7 = arith.constant 0 : index
    %c0_8 = arith.constant 0 : index
    %8 = vector.load %arg2[%c0_6, %c0_7, %c0_8] : memref<1x65x4xf32, #tpu.memory_space<vmem>>, vector<1x56x4xf32>
    %9 = vector.shape_cast %8 : vector<1x56x4xf32> to vector<56x4xf32>
    %10 = arith.truncf %9 : vector<56x4xf32> to vector<56x4xbf16>
    %c1 = arith.constant 1 : index
    %c0_9 = arith.constant 0 : index
    %c0_10 = arith.constant 0 : index
    %11 = vector.load %arg5[%c1, %c0_9, %c0_10] : memref<9x4x384xbf16, #tpu.memory_space<vmem>>, vector<1x4x384xbf16>
    %12 = vector.shape_cast %11 : vector<1x4x384xbf16> to vector<4x384xbf16>
    %cst_11 = arith.constant dense<0.000000e+00> : vector<56x384xf32>
    %13 = tpu.matmul %10, %12, %cst_11 {dimension_numbers = #tpu.dot_dimension_numbers<[1], [0], [0], [1], [0, 0, 1, 1], [], []>} : vector<56x4xbf16>, vector<4x384xbf16>, vector<56x384xf32> -> vector<56x384xf32>
    %14 = arith.addf %7, %13 : vector<56x384xf32>
    %15 = arith.maximumf %2, %9 : vector<56x4xf32>
    %c0_12 = arith.constant 0 : index
    %c1_13 = arith.constant 1 : index
    %c0_14 = arith.constant 0 : index
    %16 = vector.load %arg1[%c0_12, %c1_13, %c0_14] : memref<1x65x4xf32, #tpu.memory_space<vmem>>, vector<1x56x4xf32>
    %17 = vector.shape_cast %16 : vector<1x56x4xf32> to vector<56x4xf32>
    %18 = arith.truncf %17 : vector<56x4xf32> to vector<56x4xbf16>
    %c2 = arith.constant 2 : index
    %c0_15 = arith.constant 0 : index
    %c0_16 = arith.constant 0 : index
    %19 = vector.load %arg5[%c2, %c0_15, %c0_16] : memref<9x4x384xbf16, #tpu.memory_space<vmem>>, vector<1x4x384xbf16>
    %20 = vector.shape_cast %19 : vector<1x4x384xbf16> to vector<4x384xbf16>
    %cst_17 = arith.constant dense<0.000000e+00> : vector<56x384xf32>
    %21 = tpu.matmul %18, %20, %cst_17 {dimension_numbers = #tpu.dot_dimension_numbers<[1], [0], [0], [1], [0, 0, 1, 1], [], []>} : vector<56x4xbf16>, vector<4x384xbf16>, vector<56x384xf32> -> vector<56x384xf32>
    %22 = arith.addf %14, %21 : vector<56x384xf32>
    %23 = arith.maximumf %15, %17 : vector<56x4xf32>
    %c0_18 = arith.constant 0 : index
    %c0_19 = arith.constant 0 : index
    %c0_20 = arith.constant 0 : index
    %24 = vector.load %arg3[%c0_18, %c0_19, %c0_20] : memref<1x65x4xf32, #tpu.memory_space<vmem>>, vector<1x56x4xf32>
    %25 = vector.shape_cast %24 : vector<1x56x4xf32> to vector<56x4xf32>
    %26 = arith.truncf %25 : vector<56x4xf32> to vector<56x4xbf16>
    %c3 = arith.constant 3 : index
    %c0_21 = arith.constant 0 : index
    %c0_22 = arith.constant 0 : index
    %27 = vector.load %arg5[%c3, %c0_21, %c0_22] : memref<9x4x384xbf16, #tpu.memory_space<vmem>>, vector<1x4x384xbf16>
    %28 = vector.shape_cast %27 : vector<1x4x384xbf16> to vector<4x384xbf16>
    %cst_23 = arith.constant dense<0.000000e+00> : vector<56x384xf32>
    %29 = tpu.matmul %26, %28, %cst_23 {dimension_numbers = #tpu.dot_dimension_numbers<[1], [0], [0], [1], [0, 0, 1, 1], [], []>} : vector<56x4xbf16>, vector<4x384xbf16>, vector<56x384xf32> -> vector<56x384xf32>
    %30 = arith.addf %22, %29 : vector<56x384xf32>
    %31 = arith.maximumf %23, %25 : vector<56x4xf32>
    %c0_24 = arith.constant 0 : index
    %c0_25 = arith.constant 0 : index
    %c0_26 = arith.constant 0 : index
    %32 = vector.load %arg4[%c0_24, %c0_25, %c0_26] : memref<1x65x4xf32, #tpu.memory_space<vmem>>, vector<1x56x4xf32>
    %33 = vector.shape_cast %32 : vector<1x56x4xf32> to vector<56x4xf32>
    %34 = arith.truncf %33 : vector<56x4xf32> to vector<56x4xbf16>
    %c4 = arith.constant 4 : index
    %c0_27 = arith.constant 0 : index
    %c0_28 = arith.constant 0 : index
    %35 = vector.load %arg5[%c4, %c0_27, %c0_28] : memref<9x4x384xbf16, #tpu.memory_space<vmem>>, vector<1x4x384xbf16>
    %36 = vector.shape_cast %35 : vector<1x4x384xbf16> to vector<4x384xbf16>
    %cst_29 = arith.constant dense<0.000000e+00> : vector<56x384xf32>
    %37 = tpu.matmul %34, %36, %cst_29 {dimension_numbers = #tpu.dot_dimension_numbers<[1], [0], [0], [1], [0, 0, 1, 1], [], []>} : vector<56x4xbf16>, vector<4x384xbf16>, vector<56x384xf32> -> vector<56x384xf32>
    %38 = arith.addf %30, %37 : vector<56x384xf32>
    %39 = arith.maximumf %31, %33 : vector<56x4xf32>
    %c0_30 = arith.constant 0 : index
    %c1_31 = arith.constant 1 : index
    %c0_32 = arith.constant 0 : index
    %40 = vector.load %arg3[%c0_30, %c1_31, %c0_32] : memref<1x65x4xf32, #tpu.memory_space<vmem>>, vector<1x56x4xf32>
    %41 = vector.shape_cast %40 : vector<1x56x4xf32> to vector<56x4xf32>
    %42 = arith.truncf %41 : vector<56x4xf32> to vector<56x4xbf16>
    %c5 = arith.constant 5 : index
    %c0_33 = arith.constant 0 : index
    %c0_34 = arith.constant 0 : index
    %43 = vector.load %arg5[%c5, %c0_33, %c0_34] : memref<9x4x384xbf16, #tpu.memory_space<vmem>>, vector<1x4x384xbf16>
    %44 = vector.shape_cast %43 : vector<1x4x384xbf16> to vector<4x384xbf16>
    %cst_35 = arith.constant dense<0.000000e+00> : vector<56x384xf32>
    %45 = tpu.matmul %42, %44, %cst_35 {dimension_numbers = #tpu.dot_dimension_numbers<[1], [0], [0], [1], [0, 0, 1, 1], [], []>} : vector<56x4xbf16>, vector<4x384xbf16>, vector<56x384xf32> -> vector<56x384xf32>
    %46 = arith.addf %38, %45 : vector<56x384xf32>
    %47 = arith.maximumf %39, %41 : vector<56x4xf32>
    %c0_36 = arith.constant 0 : index
    %c8 = arith.constant 8 : index
    %c0_37 = arith.constant 0 : index
    %48 = vector.load %arg1[%c0_36, %c8, %c0_37] : memref<1x65x4xf32, #tpu.memory_space<vmem>>, vector<1x56x4xf32>
    %49 = vector.shape_cast %48 : vector<1x56x4xf32> to vector<56x4xf32>
    %50 = arith.truncf %49 : vector<56x4xf32> to vector<56x4xbf16>
    %c6 = arith.constant 6 : index
    %c0_38 = arith.constant 0 : index
    %c0_39 = arith.constant 0 : index
    %51 = vector.load %arg5[%c6, %c0_38, %c0_39] : memref<9x4x384xbf16, #tpu.memory_space<vmem>>, vector<1x4x384xbf16>
    %52 = vector.shape_cast %51 : vector<1x4x384xbf16> to vector<4x384xbf16>
    %cst_40 = arith.constant dense<0.000000e+00> : vector<56x384xf32>
    %53 = tpu.matmul %50, %52, %cst_40 {dimension_numbers = #tpu.dot_dimension_numbers<[1], [0], [0], [1], [0, 0, 1, 1], [], []>} : vector<56x4xbf16>, vector<4x384xbf16>, vector<56x384xf32> -> vector<56x384xf32>
    %54 = arith.addf %46, %53 : vector<56x384xf32>
    %55 = arith.maximumf %47, %49 : vector<56x4xf32>
    %c0_41 = arith.constant 0 : index
    %c8_42 = arith.constant 8 : index
    %c0_43 = arith.constant 0 : index
    %56 = vector.load %arg2[%c0_41, %c8_42, %c0_43] : memref<1x65x4xf32, #tpu.memory_space<vmem>>, vector<1x56x4xf32>
    %57 = vector.shape_cast %56 : vector<1x56x4xf32> to vector<56x4xf32>
    %58 = arith.truncf %57 : vector<56x4xf32> to vector<56x4xbf16>
    %c7 = arith.constant 7 : index
    %c0_44 = arith.constant 0 : index
    %c0_45 = arith.constant 0 : index
    %59 = vector.load %arg5[%c7, %c0_44, %c0_45] : memref<9x4x384xbf16, #tpu.memory_space<vmem>>, vector<1x4x384xbf16>
    %60 = vector.shape_cast %59 : vector<1x4x384xbf16> to vector<4x384xbf16>
    %cst_46 = arith.constant dense<0.000000e+00> : vector<56x384xf32>
    %61 = tpu.matmul %58, %60, %cst_46 {dimension_numbers = #tpu.dot_dimension_numbers<[1], [0], [0], [1], [0, 0, 1, 1], [], []>} : vector<56x4xbf16>, vector<4x384xbf16>, vector<56x384xf32> -> vector<56x384xf32>
    %62 = arith.addf %54, %61 : vector<56x384xf32>
    %63 = arith.maximumf %55, %57 : vector<56x4xf32>
    %c0_47 = arith.constant 0 : index
    %c9 = arith.constant 9 : index
    %c0_48 = arith.constant 0 : index
    %64 = vector.load %arg1[%c0_47, %c9, %c0_48] : memref<1x65x4xf32, #tpu.memory_space<vmem>>, vector<1x56x4xf32>
    %65 = vector.shape_cast %64 : vector<1x56x4xf32> to vector<56x4xf32>
    %66 = arith.truncf %65 : vector<56x4xf32> to vector<56x4xbf16>
    %c8_49 = arith.constant 8 : index
    %c0_50 = arith.constant 0 : index
    %c0_51 = arith.constant 0 : index
    %67 = vector.load %arg5[%c8_49, %c0_50, %c0_51] : memref<9x4x384xbf16, #tpu.memory_space<vmem>>, vector<1x4x384xbf16>
    %68 = vector.shape_cast %67 : vector<1x4x384xbf16> to vector<4x384xbf16>
    %cst_52 = arith.constant dense<0.000000e+00> : vector<56x384xf32>
    %69 = tpu.matmul %66, %68, %cst_52 {dimension_numbers = #tpu.dot_dimension_numbers<[1], [0], [0], [1], [0, 0, 1, 1], [], []>} : vector<56x4xbf16>, vector<4x384xbf16>, vector<56x384xf32> -> vector<56x384xf32>
    %70 = arith.addf %62, %69 : vector<56x384xf32>
    %71 = arith.maximumf %63, %65 : vector<56x4xf32>
    %c0_53 = arith.constant 0 : index
    %c0_54 = arith.constant 0 : index
    %72 = vector.load %arg6[%c0_53, %c0_54] : memref<1x384xf32, #tpu.memory_space<vmem>>, vector<1x384xf32>
    %73 = vector.broadcast %72 : vector<1x384xf32> to vector<56x384xf32>
    %74 = arith.addf %70, %73 : vector<56x384xf32>
    %cst_55 = arith.constant 0.000000e+00 : f32
    %75 = vector.broadcast %cst_55 : f32 to vector<56x384xf32>
    %76 = arith.maximumf %74, %75 : vector<56x384xf32>
    %c0_56 = arith.constant 0 : index
    %c0_57 = arith.constant 0 : index
    %c0_58 = arith.constant 0 : index
    %77 = vector.load %arg7[%c0_56, %c0_57, %c0_58] : memref<1x56x384xf32, #tpu.memory_space<vmem>>, vector<1x56x384xf32>
    %78 = vector.shape_cast %77 : vector<1x56x384xf32> to vector<56x384xf32>
    %79 = vector.shape_cast %76 : vector<56x384xf32> to vector<1x56x384xf32>
    tpu.vector_store %arg7[%c0_56, %c0_57, %c0_58], %79 {strides = array<i32>} : memref<1x56x384xf32, #tpu.memory_space<vmem>>, vector<1x56x384xf32>,
    %c0_59 = arith.constant 0 : index
    %c0_60 = arith.constant 0 : index
    %c0_61 = arith.constant 0 : index
    %80 = vector.load %arg8[%c0_59, %c0_60, %c0_61] : memref<1x56x4xf32, #tpu.memory_space<vmem>>, vector<1x56x4xf32>
    %81 = vector.shape_cast %80 : vector<1x56x4xf32> to vector<56x4xf32>
    %82 = vector.shape_cast %71 : vector<56x4xf32> to vector<1x56x4xf32>
    tpu.vector_store %arg8[%c0_59, %c0_60, %c0_61], %82 {strides = array<i32>} : memref<1x56x4xf32, #tpu.memory_space<vmem>>, vector<1x56x4xf32>,
    return
  }
  func.func @transform_0(%arg0: i32) -> (i32, i32, i32) {
    %c0_i32 = arith.constant 0 : i32
    %c0_i32_0 = arith.constant 0 : i32
    %c0_i32_1 = arith.constant 0 : i32
    return %arg0, %c0_i32, %c0_i32_0 : i32, i32, i32
  }
  func.func @transform_1(%arg0: i32) -> (i32, i32, i32) {
    %c0_i32 = arith.constant 0 : i32
    %c0_i32_0 = arith.constant 0 : i32
    %c0_i32_1 = arith.constant 0 : i32
    return %arg0, %c0_i32, %c0_i32_0 : i32, i32, i32
  }
  func.func @transform_2(%arg0: i32) -> (i32, i32, i32) {
    %c0_i32 = arith.constant 0 : i32
    %c0_i32_0 = arith.constant 0 : i32
    %c0_i32_1 = arith.constant 0 : i32
    return %arg0, %c0_i32, %c0_i32_0 : i32, i32, i32
  }
  func.func @transform_3(%arg0: i32) -> (i32, i32, i32) {
    %c0_i32 = arith.constant 0 : i32
    %c0_i32_0 = arith.constant 0 : i32
    %c0_i32_1 = arith.constant 0 : i32
    return %arg0, %c0_i32, %c0_i32_0 : i32, i32, i32
  }
  func.func @transform_4(%arg0: i32) -> (i32, i32, i32) {
    %c0_i32 = arith.constant 0 : i32
    %c0_i32_0 = arith.constant 0 : i32
    %c0_i32_1 = arith.constant 0 : i32
    %c0_i32_2 = arith.constant 0 : i32
    return %c0_i32, %c0_i32_0, %c0_i32_1 : i32, i32, i32
  }
  func.func @transform_5(%arg0: i32) -> (i32, i32) {
    %c0_i32 = arith.constant 0 : i32
    %c0_i32_0 = arith.constant 0 : i32
    %c0_i32_1 = arith.constant 0 : i32
    return %c0_i32, %c0_i32_0 : i32, i32
  }
  func.func @transform_6(%arg0: i32) -> (i32, i32, i32) {
    %c0_i32 = arith.constant 0 : i32
    %c0_i32_0 = arith.constant 0 : i32
    %c0_i32_1 = arith.constant 0 : i32
    return %arg0, %c0_i32, %c0_i32_0 : i32, i32, i32
  }
  func.func @transform_7(%arg0: i32) -> (i32, i32, i32) {
    %c0_i32 = arith.constant 0 : i32
    %c0_i32_0 = arith.constant 0 : i32
    %c0_i32_1 = arith.constant 0 : i32
    return %arg0, %c0_i32, %c0_i32_0 : i32, i32, i32
  }
}

</mosaic_0001>

<llo_original>
// kernel: inception_b_forward.5
$region0: #{inception_b_forward.5}
  #allocation0 [shape = 'u32[]', space=smem, size = 0x4, offset = 0x4, fixed_abs, tag = 'smem constant byte address 0x4 - core index']
  #allocation1 [shape = 'u32[144,128]{1,0:T(1,128)}', space=vmem, size = 0x12000, scoped, tag = 'internal scratch']
  %s0 = inlined_call_operand.vmem [shape: bf16[2,65,128], index: 0, kind: input, shape index: {}]
  %s1 = inlined_call_operand.vmem [shape: bf16[2,65,128], index: 1, kind: input, shape index: {}]
  %s2 = inlined_call_operand.vmem [shape: bf16[2,65,128], index: 2, kind: input, shape index: {}]
  %s3 = inlined_call_operand.vmem [shape: bf16[2,65,128], index: 3, kind: input, shape index: {}]
  %s4 = inlined_call_operand.vmem [shape: bf16[9,128,128], index: 4, kind: input, shape index: {}]
  %s5 = inlined_call_operand.vmem [shape: f32[1,128], index: 5, kind: input, shape index: {}]
  %s6 = inlined_call_operand.vmem [shape: f32[2,56,128], index: 6, kind: output, shape index: {}]
  %s7 = sld [smem:[#allocation0]]
  $region57: #{inception_b_forward.5} parent=0
    _
  %s9 = ssub.s32 1, %s7
  %s10 = scalar_select 0, %s9, %s7
  loop: start=0, step=1, limit=4
  $region2: #{inception_b_forward.5} parent=0 // loop_pre_header
    _
  $region3: #{inception_b_forward.5} parent=0 // loop_header
    %s12 = sphi 0, %s16
    %p13 = scmp.ge.s32.totalorder %s12, 4
    %s22 = sphi 0, %s24
    %s25 = sphi 0, %s22
    %s26 = sphi 0, %s25
    %s42 = sphi 0, %s26
    %s48 = sphi 0, %s50
    %s51 = sphi 0, %s48
    %s52 = sphi 0, %s51
    %s68 = sphi 0, %s52
    %s74 = sphi 0, %s76
    %s77 = sphi 0, %s74
    %s78 = sphi 0, %s77
    %s94 = sphi 0, %s78
    %s100 = sphi 0, %s102
    %s103 = sphi 0, %s100
    %s104 = sphi 0, %s103
    %s120 = sphi 0, %s104
    %s124 = sphi 0, %s124
    %s126 = sphi 0, %s124
    %s127 = sphi 0, %s126
    %s141 = sphi 0, %s127
    %s145 = sphi 0, %s145
    %s147 = sphi 0, %s145
    %s148 = sphi 0, %s147
    %s162 = sphi 0, %s148
    %s168 = sphi 0, %s170
    %s171 = sphi 0, %s168
    %s172 = sphi 0, %s171
    %s188 = sphi 0, %s172
  $region4: #{inception_b_forward.5} parent=0 // loop_header_branch
    %15 = sbr.rel (%p13) target = $region8
  $region5: #{inception_b_forward.5} parent=0 // loop_body
    %s17 = ssub.s32 %s12, 1
    %s18 = ssub.s32 %s12, 2
    %s19 = sadd.s32 %s12, 1
    %s20 = ssub.s32 %s12, %s19
    %p21 = scmp.eq.s32.totalorder %s20, 0
    %s23 = sadd.s32 %s22, 1
    %s24 = scalar_select %p21, %s22, %s23
    %p27 = pneg %p21
    %p28 = scmp.eq.s32.totalorder %s12, 1
    %p29 = por %p27, %p28
    %p30 = scmp.ne.s32.totalorder %s22, %s25
    %p31 = scmp.eq.s32.totalorder %s12, 0
    %p32 = por %p30, %p31
    %p33 = scmp.ne.s32.totalorder %s22, %s25
    %p34 = scmp.eq.s32.totalorder %s17, 1
    %p35 = por %p33, %p34
    %p36 = scmp.ne.s32.totalorder %s25, %s26
    %p37 = scmp.eq.s32.totalorder %s17, 0
    %p38 = por %p36, %p37
    %p39 = scmp.ne.s32.totalorder %s25, %s26
    %p40 = scmp.eq.s32.totalorder %s18, 1
    %p41 = por %p39, %p40
    %p43 = scmp.ne.s32.totalorder %s26, %s42
    %p44 = scmp.eq.s32.totalorder %s18, 0
    %p45 = por %p43, %p44
    %s46 = ssub.s32 %s12, %s19
    %p47 = scmp.eq.s32.totalorder %s46, 0
    %s49 = sadd.s32 %s48, 1
    %s50 = scalar_select %p47, %s48, %s49
    %p53 = pneg %p47
    %p54 = scmp.eq.s32.totalorder %s12, 1
    %p55 = por %p53, %p54
    %p56 = scmp.ne.s32.totalorder %s48, %s51
    %p57 = scmp.eq.s32.totalorder %s12, 0
    %p58 = por %p56, %p57
    %p59 = scmp.ne.s32.totalorder %s48, %s51
    %p60 = scmp.eq.s32.totalorder %s17, 1
    %p61 = por %p59, %p60
    %p62 = scmp.ne.s32.totalorder %s51, %s52
    %p63 = scmp.eq.s32.totalorder %s17, 0
    %p64 = por %p62, %p63
    %p65 = scmp.ne.s32.totalorder %s51, %s52
    %p66 = scmp.eq.s32.totalorder %s18, 1
    %p67 = por %p65, %p66
    %p69 = scmp.ne.s32.totalorder %s52, %s68
    %p70 = scmp.eq.s32.totalorder %s18, 0
    %p71 = por %p69, %p70
    %s72 = ssub.s32 %s12, %s19
    %p73 = scmp.eq.s32.totalorder %s72, 0
    %s75 = sadd.s32 %s74, 1
    %s76 = scalar_select %p73, %s74, %s75
    %p79 = pneg %p73
    %p80 = scmp.eq.s32.totalorder %s12, 1
    %p81 = por %p79, %p80
    %p82 = scmp.ne.s32.totalorder %s74, %s77
    %p83 = scmp.eq.s32.totalorder %s12, 0
    %p84 = por %p82, %p83
    %p85 = scmp.ne.s32.totalorder %s74, %s77
    %p86 = scmp.eq.s32.totalorder %s17, 1
    %p87 = por %p85, %p86
    %p88 = scmp.ne.s32.totalorder %s77, %s78
    %p89 = scmp.eq.s32.totalorder %s17, 0
    %p90 = por %p88, %p89
    %p91 = scmp.ne.s32.totalorder %s77, %s78
    %p92 = scmp.eq.s32.totalorder %s18, 1
    %p93 = por %p91, %p92
    %p95 = scmp.ne.s32.totalorder %s78, %s94
    %p96 = scmp.eq.s32.totalorder %s18, 0
    %p97 = por %p95, %p96
    %s98 = ssub.s32 %s12, %s19
    %p99 = scmp.eq.s32.totalorder %s98, 0
    %s101 = sadd.s32 %s100, 1
    %s102 = scalar_select %p99, %s100, %s101
    %p105 = pneg %p99
    %p106 = scmp.eq.s32.totalorder %s12, 1
    %p107 = por %p105, %p106
    %p108 = scmp.ne.s32.totalorder %s100, %s103
    %p109 = scmp.eq.s32.totalorder %s12, 0
    %p110 = por %p108, %p109
    %p111 = scmp.ne.s32.totalorder %s100, %s103
    %p112 = scmp.eq.s32.totalorder %s17, 1
    %p113 = por %p111, %p112
    %p114 = scmp.ne.s32.totalorder %s103, %s104
    %p115 = scmp.eq.s32.totalorder %s17, 0
    %p116 = por %p114, %p115
    %p117 = scmp.ne.s32.totalorder %s103, %s104
    %p118 = scmp.eq.s32.totalorder %s18, 1
    %p119 = por %p117, %p118
    %p121 = scmp.ne.s32.totalorder %s104, %s120
    %p122 = scmp.eq.s32.totalorder %s18, 0
    %p123 = por %p121, %p122
    %s125 = sadd.s32 %s124, 1
    %p128 = scmp.eq.s32.totalorder %s12, 1
    %p129 = scmp.ne.s32.totalorder %s124, %s126
    %p130 = scmp.eq.s32.totalorder %s12, 0
    %p131 = por %p129, %p130
    %p132 = scmp.ne.s32.totalorder %s124, %s126
    %p133 = scmp.eq.s32.totalorder %s17, 1
    %p134 = por %p132, %p133
    %p135 = scmp.ne.s32.totalorder %s126, %s127
    %p136 = scmp.eq.s32.totalorder %s17, 0
    %p137 = por %p135, %p136
    %p138 = scmp.ne.s32.totalorder %s126, %s127
    %p139 = scmp.eq.s32.totalorder %s18, 1
    %p140 = por %p138, %p139
    %p142 = scmp.ne.s32.totalorder %s127, %s141
    %p143 = scmp.eq.s32.totalorder %s18, 0
    %p144 = por %p142, %p143
    %s146 = sadd.s32 %s145, 1
    %p149 = scmp.eq.s32.totalorder %s12, 1
    %p150 = scmp.ne.s32.totalorder %s145, %s147
    %p151 = scmp.eq.s32.totalorder %s12, 0
    %p152 = por %p150, %p151
    %p153 = scmp.ne.s32.totalorder %s145, %s147
    %p154 = scmp.eq.s32.totalorder %s17, 1
    %p155 = por %p153, %p154
    %p156 = scmp.ne.s32.totalorder %s147, %s148
    %p157 = scmp.eq.s32.totalorder %s17, 0
    %p158 = por %p156, %p157
    %p159 = scmp.ne.s32.totalorder %s147, %s148
    %p160 = scmp.eq.s32.totalorder %s18, 1
    %p161 = por %p159, %p160
    %p163 = scmp.ne.s32.totalorder %s148, %s162
    %p164 = scmp.eq.s32.totalorder %s18, 0
    %p165 = por %p163, %p164
    %s166 = ssub.s32 %s12, %s19
    %p167 = scmp.eq.s32.totalorder %s166, 0
    %s169 = sadd.s32 %s168, 1
    %s170 = scalar_select %p167, %s168, %s169
    %p173 = pneg %p167
    %p174 = scmp.eq.s32.totalorder %s12, 1
    %p175 = por %p173, %p174
    %p176 = scmp.ne.s32.totalorder %s168, %s171
    %p177 = scmp.eq.s32.totalorder %s12, 0
    %p178 = por %p176, %p177
    %p179 = scmp.ne.s32.totalorder %s168, %s171
    %p180 = scmp.eq.s32.totalorder %s17, 1
    %p181 = por %p179, %p180
    %p182 = scmp.ne.s32.totalorder %s171, %s172
    %p183 = scmp.eq.s32.totalorder %s17, 0
    %p184 = por %p182, %p183
    %p185 = scmp.ne.s32.totalorder %s171, %s172
    %p186 = scmp.eq.s32.totalorder %s18, 1
    %p187 = por %p185, %p186
    %p189 = scmp.ne.s32.totalorder %s172, %s188
    %p190 = scmp.eq.s32.totalorder %s18, 0
    %p191 = por %p189, %p190
    %p192 = scmp.le.s32.totalorder 1, %s12
    %p193 = scmp.lt.s32.totalorder %s12, 3
    %p194 = pnand %p192, %p193
    %p195 = pneg %p194
    // Predicated region
    $region9: #{inception_b_forward.5} parent=5 // pred_check
      _
    $region10: #{inception_b_forward.5} parent=5 // pred_check_branch
      %197 = sbr.rel (%p194) target = $region12
    $region11: #{inception_b_forward.5} parent=5 // pred_region
      %s198 = ssub.s32 %s12, 1
      // Predicated region
      $region13: #{inception_b_forward.5} parent=11 // pred_check
        %p199 = pneg %p137
      $region14: #{inception_b_forward.5} parent=11 // pred_check_branch
        %201 = sbr.rel (%p199) target = $region16
      $region15: #{inception_b_forward.5} parent=11 // pred_region
        _
      $region16: #{inception_b_forward.5} parent=11 // pred_fallthru
        _
      // Predicated region
      $region17: #{inception_b_forward.5} parent=11 // pred_check
        %p202 = pneg %p158
      $region18: #{inception_b_forward.5} parent=11 // pred_check_branch
        %204 = sbr.rel (%p202) target = $region20
      $region19: #{inception_b_forward.5} parent=11 // pred_region
        _
      $region20: #{inception_b_forward.5} parent=11 // pred_fallthru
        _
    $region12: #{inception_b_forward.5} parent=5 // pred_fallthru
      _
    %p205 = scmp.lt.s32.totalorder %s12, 2
    // Predicated region
    $region21: #{inception_b_forward.5} parent=5 // pred_check
      %p206 = pneg %p205
    $region22: #{inception_b_forward.5} parent=5 // pred_check_branch
      %208 = sbr.rel (%p206) target = $region24
    $region23: #{inception_b_forward.5} parent=5 // pred_region
      // Predicated region
      $region25: #{inception_b_forward.5} parent=23 // pred_check
        %p209 = pneg %p32
      $region26: #{inception_b_forward.5} parent=23 // pred_check_branch
        %211 = sbr.rel (%p209) target = $region28
      $region27: #{inception_b_forward.5} parent=23 // pred_region
        %p212 = scmp.lt.s32.totalorder %s12, 1
        %s213 = scalar_select %p212, %s12, 1
        %s214 = smul.addr %s213, 9
        %s215 = smul.addr %s214, 4
        %s216 = scalar_lea.vmem %s0, %s215
      $region28: #{inception_b_forward.5} parent=23 // pred_fallthru
        _
      // Predicated region
      $region29: #{inception_b_forward.5} parent=23 // pred_check
        %p217 = pneg %p58
      $region30: #{inception_b_forward.5} parent=23 // pred_check_branch
        %219 = sbr.rel (%p217) target = $region32
      $region31: #{inception_b_forward.5} parent=23 // pred_region
        %p220 = scmp.lt.s32.totalorder %s12, 1
        %s221 = scalar_select %p220, %s12, 1
        %s222 = smul.addr %s221, 9
        %s223 = smul.addr %s222, 4
        %s224 = scalar_lea.vmem %s1, %s223
      $region32: #{inception_b_forward.5} parent=23 // pred_fallthru
        _
      // Predicated region
      $region33: #{inception_b_forward.5} parent=23 // pred_check
        %p225 = pneg %p84
      $region34: #{inception_b_forward.5} parent=23 // pred_check_branch
        %227 = sbr.rel (%p225) target = $region36
      $region35: #{inception_b_forward.5} parent=23 // pred_region
        %p228 = scmp.lt.s32.totalorder %s12, 1
        %s229 = scalar_select %p228, %s12, 1
        %s230 = smul.addr %s229, 9
        %s231 = smul.addr %s230, 4
        %s232 = scalar_lea.vmem %s2, %s231
      $region36: #{inception_b_forward.5} parent=23 // pred_fallthru
        _
      // Predicated region
      $region37: #{inception_b_forward.5} parent=23 // pred_check
        %p233 = pneg %p110
      $region38: #{inception_b_forward.5} parent=23 // pred_check_branch
        %235 = sbr.rel (%p233) target = $region40
      $region39: #{inception_b_forward.5} parent=23 // pred_region
        %p236 = scmp.lt.s32.totalorder %s12, 1
        %s237 = scalar_select %p236, %s12, 1
        %s238 = smul.addr %s237, 9
        %s239 = smul.addr %s238, 4
        %s240 = scalar_lea.vmem %s3, %s239
      $region40: #{inception_b_forward.5} parent=23 // pred_fallthru
        _
    $region24: #{inception_b_forward.5} parent=5 // pred_fallthru
      _
    %p241 = scmp.le.s32.totalorder 1, %s12
    %p242 = scmp.lt.s32.totalorder %s12, 3
    %p243 = pnand %p241, %p242
    %p244 = pneg %p243
    // Predicated region
    $region41: #{inception_b_forward.5} parent=5 // pred_check
      _
    $region42: #{inception_b_forward.5} parent=5 // pred_check_branch
      %246 = sbr.rel (%p243) target = $region44
    $region43: #{inception_b_forward.5} parent=5 // pred_region
      %s247 = ssub.s32 %s12, 1
      %p248 = scmp.lt.s32.totalorder %s17, 1
      %s249 = scalar_select %p248, %s17, 1
      %s250 = smul.addr %s249, 9
      %s251 = smul.addr %s250, 4
      %s252 = scalar_lea.vmem %s0, %s251
      %p253 = pneg %p38
      %p254 = pneg %p35
      %p255 = scmp.lt.s32.totalorder %s17, 1
      %s256 = scalar_select %p255, %s17, 1
      %s257 = smul.addr %s256, 9
      %s258 = smul.addr %s257, 4
      %s259 = scalar_lea.vmem %s1, %s258
      %p260 = pneg %p64
      %p261 = pneg %p61
      %p262 = scmp.lt.s32.totalorder %s17, 1
      %s263 = scalar_select %p262, %s17, 1
      %s264 = smul.addr %s263, 9
      %s265 = smul.addr %s264, 4
      %s266 = scalar_lea.vmem %s2, %s265
      %p267 = pneg %p90
      %p268 = pneg %p87
      %p269 = scmp.lt.s32.totalorder %s17, 1
      %s270 = scalar_select %p269, %s17, 1
      %s271 = smul.addr %s270, 9
      %s272 = smul.addr %s271, 4
      %s273 = scalar_lea.vmem %s3, %s272
      %p274 = pneg %p116
      %p275 = pneg %p113
      %p276 = pneg %p137
      %p277 = pneg %p134
      %p278 = pneg %p158
      %p279 = pneg %p155
      %p280 = pneg %p184
      %p281 = pneg %p181
      %p282 = scmp.lt.s32.totalorder %s17, 1
      %s283 = scalar_select %p282, %s17, 1
      %s284 = smul.addr %s283, 7
      %s285 = smul.addr %s284, 8
      %s286 = scalar_lea.vmem %s6, %s285
      %p287 = scmp.lt.s32.totalorder %s17, 1
      %s288 = scalar_select %p287, %s17, 1
      %s289 = smul.addr %s288, 9
      %s290 = smul.addr %s289, 4
      %s291 = scalar_lea.vmem %s0, %s290
      %p292 = scmp.lt.s32.totalorder %s17, 1
      %s293 = scalar_select %p292, %s17, 1
      %s294 = smul.addr %s293, 9
      %s295 = smul.addr %s294, 4
      %s296 = scalar_lea.vmem %s1, %s295
      %p297 = scmp.lt.s32.totalorder %s17, 1
      %s298 = scalar_select %p297, %s17, 1
      %s299 = smul.addr %s298, 9
      %s300 = smul.addr %s299, 4
      %s301 = scalar_lea.vmem %s2, %s300
      %p302 = scmp.lt.s32.totalorder %s17, 1
      %s303 = scalar_select %p302, %s17, 1
      %s304 = smul.addr %s303, 9
      %s305 = smul.addr %s304, 4
      %s306 = scalar_lea.vmem %s3, %s305
      %p307 = scmp.lt.s32.totalorder %s17, 1
      %s308 = scalar_select %p307, %s17, 1
      %s309 = smul.addr %s308, 7
      %s310 = smul.addr %s309, 8
      %s311 = scalar_lea.vmem %s6, %s310
      %v313 = vld [vmem:[%s291] sm:$0xf]
      %v314 = vld [vmem:[%s291 + $0x4] sm:$0xf]
      %v315 = vld [vmem:[%s291 + $0x8] sm:$0xf]
      %v316 = vld [vmem:[%s291 + $0xc] sm:$0xf]
      %v317 = vld [vmem:[%s291 + $0x10] sm:$0xf]
      %v318 = vld [vmem:[%s291 + $0x14] sm:$0xf]
      %v319 = vld [vmem:[%s291 + $0x18] sm:$0xf]
      %v320 = vld [vmem:[%s4] sm:$0xf]
      %v321 = vld [vmem:[%s4 + $0x4] sm:$0xf]
      %v322 = vld [vmem:[%s4 + $0x8] sm:$0xf]
      %v323 = vld [vmem:[%s4 + $0xc] sm:$0xf]
      %v324 = vld [vmem:[%s4 + $0x10] sm:$0xf]
      %v325 = vld [vmem:[%s4 + $0x14] sm:$0xf]
      %v326 = vld [vmem:[%s4 + $0x18] sm:$0xf]
      %v327 = vld [vmem:[%s4 + $0x1c] sm:$0xf]
      %v328 = vld [vmem:[%s4 + $0x20] sm:$0xf]
      %v329 = vld [vmem:[%s4 + $0x24] sm:$0xf]
      %v330 = vld [vmem:[%s4 + $0x28] sm:$0xf]
      %v331 = vld [vmem:[%s4 + $0x2c] sm:$0xf]
      %v332 = vld [vmem:[%s4 + $0x30] sm:$0xf]
      %v333 = vld [vmem:[%s4 + $0x34] sm:$0xf]
      %v334 = vld [vmem:[%s4 + $0x38] sm:$0xf]
      %v335 = vld [vmem:[%s4 + $0x3c] sm:$0xf]
      %v336 = vld [vmem:[%s296] sm:$0xf]
      %v337 = vld [vmem:[%s296 + $0x4] sm:$0xf]
      %v338 = vld [vmem:[%s296 + $0x8] sm:$0xf]
      %v339 = vld [vmem:[%s296 + $0xc] sm:$0xf]
      %v340 = vld [vmem:[%s296 + $0x10] sm:$0xf]
      %v341 = vld [vmem:[%s296 + $0x14] sm:$0xf]
      %v342 = vld [vmem:[%s296 + $0x18] sm:$0xf]
      %s343 = scalar_lea.vmem %s4, 64
      %v344 = vld [vmem:[%s343] sm:$0xf]
      %v345 = vld [vmem:[%s343 + $0x4] sm:$0xf]
      %v346 = vld [vmem:[%s343 + $0x8] sm:$0xf]
      %v347 = vld [vmem:[%s343 + $0xc] sm:$0xf]
      %v348 = vld [vmem:[%s343 + $0x10] sm:$0xf]
      %v349 = vld [vmem:[%s343 + $0x14] sm:$0xf]
      %v350 = vld [vmem:[%s343 + $0x18] sm:$0xf]
      %v351 = vld [vmem:[%s343 + $0x1c] sm:$0xf]
      %v352 = vld [vmem:[%s343 + $0x20] sm:$0xf]
      %v353 = vld [vmem:[%s343 + $0x24] sm:$0xf]
      %v354 = vld [vmem:[%s343 + $0x28] sm:$0xf]
      %v355 = vld [vmem:[%s343 + $0x2c] sm:$0xf]
      %v356 = vld [vmem:[%s343 + $0x30] sm:$0xf]
      %v357 = vld [vmem:[%s343 + $0x34] sm:$0xf]
      %v358 = vld [vmem:[%s343 + $0x38] sm:$0xf]
      %v359 = vld [vmem:[%s343 + $0x3c] sm:$0xf]
      %v367 = vunpack.c.l.b16 %v336
      %v368 = vunpack.c.l.b16 %v337
      %v369 = vunpack.c.l.b16 %v338
      %v370 = vunpack.c.l.b16 %v339
      %v371 = vunpack.c.l.b16 %v340
      %v372 = vunpack.c.l.b16 %v341
      %v373 = vunpack.c.l.b16 %v342
      %v374 = vpack.c.b16 %v368, %v367
      %v375 = vpack.c.b16 %v370, %v369
      %v376 = vpack.c.b16 %v372, %v371
      %v377 = vpack.c.b16 %v373, %v373
      %v398 = vunpack.c.l.b16 %v344
      %v399 = vunpack.c.l.b16 %v345
      %v400 = vunpack.c.l.b16 %v346
      %v401 = vunpack.c.l.b16 %v347
      %v402 = vunpack.c.l.b16 %v348
      %v403 = vunpack.c.l.b16 %v349
      %v404 = vunpack.c.l.b16 %v350
      %v405 = vunpack.c.l.b16 %v351
      %v406 = vunpack.c.l.b16 %v352
      %v407 = vunpack.c.l.b16 %v353
      %v408 = vunpack.c.l.b16 %v354
      %v409 = vunpack.c.l.b16 %v355
      %v410 = vunpack.c.l.b16 %v356
      %v411 = vunpack.c.l.b16 %v357
      %v412 = vunpack.c.l.b16 %v358
      %v413 = vunpack.c.l.b16 %v359
      %v414 = vpack.c.b16 %v399, %v398
      %v415 = vpack.c.b16 %v401, %v400
      %v416 = vpack.c.b16 %v403, %v402
      %v417 = vpack.c.b16 %v405, %v404
      %v418 = vpack.c.b16 %v407, %v406
      %v419 = vpack.c.b16 %v409, %v408
      %v420 = vpack.c.b16 %v411, %v410
      %v421 = vpack.c.b16 %v413, %v412
      %430 = vmatprep.subr.bf16.mxu0 0
      %431 = vmatpush1.bf16.msra.mxu0 %v421
      %432 = vmatprep.subr.bf16.mxu0 0
      %433 = vmatpush1.bf16.msra.mxu0 %v420
      %434 = vmatprep.subr.bf16.mxu0 0
      %435 = vmatpush1.bf16.msra.mxu0 %v419
      %436 = vmatprep.subr.bf16.mxu0 0
      %437 = vmatpush1.bf16.msra.mxu0 %v418
      %438 = vmatprep.subr.bf16.mxu0 0
      %439 = vmatpush1.bf16.msra.mxu0 %v417
      %440 = vmatprep.subr.bf16.mxu0 0
      %441 = vmatpush1.bf16.msra.mxu0 %v416
      %442 = vmatprep.subr.bf16.mxu0 0
      %443 = vmatpush1.bf16.msra.mxu0 %v415
      %444 = vmatprep.subr.bf16.mxu0 0
      %445 = vmatpush1.bf16.msra.mxu0 %v414
      %446 = vmatprep.subr.bf16.mxu0 0
      %447 = vmatpush2.bf16.msra.mxu0 0
      %448 = vmatprep.subr.bf16.mxu0 0
      %449 = vmatpush2.bf16.msra.mxu0 0
      %450 = vmatprep.subr.bf16.mxu0 0
      %451 = vmatpush2.bf16.msra.mxu0 0
      %452 = vmatprep.subr.bf16.mxu0 0
      %453 = vmatpush2.bf16.msra.mxu0 0
      %454 = vmatprep.subr.bf16.mxu0 0
      %455 = vmatpush2.bf16.msra.mxu0 0
      %456 = vmatprep.subr.bf16.mxu0 0
      %457 = vmatpush2.bf16.msra.mxu0 0
      %458 = vmatprep.subr.bf16.mxu0 0
      %459 = vmatpush2.bf16.msra.mxu0 0
      %460 = vmatprep.subr.bf16.mxu0 0
      %461 = vmatpush2.bf16.msra.mxu0 0
      %462 = vmatprep.mubr.bf16.mxu0 0
      %463 = vmatmul.mubr.bf16.gmra.mxu0 %v374
      %v464 = vpop.f32.mrf.mxu0
      %v465 = vadd.f32 0.0, %v464
      %v466 = vpop.f32.mrf.mxu0
      %v467 = vpop.f32.mrf.mxu0
      %v468 = vadd.f32 0.0, %v467
      %v469 = vpop.f32.mrf.mxu0
      %470 = vmatprep.mubr.bf16.mxu0 0
      %471 = vmatmul.mubr.bf16.gmra.mxu0 %v375
      %v472 = vpop.f32.mrf.mxu0
      %v473 = vadd.f32 0.0, %v472
      %v474 = vpop.f32.mrf.mxu0
      %v475 = vpop.f32.mrf.mxu0
      %v476 = vadd.f32 0.0, %v475
      %v477 = vpop.f32.mrf.mxu0
      %478 = vmatprep.mubr.bf16.mxu0 0
      %479 = vmatmul.mubr.bf16.gmra.mxu0 %v376
      %v480 = vpop.f32.mrf.mxu0
      %v481 = vadd.f32 0.0, %v480
      %v482 = vpop.f32.mrf.mxu0
      %v483 = vpop.f32.mrf.mxu0
      %v484 = vadd.f32 0.0, %v483
      %v485 = vpop.f32.mrf.mxu0
      %486 = vmatprep.mubr.bf16.mxu0 0
      %487 = vmatmul.mubr.bf16.gmra.mxu0 %v377
      %v488 = vpop.f32.mrf.mxu0
      %v489 = vadd.f32 0.0, %v488
      %v490 = vpop.f32.mrf.mxu0
      %v491 = vpop.f32.mrf.mxu0
      %v492 = vpop.f32.mrf.mxu0
      %493 = vdwg.mxu0
      %v501 = vunpack.c.l.b16 %v313
      %v502 = vunpack.c.l.b16 %v314
      %v503 = vunpack.c.l.b16 %v315
      %v504 = vunpack.c.l.b16 %v316
      %v505 = vunpack.c.l.b16 %v317
      %v506 = vunpack.c.l.b16 %v318
      %v507 = vunpack.c.l.b16 %v319
      %v508 = vpack.c.b16 %v502, %v501
      %v509 = vpack.c.b16 %v504, %v503
      %v510 = vpack.c.b16 %v506, %v505
      %v511 = vpack.c.b16 %v507, %v507
      %v532 = vunpack.c.l.b16 %v320
      %v533 = vunpack.c.l.b16 %v321
      %v534 = vunpack.c.l.b16 %v322
      %v535 = vunpack.c.l.b16 %v323
      %v536 = vunpack.c.l.b16 %v324
      %v537 = vunpack.c.l.b16 %v325
      %v538 = vunpack.c.l.b16 %v326
      %v539 = vunpack.c.l.b16 %v327
      %v540 = vunpack.c.l.b16 %v328
      %v541 = vunpack.c.l.b16 %v329
      %v542 = vunpack.c.l.b16 %v330
      %v543 = vunpack.c.l.b16 %v331
      %v544 = vunpack.c.l.b16 %v332
      %v545 = vunpack.c.l.b16 %v333
      %v546 = vunpack.c.l.b16 %v334
      %v547 = vunpack.c.l.b16 %v335
      %v548 = vpack.c.b16 %v533, %v532
      %v549 = vpack.c.b16 %v535, %v534
      %v550 = vpack.c.b16 %v537, %v536
      %v551 = vpack.c.b16 %v539, %v538
      %v552 = vpack.c.b16 %v541, %v540
      %v553 = vpack.c.b16 %v543, %v542
      %v554 = vpack.c.b16 %v545, %v544
      %v555 = vpack.c.b16 %v547, %v546
      %564 = vmatprep.subr.bf16.mxu0 0
      %565 = vmatpush1.bf16.msra.mxu0 %v555
      %566 = vmatprep.subr.bf16.mxu0 0
      %567 = vmatpush1.bf16.msra.mxu0 %v554
      %568 = vmatprep.subr.bf16.mxu0 0
      %569 = vmatpush1.bf16.msra.mxu0 %v553
      %570 = vmatprep.subr.bf16.mxu0 0
      %571 = vmatpush1.bf16.msra.mxu0 %v552
      %572 = vmatprep.subr.bf16.mxu0 0
      %573 = vmatpush1.bf16.msra.mxu0 %v551
      %574 = vmatprep.subr.bf16.mxu0 0
      %575 = vmatpush1.bf16.msra.mxu0 %v550
      %576 = vmatprep.subr.bf16.mxu0 0
      %577 = vmatpush1.bf16.msra.mxu0 %v549
      %578 = vmatprep.subr.bf16.mxu0 0
      %579 = vmatpush1.bf16.msra.mxu0 %v548
      %580 = vmatprep.subr.bf16.mxu0 0
      %581 = vmatpush2.bf16.msra.mxu0 0
      %582 = vmatprep.subr.bf16.mxu0 0
      %583 = vmatpush2.bf16.msra.mxu0 0
      %584 = vmatprep.subr.bf16.mxu0 0
      %585 = vmatpush2.bf16.msra.mxu0 0
      %586 = vmatprep.subr.bf16.mxu0 0
      %587 = vmatpush2.bf16.msra.mxu0 0
      %588 = vmatprep.subr.bf16.mxu0 0
      %589 = vmatpush2.bf16.msra.mxu0 0
      %590 = vmatprep.subr.bf16.mxu0 0
      %591 = vmatpush2.bf16.msra.mxu0 0
      %592 = vmatprep.subr.bf16.mxu0 0
      %593 = vmatpush2.bf16.msra.mxu0 0
      %594 = vmatprep.subr.bf16.mxu0 0
      %595 = vmatpush2.bf16.msra.mxu0 0
      %596 = vmatprep.mubr.bf16.mxu0 0
      %597 = vmatmul.mubr.bf16.gmra.mxu0 %v508
      %v598 = vpop.f32.mrf.mxu0
      %v599 = vadd.f32 %v465, %v598
      %v600 = vpop.f32.mrf.mxu0
      %v601 = vpop.f32.mrf.mxu0
      %v602 = vadd.f32 %v468, %v601
      %v603 = vpop.f32.mrf.mxu0
      %604 = vmatprep.mubr.bf16.mxu0 0
      %605 = vmatmul.mubr.bf16.gmra.mxu0 %v509
      %v606 = vpop.f32.mrf.mxu0
      %v607 = vadd.f32 %v473, %v606
      %v608 = vpop.f32.mrf.mxu0
      %v609 = vpop.f32.mrf.mxu0
      %v610 = vadd.f32 %v476, %v609
      %v611 = vpop.f32.mrf.mxu0
      %612 = vmatprep.mubr.bf16.mxu0 0
      %613 = vmatmul.mubr.bf16.gmra.mxu0 %v510
      %v614 = vpop.f32.mrf.mxu0
      %v615 = vadd.f32 %v481, %v614
      %v616 = vpop.f32.mrf.mxu0
      %v617 = vpop.f32.mrf.mxu0
      %v618 = vadd.f32 %v484, %v617
      %v619 = vpop.f32.mrf.mxu0
      %620 = vmatprep.mubr.bf16.mxu0 0
      %621 = vmatmul.mubr.bf16.gmra.mxu0 %v511
      %v622 = vpop.f32.mrf.mxu0
      %v623 = vadd.f32 %v489, %v622
      %v624 = vpop.f32.mrf.mxu0
      %v625 = vpop.f32.mrf.mxu0
      %v626 = vpop.f32.mrf.mxu0
      %627 = vdwg.mxu0
      %v628 = vld [vmem:[%s291] sm:$0xf]
      %v629 = vld [vmem:[%s291 + $0x4] sm:$0xf]
      %v630 = vld [vmem:[%s291 + $0x8] sm:$0xf]
      %v631 = vld [vmem:[%s291 + $0xc] sm:$0xf]
      %v632 = vld [vmem:[%s291 + $0x10] sm:$0xf]
      %v633 = vld [vmem:[%s291 + $0x14] sm:$0xf]
      %v634 = vld [vmem:[%s291 + $0x18] sm:$0xf]
      %v635 = vld [vmem:[%s291 + $0x1c] sm:$0x1]
      %s636 = scalar_lea.vmem %s4, 128
      %v637 = vld [vmem:[%s636] sm:$0xf]
      %v638 = vld [vmem:[%s636 + $0x4] sm:$0xf]
      %v639 = vld [vmem:[%s636 + $0x8] sm:$0xf]
      %v640 = vld [vmem:[%s636 + $0xc] sm:$0xf]
      %v641 = vld [vmem:[%s636 + $0x10] sm:$0xf]
      %v642 = vld [vmem:[%s636 + $0x14] sm:$0xf]
      %v643 = vld [vmem:[%s636 + $0x18] sm:$0xf]
      %v644 = vld [vmem:[%s636 + $0x1c] sm:$0xf]
      %v645 = vld [vmem:[%s636 + $0x20] sm:$0xf]
      %v646 = vld [vmem:[%s636 + $0x24] sm:$0xf]
      %v647 = vld [vmem:[%s636 + $0x28] sm:$0xf]
      %v648 = vld [vmem:[%s636 + $0x2c] sm:$0xf]
      %v649 = vld [vmem:[%s636 + $0x30] sm:$0xf]
      %v650 = vld [vmem:[%s636 + $0x34] sm:$0xf]
      %v651 = vld [vmem:[%s636 + $0x38] sm:$0xf]
      %v652 = vld [vmem:[%s636 + $0x3c] sm:$0xf]
      %v661 = vunpack.c.l.b16 %v628
      %v662 = vunpack.c.l.b16 %v629
      %v663 = vunpack.c.l.b16 %v630
      %v664 = vunpack.c.l.b16 %v631
      %v665 = vunpack.c.l.b16 %v632
      %v666 = vunpack.c.l.b16 %v633
      %v667 = vunpack.c.l.b16 %v634
      %v668 = vunpack.c.l.b16 %v635
      %v669 = vpack.c.b16 %v662, %v661
      %v670 = vpack.c.b16 %v664, %v663
      %v671 = vpack.c.b16 %v666, %v665
      %v672 = vpack.c.b16 %v668, %v667
      %vm673 = vsmask.f32 7424
      %v675 = vshrl.u32 %v669, 16
      %v677 = vshll.u32 %v669, 16
      %v679 = vrot.slane %v677, 1
      %v680 = vor.u32 %v675, %v679
      %v682 = vshll.u32 %v670, 16
      %v684 = vrot.slane %v682, 1
      %v685 = vsel %vm673, %v680, %v684
      %v686 = vshrl.u32 %v670, 16
      %v688 = vor.u32 %v686, %v684
      %v690 = vshll.u32 %v671, 16
      %v692 = vrot.slane %v690, 1
      %v693 = vsel %vm673, %v688, %v692
      %v694 = vshrl.u32 %v671, 16
      %v696 = vor.u32 %v694, %v692
      %v698 = vshll.u32 %v672, 16
      %v700 = vrot.slane %v698, 1
      %v701 = vsel %vm673, %v696, %v700
      %v702 = vshrl.u32 %v672, 16
      %v704 = vor.u32 %v702, %v700
      %v725 = vunpack.c.l.b16 %v637
      %v726 = vunpack.c.l.b16 %v638
      %v727 = vunpack.c.l.b16 %v639
      %v728 = vunpack.c.l.b16 %v640
      %v729 = vunpack.c.l.b16 %v641
      %v730 = vunpack.c.l.b16 %v642
      %v731 = vunpack.c.l.b16 %v643
      %v732 = vunpack.c.l.b16 %v644
      %v733 = vunpack.c.l.b16 %v645
      %v734 = vunpack.c.l.b16 %v646
      %v735 = vunpack.c.l.b16 %v647
      %v736 = vunpack.c.l.b16 %v648
      %v737 = vunpack.c.l.b16 %v649
      %v738 = vunpack.c.l.b16 %v650
      %v739 = vunpack.c.l.b16 %v651
      %v740 = vunpack.c.l.b16 %v652
      %v741 = vpack.c.b16 %v726, %v725
      %v742 = vpack.c.b16 %v728, %v727
      %v743 = vpack.c.b16 %v730, %v729
      %v744 = vpack.c.b16 %v732, %v731
      %v745 = vpack.c.b16 %v734, %v733
      %v746 = vpack.c.b16 %v736, %v735
      %v747 = vpack.c.b16 %v738, %v737
      %v748 = vpack.c.b16 %v740, %v739
      %757 = vmatprep.subr.bf16.mxu0 0
      %758 = vmatpush1.bf16.msra.mxu0 %v748
      %759 = vmatprep.subr.bf16.mxu0 0
      %760 = vmatpush1.bf16.msra.mxu0 %v747
      %761 = vmatprep.subr.bf16.mxu0 0
      %762 = vmatpush1.bf16.msra.mxu0 %v746
      %763 = vmatprep.subr.bf16.mxu0 0
      %764 = vmatpush1.bf16.msra.mxu0 %v745
      %765 = vmatprep.subr.bf16.mxu0 0
      %766 = vmatpush1.bf16.msra.mxu0 %v744
      %767 = vmatprep.subr.bf16.mxu0 0
      %768 = vmatpush1.bf16.msra.mxu0 %v743
      %769 = vmatprep.subr.bf16.mxu0 0
      %770 = vmatpush1.bf16.msra.mxu0 %v742
      %771 = vmatprep.subr.bf16.mxu0 0
      %772 = vmatpush1.bf16.msra.mxu0 %v741
      %773 = vmatprep.subr.bf16.mxu0 0
      %774 = vmatpush2.bf16.msra.mxu0 0
      %775 = vmatprep.subr.bf16.mxu0 0
      %776 = vmatpush2.bf16.msra.mxu0 0
      %777 = vmatprep.subr.bf16.mxu0 0
      %778 = vmatpush2.bf16.msra.mxu0 0
      %779 = vmatprep.subr.bf16.mxu0 0
      %780 = vmatpush2.bf16.msra.mxu0 0
      %781 = vmatprep.subr.bf16.mxu0 0
      %782 = vmatpush2.bf16.msra.mxu0 0
      %783 = vmatprep.subr.bf16.mxu0 0
      %784 = vmatpush2.bf16.msra.mxu0 0
      %785 = vmatprep.subr.bf16.mxu0 0
      %786 = vmatpush2.bf16.msra.mxu0 0
      %787 = vmatprep.subr.bf16.mxu0 0
      %788 = vmatpush2.bf16.msra.mxu0 0
      %789 = vmatprep.mubr.bf16.mxu0 0
      %790 = vmatmul.mubr.bf16.gmra.mxu0 %v685
      %v791 = vpop.f32.mrf.mxu0
      %v792 = vadd.f32 0.0, %v791
      %v793 = vpop.f32.mrf.mxu0
      %v794 = vpop.f32.mrf.mxu0
      %v795 = vadd.f32 0.0, %v794
      %v796 = vpop.f32.mrf.mxu0
      %797 = vmatprep.mubr.bf16.mxu0 0
      %798 = vmatmul.mubr.bf16.gmra.mxu0 %v693
      %v799 = vpop.f32.mrf.mxu0
      %v800 = vadd.f32 0.0, %v799
      %v801 = vpop.f32.mrf.mxu0
      %v802 = vpop.f32.mrf.mxu0
      %v803 = vadd.f32 0.0, %v802
      %v804 = vpop.f32.mrf.mxu0
      %805 = vmatprep.mubr.bf16.mxu0 0
      %806 = vmatmul.mubr.bf16.gmra.mxu0 %v701
      %v807 = vpop.f32.mrf.mxu0
      %v808 = vadd.f32 0.0, %v807
      %v809 = vpop.f32.mrf.mxu0
      %v810 = vpop.f32.mrf.mxu0
      %v811 = vadd.f32 0.0, %v810
      %v812 = vpop.f32.mrf.mxu0
      %813 = vmatprep.mubr.bf16.mxu0 0
      %814 = vmatmul.mubr.bf16.gmra.mxu0 %v704
      %v815 = vpop.f32.mrf.mxu0
      %v816 = vadd.f32 0.0, %v815
      %v817 = vpop.f32.mrf.mxu0
      %v818 = vpop.f32.mrf.mxu0
      %v819 = vpop.f32.mrf.mxu0
      %820 = vdwg.mxu0
      %v821 = vadd.f32 %v599, %v792
      %v822 = vadd.f32 %v602, %v795
      %v823 = vadd.f32 %v607, %v800
      %v824 = vadd.f32 %v610, %v803
      %v825 = vadd.f32 %v615, %v808
      %v826 = vadd.f32 %v618, %v811
      %v827 = vadd.f32 %v623, %v816
      %v828 = vld [vmem:[%s301] sm:$0xf]
      %v829 = vld [vmem:[%s301 + $0x4] sm:$0xf]
      %v830 = vld [vmem:[%s301 + $0x8] sm:$0xf]
      %v831 = vld [vmem:[%s301 + $0xc] sm:$0xf]
      %v832 = vld [vmem:[%s301 + $0x10] sm:$0xf]
      %v833 = vld [vmem:[%s301 + $0x14] sm:$0xf]
      %v834 = vld [vmem:[%s301 + $0x18] sm:$0xf]
      %s835 = scalar_lea.vmem %s4, 192
      %v836 = vld [vmem:[%s835] sm:$0xf]
      %v837 = vld [vmem:[%s835 + $0x4] sm:$0xf]
      %v838 = vld [vmem:[%s835 + $0x8] sm:$0xf]
      %v839 = vld [vmem:[%s835 + $0xc] sm:$0xf]
      %v840 = vld [vmem:[%s835 + $0x10] sm:$0xf]
      %v841 = vld [vmem:[%s835 + $0x14] sm:$0xf]
      %v842 = vld [vmem:[%s835 + $0x18] sm:$0xf]
      %v843 = vld [vmem:[%s835 + $0x1c] sm:$0xf]
      %v844 = vld [vmem:[%s835 + $0x20] sm:$0xf]
      %v845 = vld [vmem:[%s835 + $0x24] sm:$0xf]
      %v846 = vld [vmem:[%s835 + $0x28] sm:$0xf]
      %v847 = vld [vmem:[%s835 + $0x2c] sm:$0xf]
      %v848 = vld [vmem:[%s835 + $0x30] sm:$0xf]
      %v849 = vld [vmem:[%s835 + $0x34] sm:$0xf]
      %v850 = vld [vmem:[%s835 + $0x38] sm:$0xf]
      %v851 = vld [vmem:[%s835 + $0x3c] sm:$0xf]
      %v859 = vunpack.c.l.b16 %v828
      %v860 = vunpack.c.l.b16 %v829
      %v861 = vunpack.c.l.b16 %v830
      %v862 = vunpack.c.l.b16 %v831
      %v863 = vunpack.c.l.b16 %v832
      %v864 = vunpack.c.l.b16 %v833
      %v865 = vunpack.c.l.b16 %v834
      %v866 = vpack.c.b16 %v860, %v859
      %v867 = vpack.c.b16 %v862, %v861
      %v868 = vpack.c.b16 %v864, %v863
      %v869 = vpack.c.b16 %v865, %v865
      %v890 = vunpack.c.l.b16 %v836
      %v891 = vunpack.c.l.b16 %v837
      %v892 = vunpack.c.l.b16 %v838
      %v893 = vunpack.c.l.b16 %v839
      %v894 = vunpack.c.l.b16 %v840
      %v895 = vunpack.c.l.b16 %v841
      %v896 = vunpack.c.l.b16 %v842
      %v897 = vunpack.c.l.b16 %v843
      %v898 = vunpack.c.l.b16 %v844
      %v899 = vunpack.c.l.b16 %v845
      %v900 = vunpack.c.l.b16 %v846
      %v901 = vunpack.c.l.b16 %v847
      %v902 = vunpack.c.l.b16 %v848
      %v903 = vunpack.c.l.b16 %v849
      %v904 = vunpack.c.l.b16 %v850
      %v905 = vunpack.c.l.b16 %v851
      %v906 = vpack.c.b16 %v891, %v890
      %v907 = vpack.c.b16 %v893, %v892
      %v908 = vpack.c.b16 %v895, %v894
      %v909 = vpack.c.b16 %v897, %v896
      %v910 = vpack.c.b16 %v899, %v898
      %v911 = vpack.c.b16 %v901, %v900
      %v912 = vpack.c.b16 %v903, %v902
      %v913 = vpack.c.b16 %v905, %v904
      %922 = vmatprep.subr.bf16.mxu0 0
      %923 = vmatpush1.bf16.msra.mxu0 %v913
      %924 = vmatprep.subr.bf16.mxu0 0
      %925 = vmatpush1.bf16.msra.mxu0 %v912
      %926 = vmatprep.subr.bf16.mxu0 0
      %927 = vmatpush1.bf16.msra.mxu0 %v911
      %928 = vmatprep.subr.bf16.mxu0 0
      %929 = vmatpush1.bf16.msra.mxu0 %v910
      %930 = vmatprep.subr.bf16.mxu0 0
      %931 = vmatpush1.bf16.msra.mxu0 %v909
      %932 = vmatprep.subr.bf16.mxu0 0
      %933 = vmatpush1.bf16.msra.mxu0 %v908
      %934 = vmatprep.subr.bf16.mxu0 0
      %935 = vmatpush1.bf16.msra.mxu0 %v907
      %936 = vmatprep.subr.bf16.mxu0 0
      %937 = vmatpush1.bf16.msra.mxu0 %v906
      %938 = vmatprep.subr.bf16.mxu0 0
      %939 = vmatpush2.bf16.msra.mxu0 0
      %940 = vmatprep.subr.bf16.mxu0 0
      %941 = vmatpush2.bf16.msra.mxu0 0
      %942 = vmatprep.subr.bf16.mxu0 0
      %943 = vmatpush2.bf16.msra.mxu0 0
      %944 = vmatprep.subr.bf16.mxu0 0
      %945 = vmatpush2.bf16.msra.mxu0 0
      %946 = vmatprep.subr.bf16.mxu0 0
      %947 = vmatpush2.bf16.msra.mxu0 0
      %948 = vmatprep.subr.bf16.mxu0 0
      %949 = vmatpush2.bf16.msra.mxu0 0
      %950 = vmatprep.subr.bf16.mxu0 0
      %951 = vmatpush2.bf16.msra.mxu0 0
      %952 = vmatprep.subr.bf16.mxu0 0
      %953 = vmatpush2.bf16.msra.mxu0 0
      %954 = vmatprep.mubr.bf16.mxu0 0
      %955 = vmatmul.mubr.bf16.gmra.mxu0 %v866
      %v956 = vpop.f32.mrf.mxu0
      %v957 = vadd.f32 0.0, %v956
      %v958 = vpop.f32.mrf.mxu0
      %v959 = vpop.f32.mrf.mxu0
      %v960 = vadd.f32 0.0, %v959
      %v961 = vpop.f32.mrf.mxu0
      %962 = vmatprep.mubr.bf16.mxu0 0
      %963 = vmatmul.mubr.bf16.gmra.mxu0 %v867
      %v964 = vpop.f32.mrf.mxu0
      %v965 = vadd.f32 0.0, %v964
      %v966 = vpop.f32.mrf.mxu0
      %v967 = vpop.f32.mrf.mxu0
      %v968 = vadd.f32 0.0, %v967
      %v969 = vpop.f32.mrf.mxu0
      %970 = vmatprep.mubr.bf16.mxu0 0
      %971 = vmatmul.mubr.bf16.gmra.mxu0 %v868
      %v972 = vpop.f32.mrf.mxu0
      %v973 = vadd.f32 0.0, %v972
      %v974 = vpop.f32.mrf.mxu0
      %v975 = vpop.f32.mrf.mxu0
      %v976 = vadd.f32 0.0, %v975
      %v977 = vpop.f32.mrf.mxu0
      %978 = vmatprep.mubr.bf16.mxu0 0
      %979 = vmatmul.mubr.bf16.gmra.mxu0 %v869
      %v980 = vpop.f32.mrf.mxu0
      %v981 = vadd.f32 0.0, %v980
      %v982 = vpop.f32.mrf.mxu0
      %v983 = vpop.f32.mrf.mxu0
      %v984 = vpop.f32.mrf.mxu0
      %985 = vdwg.mxu0
      %v986 = vadd.f32 %v821, %v957
      %v987 = vadd.f32 %v822, %v960
      %v988 = vadd.f32 %v823, %v965
      %v989 = vadd.f32 %v824, %v968
      %v990 = vadd.f32 %v825, %v973
      %v991 = vadd.f32 %v826, %v976
      %v992 = vadd.f32 %v827, %v981
      %v993 = vld [vmem:[%s306] sm:$0xf]
      %v994 = vld [vmem:[%s306 + $0x4] sm:$0xf]
      %v995 = vld [vmem:[%s306 + $0x8] sm:$0xf]
      %v996 = vld [vmem:[%s306 + $0xc] sm:$0xf]
      %v997 = vld [vmem:[%s306 + $0x10] sm:$0xf]
      %v998 = vld [vmem:[%s306 + $0x14] sm:$0xf]
      %v999 = vld [vmem:[%s306 + $0x18] sm:$0xf]
      %s1000 = scalar_lea.vmem %s4, 256
      %v1001 = vld [vmem:[%s1000] sm:$0xf]
      %v1002 = vld [vmem:[%s1000 + $0x4] sm:$0xf]
      %v1003 = vld [vmem:[%s1000 + $0x8] sm:$0xf]
      %v1004 = vld [vmem:[%s1000 + $0xc] sm:$0xf]
      %v1005 = vld [vmem:[%s1000 + $0x10] sm:$0xf]
      %v1006 = vld [vmem:[%s1000 + $0x14] sm:$0xf]
      %v1007 = vld [vmem:[%s1000 + $0x18] sm:$0xf]
      %v1008 = vld [vmem:[%s1000 + $0x1c] sm:$0xf]
      %v1009 = vld [vmem:[%s1000 + $0x20] sm:$0xf]
      %v1010 = vld [vmem:[%s1000 + $0x24] sm:$0xf]
      %v1011 = vld [vmem:[%s1000 + $0x28] sm:$0xf]
      %v1012 = vld [vmem:[%s1000 + $0x2c] sm:$0xf]
      %v1013 = vld [vmem:[%s1000 + $0x30] sm:$0xf]
      %v1014 = vld [vmem:[%s1000 + $0x34] sm:$0xf]
      %v1015 = vld [vmem:[%s1000 + $0x38] sm:$0xf]
      %v1016 = vld [vmem:[%s1000 + $0x3c] sm:$0xf]
      %v1024 = vunpack.c.l.b16 %v993
      %v1025 = vunpack.c.l.b16 %v994
      %v1026 = vunpack.c.l.b16 %v995
      %v1027 = vunpack.c.l.b16 %v996
      %v1028 = vunpack.c.l.b16 %v997
      %v1029 = vunpack.c.l.b16 %v998
      %v1030 = vunpack.c.l.b16 %v999
      %v1031 = vpack.c.b16 %v1025, %v1024
      %v1032 = vpack.c.b16 %v1027, %v1026
      %v1033 = vpack.c.b16 %v1029, %v1028
      %v1034 = vpack.c.b16 %v1030, %v1030
      %v1055 = vunpack.c.l.b16 %v1001
      %v1056 = vunpack.c.l.b16 %v1002
      %v1057 = vunpack.c.l.b16 %v1003
      %v1058 = vunpack.c.l.b16 %v1004
      %v1059 = vunpack.c.l.b16 %v1005
      %v1060 = vunpack.c.l.b16 %v1006
      %v1061 = vunpack.c.l.b16 %v1007
      %v1062 = vunpack.c.l.b16 %v1008
      %v1063 = vunpack.c.l.b16 %v1009
      %v1064 = vunpack.c.l.b16 %v1010
      %v1065 = vunpack.c.l.b16 %v1011
      %v1066 = vunpack.c.l.b16 %v1012
      %v1067 = vunpack.c.l.b16 %v1013
      %v1068 = vunpack.c.l.b16 %v1014
      %v1069 = vunpack.c.l.b16 %v1015
      %v1070 = vunpack.c.l.b16 %v1016
      %v1071 = vpack.c.b16 %v1056, %v1055
      %v1072 = vpack.c.b16 %v1058, %v1057
      %v1073 = vpack.c.b16 %v1060, %v1059
      %v1074 = vpack.c.b16 %v1062, %v1061
      %v1075 = vpack.c.b16 %v1064, %v1063
      %v1076 = vpack.c.b16 %v1066, %v1065
      %v1077 = vpack.c.b16 %v1068, %v1067
      %v1078 = vpack.c.b16 %v1070, %v1069
      %1087 = vmatprep.subr.bf16.mxu0 0
      %1088 = vmatpush1.bf16.msra.mxu0 %v1078
      %1089 = vmatprep.subr.bf16.mxu0 0
      %1090 = vmatpush1.bf16.msra.mxu0 %v1077
      %1091 = vmatprep.subr.bf16.mxu0 0
      %1092 = vmatpush1.bf16.msra.mxu0 %v1076
      %1093 = vmatprep.subr.bf16.mxu0 0
      %1094 = vmatpush1.bf16.msra.mxu0 %v1075
      %1095 = vmatprep.subr.bf16.mxu0 0
      %1096 = vmatpush1.bf16.msra.mxu0 %v1074
      %1097 = vmatprep.subr.bf16.mxu0 0
      %1098 = vmatpush1.bf16.msra.mxu0 %v1073
      %1099 = vmatprep.subr.bf16.mxu0 0
      %1100 = vmatpush1.bf16.msra.mxu0 %v1072
      %1101 = vmatprep.subr.bf16.mxu0 0
      %1102 = vmatpush1.bf16.msra.mxu0 %v1071
      %1103 = vmatprep.subr.bf16.mxu0 0
      %1104 = vmatpush2.bf16.msra.mxu0 0
      %1105 = vmatprep.subr.bf16.mxu0 0
      %1106 = vmatpush2.bf16.msra.mxu0 0
      %1107 = vmatprep.subr.bf16.mxu0 0
      %1108 = vmatpush2.bf16.msra.mxu0 0
      %1109 = vmatprep.subr.bf16.mxu0 0
      %1110 = vmatpush2.bf16.msra.mxu0 0
      %1111 = vmatprep.subr.bf16.mxu0 0
      %1112 = vmatpush2.bf16.msra.mxu0 0
      %1113 = vmatprep.subr.bf16.mxu0 0
      %1114 = vmatpush2.bf16.msra.mxu0 0
      %1115 = vmatprep.subr.bf16.mxu0 0
      %1116 = vmatpush2.bf16.msra.mxu0 0
      %1117 = vmatprep.subr.bf16.mxu0 0
      %1118 = vmatpush2.bf16.msra.mxu0 0
      %1119 = vmatprep.mubr.bf16.mxu0 0
      %1120 = vmatmul.mubr.bf16.gmra.mxu0 %v1031
      %v1121 = vpop.f32.mrf.mxu0
      %v1122 = vadd.f32 0.0, %v1121
      %v1123 = vpop.f32.mrf.mxu0
      %v1124 = vpop.f32.mrf.mxu0
      %v1125 = vadd.f32 0.0, %v1124
      %v1126 = vpop.f32.mrf.mxu0
      %1127 = vmatprep.mubr.bf16.mxu0 0
      %1128 = vmatmul.mubr.bf16.gmra.mxu0 %v1032
      %v1129 = vpop.f32.mrf.mxu0
      %v1130 = vadd.f32 0.0, %v1129
      %v1131 = vpop.f32.mrf.mxu0
      %v1132 = vpop.f32.mrf.mxu0
      %v1133 = vadd.f32 0.0, %v1132
      %v1134 = vpop.f32.mrf.mxu0
      %1135 = vmatprep.mubr.bf16.mxu0 0
      %1136 = vmatmul.mubr.bf16.gmra.mxu0 %v1033
      %v1137 = vpop.f32.mrf.mxu0
      %v1138 = vadd.f32 0.0, %v1137
      %v1139 = vpop.f32.mrf.mxu0
      %v1140 = vpop.f32.mrf.mxu0
      %v1141 = vadd.f32 0.0, %v1140
      %v1142 = vpop.f32.mrf.mxu0
      %1143 = vmatprep.mubr.bf16.mxu0 0
      %1144 = vmatmul.mubr.bf16.gmra.mxu0 %v1034
      %v1145 = vpop.f32.mrf.mxu0
      %v1146 = vadd.f32 0.0, %v1145
      %v1147 = vpop.f32.mrf.mxu0
      %v1148 = vpop.f32.mrf.mxu0
      %v1149 = vpop.f32.mrf.mxu0
      %1150 = vdwg.mxu0
      %v1151 = vadd.f32 %v986, %v1122
      %v1152 = vadd.f32 %v987, %v1125
      %v1153 = vadd.f32 %v988, %v1130
      %v1154 = vadd.f32 %v989, %v1133
      %v1155 = vadd.f32 %v990, %v1138
      %v1156 = vadd.f32 %v991, %v1141
      %v1157 = vadd.f32 %v992, %v1146
      %v1158 = vld [vmem:[%s301] sm:$0xf]
      %v1159 = vld [vmem:[%s301 + $0x4] sm:$0xf]
      %v1160 = vld [vmem:[%s301 + $0x8] sm:$0xf]
      %v1161 = vld [vmem:[%s301 + $0xc] sm:$0xf]
      %v1162 = vld [vmem:[%s301 + $0x10] sm:$0xf]
      %v1163 = vld [vmem:[%s301 + $0x14] sm:$0xf]
      %v1164 = vld [vmem:[%s301 + $0x18] sm:$0xf]
      %v1165 = vld [vmem:[%s301 + $0x1c] sm:$0x1]
      %s1166 = scalar_lea.vmem %s4, 320
      %v1167 = vld [vmem:[%s1166] sm:$0xf]
      %v1168 = vld [vmem:[%s1166 + $0x4] sm:$0xf]
      %v1169 = vld [vmem:[%s1166 + $0x8] sm:$0xf]
      %v1170 = vld [vmem:[%s1166 + $0xc] sm:$0xf]
      %v1171 = vld [vmem:[%s1166 + $0x10] sm:$0xf]
      %v1172 = vld [vmem:[%s1166 + $0x14] sm:$0xf]
      %v1173 = vld [vmem:[%s1166 + $0x18] sm:$0xf]
      %v1174 = vld [vmem:[%s1166 + $0x1c] sm:$0xf]
      %v1175 = vld [vmem:[%s1166 + $0x20] sm:$0xf]
      %v1176 = vld [vmem:[%s1166 + $0x24] sm:$0xf]
      %v1177 = vld [vmem:[%s1166 + $0x28] sm:$0xf]
      %v1178 = vld [vmem:[%s1166 + $0x2c] sm:$0xf]
      %v1179 = vld [vmem:[%s1166 + $0x30] sm:$0xf]
      %v1180 = vld [vmem:[%s1166 + $0x34] sm:$0xf]
      %v1181 = vld [vmem:[%s1166 + $0x38] sm:$0xf]
      %v1182 = vld [vmem:[%s1166 + $0x3c] sm:$0xf]
      %v1191 = vunpack.c.l.b16 %v1158
      %v1192 = vunpack.c.l.b16 %v1159
      %v1193 = vunpack.c.l.b16 %v1160
      %v1194 = vunpack.c.l.b16 %v1161
      %v1195 = vunpack.c.l.b16 %v1162
      %v1196 = vunpack.c.l.b16 %v1163
      %v1197 = vunpack.c.l.b16 %v1164
      %v1198 = vunpack.c.l.b16 %v1165
      %v1199 = vpack.c.b16 %v1192, %v1191
      %v1200 = vpack.c.b16 %v1194, %v1193
      %v1201 = vpack.c.b16 %v1196, %v1195
      %v1202 = vpack.c.b16 %v1198, %v1197
      %v1204 = vshrl.u32 %v1199, 16
      %v1206 = vshll.u32 %v1199, 16
      %v1208 = vrot.slane %v1206, 1
      %v1209 = vor.u32 %v1204, %v1208
      %v1211 = vshll.u32 %v1200, 16
      %v1213 = vrot.slane %v1211, 1
      %v1214 = vsel %vm673, %v1209, %v1213
      %v1215 = vshrl.u32 %v1200, 16
      %v1217 = vor.u32 %v1215, %v1213
      %v1219 = vshll.u32 %v1201, 16
      %v1221 = vrot.slane %v1219, 1
      %v1222 = vsel %vm673, %v1217, %v1221
      %v1223 = vshrl.u32 %v1201, 16
      %v1225 = vor.u32 %v1223, %v1221
      %v1227 = vshll.u32 %v1202, 16
      %v1229 = vrot.slane %v1227, 1
      %v1230 = vsel %vm673, %v1225, %v1229
      %v1231 = vshrl.u32 %v1202, 16
      %v1233 = vor.u32 %v1231, %v1229
      %v1254 = vunpack.c.l.b16 %v1167
      %v1255 = vunpack.c.l.b16 %v1168
      %v1256 = vunpack.c.l.b16 %v1169
      %v1257 = vunpack.c.l.b16 %v1170
      %v1258 = vunpack.c.l.b16 %v1171
      %v1259 = vunpack.c.l.b16 %v1172
      %v1260 = vunpack.c.l.b16 %v1173
      %v1261 = vunpack.c.l.b16 %v1174
      %v1262 = vunpack.c.l.b16 %v1175
      %v1263 = vunpack.c.l.b16 %v1176
      %v1264 = vunpack.c.l.b16 %v1177
      %v1265 = vunpack.c.l.b16 %v1178
      %v1266 = vunpack.c.l.b16 %v1179
      %v1267 = vunpack.c.l.b16 %v1180
      %v1268 = vunpack.c.l.b16 %v1181
      %v1269 = vunpack.c.l.b16 %v1182
      %v1270 = vpack.c.b16 %v1255, %v1254
      %v1271 = vpack.c.b16 %v1257, %v1256
      %v1272 = vpack.c.b16 %v1259, %v1258
      %v1273 = vpack.c.b16 %v1261, %v1260
      %v1274 = vpack.c.b16 %v1263, %v1262
      %v1275 = vpack.c.b16 %v1265, %v1264
      %v1276 = vpack.c.b16 %v1267, %v1266
      %v1277 = vpack.c.b16 %v1269, %v1268
      %1286 = vmatprep.subr.bf16.mxu0 0
      %1287 = vmatpush1.bf16.msra.mxu0 %v1277
      %1288 = vmatprep.subr.bf16.mxu0 0
      %1289 = vmatpush1.bf16.msra.mxu0 %v1276
      %1290 = vmatprep.subr.bf16.mxu0 0
      %1291 = vmatpush1.bf16.msra.mxu0 %v1275
      %1292 = vmatprep.subr.bf16.mxu0 0
      %1293 = vmatpush1.bf16.msra.mxu0 %v1274
      %1294 = vmatprep.subr.bf16.mxu0 0
      %1295 = vmatpush1.bf16.msra.mxu0 %v1273
      %1296 = vmatprep.subr.bf16.mxu0 0
      %1297 = vmatpush1.bf16.msra.mxu0 %v1272
      %1298 = vmatprep.subr.bf16.mxu0 0
      %1299 = vmatpush1.bf16.msra.mxu0 %v1271
      %1300 = vmatprep.subr.bf16.mxu0 0
      %1301 = vmatpush1.bf16.msra.mxu0 %v1270
      %1302 = vmatprep.subr.bf16.mxu0 0
      %1303 = vmatpush2.bf16.msra.mxu0 0
      %1304 = vmatprep.subr.bf16.mxu0 0
      %1305 = vmatpush2.bf16.msra.mxu0 0
      %1306 = vmatprep.subr.bf16.mxu0 0
      %1307 = vmatpush2.bf16.msra.mxu0 0
      %1308 = vmatprep.subr.bf16.mxu0 0
      %1309 = vmatpush2.bf16.msra.mxu0 0
      %1310 = vmatprep.subr.bf16.mxu0 0
      %1311 = vmatpush2.bf16.msra.mxu0 0
      %1312 = vmatprep.subr.bf16.mxu0 0
      %1313 = vmatpush2.bf16.msra.mxu0 0
      %1314 = vmatprep.subr.bf16.mxu0 0
      %1315 = vmatpush2.bf16.msra.mxu0 0
      %1316 = vmatprep.subr.bf16.mxu0 0
      %1317 = vmatpush2.bf16.msra.mxu0 0
      %1318 = vmatprep.mubr.bf16.mxu0 0
      %1319 = vmatmul.mubr.bf16.gmra.mxu0 %v1214
      %v1320 = vpop.f32.mrf.mxu0
      %v1321 = vadd.f32 0.0, %v1320
      %v1322 = vpop.f32.mrf.mxu0
      %v1323 = vpop.f32.mrf.mxu0
      %v1324 = vadd.f32 0.0, %v1323
      %v1325 = vpop.f32.mrf.mxu0
      %1326 = vmatprep.mubr.bf16.mxu0 0
      %1327 = vmatmul.mubr.bf16.gmra.mxu0 %v1222
      %v1328 = vpop.f32.mrf.mxu0
      %v1329 = vadd.f32 0.0, %v1328
      %v1330 = vpop.f32.mrf.mxu0
      %v1331 = vpop.f32.mrf.mxu0
      %v1332 = vadd.f32 0.0, %v1331
      %v1333 = vpop.f32.mrf.mxu0
      %1334 = vmatprep.mubr.bf16.mxu0 0
      %1335 = vmatmul.mubr.bf16.gmra.mxu0 %v1230
      %v1336 = vpop.f32.mrf.mxu0
      %v1337 = vadd.f32 0.0, %v1336
      %v1338 = vpop.f32.mrf.mxu0
      %v1339 = vpop.f32.mrf.mxu0
      %v1340 = vadd.f32 0.0, %v1339
      %v1341 = vpop.f32.mrf.mxu0
      %1342 = vmatprep.mubr.bf16.mxu0 0
      %1343 = vmatmul.mubr.bf16.gmra.mxu0 %v1233
      %v1344 = vpop.f32.mrf.mxu0
      %v1345 = vadd.f32 0.0, %v1344
      %v1346 = vpop.f32.mrf.mxu0
      %v1347 = vpop.f32.mrf.mxu0
      %v1348 = vpop.f32.mrf.mxu0
      %1349 = vdwg.mxu0
      %v1350 = vadd.f32 %v1151, %v1321
      %v1351 = vadd.f32 %v1152, %v1324
      %v1352 = vadd.f32 %v1153, %v1329
      %v1353 = vadd.f32 %v1154, %v1332
      %v1354 = vadd.f32 %v1155, %v1337
      %v1355 = vadd.f32 %v1156, %v1340
      %v1356 = vadd.f32 %v1157, %v1345
      %v1357 = vld [vmem:[%s291 + $0x1c] sm:$0xf]
      %s1358 = scalar_lea.vmem %s4, 384
      %v1359 = vld [vmem:[%s1358] sm:$0xf]
      %v1360 = vld [vmem:[%s1358 + $0x4] sm:$0xf]
      %v1361 = vld [vmem:[%s1358 + $0x8] sm:$0xf]
      %v1362 = vld [vmem:[%s1358 + $0xc] sm:$0xf]
      %v1363 = vld [vmem:[%s1358 + $0x10] sm:$0xf]
      %v1364 = vld [vmem:[%s1358 + $0x14] sm:$0xf]
      %v1365 = vld [vmem:[%s1358 + $0x18] sm:$0xf]
      %v1366 = vld [vmem:[%s1358 + $0x1c] sm:$0xf]
      %v1367 = vld [vmem:[%s1358 + $0x20] sm:$0xf]
      %v1368 = vld [vmem:[%s1358 + $0x24] sm:$0xf]
      %v1369 = vld [vmem:[%s1358 + $0x28] sm:$0xf]
      %v1370 = vld [vmem:[%s1358 + $0x2c] sm:$0xf]
      %v1371 = vld [vmem:[%s1358 + $0x30] sm:$0xf]
      %v1372 = vld [vmem:[%s1358 + $0x34] sm:$0xf]
      %v1373 = vld [vmem:[%s1358 + $0x38] sm:$0xf]
      %v1374 = vld [vmem:[%s1358 + $0x3c] sm:$0xf]
      %v1376 = vunpack.c.l.b16 %v1357
      %v1377 = vpack.c.b16 %v663, %v662
      %v1378 = vpack.c.b16 %v665, %v664
      %v1379 = vpack.c.b16 %v667, %v666
      %v1380 = vpack.c.b16 %v1376, %v1376
      %v1401 = vunpack.c.l.b16 %v1359
      %v1402 = vunpack.c.l.b16 %v1360
      %v1403 = vunpack.c.l.b16 %v1361
      %v1404 = vunpack.c.l.b16 %v1362
      %v1405 = vunpack.c.l.b16 %v1363
      %v1406 = vunpack.c.l.b16 %v1364
      %v1407 = vunpack.c.l.b16 %v1365
      %v1408 = vunpack.c.l.b16 %v1366
      %v1409 = vunpack.c.l.b16 %v1367
      %v1410 = vunpack.c.l.b16 %v1368
      %v1411 = vunpack.c.l.b16 %v1369
      %v1412 = vunpack.c.l.b16 %v1370
      %v1413 = vunpack.c.l.b16 %v1371
      %v1414 = vunpack.c.l.b16 %v1372
      %v1415 = vunpack.c.l.b16 %v1373
      %v1416 = vunpack.c.l.b16 %v1374
      %v1417 = vpack.c.b16 %v1402, %v1401
      %v1418 = vpack.c.b16 %v1404, %v1403
      %v1419 = vpack.c.b16 %v1406, %v1405
      %v1420 = vpack.c.b16 %v1408, %v1407
      %v1421 = vpack.c.b16 %v1410, %v1409
      %v1422 = vpack.c.b16 %v1412, %v1411
      %v1423 = vpack.c.b16 %v1414, %v1413
      %v1424 = vpack.c.b16 %v1416, %v1415
      %1433 = vmatprep.subr.bf16.mxu0 0
      %1434 = vmatpush1.bf16.msra.mxu0 %v1424
      %1435 = vmatprep.subr.bf16.mxu0 0
      %1436 = vmatpush1.bf16.msra.mxu0 %v1423
      %1437 = vmatprep.subr.bf16.mxu0 0
      %1438 = vmatpush1.bf16.msra.mxu0 %v1422
      %1439 = vmatprep.subr.bf16.mxu0 0
      %1440 = vmatpush1.bf16.msra.mxu0 %v1421
      %1441 = vmatprep.subr.bf16.mxu0 0
      %1442 = vmatpush1.bf16.msra.mxu0 %v1420
      %1443 = vmatprep.subr.bf16.mxu0 0
      %1444 = vmatpush1.bf16.msra.mxu0 %v1419
      %1445 = vmatprep.subr.bf16.mxu0 0
      %1446 = vmatpush1.bf16.msra.mxu0 %v1418
      %1447 = vmatprep.subr.bf16.mxu0 0
      %1448 = vmatpush1.bf16.msra.mxu0 %v1417
      %1449 = vmatprep.subr.bf16.mxu0 0
      %1450 = vmatpush2.bf16.msra.mxu0 0
      %1451 = vmatprep.subr.bf16.mxu0 0
      %1452 = vmatpush2.bf16.msra.mxu0 0
      %1453 = vmatprep.subr.bf16.mxu0 0
      %1454 = vmatpush2.bf16.msra.mxu0 0
      %1455 = vmatprep.subr.bf16.mxu0 0
      %1456 = vmatpush2.bf16.msra.mxu0 0
      %1457 = vmatprep.subr.bf16.mxu0 0
      %1458 = vmatpush2.bf16.msra.mxu0 0
      %1459 = vmatprep.subr.bf16.mxu0 0
      %1460 = vmatpush2.bf16.msra.mxu0 0
      %1461 = vmatprep.subr.bf16.mxu0 0
      %1462 = vmatpush2.bf16.msra.mxu0 0
      %1463 = vmatprep.subr.bf16.mxu0 0
      %1464 = vmatpush2.bf16.msra.mxu0 0
      %1465 = vmatprep.mubr.bf16.mxu0 0
      %1466 = vmatmul.mubr.bf16.gmra.mxu0 %v1377
      %v1467 = vpop.f32.mrf.mxu0
      %v1468 = vadd.f32 0.0, %v1467
      %v1469 = vpop.f32.mrf.mxu0
      %v1470 = vpop.f32.mrf.mxu0
      %v1471 = vadd.f32 0.0, %v1470
      %v1472 = vpop.f32.mrf.mxu0
      %1473 = vmatprep.mubr.bf16.mxu0 0
      %1474 = vmatmul.mubr.bf16.gmra.mxu0 %v1378
      %v1475 = vpop.f32.mrf.mxu0
      %v1476 = vadd.f32 0.0, %v1475
      %v1477 = vpop.f32.mrf.mxu0
      %v1478 = vpop.f32.mrf.mxu0
      %v1479 = vadd.f32 0.0, %v1478
      %v1480 = vpop.f32.mrf.mxu0
      %1481 = vmatprep.mubr.bf16.mxu0 0
      %1482 = vmatmul.mubr.bf16.gmra.mxu0 %v1379
      %v1483 = vpop.f32.mrf.mxu0
      %v1484 = vadd.f32 0.0, %v1483
      %v1485 = vpop.f32.mrf.mxu0
      %v1486 = vpop.f32.mrf.mxu0
      %v1487 = vadd.f32 0.0, %v1486
      %v1488 = vpop.f32.mrf.mxu0
      %1489 = vmatprep.mubr.bf16.mxu0 0
      %1490 = vmatmul.mubr.bf16.gmra.mxu0 %v1380
      %v1491 = vpop.f32.mrf.mxu0
      %v1492 = vadd.f32 0.0, %v1491
      %v1493 = vpop.f32.mrf.mxu0
      %v1494 = vpop.f32.mrf.mxu0
      %v1495 = vpop.f32.mrf.mxu0
      %1496 = vdwg.mxu0
      %v1497 = vadd.f32 %v1350, %v1468
      %v1498 = vadd.f32 %v1351, %v1471
      %v1499 = vadd.f32 %v1352, %v1476
      %v1500 = vadd.f32 %v1353, %v1479
      %v1501 = vadd.f32 %v1354, %v1484
      %v1502 = vadd.f32 %v1355, %v1487
      %v1503 = vadd.f32 %v1356, %v1492
      %v1504 = vld [vmem:[%s296 + $0x4] sm:$0xf]
      %v1505 = vld [vmem:[%s296 + $0x8] sm:$0xf]
      %v1506 = vld [vmem:[%s296 + $0xc] sm:$0xf]
      %v1507 = vld [vmem:[%s296 + $0x10] sm:$0xf]
      %v1508 = vld [vmem:[%s296 + $0x14] sm:$0xf]
      %v1509 = vld [vmem:[%s296 + $0x18] sm:$0xf]
      %v1510 = vld [vmem:[%s296 + $0x1c] sm:$0xf]
      %s1511 = scalar_lea.vmem %s4, 448
      %v1512 = vld [vmem:[%s1511] sm:$0xf]
      %v1513 = vld [vmem:[%s1511 + $0x4] sm:$0xf]
      %v1514 = vld [vmem:[%s1511 + $0x8] sm:$0xf]
      %v1515 = vld [vmem:[%s1511 + $0xc] sm:$0xf]
      %v1516 = vld [vmem:[%s1511 + $0x10] sm:$0xf]
      %v1517 = vld [vmem:[%s1511 + $0x14] sm:$0xf]
      %v1518 = vld [vmem:[%s1511 + $0x18] sm:$0xf]
      %v1519 = vld [vmem:[%s1511 + $0x1c] sm:$0xf]
      %v1520 = vld [vmem:[%s1511 + $0x20] sm:$0xf]
      %v1521 = vld [vmem:[%s1511 + $0x24] sm:$0xf]
      %v1522 = vld [vmem:[%s1511 + $0x28] sm:$0xf]
      %v1523 = vld [vmem:[%s1511 + $0x2c] sm:$0xf]
      %v1524 = vld [vmem:[%s1511 + $0x30] sm:$0xf]
      %v1525 = vld [vmem:[%s1511 + $0x34] sm:$0xf]
      %v1526 = vld [vmem:[%s1511 + $0x38] sm:$0xf]
      %v1527 = vld [vmem:[%s1511 + $0x3c] sm:$0xf]
      %v1535 = vunpack.c.l.b16 %v1504
      %v1536 = vunpack.c.l.b16 %v1505
      %v1537 = vunpack.c.l.b16 %v1506
      %v1538 = vunpack.c.l.b16 %v1507
      %v1539 = vunpack.c.l.b16 %v1508
      %v1540 = vunpack.c.l.b16 %v1509
      %v1541 = vunpack.c.l.b16 %v1510
      %v1542 = vpack.c.b16 %v1536, %v1535
      %v1543 = vpack.c.b16 %v1538, %v1537
      %v1544 = vpack.c.b16 %v1540, %v1539
      %v1545 = vpack.c.b16 %v1541, %v1541
      %v1566 = vunpack.c.l.b16 %v1512
      %v1567 = vunpack.c.l.b16 %v1513
      %v1568 = vunpack.c.l.b16 %v1514
      %v1569 = vunpack.c.l.b16 %v1515
      %v1570 = vunpack.c.l.b16 %v1516
      %v1571 = vunpack.c.l.b16 %v1517
      %v1572 = vunpack.c.l.b16 %v1518
      %v1573 = vunpack.c.l.b16 %v1519
      %v1574 = vunpack.c.l.b16 %v1520
      %v1575 = vunpack.c.l.b16 %v1521
      %v1576 = vunpack.c.l.b16 %v1522
      %v1577 = vunpack.c.l.b16 %v1523
      %v1578 = vunpack.c.l.b16 %v1524
      %v1579 = vunpack.c.l.b16 %v1525
      %v1580 = vunpack.c.l.b16 %v1526
      %v1581 = vunpack.c.l.b16 %v1527
      %v1582 = vpack.c.b16 %v1567, %v1566
      %v1583 = vpack.c.b16 %v1569, %v1568
      %v1584 = vpack.c.b16 %v1571, %v1570
      %v1585 = vpack.c.b16 %v1573, %v1572
      %v1586 = vpack.c.b16 %v1575, %v1574
      %v1587 = vpack.c.b16 %v1577, %v1576
      %v1588 = vpack.c.b16 %v1579, %v1578
      %v1589 = vpack.c.b16 %v1581, %v1580
      %1598 = vmatprep.subr.bf16.mxu0 0
      %1599 = vmatpush1.bf16.msra.mxu0 %v1589
      %1600 = vmatprep.subr.bf16.mxu0 0
      %1601 = vmatpush1.bf16.msra.mxu0 %v1588
      %1602 = vmatprep.subr.bf16.mxu0 0
      %1603 = vmatpush1.bf16.msra.mxu0 %v1587
      %1604 = vmatprep.subr.bf16.mxu0 0
      %1605 = vmatpush1.bf16.msra.mxu0 %v1586
      %1606 = vmatprep.subr.bf16.mxu0 0
      %1607 = vmatpush1.bf16.msra.mxu0 %v1585
      %1608 = vmatprep.subr.bf16.mxu0 0
      %1609 = vmatpush1.bf16.msra.mxu0 %v1584
      %1610 = vmatprep.subr.bf16.mxu0 0
      %1611 = vmatpush1.bf16.msra.mxu0 %v1583
      %1612 = vmatprep.subr.bf16.mxu0 0
      %1613 = vmatpush1.bf16.msra.mxu0 %v1582
      %1614 = vmatprep.subr.bf16.mxu0 0
      %1615 = vmatpush2.bf16.msra.mxu0 0
      %1616 = vmatprep.subr.bf16.mxu0 0
      %1617 = vmatpush2.bf16.msra.mxu0 0
      %1618 = vmatprep.subr.bf16.mxu0 0
      %1619 = vmatpush2.bf16.msra.mxu0 0
      %1620 = vmatprep.subr.bf16.mxu0 0
      %1621 = vmatpush2.bf16.msra.mxu0 0
      %1622 = vmatprep.subr.bf16.mxu0 0
      %1623 = vmatpush2.bf16.msra.mxu0 0
      %1624 = vmatprep.subr.bf16.mxu0 0
      %1625 = vmatpush2.bf16.msra.mxu0 0
      %1626 = vmatprep.subr.bf16.mxu0 0
      %1627 = vmatpush2.bf16.msra.mxu0 0
      %1628 = vmatprep.subr.bf16.mxu0 0
      %1629 = vmatpush2.bf16.msra.mxu0 0
      %1630 = vmatprep.mubr.bf16.mxu0 0
      %1631 = vmatmul.mubr.bf16.gmra.mxu0 %v1542
      %v1632 = vpop.f32.mrf.mxu0
      %v1633 = vadd.f32 0.0, %v1632
      %v1634 = vpop.f32.mrf.mxu0
      %v1635 = vpop.f32.mrf.mxu0
      %v1636 = vadd.f32 0.0, %v1635
      %v1637 = vpop.f32.mrf.mxu0
      %1638 = vmatprep.mubr.bf16.mxu0 0
      %1639 = vmatmul.mubr.bf16.gmra.mxu0 %v1543
      %v1640 = vpop.f32.mrf.mxu0
      %v1641 = vadd.f32 0.0, %v1640
      %v1642 = vpop.f32.mrf.mxu0
      %v1643 = vpop.f32.mrf.mxu0
      %v1644 = vadd.f32 0.0, %v1643
      %v1645 = vpop.f32.mrf.mxu0
      %1646 = vmatprep.mubr.bf16.mxu0 0
      %1647 = vmatmul.mubr.bf16.gmra.mxu0 %v1544
      %v1648 = vpop.f32.mrf.mxu0
      %v1649 = vadd.f32 0.0, %v1648
      %v1650 = vpop.f32.mrf.mxu0
      %v1651 = vpop.f32.mrf.mxu0
      %v1652 = vadd.f32 0.0, %v1651
      %v1653 = vpop.f32.mrf.mxu0
      %1654 = vmatprep.mubr.bf16.mxu0 0
      %1655 = vmatmul.mubr.bf16.gmra.mxu0 %v1545
      %v1656 = vpop.f32.mrf.mxu0
      %v1657 = vadd.f32 0.0, %v1656
      %v1658 = vpop.f32.mrf.mxu0
      %v1659 = vpop.f32.mrf.mxu0
      %v1660 = vpop.f32.mrf.mxu0
      %1661 = vdwg.mxu0
      %v1662 = vadd.f32 %v1497, %v1633
      %v1663 = vadd.f32 %v1498, %v1636
      %v1664 = vadd.f32 %v1499, %v1641
      %v1665 = vadd.f32 %v1500, %v1644
      %v1666 = vadd.f32 %v1501, %v1649
      %v1667 = vadd.f32 %v1502, %v1652
      %v1668 = vadd.f32 %v1503, %v1657
      %v1669 = vld [vmem:[%s291 + $0x4] sm:$0xf]
      %v1670 = vld [vmem:[%s291 + $0x8] sm:$0xf]
      %v1671 = vld [vmem:[%s291 + $0xc] sm:$0xf]
      %v1672 = vld [vmem:[%s291 + $0x10] sm:$0xf]
      %v1673 = vld [vmem:[%s291 + $0x14] sm:$0xf]
      %v1674 = vld [vmem:[%s291 + $0x18] sm:$0xf]
      %v1675 = vld [vmem:[%s291 + $0x1c] sm:$0xf]
      %v1676 = vld [vmem:[%s291 + $0x20] sm:$0x1]
      %s1677 = scalar_lea.vmem %s4, 512
      %v1678 = vld [vmem:[%s1677] sm:$0xf]
      %v1679 = vld [vmem:[%s1677 + $0x4] sm:$0xf]
      %v1680 = vld [vmem:[%s1677 + $0x8] sm:$0xf]
      %v1681 = vld [vmem:[%s1677 + $0xc] sm:$0xf]
      %v1682 = vld [vmem:[%s1677 + $0x10] sm:$0xf]
      %v1683 = vld [vmem:[%s1677 + $0x14] sm:$0xf]
      %v1684 = vld [vmem:[%s1677 + $0x18] sm:$0xf]
      %v1685 = vld [vmem:[%s1677 + $0x1c] sm:$0xf]
      %v1686 = vld [vmem:[%s1677 + $0x20] sm:$0xf]
      %v1687 = vld [vmem:[%s1677 + $0x24] sm:$0xf]
      %v1688 = vld [vmem:[%s1677 + $0x28] sm:$0xf]
      %v1689 = vld [vmem:[%s1677 + $0x2c] sm:$0xf]
      %v1690 = vld [vmem:[%s1677 + $0x30] sm:$0xf]
      %v1691 = vld [vmem:[%s1677 + $0x34] sm:$0xf]
      %v1692 = vld [vmem:[%s1677 + $0x38] sm:$0xf]
      %v1693 = vld [vmem:[%s1677 + $0x3c] sm:$0xf]
      %v1702 = vunpack.c.l.b16 %v1669
      %v1703 = vunpack.c.l.b16 %v1670
      %v1704 = vunpack.c.l.b16 %v1671
      %v1705 = vunpack.c.l.b16 %v1672
      %v1706 = vunpack.c.l.b16 %v1673
      %v1707 = vunpack.c.l.b16 %v1674
      %v1708 = vunpack.c.l.b16 %v1675
      %v1709 = vunpack.c.l.b16 %v1676
      %v1710 = vpack.c.b16 %v1703, %v1702
      %v1711 = vpack.c.b16 %v1705, %v1704
      %v1712 = vpack.c.b16 %v1707, %v1706
      %v1713 = vpack.c.b16 %v1709, %v1708
      %v1715 = vshrl.u32 %v1710, 16
      %v1717 = vshll.u32 %v1710, 16
      %v1719 = vrot.slane %v1717, 1
      %v1720 = vor.u32 %v1715, %v1719
      %v1722 = vshll.u32 %v1711, 16
      %v1724 = vrot.slane %v1722, 1
      %v1725 = vsel %vm673, %v1720, %v1724
      %v1726 = vshrl.u32 %v1711, 16
      %v1728 = vor.u32 %v1726, %v1724
      %v1730 = vshll.u32 %v1712, 16
      %v1732 = vrot.slane %v1730, 1
      %v1733 = vsel %vm673, %v1728, %v1732
      %v1734 = vshrl.u32 %v1712, 16
      %v1736 = vor.u32 %v1734, %v1732
      %v1738 = vshll.u32 %v1713, 16
      %v1740 = vrot.slane %v1738, 1
      %v1741 = vsel %vm673, %v1736, %v1740
      %v1742 = vshrl.u32 %v1713, 16
      %v1744 = vor.u32 %v1742, %v1740
      %v1765 = vunpack.c.l.b16 %v1678
      %v1766 = vunpack.c.l.b16 %v1679
      %v1767 = vunpack.c.l.b16 %v1680
      %v1768 = vunpack.c.l.b16 %v1681
      %v1769 = vunpack.c.l.b16 %v1682
      %v1770 = vunpack.c.l.b16 %v1683
      %v1771 = vunpack.c.l.b16 %v1684
      %v1772 = vunpack.c.l.b16 %v1685
      %v1773 = vunpack.c.l.b16 %v1686
      %v1774 = vunpack.c.l.b16 %v1687
      %v1775 = vunpack.c.l.b16 %v1688
      %v1776 = vunpack.c.l.b16 %v1689
      %v1777 = vunpack.c.l.b16 %v1690
      %v1778 = vunpack.c.l.b16 %v1691
      %v1779 = vunpack.c.l.b16 %v1692
      %v1780 = vunpack.c.l.b16 %v1693
      %v1781 = vpack.c.b16 %v1766, %v1765
      %v1782 = vpack.c.b16 %v1768, %v1767
      %v1783 = vpack.c.b16 %v1770, %v1769
      %v1784 = vpack.c.b16 %v1772, %v1771
      %v1785 = vpack.c.b16 %v1774, %v1773
      %v1786 = vpack.c.b16 %v1776, %v1775
      %v1787 = vpack.c.b16 %v1778, %v1777
      %v1788 = vpack.c.b16 %v1780, %v1779
      %1797 = vmatprep.subr.bf16.mxu0 0
      %1798 = vmatpush1.bf16.msra.mxu0 %v1788
      %1799 = vmatprep.subr.bf16.mxu0 0
      %1800 = vmatpush1.bf16.msra.mxu0 %v1787
      %1801 = vmatprep.subr.bf16.mxu0 0
      %1802 = vmatpush1.bf16.msra.mxu0 %v1786
      %1803 = vmatprep.subr.bf16.mxu0 0
      %1804 = vmatpush1.bf16.msra.mxu0 %v1785
      %1805 = vmatprep.subr.bf16.mxu0 0
      %1806 = vmatpush1.bf16.msra.mxu0 %v1784
      %1807 = vmatprep.subr.bf16.mxu0 0
      %1808 = vmatpush1.bf16.msra.mxu0 %v1783
      %1809 = vmatprep.subr.bf16.mxu0 0
      %1810 = vmatpush1.bf16.msra.mxu0 %v1782
      %1811 = vmatprep.subr.bf16.mxu0 0
      %1812 = vmatpush1.bf16.msra.mxu0 %v1781
      %1813 = vmatprep.subr.bf16.mxu0 0
      %1814 = vmatpush2.bf16.msra.mxu0 0
      %1815 = vmatprep.subr.bf16.mxu0 0
      %1816 = vmatpush2.bf16.msra.mxu0 0
      %1817 = vmatprep.subr.bf16.mxu0 0
      %1818 = vmatpush2.bf16.msra.mxu0 0
      %1819 = vmatprep.subr.bf16.mxu0 0
      %1820 = vmatpush2.bf16.msra.mxu0 0
      %1821 = vmatprep.subr.bf16.mxu0 0
      %1822 = vmatpush2.bf16.msra.mxu0 0
      %1823 = vmatprep.subr.bf16.mxu0 0
      %1824 = vmatpush2.bf16.msra.mxu0 0
      %1825 = vmatprep.subr.bf16.mxu0 0
      %1826 = vmatpush2.bf16.msra.mxu0 0
      %1827 = vmatprep.subr.bf16.mxu0 0
      %1828 = vmatpush2.bf16.msra.mxu0 0
      %1829 = vmatprep.mubr.bf16.mxu0 0
      %1830 = vmatmul.mubr.bf16.gmra.mxu0 %v1725
      %v1831 = vpop.f32.mrf.mxu0
      %v1832 = vadd.f32 0.0, %v1831
      %v1833 = vpop.f32.mrf.mxu0
      %v1834 = vpop.f32.mrf.mxu0
      %v1835 = vadd.f32 0.0, %v1834
      %v1836 = vpop.f32.mrf.mxu0
      %1837 = vmatprep.mubr.bf16.mxu0 0
      %1838 = vmatmul.mubr.bf16.gmra.mxu0 %v1733
      %v1839 = vpop.f32.mrf.mxu0
      %v1840 = vadd.f32 0.0, %v1839
      %v1841 = vpop.f32.mrf.mxu0
      %v1842 = vpop.f32.mrf.mxu0
      %v1843 = vadd.f32 0.0, %v1842
      %v1844 = vpop.f32.mrf.mxu0
      %1845 = vmatprep.mubr.bf16.mxu0 0
      %1846 = vmatmul.mubr.bf16.gmra.mxu0 %v1741
      %v1847 = vpop.f32.mrf.mxu0
      %v1848 = vadd.f32 0.0, %v1847
      %v1849 = vpop.f32.mrf.mxu0
      %v1850 = vpop.f32.mrf.mxu0
      %v1851 = vadd.f32 0.0, %v1850
      %v1852 = vpop.f32.mrf.mxu0
      %1853 = vmatprep.mubr.bf16.mxu0 0
      %1854 = vmatmul.mubr.bf16.gmra.mxu0 %v1744
      %v1855 = vpop.f32.mrf.mxu0
      %v1856 = vadd.f32 0.0, %v1855
      %v1857 = vpop.f32.mrf.mxu0
      %v1858 = vpop.f32.mrf.mxu0
      %v1859 = vpop.f32.mrf.mxu0
      %1860 = vdwg.mxu0
      %v1861 = vadd.f32 %v1662, %v1832
      %v1862 = vadd.f32 %v1663, %v1835
      %v1863 = vadd.f32 %v1664, %v1840
      %v1864 = vadd.f32 %v1665, %v1843
      %v1865 = vadd.f32 %v1666, %v1848
      %v1866 = vadd.f32 %v1667, %v1851
      %v1867 = vadd.f32 %v1668, %v1856
      %v1868 = vld [vmem:[%s5] sm:$0x1]
      %v1870 = vlaneseq
      %v1871 = vshrl.u32 %v1870, 7
      %v1872 = vsub.s32 0, %v1871
      %v1873 = vrot.slane %v1868, %v1872
      %v1875 = vadd.f32 %v1861, %v1873
      %v1876 = vadd.f32 %v1862, %v1873
      %v1877 = vadd.f32 %v1863, %v1873
      %v1878 = vadd.f32 %v1864, %v1873
      %v1879 = vadd.f32 %v1865, %v1873
      %v1880 = vadd.f32 %v1866, %v1873
      %v1881 = vadd.f32 %v1867, %v1873
      %v1882 = vmax.f32 %v1875, 0.0
      %v1883 = vmax.f32 %v1876, 0.0
      %v1884 = vmax.f32 %v1877, 0.0
      %v1885 = vmax.f32 %v1878, 0.0
      %v1886 = vmax.f32 %v1879, 0.0
      %v1887 = vmax.f32 %v1880, 0.0
      %v1888 = vmax.f32 %v1881, 0.0
      %1889 = vst [vmem:[%s311] sm:$0xff] %v1882
      %1890 = vst [vmem:[%s311 + $0x8] sm:$0xff] %v1883
      %1891 = vst [vmem:[%s311 + $0x10] sm:$0xff] %v1884
      %1892 = vst [vmem:[%s311 + $0x18] sm:$0xff] %v1885
      %1893 = vst [vmem:[%s311 + $0x20] sm:$0xff] %v1886
      %1894 = vst [vmem:[%s311 + $0x28] sm:$0xff] %v1887
      %1895 = vst [vmem:[%s311 + $0x30] sm:$0xff] %v1888
      %p1896 = scmp.lt.s32.totalorder %s17, 1
      %s1897 = scalar_select %p1896, %s17, 1
      %s1898 = smul.addr %s1897, 7
      %s1899 = smul.addr %s1898, 8
      %s1900 = scalar_lea.vmem %s6, %s1899
      // Predicated region
      $region45: #{inception_b_forward.5} parent=43 // pred_check
        %p1901 = pneg %p181
      $region46: #{inception_b_forward.5} parent=43 // pred_check_branch
        %1903 = sbr.rel (%p1901) target = $region48
      $region47: #{inception_b_forward.5} parent=43 // pred_region
        _
      $region48: #{inception_b_forward.5} parent=43 // pred_fallthru
        _
    $region44: #{inception_b_forward.5} parent=5 // pred_fallthru
      _
    %p1904 = scmp.le.s32.totalorder 2, %s12
    // Predicated region
    $region49: #{inception_b_forward.5} parent=5 // pred_check
      %p1905 = pneg %p1904
    $region50: #{inception_b_forward.5} parent=5 // pred_check_branch
      %1907 = sbr.rel (%p1905) target = $region52
    $region51: #{inception_b_forward.5} parent=5 // pred_region
      %s1908 = ssub.s32 %s12, 2
      // Predicated region
      $region53: #{inception_b_forward.5} parent=51 // pred_check
        %p1909 = pneg %p187
      $region54: #{inception_b_forward.5} parent=51 // pred_check_branch
        %1911 = sbr.rel (%p1909) target = $region56
      $region55: #{inception_b_forward.5} parent=51 // pred_region
        %p1912 = scmp.lt.s32.totalorder %s18, 1
        %s1913 = scalar_select %p1912, %s18, 1
        %s1914 = smul.addr %s1913, 7
        %s1915 = smul.addr %s1914, 8
        %s1916 = scalar_lea.vmem %s6, %s1915
      $region56: #{inception_b_forward.5} parent=51 // pred_fallthru
        _
    $region52: #{inception_b_forward.5} parent=5 // pred_fallthru
      _
  $region6: #{inception_b_forward.5} parent=0 // loop_footer
    %s16 = sadd.s32 1, %s12
  $region7: #{inception_b_forward.5} parent=0 // loop_footer_branch
    %11 = sbr.rel target = $region3
  $region8: #{inception_b_forward.5} parent=0 // loop_exit
    _

// kernel: inception_b_forward.3
$region0: #{inception_b_forward.3}
  #allocation0 [shape = 'u32[]', space=smem, size = 0x4, offset = 0x4, fixed_abs, tag = 'smem constant byte address 0x4 - core index']
  #allocation1 [shape = 'u32[144,128]{1,0:T(1,128)}', space=vmem, size = 0x12000, scoped, tag = 'internal scratch']
  %s0 = inlined_call_operand.vmem [shape: f32[2,65,4], index: 0, kind: input, shape index: {}]
  %s1 = inlined_call_operand.vmem [shape: f32[2,65,4], index: 1, kind: input, shape index: {}]
  %s2 = inlined_call_operand.vmem [shape: f32[2,65,4], index: 2, kind: input, shape index: {}]
  %s3 = inlined_call_operand.vmem [shape: f32[2,65,4], index: 3, kind: input, shape index: {}]
  %s4 = inlined_call_operand.vmem [shape: bf16[9,4,384], index: 4, kind: input, shape index: {}]
  %s5 = inlined_call_operand.vmem [shape: f32[1,384], index: 5, kind: input, shape index: {}]
  %s6 = inlined_call_operand.vmem [shape: f32[2,56,384], index: 6, kind: output, shape index: {0}]
  %s7 = inlined_call_operand.vmem [shape: f32[2,56,4], index: 7, kind: output, shape index: {1}]
  %8 = xla_tuple %s6, %s7
  %s9 = sld [smem:[#allocation0]]
  $region65: #{inception_b_forward.3} parent=0
    _
  %s11 = ssub.s32 1, %s9
  %s12 = scalar_select 0, %s11, %s9
  loop: start=0, step=1, limit=4
  $region2: #{inception_b_forward.3} parent=0 // loop_pre_header
    _
  $region3: #{inception_b_forward.3} parent=0 // loop_header
    %s14 = sphi 0, %s18
    %p15 = scmp.ge.s32.totalorder %s14, 4
    %s24 = sphi 0, %s26
    %s27 = sphi 0, %s24
    %s28 = sphi 0, %s27
    %s44 = sphi 0, %s28
    %s50 = sphi 0, %s52
    %s53 = sphi 0, %s50
    %s54 = sphi 0, %s53
    %s70 = sphi 0, %s54
    %s76 = sphi 0, %s78
    %s79 = sphi 0, %s76
    %s80 = sphi 0, %s79
    %s96 = sphi 0, %s80
    %s102 = sphi 0, %s104
    %s105 = sphi 0, %s102
    %s106 = sphi 0, %s105
    %s122 = sphi 0, %s106
    %s126 = sphi 0, %s126
    %s128 = sphi 0, %s126
    %s129 = sphi 0, %s128
    %s143 = sphi 0, %s129
    %s147 = sphi 0, %s147
    %s149 = sphi 0, %s147
    %s150 = sphi 0, %s149
    %s164 = sphi 0, %s150
    %s170 = sphi 0, %s172
    %s173 = sphi 0, %s170
    %s174 = sphi 0, %s173
    %s190 = sphi 0, %s174
    %s196 = sphi 0, %s198
    %s199 = sphi 0, %s196
    %s200 = sphi 0, %s199
    %s216 = sphi 0, %s200
  $region4: #{inception_b_forward.3} parent=0 // loop_header_branch
    %17 = sbr.rel (%p15) target = $region8
  $region5: #{inception_b_forward.3} parent=0 // loop_body
    %s19 = ssub.s32 %s14, 1
    %s20 = ssub.s32 %s14, 2
    %s21 = sadd.s32 %s14, 1
    %s22 = ssub.s32 %s14, %s21
    %p23 = scmp.eq.s32.totalorder %s22, 0
    %s25 = sadd.s32 %s24, 1
    %s26 = scalar_select %p23, %s24, %s25
    %p29 = pneg %p23
    %p30 = scmp.eq.s32.totalorder %s14, 1
    %p31 = por %p29, %p30
    %p32 = scmp.ne.s32.totalorder %s24, %s27
    %p33 = scmp.eq.s32.totalorder %s14, 0
    %p34 = por %p32, %p33
    %p35 = scmp.ne.s32.totalorder %s24, %s27
    %p36 = scmp.eq.s32.totalorder %s19, 1
    %p37 = por %p35, %p36
    %p38 = scmp.ne.s32.totalorder %s27, %s28
    %p39 = scmp.eq.s32.totalorder %s19, 0
    %p40 = por %p38, %p39
    %p41 = scmp.ne.s32.totalorder %s27, %s28
    %p42 = scmp.eq.s32.totalorder %s20, 1
    %p43 = por %p41, %p42
    %p45 = scmp.ne.s32.totalorder %s28, %s44
    %p46 = scmp.eq.s32.totalorder %s20, 0
    %p47 = por %p45, %p46
    %s48 = ssub.s32 %s14, %s21
    %p49 = scmp.eq.s32.totalorder %s48, 0
    %s51 = sadd.s32 %s50, 1
    %s52 = scalar_select %p49, %s50, %s51
    %p55 = pneg %p49
    %p56 = scmp.eq.s32.totalorder %s14, 1
    %p57 = por %p55, %p56
    %p58 = scmp.ne.s32.totalorder %s50, %s53
    %p59 = scmp.eq.s32.totalorder %s14, 0
    %p60 = por %p58, %p59
    %p61 = scmp.ne.s32.totalorder %s50, %s53
    %p62 = scmp.eq.s32.totalorder %s19, 1
    %p63 = por %p61, %p62
    %p64 = scmp.ne.s32.totalorder %s53, %s54
    %p65 = scmp.eq.s32.totalorder %s19, 0
    %p66 = por %p64, %p65
    %p67 = scmp.ne.s32.totalorder %s53, %s54
    %p68 = scmp.eq.s32.totalorder %s20, 1
    %p69 = por %p67, %p68
    %p71 = scmp.ne.s32.totalorder %s54, %s70
    %p72 = scmp.eq.s32.totalorder %s20, 0
    %p73 = por %p71, %p72
    %s74 = ssub.s32 %s14, %s21
    %p75 = scmp.eq.s32.totalorder %s74, 0
    %s77 = sadd.s32 %s76, 1
    %s78 = scalar_select %p75, %s76, %s77
    %p81 = pneg %p75
    %p82 = scmp.eq.s32.totalorder %s14, 1
    %p83 = por %p81, %p82
    %p84 = scmp.ne.s32.totalorder %s76, %s79
    %p85 = scmp.eq.s32.totalorder %s14, 0
    %p86 = por %p84, %p85
    %p87 = scmp.ne.s32.totalorder %s76, %s79
    %p88 = scmp.eq.s32.totalorder %s19, 1
    %p89 = por %p87, %p88
    %p90 = scmp.ne.s32.totalorder %s79, %s80
    %p91 = scmp.eq.s32.totalorder %s19, 0
    %p92 = por %p90, %p91
    %p93 = scmp.ne.s32.totalorder %s79, %s80
    %p94 = scmp.eq.s32.totalorder %s20, 1
    %p95 = por %p93, %p94
    %p97 = scmp.ne.s32.totalorder %s80, %s96
    %p98 = scmp.eq.s32.totalorder %s20, 0
    %p99 = por %p97, %p98
    %s100 = ssub.s32 %s14, %s21
    %p101 = scmp.eq.s32.totalorder %s100, 0
    %s103 = sadd.s32 %s102, 1
    %s104 = scalar_select %p101, %s102, %s103
    %p107 = pneg %p101
    %p108 = scmp.eq.s32.totalorder %s14, 1
    %p109 = por %p107, %p108
    %p110 = scmp.ne.s32.totalorder %s102, %s105
    %p111 = scmp.eq.s32.totalorder %s14, 0
    %p112 = por %p110, %p111
    %p113 = scmp.ne.s32.totalorder %s102, %s105
    %p114 = scmp.eq.s32.totalorder %s19, 1
    %p115 = por %p113, %p114
    %p116 = scmp.ne.s32.totalorder %s105, %s106
    %p117 = scmp.eq.s32.totalorder %s19, 0
    %p118 = por %p116, %p117
    %p119 = scmp.ne.s32.totalorder %s105, %s106
    %p120 = scmp.eq.s32.totalorder %s20, 1
    %p121 = por %p119, %p120
    %p123 = scmp.ne.s32.totalorder %s106, %s122
    %p124 = scmp.eq.s32.totalorder %s20, 0
    %p125 = por %p123, %p124
    %s127 = sadd.s32 %s126, 1
    %p130 = scmp.eq.s32.totalorder %s14, 1
    %p131 = scmp.ne.s32.totalorder %s126, %s128
    %p132 = scmp.eq.s32.totalorder %s14, 0
    %p133 = por %p131, %p132
    %p134 = scmp.ne.s32.totalorder %s126, %s128
    %p135 = scmp.eq.s32.totalorder %s19, 1
    %p136 = por %p134, %p135
    %p137 = scmp.ne.s32.totalorder %s128, %s129
    %p138 = scmp.eq.s32.totalorder %s19, 0
    %p139 = por %p137, %p138
    %p140 = scmp.ne.s32.totalorder %s128, %s129
    %p141 = scmp.eq.s32.totalorder %s20, 1
    %p142 = por %p140, %p141
    %p144 = scmp.ne.s32.totalorder %s129, %s143
    %p145 = scmp.eq.s32.totalorder %s20, 0
    %p146 = por %p144, %p145
    %s148 = sadd.s32 %s147, 1
    %p151 = scmp.eq.s32.totalorder %s14, 1
    %p152 = scmp.ne.s32.totalorder %s147, %s149
    %p153 = scmp.eq.s32.totalorder %s14, 0
    %p154 = por %p152, %p153
    %p155 = scmp.ne.s32.totalorder %s147, %s149
    %p156 = scmp.eq.s32.totalorder %s19, 1
    %p157 = por %p155, %p156
    %p158 = scmp.ne.s32.totalorder %s149, %s150
    %p159 = scmp.eq.s32.totalorder %s19, 0
    %p160 = por %p158, %p159
    %p161 = scmp.ne.s32.totalorder %s149, %s150
    %p162 = scmp.eq.s32.totalorder %s20, 1
    %p163 = por %p161, %p162
    %p165 = scmp.ne.s32.totalorder %s150, %s164
    %p166 = scmp.eq.s32.totalorder %s20, 0
    %p167 = por %p165, %p166
    %s168 = ssub.s32 %s14, %s21
    %p169 = scmp.eq.s32.totalorder %s168, 0
    %s171 = sadd.s32 %s170, 1
    %s172 = scalar_select %p169, %s170, %s171
    %p175 = pneg %p169
    %p176 = scmp.eq.s32.totalorder %s14, 1
    %p177 = por %p175, %p176
    %p178 = scmp.ne.s32.totalorder %s170, %s173
    %p179 = scmp.eq.s32.totalorder %s14, 0
    %p180 = por %p178, %p179
    %p181 = scmp.ne.s32.totalorder %s170, %s173
    %p182 = scmp.eq.s32.totalorder %s19, 1
    %p183 = por %p181, %p182
    %p184 = scmp.ne.s32.totalorder %s173, %s174
    %p185 = scmp.eq.s32.totalorder %s19, 0
    %p186 = por %p184, %p185
    %p187 = scmp.ne.s32.totalorder %s173, %s174
    %p188 = scmp.eq.s32.totalorder %s20, 1
    %p189 = por %p187, %p188
    %p191 = scmp.ne.s32.totalorder %s174, %s190
    %p192 = scmp.eq.s32.totalorder %s20, 0
    %p193 = por %p191, %p192
    %s194 = ssub.s32 %s14, %s21
    %p195 = scmp.eq.s32.totalorder %s194, 0
    %s197 = sadd.s32 %s196, 1
    %s198 = scalar_select %p195, %s196, %s197
    %p201 = pneg %p195
    %p202 = scmp.eq.s32.totalorder %s14, 1
    %p203 = por %p201, %p202
    %p204 = scmp.ne.s32.totalorder %s196, %s199
    %p205 = scmp.eq.s32.totalorder %s14, 0
    %p206 = por %p204, %p205
    %p207 = scmp.ne.s32.totalorder %s196, %s199
    %p208 = scmp.eq.s32.totalorder %s19, 1
    %p209 = por %p207, %p208
    %p210 = scmp.ne.s32.totalorder %s199, %s200
    %p211 = scmp.eq.s32.totalorder %s19, 0
    %p212 = por %p210, %p211
    %p213 = scmp.ne.s32.totalorder %s199, %s200
    %p214 = scmp.eq.s32.totalorder %s20, 1
    %p215 = por %p213, %p214
    %p217 = scmp.ne.s32.totalorder %s200, %s216
    %p218 = scmp.eq.s32.totalorder %s20, 0
    %p219 = por %p217, %p218
    %p220 = scmp.le.s32.totalorder 1, %s14
    %p221 = scmp.lt.s32.totalorder %s14, 3
    %p222 = pnand %p220, %p221
    %p223 = pneg %p222
    // Predicated region
    $region9: #{inception_b_forward.3} parent=5 // pred_check
      _
    $region10: #{inception_b_forward.3} parent=5 // pred_check_branch
      %225 = sbr.rel (%p222) target = $region12
    $region11: #{inception_b_forward.3} parent=5 // pred_region
      %s226 = ssub.s32 %s14, 1
      // Predicated region
      $region13: #{inception_b_forward.3} parent=11 // pred_check
        %p227 = pneg %p139
      $region14: #{inception_b_forward.3} parent=11 // pred_check_branch
        %229 = sbr.rel (%p227) target = $region16
      $region15: #{inception_b_forward.3} parent=11 // pred_region
        _
      $region16: #{inception_b_forward.3} parent=11 // pred_fallthru
        _
      // Predicated region
      $region17: #{inception_b_forward.3} parent=11 // pred_check
        %p230 = pneg %p160
      $region18: #{inception_b_forward.3} parent=11 // pred_check_branch
        %232 = sbr.rel (%p230) target = $region20
      $region19: #{inception_b_forward.3} parent=11 // pred_region
        _
      $region20: #{inception_b_forward.3} parent=11 // pred_fallthru
        _
    $region12: #{inception_b_forward.3} parent=5 // pred_fallthru
      _
    %p233 = scmp.lt.s32.totalorder %s14, 2
    // Predicated region
    $region21: #{inception_b_forward.3} parent=5 // pred_check
      %p234 = pneg %p233
    $region22: #{inception_b_forward.3} parent=5 // pred_check_branch
      %236 = sbr.rel (%p234) target = $region24
    $region23: #{inception_b_forward.3} parent=5 // pred_region
      // Predicated region
      $region25: #{inception_b_forward.3} parent=23 // pred_check
        %p237 = pneg %p34
      $region26: #{inception_b_forward.3} parent=23 // pred_check_branch
        %239 = sbr.rel (%p237) target = $region28
      $region27: #{inception_b_forward.3} parent=23 // pred_region
        %p240 = scmp.lt.s32.totalorder %s14, 1
        %s241 = scalar_select %p240, %s14, 1
        %s242 = smul.addr %s241, 9
        %s243 = smul.addr %s242, 8
        %s244 = scalar_lea.vmem %s0, %s243
      $region28: #{inception_b_forward.3} parent=23 // pred_fallthru
        _
      // Predicated region
      $region29: #{inception_b_forward.3} parent=23 // pred_check
        %p245 = pneg %p60
      $region30: #{inception_b_forward.3} parent=23 // pred_check_branch
        %247 = sbr.rel (%p245) target = $region32
      $region31: #{inception_b_forward.3} parent=23 // pred_region
        %p248 = scmp.lt.s32.totalorder %s14, 1
        %s249 = scalar_select %p248, %s14, 1
        %s250 = smul.addr %s249, 9
        %s251 = smul.addr %s250, 8
        %s252 = scalar_lea.vmem %s1, %s251
      $region32: #{inception_b_forward.3} parent=23 // pred_fallthru
        _
      // Predicated region
      $region33: #{inception_b_forward.3} parent=23 // pred_check
        %p253 = pneg %p86
      $region34: #{inception_b_forward.3} parent=23 // pred_check_branch
        %255 = sbr.rel (%p253) target = $region36
      $region35: #{inception_b_forward.3} parent=23 // pred_region
        %p256 = scmp.lt.s32.totalorder %s14, 1
        %s257 = scalar_select %p256, %s14, 1
        %s258 = smul.addr %s257, 9
        %s259 = smul.addr %s258, 8
        %s260 = scalar_lea.vmem %s2, %s259
      $region36: #{inception_b_forward.3} parent=23 // pred_fallthru
        _
      // Predicated region
      $region37: #{inception_b_forward.3} parent=23 // pred_check
        %p261 = pneg %p112
      $region38: #{inception_b_forward.3} parent=23 // pred_check_branch
        %263 = sbr.rel (%p261) target = $region40
      $region39: #{inception_b_forward.3} parent=23 // pred_region
        %p264 = scmp.lt.s32.totalorder %s14, 1
        %s265 = scalar_select %p264, %s14, 1
        %s266 = smul.addr %s265, 9
        %s267 = smul.addr %s266, 8
        %s268 = scalar_lea.vmem %s3, %s267
      $region40: #{inception_b_forward.3} parent=23 // pred_fallthru
        _
    $region24: #{inception_b_forward.3} parent=5 // pred_fallthru
      _
    %p269 = scmp.le.s32.totalorder 1, %s14
    %p270 = scmp.lt.s32.totalorder %s14, 3
    %p271 = pnand %p269, %p270
    %p272 = pneg %p271
    // Predicated region
    $region41: #{inception_b_forward.3} parent=5 // pred_check
      _
    $region42: #{inception_b_forward.3} parent=5 // pred_check_branch
      %274 = sbr.rel (%p271) target = $region44
    $region43: #{inception_b_forward.3} parent=5 // pred_region
      %s275 = ssub.s32 %s14, 1
      %p276 = scmp.lt.s32.totalorder %s19, 1
      %s277 = scalar_select %p276, %s19, 1
      %s278 = smul.addr %s277, 9
      %s279 = smul.addr %s278, 8
      %s280 = scalar_lea.vmem %s0, %s279
      %p281 = pneg %p40
      %p282 = pneg %p37
      %p283 = scmp.lt.s32.totalorder %s19, 1
      %s284 = scalar_select %p283, %s19, 1
      %s285 = smul.addr %s284, 9
      %s286 = smul.addr %s285, 8
      %s287 = scalar_lea.vmem %s1, %s286
      %p288 = pneg %p66
      %p289 = pneg %p63
      %p290 = scmp.lt.s32.totalorder %s19, 1
      %s291 = scalar_select %p290, %s19, 1
      %s292 = smul.addr %s291, 9
      %s293 = smul.addr %s292, 8
      %s294 = scalar_lea.vmem %s2, %s293
      %p295 = pneg %p92
      %p296 = pneg %p89
      %p297 = scmp.lt.s32.totalorder %s19, 1
      %s298 = scalar_select %p297, %s19, 1
      %s299 = smul.addr %s298, 9
      %s300 = smul.addr %s299, 8
      %s301 = scalar_lea.vmem %s3, %s300
      %p302 = pneg %p118
      %p303 = pneg %p115
      %p304 = pneg %p139
      %p305 = pneg %p136
      %p306 = pneg %p160
      %p307 = pneg %p157
      %p308 = pneg %p186
      %p309 = pneg %p183
      %p310 = scmp.lt.s32.totalorder %s19, 1
      %s311 = scalar_select %p310, %s19, 1
      %s312 = smul.addr %s311, 21
      %s313 = smul.addr %s312, 8
      %s314 = scalar_lea.vmem %s6, %s313
      %p315 = pneg %p212
      %p316 = pneg %p209
      %p317 = scmp.lt.s32.totalorder %s19, 1
      %s318 = scalar_select %p317, %s19, 1
      %s319 = smul.addr %s318, 7
      %s320 = smul.addr %s319, 8
      %s321 = scalar_lea.vmem %s7, %s320
      %p322 = scmp.lt.s32.totalorder %s19, 1
      %s323 = scalar_select %p322, %s19, 1
      %s324 = smul.addr %s323, 9
      %s325 = smul.addr %s324, 8
      %s326 = scalar_lea.vmem %s0, %s325
      %p327 = scmp.lt.s32.totalorder %s19, 1
      %s328 = scalar_select %p327, %s19, 1
      %s329 = smul.addr %s328, 9
      %s330 = smul.addr %s329, 8
      %s331 = scalar_lea.vmem %s1, %s330
      %p332 = scmp.lt.s32.totalorder %s19, 1
      %s333 = scalar_select %p332, %s19, 1
      %s334 = smul.addr %s333, 9
      %s335 = smul.addr %s334, 8
      %s336 = scalar_lea.vmem %s2, %s335
      %p337 = scmp.lt.s32.totalorder %s19, 1
      %s338 = scalar_select %p337, %s19, 1
      %s339 = smul.addr %s338, 9
      %s340 = smul.addr %s339, 8
      %s341 = scalar_lea.vmem %s3, %s340
      %p342 = scmp.lt.s32.totalorder %s19, 1
      %s343 = scalar_select %p342, %s19, 1
      %s344 = smul.addr %s343, 21
      %s345 = smul.addr %s344, 8
      %s346 = scalar_lea.vmem %s6, %s345
      %p347 = scmp.lt.s32.totalorder %s19, 1
      %s348 = scalar_select %p347, %s19, 1
      %s349 = smul.addr %s348, 7
      %s350 = smul.addr %s349, 8
      %s351 = scalar_lea.vmem %s7, %s350
      %v353 = vld [vmem:[%s326] sm:$0xff]
      %v354 = vld [vmem:[%s326 + $0x8] sm:$0xff]
      %v355 = vld [vmem:[%s326 + $0x10] sm:$0xff]
      %v356 = vld [vmem:[%s326 + $0x18] sm:$0xff]
      %v357 = vld [vmem:[%s326 + $0x20] sm:$0xff]
      %v358 = vld [vmem:[%s326 + $0x28] sm:$0xff]
      %v359 = vld [vmem:[%s326 + $0x30] sm:$0xff]
      %v360 = vpack.c.bf16 %v354, %v353
      %v361 = vpack.c.bf16 %v356, %v355
      %v362 = vpack.c.bf16 %v358, %v357
      %v363 = vpack.c.bf16 %v359, %v359
      %v364 = vld [vmem:[%s4] sm:$0x3f]
      %v365 = vld [vmem:[%s331] sm:$0xff]
      %v366 = vld [vmem:[%s331 + $0x8] sm:$0xff]
      %v367 = vld [vmem:[%s331 + $0x10] sm:$0xff]
      %v368 = vld [vmem:[%s331 + $0x18] sm:$0xff]
      %v369 = vld [vmem:[%s331 + $0x20] sm:$0xff]
      %v370 = vld [vmem:[%s331 + $0x28] sm:$0xff]
      %v371 = vld [vmem:[%s331 + $0x30] sm:$0xff]
      %v372 = vpack.c.bf16 %v366, %v365
      %v373 = vpack.c.bf16 %v368, %v367
      %v374 = vpack.c.bf16 %v370, %v369
      %v375 = vpack.c.bf16 %v371, %v371
      %s376 = scalar_lea.vmem %s4, 6
      %v377 = vld [vmem:[%s376] sm:$0x3f]
      %v379 = vcombine.high %v377, %v377
      %v381 = vunpack.c.l.s4 1983009808
      %v382 = vunpack.c.0.s8 %v381
      %v383 = vlaneseq
      %v384 = vshrl.u32 %v383, 7
      %v385 = vsub.s32 %v382, %v384
      %v386 = vrot.slane %v377, %v385
      %v388 = vunpack.c.l.s4 1983009808
      %v389 = vunpack.c.0.s8 %v388
      %v390 = vlaneseq
      %v391 = vshrl.u32 %v390, 7
      %v392 = vsub.s32 %v389, %v391
      %v393 = vrot.slane %v379, %v392
      %v394 = vcombine.high %v386, %v386
      %vm395 = vcmask 31744
      %v397 = vsel %vm395, %v372, 0
      %v400 = vsel %vm395, %v373, 0
      %v403 = vsel %vm395, %v374, 0
      %v406 = vsel %vm395, %v375, 0
      %vm408 = vcmask 1041408
      %v410 = vsel %vm408, %v386, 0
      %v413 = vsel %vm408, %v394, 0
      %v416 = vsel %vm408, %v393, 0
      %418 = vmatprep.subr.bf16.mxu0 0
      %419 = vmatpush1.bf16.msra.mxu0 0
      %420 = vmatprep.subr.bf16.mxu0 0
      %421 = vmatpush1.bf16.msra.mxu0 0
      %422 = vmatprep.subr.bf16.mxu0 0
      %423 = vmatpush1.bf16.msra.mxu0 0
      %424 = vmatprep.subr.bf16.mxu0 0
      %425 = vmatpush1.bf16.msra.mxu0 0
      %426 = vmatprep.subr.bf16.mxu0 0
      %427 = vmatpush1.bf16.msra.mxu0 0
      %428 = vmatprep.subr.bf16.mxu0 0
      %429 = vmatpush1.bf16.msra.mxu0 0
      %430 = vmatprep.subr.bf16.mxu0 0
      %431 = vmatpush1.bf16.msra.mxu0 0
      %432 = vmatprep.subr.bf16.mxu0 %v413
      %433 = vmatpush1.bf16.msra.mxu0 %v410
      %434 = vmatprep.subr.bf16.mxu0 0
      %435 = vmatpush2.bf16.msra.mxu0 0
      %436 = vmatprep.subr.bf16.mxu0 0
      %437 = vmatpush2.bf16.msra.mxu0 0
      %438 = vmatprep.subr.bf16.mxu0 0
      %439 = vmatpush2.bf16.msra.mxu0 0
      %440 = vmatprep.subr.bf16.mxu0 0
      %441 = vmatpush2.bf16.msra.mxu0 0
      %442 = vmatprep.subr.bf16.mxu0 0
      %443 = vmatpush2.bf16.msra.mxu0 0
      %444 = vmatprep.subr.bf16.mxu0 0
      %445 = vmatpush2.bf16.msra.mxu0 0
      %446 = vmatprep.subr.bf16.mxu0 0
      %447 = vmatpush2.bf16.msra.mxu0 0
      %448 = vmatprep.subr.bf16.mxu0 0
      %449 = vmatpush2.bf16.msra.mxu0 0
      %450 = vmatprep.mubr.bf16.mxu0 0
      %451 = vmatmul.mubr.bf16.gmra.mxu0 %v397
      %v452 = vpop.f32.mrf.mxu0
      %v453 = vadd.f32 0.0, %v452
      %v454 = vpop.f32.mrf.mxu0
      %v455 = vadd.f32 0.0, %v454
      %v456 = vpop.f32.mrf.mxu0
      %v457 = vadd.f32 0.0, %v456
      %v458 = vpop.f32.mrf.mxu0
      %v459 = vadd.f32 0.0, %v458
      %460 = vmatprep.mubr.bf16.mxu0 0
      %461 = vmatmul.mubr.bf16.gmra.mxu0 %v400
      %v462 = vpop.f32.mrf.mxu0
      %v463 = vadd.f32 0.0, %v462
      %v464 = vpop.f32.mrf.mxu0
      %v465 = vadd.f32 0.0, %v464
      %v466 = vpop.f32.mrf.mxu0
      %v467 = vadd.f32 0.0, %v466
      %v468 = vpop.f32.mrf.mxu0
      %v469 = vadd.f32 0.0, %v468
      %470 = vmatprep.mubr.bf16.mxu0 0
      %471 = vmatmul.mubr.bf16.gmra.mxu0 %v403
      %v472 = vpop.f32.mrf.mxu0
      %v473 = vadd.f32 0.0, %v472
      %v474 = vpop.f32.mrf.mxu0
      %v475 = vadd.f32 0.0, %v474
      %v476 = vpop.f32.mrf.mxu0
      %v477 = vadd.f32 0.0, %v476
      %v478 = vpop.f32.mrf.mxu0
      %v479 = vadd.f32 0.0, %v478
      %480 = vmatprep.mubr.bf16.mxu0 0
      %481 = vmatmul.mubr.bf16.gmra.mxu0 %v406
      %v482 = vpop.f32.mrf.mxu0
      %v483 = vadd.f32 0.0, %v482
      %v484 = vpop.f32.mrf.mxu0
      %v485 = vadd.f32 0.0, %v484
      %v486 = vpop.f32.mrf.mxu0
      %v487 = vpop.f32.mrf.mxu0
      %488 = vdwg.mxu0
      %489 = vmatprep.subr.bf16.mxu0 0
      %490 = vmatpush1.bf16.msra.mxu0 0
      %491 = vmatprep.subr.bf16.mxu0 0
      %492 = vmatpush1.bf16.msra.mxu0 0
      %493 = vmatprep.subr.bf16.mxu0 0
      %494 = vmatpush1.bf16.msra.mxu0 0
      %495 = vmatprep.subr.bf16.mxu0 0
      %496 = vmatpush1.bf16.msra.mxu0 0
      %497 = vmatprep.subr.bf16.mxu0 0
      %498 = vmatpush1.bf16.msra.mxu0 0
      %499 = vmatprep.subr.bf16.mxu0 0
      %500 = vmatpush1.bf16.msra.mxu0 0
      %501 = vmatprep.subr.bf16.mxu0 0
      %502 = vmatpush1.bf16.msra.mxu0 0
      %503 = vmatprep.subr.bf16.mxu0 0
      %504 = vmatpush1.bf16.msra.mxu0 %v416
      %505 = vmatprep.subr.bf16.mxu0 0
      %506 = vmatpush2.bf16.msra.mxu0 0
      %507 = vmatprep.subr.bf16.mxu0 0
      %508 = vmatpush2.bf16.msra.mxu0 0
      %509 = vmatprep.subr.bf16.mxu0 0
      %510 = vmatpush2.bf16.msra.mxu0 0
      %511 = vmatprep.subr.bf16.mxu0 0
      %512 = vmatpush2.bf16.msra.mxu0 0
      %513 = vmatprep.subr.bf16.mxu0 0
      %514 = vmatpush2.bf16.msra.mxu0 0
      %515 = vmatprep.subr.bf16.mxu0 0
      %516 = vmatpush2.bf16.msra.mxu0 0
      %517 = vmatprep.subr.bf16.mxu0 0
      %518 = vmatpush2.bf16.msra.mxu0 0
      %519 = vmatprep.subr.bf16.mxu0 0
      %520 = vmatpush2.bf16.msra.mxu0 0
      %521 = vmatprep.mubr.bf16.mxu0 0
      %522 = vmatmul.mubr.bf16.gmra.mxu0 %v397
      %v523 = vpop.f32.mrf.mxu0
      %v524 = vadd.f32 0.0, %v523
      %v525 = vpop.f32.mrf.mxu0
      %v526 = vpop.f32.mrf.mxu0
      %v527 = vadd.f32 0.0, %v526
      %v528 = vpop.f32.mrf.mxu0
      %529 = vmatprep.mubr.bf16.mxu0 0
      %530 = vmatmul.mubr.bf16.gmra.mxu0 %v400
      %v531 = vpop.f32.mrf.mxu0
      %v532 = vadd.f32 0.0, %v531
      %v533 = vpop.f32.mrf.mxu0
      %v534 = vpop.f32.mrf.mxu0
      %v535 = vadd.f32 0.0, %v534
      %v536 = vpop.f32.mrf.mxu0
      %537 = vmatprep.mubr.bf16.mxu0 0
      %538 = vmatmul.mubr.bf16.gmra.mxu0 %v403
      %v539 = vpop.f32.mrf.mxu0
      %v540 = vadd.f32 0.0, %v539
      %v541 = vpop.f32.mrf.mxu0
      %v542 = vpop.f32.mrf.mxu0
      %v543 = vadd.f32 0.0, %v542
      %v544 = vpop.f32.mrf.mxu0
      %545 = vmatprep.mubr.bf16.mxu0 0
      %546 = vmatmul.mubr.bf16.gmra.mxu0 %v406
      %v547 = vpop.f32.mrf.mxu0
      %v548 = vadd.f32 0.0, %v547
      %v549 = vpop.f32.mrf.mxu0
      %v550 = vpop.f32.mrf.mxu0
      %v551 = vpop.f32.mrf.mxu0
      %552 = vdwg.mxu0
      %v554 = vcombine.high %v364, %v364
      %v556 = vunpack.c.l.s4 1983009808
      %v557 = vunpack.c.0.s8 %v556
      %v558 = vlaneseq
      %v559 = vshrl.u32 %v558, 7
      %v560 = vsub.s32 %v557, %v559
      %v561 = vrot.slane %v364, %v560
      %v563 = vunpack.c.l.s4 1983009808
      %v564 = vunpack.c.0.s8 %v563
      %v565 = vlaneseq
      %v566 = vshrl.u32 %v565, 7
      %v567 = vsub.s32 %v564, %v566
      %v568 = vrot.slane %v554, %v567
      %v569 = vcombine.high %v561, %v561
      %v571 = vsel %vm395, %v360, 0
      %v574 = vsel %vm395, %v361, 0
      %v577 = vsel %vm395, %v362, 0
      %v580 = vsel %vm395, %v363, 0
      %v583 = vsel %vm408, %v561, 0
      %v586 = vsel %vm408, %v569, 0
      %v589 = vsel %vm408, %v568, 0
      %591 = vmatprep.subr.bf16.mxu0 0
      %592 = vmatpush1.bf16.msra.mxu0 0
      %593 = vmatprep.subr.bf16.mxu0 0
      %594 = vmatpush1.bf16.msra.mxu0 0
      %595 = vmatprep.subr.bf16.mxu0 0
      %596 = vmatpush1.bf16.msra.mxu0 0
      %597 = vmatprep.subr.bf16.mxu0 0
      %598 = vmatpush1.bf16.msra.mxu0 0
      %599 = vmatprep.subr.bf16.mxu0 0
      %600 = vmatpush1.bf16.msra.mxu0 0
      %601 = vmatprep.subr.bf16.mxu0 0
      %602 = vmatpush1.bf16.msra.mxu0 0
      %603 = vmatprep.subr.bf16.mxu0 0
      %604 = vmatpush1.bf16.msra.mxu0 0
      %605 = vmatprep.subr.bf16.mxu0 %v586
      %606 = vmatpush1.bf16.msra.mxu0 %v583
      %607 = vmatprep.subr.bf16.mxu0 0
      %608 = vmatpush2.bf16.msra.mxu0 0
      %609 = vmatprep.subr.bf16.mxu0 0
      %610 = vmatpush2.bf16.msra.mxu0 0
      %611 = vmatprep.subr.bf16.mxu0 0
      %612 = vmatpush2.bf16.msra.mxu0 0
      %613 = vmatprep.subr.bf16.mxu0 0
      %614 = vmatpush2.bf16.msra.mxu0 0
      %615 = vmatprep.subr.bf16.mxu0 0
      %616 = vmatpush2.bf16.msra.mxu0 0
      %617 = vmatprep.subr.bf16.mxu0 0
      %618 = vmatpush2.bf16.msra.mxu0 0
      %619 = vmatprep.subr.bf16.mxu0 0
      %620 = vmatpush2.bf16.msra.mxu0 0
      %621 = vmatprep.subr.bf16.mxu0 0
      %622 = vmatpush2.bf16.msra.mxu0 0
      %623 = vmatprep.mubr.bf16.mxu0 0
      %624 = vmatmul.mubr.bf16.gmra.mxu0 %v571
      %v625 = vpop.f32.mrf.mxu0
      %v626 = vadd.f32 %v453, %v625
      %v627 = vpop.f32.mrf.mxu0
      %v628 = vadd.f32 %v455, %v627
      %v629 = vpop.f32.mrf.mxu0
      %v630 = vadd.f32 %v457, %v629
      %v631 = vpop.f32.mrf.mxu0
      %v632 = vadd.f32 %v459, %v631
      %633 = vmatprep.mubr.bf16.mxu0 0
      %634 = vmatmul.mubr.bf16.gmra.mxu0 %v574
      %v635 = vpop.f32.mrf.mxu0
      %v636 = vadd.f32 %v463, %v635
      %v637 = vpop.f32.mrf.mxu0
      %v638 = vadd.f32 %v465, %v637
      %v639 = vpop.f32.mrf.mxu0
      %v640 = vadd.f32 %v467, %v639
      %v641 = vpop.f32.mrf.mxu0
      %v642 = vadd.f32 %v469, %v641
      %643 = vmatprep.mubr.bf16.mxu0 0
      %644 = vmatmul.mubr.bf16.gmra.mxu0 %v577
      %v645 = vpop.f32.mrf.mxu0
      %v646 = vadd.f32 %v473, %v645
      %v647 = vpop.f32.mrf.mxu0
      %v648 = vadd.f32 %v475, %v647
      %v649 = vpop.f32.mrf.mxu0
      %v650 = vadd.f32 %v477, %v649
      %v651 = vpop.f32.mrf.mxu0
      %v652 = vadd.f32 %v479, %v651
      %653 = vmatprep.mubr.bf16.mxu0 0
      %654 = vmatmul.mubr.bf16.gmra.mxu0 %v580
      %v655 = vpop.f32.mrf.mxu0
      %v656 = vadd.f32 %v483, %v655
      %v657 = vpop.f32.mrf.mxu0
      %v658 = vadd.f32 %v485, %v657
      %v659 = vpop.f32.mrf.mxu0
      %v660 = vpop.f32.mrf.mxu0
      %661 = vdwg.mxu0
      %662 = vmatprep.subr.bf16.mxu0 0
      %663 = vmatpush1.bf16.msra.mxu0 0
      %664 = vmatprep.subr.bf16.mxu0 0
      %665 = vmatpush1.bf16.msra.mxu0 0
      %666 = vmatprep.subr.bf16.mxu0 0
      %667 = vmatpush1.bf16.msra.mxu0 0
      %668 = vmatprep.subr.bf16.mxu0 0
      %669 = vmatpush1.bf16.msra.mxu0 0
      %670 = vmatprep.subr.bf16.mxu0 0
      %671 = vmatpush1.bf16.msra.mxu0 0
      %672 = vmatprep.subr.bf16.mxu0 0
      %673 = vmatpush1.bf16.msra.mxu0 0
      %674 = vmatprep.subr.bf16.mxu0 0
      %675 = vmatpush1.bf16.msra.mxu0 0
      %676 = vmatprep.subr.bf16.mxu0 0
      %677 = vmatpush1.bf16.msra.mxu0 %v589
      %678 = vmatprep.subr.bf16.mxu0 0
      %679 = vmatpush2.bf16.msra.mxu0 0
      %680 = vmatprep.subr.bf16.mxu0 0
      %681 = vmatpush2.bf16.msra.mxu0 0
      %682 = vmatprep.subr.bf16.mxu0 0
      %683 = vmatpush2.bf16.msra.mxu0 0
      %684 = vmatprep.subr.bf16.mxu0 0
      %685 = vmatpush2.bf16.msra.mxu0 0
      %686 = vmatprep.subr.bf16.mxu0 0
      %687 = vmatpush2.bf16.msra.mxu0 0
      %688 = vmatprep.subr.bf16.mxu0 0
      %689 = vmatpush2.bf16.msra.mxu0 0
      %690 = vmatprep.subr.bf16.mxu0 0
      %691 = vmatpush2.bf16.msra.mxu0 0
      %692 = vmatprep.subr.bf16.mxu0 0
      %693 = vmatpush2.bf16.msra.mxu0 0
      %694 = vmatprep.mubr.bf16.mxu0 0
      %695 = vmatmul.mubr.bf16.gmra.mxu0 %v571
      %v696 = vpop.f32.mrf.mxu0
      %v697 = vadd.f32 %v524, %v696
      %v698 = vpop.f32.mrf.mxu0
      %v699 = vpop.f32.mrf.mxu0
      %v700 = vadd.f32 %v527, %v699
      %v701 = vpop.f32.mrf.mxu0
      %702 = vmatprep.mubr.bf16.mxu0 0
      %703 = vmatmul.mubr.bf16.gmra.mxu0 %v574
      %v704 = vpop.f32.mrf.mxu0
      %v705 = vadd.f32 %v532, %v704
      %v706 = vpop.f32.mrf.mxu0
      %v707 = vpop.f32.mrf.mxu0
      %v708 = vadd.f32 %v535, %v707
      %v709 = vpop.f32.mrf.mxu0
      %710 = vmatprep.mubr.bf16.mxu0 0
      %711 = vmatmul.mubr.bf16.gmra.mxu0 %v577
      %v712 = vpop.f32.mrf.mxu0
      %v713 = vadd.f32 %v540, %v712
      %v714 = vpop.f32.mrf.mxu0
      %v715 = vpop.f32.mrf.mxu0
      %v716 = vadd.f32 %v543, %v715
      %v717 = vpop.f32.mrf.mxu0
      %718 = vmatprep.mubr.bf16.mxu0 0
      %719 = vmatmul.mubr.bf16.gmra.mxu0 %v580
      %v720 = vpop.f32.mrf.mxu0
      %v721 = vadd.f32 %v548, %v720
      %v722 = vpop.f32.mrf.mxu0
      %v723 = vpop.f32.mrf.mxu0
      %v724 = vpop.f32.mrf.mxu0
      %725 = vdwg.mxu0
      %v726 = vmax.f32 %v353, %v365
      %v727 = vmax.f32 %v354, %v366
      %v728 = vmax.f32 %v355, %v367
      %v729 = vmax.f32 %v356, %v368
      %v730 = vmax.f32 %v357, %v369
      %v731 = vmax.f32 %v358, %v370
      %v732 = vmax.f32 %v359, %v371
      %v733 = vld [vmem:[%s326 + $0x1] sm:$0xff]
      %v734 = vld [vmem:[%s326 + $0x9] sm:$0xff]
      %v735 = vld [vmem:[%s326 + $0x11] sm:$0xff]
      %v736 = vld [vmem:[%s326 + $0x19] sm:$0xff]
      %v737 = vld [vmem:[%s326 + $0x21] sm:$0xff]
      %v738 = vld [vmem:[%s326 + $0x29] sm:$0xff]
      %v739 = vld [vmem:[%s326 + $0x31] sm:$0xff]
      %v740 = vpack.c.bf16 %v734, %v733
      %v741 = vpack.c.bf16 %v736, %v735
      %v742 = vpack.c.bf16 %v738, %v737
      %v743 = vpack.c.bf16 %v739, %v739
      %s744 = scalar_lea.vmem %s4, 12
      %v745 = vld [vmem:[%s744] sm:$0x3f]
      %v747 = vcombine.high %v745, %v745
      %v749 = vunpack.c.l.s4 1983009808
      %v750 = vunpack.c.0.s8 %v749
      %v751 = vlaneseq
      %v752 = vshrl.u32 %v751, 7
      %v753 = vsub.s32 %v750, %v752
      %v754 = vrot.slane %v745, %v753
      %v756 = vunpack.c.l.s4 1983009808
      %v757 = vunpack.c.0.s8 %v756
      %v758 = vlaneseq
      %v759 = vshrl.u32 %v758, 7
      %v760 = vsub.s32 %v757, %v759
      %v761 = vrot.slane %v747, %v760
      %v762 = vcombine.high %v754, %v754
      %v764 = vsel %vm395, %v740, 0
      %v767 = vsel %vm395, %v741, 0
      %v770 = vsel %vm395, %v742, 0
      %v773 = vsel %vm395, %v743, 0
      %v776 = vsel %vm408, %v754, 0
      %v779 = vsel %vm408, %v762, 0
      %v782 = vsel %vm408, %v761, 0
      %784 = vmatprep.subr.bf16.mxu0 0
      %785 = vmatpush1.bf16.msra.mxu0 0
      %786 = vmatprep.subr.bf16.mxu0 0
      %787 = vmatpush1.bf16.msra.mxu0 0
      %788 = vmatprep.subr.bf16.mxu0 0
      %789 = vmatpush1.bf16.msra.mxu0 0
      %790 = vmatprep.subr.bf16.mxu0 0
      %791 = vmatpush1.bf16.msra.mxu0 0
      %792 = vmatprep.subr.bf16.mxu0 0
      %793 = vmatpush1.bf16.msra.mxu0 0
      %794 = vmatprep.subr.bf16.mxu0 0
      %795 = vmatpush1.bf16.msra.mxu0 0
      %796 = vmatprep.subr.bf16.mxu0 0
      %797 = vmatpush1.bf16.msra.mxu0 0
      %798 = vmatprep.subr.bf16.mxu0 %v779
      %799 = vmatpush1.bf16.msra.mxu0 %v776
      %800 = vmatprep.subr.bf16.mxu0 0
      %801 = vmatpush2.bf16.msra.mxu0 0
      %802 = vmatprep.subr.bf16.mxu0 0
      %803 = vmatpush2.bf16.msra.mxu0 0
      %804 = vmatprep.subr.bf16.mxu0 0
      %805 = vmatpush2.bf16.msra.mxu0 0
      %806 = vmatprep.subr.bf16.mxu0 0
      %807 = vmatpush2.bf16.msra.mxu0 0
      %808 = vmatprep.subr.bf16.mxu0 0
      %809 = vmatpush2.bf16.msra.mxu0 0
      %810 = vmatprep.subr.bf16.mxu0 0
      %811 = vmatpush2.bf16.msra.mxu0 0
      %812 = vmatprep.subr.bf16.mxu0 0
      %813 = vmatpush2.bf16.msra.mxu0 0
      %814 = vmatprep.subr.bf16.mxu0 0
      %815 = vmatpush2.bf16.msra.mxu0 0
      %816 = vmatprep.mubr.bf16.mxu0 0
      %817 = vmatmul.mubr.bf16.gmra.mxu0 %v764
      %v818 = vpop.f32.mrf.mxu0
      %v819 = vadd.f32 0.0, %v818
      %v820 = vpop.f32.mrf.mxu0
      %v821 = vadd.f32 0.0, %v820
      %v822 = vpop.f32.mrf.mxu0
      %v823 = vadd.f32 0.0, %v822
      %v824 = vpop.f32.mrf.mxu0
      %v825 = vadd.f32 0.0, %v824
      %826 = vmatprep.mubr.bf16.mxu0 0
      %827 = vmatmul.mubr.bf16.gmra.mxu0 %v767
      %v828 = vpop.f32.mrf.mxu0
      %v829 = vadd.f32 0.0, %v828
      %v830 = vpop.f32.mrf.mxu0
      %v831 = vadd.f32 0.0, %v830
      %v832 = vpop.f32.mrf.mxu0
      %v833 = vadd.f32 0.0, %v832
      %v834 = vpop.f32.mrf.mxu0
      %v835 = vadd.f32 0.0, %v834
      %836 = vmatprep.mubr.bf16.mxu0 0
      %837 = vmatmul.mubr.bf16.gmra.mxu0 %v770
      %v838 = vpop.f32.mrf.mxu0
      %v839 = vadd.f32 0.0, %v838
      %v840 = vpop.f32.mrf.mxu0
      %v841 = vadd.f32 0.0, %v840
      %v842 = vpop.f32.mrf.mxu0
      %v843 = vadd.f32 0.0, %v842
      %v844 = vpop.f32.mrf.mxu0
      %v845 = vadd.f32 0.0, %v844
      %846 = vmatprep.mubr.bf16.mxu0 0
      %847 = vmatmul.mubr.bf16.gmra.mxu0 %v773
      %v848 = vpop.f32.mrf.mxu0
      %v849 = vadd.f32 0.0, %v848
      %v850 = vpop.f32.mrf.mxu0
      %v851 = vadd.f32 0.0, %v850
      %v852 = vpop.f32.mrf.mxu0
      %v853 = vpop.f32.mrf.mxu0
      %854 = vdwg.mxu0
      %855 = vmatprep.subr.bf16.mxu0 0
      %856 = vmatpush1.bf16.msra.mxu0 0
      %857 = vmatprep.subr.bf16.mxu0 0
      %858 = vmatpush1.bf16.msra.mxu0 0
      %859 = vmatprep.subr.bf16.mxu0 0
      %860 = vmatpush1.bf16.msra.mxu0 0
      %861 = vmatprep.subr.bf16.mxu0 0
      %862 = vmatpush1.bf16.msra.mxu0 0
      %863 = vmatprep.subr.bf16.mxu0 0
      %864 = vmatpush1.bf16.msra.mxu0 0
      %865 = vmatprep.subr.bf16.mxu0 0
      %866 = vmatpush1.bf16.msra.mxu0 0
      %867 = vmatprep.subr.bf16.mxu0 0
      %868 = vmatpush1.bf16.msra.mxu0 0
      %869 = vmatprep.subr.bf16.mxu0 0
      %870 = vmatpush1.bf16.msra.mxu0 %v782
      %871 = vmatprep.subr.bf16.mxu0 0
      %872 = vmatpush2.bf16.msra.mxu0 0
      %873 = vmatprep.subr.bf16.mxu0 0
      %874 = vmatpush2.bf16.msra.mxu0 0
      %875 = vmatprep.subr.bf16.mxu0 0
      %876 = vmatpush2.bf16.msra.mxu0 0
      %877 = vmatprep.subr.bf16.mxu0 0
      %878 = vmatpush2.bf16.msra.mxu0 0
      %879 = vmatprep.subr.bf16.mxu0 0
      %880 = vmatpush2.bf16.msra.mxu0 0
      %881 = vmatprep.subr.bf16.mxu0 0
      %882 = vmatpush2.bf16.msra.mxu0 0
      %883 = vmatprep.subr.bf16.mxu0 0
      %884 = vmatpush2.bf16.msra.mxu0 0
      %885 = vmatprep.subr.bf16.mxu0 0
      %886 = vmatpush2.bf16.msra.mxu0 0
      %887 = vmatprep.mubr.bf16.mxu0 0
      %888 = vmatmul.mubr.bf16.gmra.mxu0 %v764
      %v889 = vpop.f32.mrf.mxu0
      %v890 = vadd.f32 0.0, %v889
      %v891 = vpop.f32.mrf.mxu0
      %v892 = vpop.f32.mrf.mxu0
      %v893 = vadd.f32 0.0, %v892
      %v894 = vpop.f32.mrf.mxu0
      %895 = vmatprep.mubr.bf16.mxu0 0
      %896 = vmatmul.mubr.bf16.gmra.mxu0 %v767
      %v897 = vpop.f32.mrf.mxu0
      %v898 = vadd.f32 0.0, %v897
      %v899 = vpop.f32.mrf.mxu0
      %v900 = vpop.f32.mrf.mxu0
      %v901 = vadd.f32 0.0, %v900
      %v902 = vpop.f32.mrf.mxu0
      %903 = vmatprep.mubr.bf16.mxu0 0
      %904 = vmatmul.mubr.bf16.gmra.mxu0 %v770
      %v905 = vpop.f32.mrf.mxu0
      %v906 = vadd.f32 0.0, %v905
      %v907 = vpop.f32.mrf.mxu0
      %v908 = vpop.f32.mrf.mxu0
      %v909 = vadd.f32 0.0, %v908
      %v910 = vpop.f32.mrf.mxu0
      %911 = vmatprep.mubr.bf16.mxu0 0
      %912 = vmatmul.mubr.bf16.gmra.mxu0 %v773
      %v913 = vpop.f32.mrf.mxu0
      %v914 = vadd.f32 0.0, %v913
      %v915 = vpop.f32.mrf.mxu0
      %v916 = vpop.f32.mrf.mxu0
      %v917 = vpop.f32.mrf.mxu0
      %918 = vdwg.mxu0
      %v919 = vadd.f32 %v626, %v819
      %v920 = vadd.f32 %v628, %v821
      %v921 = vadd.f32 %v697, %v890
      %v922 = vadd.f32 %v630, %v823
      %v923 = vadd.f32 %v632, %v825
      %v924 = vadd.f32 %v700, %v893
      %v925 = vadd.f32 %v636, %v829
      %v926 = vadd.f32 %v638, %v831
      %v927 = vadd.f32 %v705, %v898
      %v928 = vadd.f32 %v640, %v833
      %v929 = vadd.f32 %v642, %v835
      %v930 = vadd.f32 %v708, %v901
      %v931 = vadd.f32 %v646, %v839
      %v932 = vadd.f32 %v648, %v841
      %v933 = vadd.f32 %v713, %v906
      %v934 = vadd.f32 %v650, %v843
      %v935 = vadd.f32 %v652, %v845
      %v936 = vadd.f32 %v716, %v909
      %v937 = vadd.f32 %v656, %v849
      %v938 = vadd.f32 %v658, %v851
      %v939 = vadd.f32 %v721, %v914
      %v940 = vmax.f32 %v726, %v733
      %v941 = vmax.f32 %v727, %v734
      %v942 = vmax.f32 %v728, %v735
      %v943 = vmax.f32 %v729, %v736
      %v944 = vmax.f32 %v730, %v737
      %v945 = vmax.f32 %v731, %v738
      %v946 = vmax.f32 %v732, %v739
      %v947 = vld [vmem:[%s336] sm:$0xff]
      %v948 = vld [vmem:[%s336 + $0x8] sm:$0xff]
      %v949 = vld [vmem:[%s336 + $0x10] sm:$0xff]
      %v950 = vld [vmem:[%s336 + $0x18] sm:$0xff]
      %v951 = vld [vmem:[%s336 + $0x20] sm:$0xff]
      %v952 = vld [vmem:[%s336 + $0x28] sm:$0xff]
      %v953 = vld [vmem:[%s336 + $0x30] sm:$0xff]
      %v954 = vpack.c.bf16 %v948, %v947
      %v955 = vpack.c.bf16 %v950, %v949
      %v956 = vpack.c.bf16 %v952, %v951
      %v957 = vpack.c.bf16 %v953, %v953
      %s958 = scalar_lea.vmem %s4, 18
      %v959 = vld [vmem:[%s958] sm:$0x3f]
      %v961 = vcombine.high %v959, %v959
      %v963 = vunpack.c.l.s4 1983009808
      %v964 = vunpack.c.0.s8 %v963
      %v965 = vlaneseq
      %v966 = vshrl.u32 %v965, 7
      %v967 = vsub.s32 %v964, %v966
      %v968 = vrot.slane %v959, %v967
      %v970 = vunpack.c.l.s4 1983009808
      %v971 = vunpack.c.0.s8 %v970
      %v972 = vlaneseq
      %v973 = vshrl.u32 %v972, 7
      %v974 = vsub.s32 %v971, %v973
      %v975 = vrot.slane %v961, %v974
      %v976 = vcombine.high %v968, %v968
      %v978 = vsel %vm395, %v954, 0
      %v981 = vsel %vm395, %v955, 0
      %v984 = vsel %vm395, %v956, 0
      %v987 = vsel %vm395, %v957, 0
      %v990 = vsel %vm408, %v968, 0
      %v993 = vsel %vm408, %v976, 0
      %v996 = vsel %vm408, %v975, 0
      %998 = vmatprep.subr.bf16.mxu0 0
      %999 = vmatpush1.bf16.msra.mxu0 0
      %1000 = vmatprep.subr.bf16.mxu0 0
      %1001 = vmatpush1.bf16.msra.mxu0 0
      %1002 = vmatprep.subr.bf16.mxu0 0
      %1003 = vmatpush1.bf16.msra.mxu0 0
      %1004 = vmatprep.subr.bf16.mxu0 0
      %1005 = vmatpush1.bf16.msra.mxu0 0
      %1006 = vmatprep.subr.bf16.mxu0 0
      %1007 = vmatpush1.bf16.msra.mxu0 0
      %1008 = vmatprep.subr.bf16.mxu0 0
      %1009 = vmatpush1.bf16.msra.mxu0 0
      %1010 = vmatprep.subr.bf16.mxu0 0
      %1011 = vmatpush1.bf16.msra.mxu0 0
      %1012 = vmatprep.subr.bf16.mxu0 %v993
      %1013 = vmatpush1.bf16.msra.mxu0 %v990
      %1014 = vmatprep.subr.bf16.mxu0 0
      %1015 = vmatpush2.bf16.msra.mxu0 0
      %1016 = vmatprep.subr.bf16.mxu0 0
      %1017 = vmatpush2.bf16.msra.mxu0 0
      %1018 = vmatprep.subr.bf16.mxu0 0
      %1019 = vmatpush2.bf16.msra.mxu0 0
      %1020 = vmatprep.subr.bf16.mxu0 0
      %1021 = vmatpush2.bf16.msra.mxu0 0
      %1022 = vmatprep.subr.bf16.mxu0 0
      %1023 = vmatpush2.bf16.msra.mxu0 0
      %1024 = vmatprep.subr.bf16.mxu0 0
      %1025 = vmatpush2.bf16.msra.mxu0 0
      %1026 = vmatprep.subr.bf16.mxu0 0
      %1027 = vmatpush2.bf16.msra.mxu0 0
      %1028 = vmatprep.subr.bf16.mxu0 0
      %1029 = vmatpush2.bf16.msra.mxu0 0
      %1030 = vmatprep.mubr.bf16.mxu0 0
      %1031 = vmatmul.mubr.bf16.gmra.mxu0 %v978
      %v1032 = vpop.f32.mrf.mxu0
      %v1033 = vadd.f32 0.0, %v1032
      %v1034 = vpop.f32.mrf.mxu0
      %v1035 = vadd.f32 0.0, %v1034
      %v1036 = vpop.f32.mrf.mxu0
      %v1037 = vadd.f32 0.0, %v1036
      %v1038 = vpop.f32.mrf.mxu0
      %v1039 = vadd.f32 0.0, %v1038
      %1040 = vmatprep.mubr.bf16.mxu0 0
      %1041 = vmatmul.mubr.bf16.gmra.mxu0 %v981
      %v1042 = vpop.f32.mrf.mxu0
      %v1043 = vadd.f32 0.0, %v1042
      %v1044 = vpop.f32.mrf.mxu0
      %v1045 = vadd.f32 0.0, %v1044
      %v1046 = vpop.f32.mrf.mxu0
      %v1047 = vadd.f32 0.0, %v1046
      %v1048 = vpop.f32.mrf.mxu0
      %v1049 = vadd.f32 0.0, %v1048
      %1050 = vmatprep.mubr.bf16.mxu0 0
      %1051 = vmatmul.mubr.bf16.gmra.mxu0 %v984
      %v1052 = vpop.f32.mrf.mxu0
      %v1053 = vadd.f32 0.0, %v1052
      %v1054 = vpop.f32.mrf.mxu0
      %v1055 = vadd.f32 0.0, %v1054
      %v1056 = vpop.f32.mrf.mxu0
      %v1057 = vadd.f32 0.0, %v1056
      %v1058 = vpop.f32.mrf.mxu0
      %v1059 = vadd.f32 0.0, %v1058
      %1060 = vmatprep.mubr.bf16.mxu0 0
      %1061 = vmatmul.mubr.bf16.gmra.mxu0 %v987
      %v1062 = vpop.f32.mrf.mxu0
      %v1063 = vadd.f32 0.0, %v1062
      %v1064 = vpop.f32.mrf.mxu0
      %v1065 = vadd.f32 0.0, %v1064
      %v1066 = vpop.f32.mrf.mxu0
      %v1067 = vpop.f32.mrf.mxu0
      %1068 = vdwg.mxu0
      %1069 = vmatprep.subr.bf16.mxu0 0
      %1070 = vmatpush1.bf16.msra.mxu0 0
      %1071 = vmatprep.subr.bf16.mxu0 0
      %1072 = vmatpush1.bf16.msra.mxu0 0
      %1073 = vmatprep.subr.bf16.mxu0 0
      %1074 = vmatpush1.bf16.msra.mxu0 0
      %1075 = vmatprep.subr.bf16.mxu0 0
      %1076 = vmatpush1.bf16.msra.mxu0 0
      %1077 = vmatprep.subr.bf16.mxu0 0
      %1078 = vmatpush1.bf16.msra.mxu0 0
      %1079 = vmatprep.subr.bf16.mxu0 0
      %1080 = vmatpush1.bf16.msra.mxu0 0
      %1081 = vmatprep.subr.bf16.mxu0 0
      %1082 = vmatpush1.bf16.msra.mxu0 0
      %1083 = vmatprep.subr.bf16.mxu0 0
      %1084 = vmatpush1.bf16.msra.mxu0 %v996
      %1085 = vmatprep.subr.bf16.mxu0 0
      %1086 = vmatpush2.bf16.msra.mxu0 0
      %1087 = vmatprep.subr.bf16.mxu0 0
      %1088 = vmatpush2.bf16.msra.mxu0 0
      %1089 = vmatprep.subr.bf16.mxu0 0
      %1090 = vmatpush2.bf16.msra.mxu0 0
      %1091 = vmatprep.subr.bf16.mxu0 0
      %1092 = vmatpush2.bf16.msra.mxu0 0
      %1093 = vmatprep.subr.bf16.mxu0 0
      %1094 = vmatpush2.bf16.msra.mxu0 0
      %1095 = vmatprep.subr.bf16.mxu0 0
      %1096 = vmatpush2.bf16.msra.mxu0 0
      %1097 = vmatprep.subr.bf16.mxu0 0
      %1098 = vmatpush2.bf16.msra.mxu0 0
      %1099 = vmatprep.subr.bf16.mxu0 0
      %1100 = vmatpush2.bf16.msra.mxu0 0
      %1101 = vmatprep.mubr.bf16.mxu0 0
      %1102 = vmatmul.mubr.bf16.gmra.mxu0 %v978
      %v1103 = vpop.f32.mrf.mxu0
      %v1104 = vadd.f32 0.0, %v1103
      %v1105 = vpop.f32.mrf.mxu0
      %v1106 = vpop.f32.mrf.mxu0
      %v1107 = vadd.f32 0.0, %v1106
      %v1108 = vpop.f32.mrf.mxu0
      %1109 = vmatprep.mubr.bf16.mxu0 0
      %1110 = vmatmul.mubr.bf16.gmra.mxu0 %v981
      %v1111 = vpop.f32.mrf.mxu0
      %v1112 = vadd.f32 0.0, %v1111
      %v1113 = vpop.f32.mrf.mxu0
      %v1114 = vpop.f32.mrf.mxu0
      %v1115 = vadd.f32 0.0, %v1114
      %v1116 = vpop.f32.mrf.mxu0
      %1117 = vmatprep.mubr.bf16.mxu0 0
      %1118 = vmatmul.mubr.bf16.gmra.mxu0 %v984
      %v1119 = vpop.f32.mrf.mxu0
      %v1120 = vadd.f32 0.0, %v1119
      %v1121 = vpop.f32.mrf.mxu0
      %v1122 = vpop.f32.mrf.mxu0
      %v1123 = vadd.f32 0.0, %v1122
      %v1124 = vpop.f32.mrf.mxu0
      %1125 = vmatprep.mubr.bf16.mxu0 0
      %1126 = vmatmul.mubr.bf16.gmra.mxu0 %v987
      %v1127 = vpop.f32.mrf.mxu0
      %v1128 = vadd.f32 0.0, %v1127
      %v1129 = vpop.f32.mrf.mxu0
      %v1130 = vpop.f32.mrf.mxu0
      %v1131 = vpop.f32.mrf.mxu0
      %1132 = vdwg.mxu0
      %v1133 = vadd.f32 %v919, %v1033
      %v1134 = vadd.f32 %v920, %v1035
      %v1135 = vadd.f32 %v921, %v1104
      %v1136 = vadd.f32 %v922, %v1037
      %v1137 = vadd.f32 %v923, %v1039
      %v1138 = vadd.f32 %v924, %v1107
      %v1139 = vadd.f32 %v925, %v1043
      %v1140 = vadd.f32 %v926, %v1045
      %v1141 = vadd.f32 %v927, %v1112
      %v1142 = vadd.f32 %v928, %v1047
      %v1143 = vadd.f32 %v929, %v1049
      %v1144 = vadd.f32 %v930, %v1115
      %v1145 = vadd.f32 %v931, %v1053
      %v1146 = vadd.f32 %v932, %v1055
      %v1147 = vadd.f32 %v933, %v1120
      %v1148 = vadd.f32 %v934, %v1057
      %v1149 = vadd.f32 %v935, %v1059
      %v1150 = vadd.f32 %v936, %v1123
      %v1151 = vadd.f32 %v937, %v1063
      %v1152 = vadd.f32 %v938, %v1065
      %v1153 = vadd.f32 %v939, %v1128
      %v1154 = vmax.f32 %v940, %v947
      %v1155 = vmax.f32 %v941, %v948
      %v1156 = vmax.f32 %v942, %v949
      %v1157 = vmax.f32 %v943, %v950
      %v1158 = vmax.f32 %v944, %v951
      %v1159 = vmax.f32 %v945, %v952
      %v1160 = vmax.f32 %v946, %v953
      %v1161 = vld [vmem:[%s341] sm:$0xff]
      %v1162 = vld [vmem:[%s341 + $0x8] sm:$0xff]
      %v1163 = vld [vmem:[%s341 + $0x10] sm:$0xff]
      %v1164 = vld [vmem:[%s341 + $0x18] sm:$0xff]
      %v1165 = vld [vmem:[%s341 + $0x20] sm:$0xff]
      %v1166 = vld [vmem:[%s341 + $0x28] sm:$0xff]
      %v1167 = vld [vmem:[%s341 + $0x30] sm:$0xff]
      %v1168 = vpack.c.bf16 %v1162, %v1161
      %v1169 = vpack.c.bf16 %v1164, %v1163
      %v1170 = vpack.c.bf16 %v1166, %v1165
      %v1171 = vpack.c.bf16 %v1167, %v1167
      %s1172 = scalar_lea.vmem %s4, 24
      %v1173 = vld [vmem:[%s1172] sm:$0x3f]
      %v1175 = vcombine.high %v1173, %v1173
      %v1177 = vunpack.c.l.s4 1983009808
      %v1178 = vunpack.c.0.s8 %v1177
      %v1179 = vlaneseq
      %v1180 = vshrl.u32 %v1179, 7
      %v1181 = vsub.s32 %v1178, %v1180
      %v1182 = vrot.slane %v1173, %v1181
      %v1184 = vunpack.c.l.s4 1983009808
      %v1185 = vunpack.c.0.s8 %v1184
      %v1186 = vlaneseq
      %v1187 = vshrl.u32 %v1186, 7
      %v1188 = vsub.s32 %v1185, %v1187
      %v1189 = vrot.slane %v1175, %v1188
      %v1190 = vcombine.high %v1182, %v1182
      %v1192 = vsel %vm395, %v1168, 0
      %v1195 = vsel %vm395, %v1169, 0
      %v1198 = vsel %vm395, %v1170, 0
      %v1201 = vsel %vm395, %v1171, 0
      %v1204 = vsel %vm408, %v1182, 0
      %v1207 = vsel %vm408, %v1190, 0
      %v1210 = vsel %vm408, %v1189, 0
      %1212 = vmatprep.subr.bf16.mxu0 0
      %1213 = vmatpush1.bf16.msra.mxu0 0
      %1214 = vmatprep.subr.bf16.mxu0 0
      %1215 = vmatpush1.bf16.msra.mxu0 0
      %1216 = vmatprep.subr.bf16.mxu0 0
      %1217 = vmatpush1.bf16.msra.mxu0 0
      %1218 = vmatprep.subr.bf16.mxu0 0
      %1219 = vmatpush1.bf16.msra.mxu0 0
      %1220 = vmatprep.subr.bf16.mxu0 0
      %1221 = vmatpush1.bf16.msra.mxu0 0
      %1222 = vmatprep.subr.bf16.mxu0 0
      %1223 = vmatpush1.bf16.msra.mxu0 0
      %1224 = vmatprep.subr.bf16.mxu0 0
      %1225 = vmatpush1.bf16.msra.mxu0 0
      %1226 = vmatprep.subr.bf16.mxu0 %v1207
      %1227 = vmatpush1.bf16.msra.mxu0 %v1204
      %1228 = vmatprep.subr.bf16.mxu0 0
      %1229 = vmatpush2.bf16.msra.mxu0 0
      %1230 = vmatprep.subr.bf16.mxu0 0
      %1231 = vmatpush2.bf16.msra.mxu0 0
      %1232 = vmatprep.subr.bf16.mxu0 0
      %1233 = vmatpush2.bf16.msra.mxu0 0
      %1234 = vmatprep.subr.bf16.mxu0 0
      %1235 = vmatpush2.bf16.msra.mxu0 0
      %1236 = vmatprep.subr.bf16.mxu0 0
      %1237 = vmatpush2.bf16.msra.mxu0 0
      %1238 = vmatprep.subr.bf16.mxu0 0
      %1239 = vmatpush2.bf16.msra.mxu0 0
      %1240 = vmatprep.subr.bf16.mxu0 0
      %1241 = vmatpush2.bf16.msra.mxu0 0
      %1242 = vmatprep.subr.bf16.mxu0 0
      %1243 = vmatpush2.bf16.msra.mxu0 0
      %1244 = vmatprep.mubr.bf16.mxu0 0
      %1245 = vmatmul.mubr.bf16.gmra.mxu0 %v1192
      %v1246 = vpop.f32.mrf.mxu0
      %v1247 = vadd.f32 0.0, %v1246
      %v1248 = vpop.f32.mrf.mxu0
      %v1249 = vadd.f32 0.0, %v1248
      %v1250 = vpop.f32.mrf.mxu0
      %v1251 = vadd.f32 0.0, %v1250
      %v1252 = vpop.f32.mrf.mxu0
      %v1253 = vadd.f32 0.0, %v1252
      %1254 = vmatprep.mubr.bf16.mxu0 0
      %1255 = vmatmul.mubr.bf16.gmra.mxu0 %v1195
      %v1256 = vpop.f32.mrf.mxu0
      %v1257 = vadd.f32 0.0, %v1256
      %v1258 = vpop.f32.mrf.mxu0
      %v1259 = vadd.f32 0.0, %v1258
      %v1260 = vpop.f32.mrf.mxu0
      %v1261 = vadd.f32 0.0, %v1260
      %v1262 = vpop.f32.mrf.mxu0
      %v1263 = vadd.f32 0.0, %v1262
      %1264 = vmatprep.mubr.bf16.mxu0 0
      %1265 = vmatmul.mubr.bf16.gmra.mxu0 %v1198
      %v1266 = vpop.f32.mrf.mxu0
      %v1267 = vadd.f32 0.0, %v1266
      %v1268 = vpop.f32.mrf.mxu0
      %v1269 = vadd.f32 0.0, %v1268
      %v1270 = vpop.f32.mrf.mxu0
      %v1271 = vadd.f32 0.0, %v1270
      %v1272 = vpop.f32.mrf.mxu0
      %v1273 = vadd.f32 0.0, %v1272
      %1274 = vmatprep.mubr.bf16.mxu0 0
      %1275 = vmatmul.mubr.bf16.gmra.mxu0 %v1201
      %v1276 = vpop.f32.mrf.mxu0
      %v1277 = vadd.f32 0.0, %v1276
      %v1278 = vpop.f32.mrf.mxu0
      %v1279 = vadd.f32 0.0, %v1278
      %v1280 = vpop.f32.mrf.mxu0
      %v1281 = vpop.f32.mrf.mxu0
      %1282 = vdwg.mxu0
      %1283 = vmatprep.subr.bf16.mxu0 0
      %1284 = vmatpush1.bf16.msra.mxu0 0
      %1285 = vmatprep.subr.bf16.mxu0 0
      %1286 = vmatpush1.bf16.msra.mxu0 0
      %1287 = vmatprep.subr.bf16.mxu0 0
      %1288 = vmatpush1.bf16.msra.mxu0 0
      %1289 = vmatprep.subr.bf16.mxu0 0
      %1290 = vmatpush1.bf16.msra.mxu0 0
      %1291 = vmatprep.subr.bf16.mxu0 0
      %1292 = vmatpush1.bf16.msra.mxu0 0
      %1293 = vmatprep.subr.bf16.mxu0 0
      %1294 = vmatpush1.bf16.msra.mxu0 0
      %1295 = vmatprep.subr.bf16.mxu0 0
      %1296 = vmatpush1.bf16.msra.mxu0 0
      %1297 = vmatprep.subr.bf16.mxu0 0
      %1298 = vmatpush1.bf16.msra.mxu0 %v1210
      %1299 = vmatprep.subr.bf16.mxu0 0
      %1300 = vmatpush2.bf16.msra.mxu0 0
      %1301 = vmatprep.subr.bf16.mxu0 0
      %1302 = vmatpush2.bf16.msra.mxu0 0
      %1303 = vmatprep.subr.bf16.mxu0 0
      %1304 = vmatpush2.bf16.msra.mxu0 0
      %1305 = vmatprep.subr.bf16.mxu0 0
      %1306 = vmatpush2.bf16.msra.mxu0 0
      %1307 = vmatprep.subr.bf16.mxu0 0
      %1308 = vmatpush2.bf16.msra.mxu0 0
      %1309 = vmatprep.subr.bf16.mxu0 0
      %1310 = vmatpush2.bf16.msra.mxu0 0
      %1311 = vmatprep.subr.bf16.mxu0 0
      %1312 = vmatpush2.bf16.msra.mxu0 0
      %1313 = vmatprep.subr.bf16.mxu0 0
      %1314 = vmatpush2.bf16.msra.mxu0 0
      %1315 = vmatprep.mubr.bf16.mxu0 0
      %1316 = vmatmul.mubr.bf16.gmra.mxu0 %v1192
      %v1317 = vpop.f32.mrf.mxu0
      %v1318 = vadd.f32 0.0, %v1317
      %v1319 = vpop.f32.mrf.mxu0
      %v1320 = vpop.f32.mrf.mxu0
      %v1321 = vadd.f32 0.0, %v1320
      %v1322 = vpop.f32.mrf.mxu0
      %1323 = vmatprep.mubr.bf16.mxu0 0
      %1324 = vmatmul.mubr.bf16.gmra.mxu0 %v1195
      %v1325 = vpop.f32.mrf.mxu0
      %v1326 = vadd.f32 0.0, %v1325
      %v1327 = vpop.f32.mrf.mxu0
      %v1328 = vpop.f32.mrf.mxu0
      %v1329 = vadd.f32 0.0, %v1328
      %v1330 = vpop.f32.mrf.mxu0
      %1331 = vmatprep.mubr.bf16.mxu0 0
      %1332 = vmatmul.mubr.bf16.gmra.mxu0 %v1198
      %v1333 = vpop.f32.mrf.mxu0
      %v1334 = vadd.f32 0.0, %v1333
      %v1335 = vpop.f32.mrf.mxu0
      %v1336 = vpop.f32.mrf.mxu0
      %v1337 = vadd.f32 0.0, %v1336
      %v1338 = vpop.f32.mrf.mxu0
      %1339 = vmatprep.mubr.bf16.mxu0 0
      %1340 = vmatmul.mubr.bf16.gmra.mxu0 %v1201
      %v1341 = vpop.f32.mrf.mxu0
      %v1342 = vadd.f32 0.0, %v1341
      %v1343 = vpop.f32.mrf.mxu0
      %v1344 = vpop.f32.mrf.mxu0
      %v1345 = vpop.f32.mrf.mxu0
      %1346 = vdwg.mxu0
      %v1347 = vadd.f32 %v1133, %v1247
      %v1348 = vadd.f32 %v1134, %v1249
      %v1349 = vadd.f32 %v1135, %v1318
      %v1350 = vadd.f32 %v1136, %v1251
      %v1351 = vadd.f32 %v1137, %v1253
      %v1352 = vadd.f32 %v1138, %v1321
      %v1353 = vadd.f32 %v1139, %v1257
      %v1354 = vadd.f32 %v1140, %v1259
      %v1355 = vadd.f32 %v1141, %v1326
      %v1356 = vadd.f32 %v1142, %v1261
      %v1357 = vadd.f32 %v1143, %v1263
      %v1358 = vadd.f32 %v1144, %v1329
      %v1359 = vadd.f32 %v1145, %v1267
      %v1360 = vadd.f32 %v1146, %v1269
      %v1361 = vadd.f32 %v1147, %v1334
      %v1362 = vadd.f32 %v1148, %v1271
      %v1363 = vadd.f32 %v1149, %v1273
      %v1364 = vadd.f32 %v1150, %v1337
      %v1365 = vadd.f32 %v1151, %v1277
      %v1366 = vadd.f32 %v1152, %v1279
      %v1367 = vadd.f32 %v1153, %v1342
      %v1368 = vmax.f32 %v1154, %v1161
      %v1369 = vmax.f32 %v1155, %v1162
      %v1370 = vmax.f32 %v1156, %v1163
      %v1371 = vmax.f32 %v1157, %v1164
      %v1372 = vmax.f32 %v1158, %v1165
      %v1373 = vmax.f32 %v1159, %v1166
      %v1374 = vmax.f32 %v1160, %v1167
      %v1375 = vld [vmem:[%s336 + $0x1] sm:$0xff]
      %v1376 = vld [vmem:[%s336 + $0x9] sm:$0xff]
      %v1377 = vld [vmem:[%s336 + $0x11] sm:$0xff]
      %v1378 = vld [vmem:[%s336 + $0x19] sm:$0xff]
      %v1379 = vld [vmem:[%s336 + $0x21] sm:$0xff]
      %v1380 = vld [vmem:[%s336 + $0x29] sm:$0xff]
      %v1381 = vld [vmem:[%s336 + $0x31] sm:$0xff]
      %v1382 = vpack.c.bf16 %v1376, %v1375
      %v1383 = vpack.c.bf16 %v1378, %v1377
      %v1384 = vpack.c.bf16 %v1380, %v1379
      %v1385 = vpack.c.bf16 %v1381, %v1381
      %s1386 = scalar_lea.vmem %s4, 30
      %v1387 = vld [vmem:[%s1386] sm:$0x3f]
      %v1389 = vcombine.high %v1387, %v1387
      %v1391 = vunpack.c.l.s4 1983009808
      %v1392 = vunpack.c.0.s8 %v1391
      %v1393 = vlaneseq
      %v1394 = vshrl.u32 %v1393, 7
      %v1395 = vsub.s32 %v1392, %v1394
      %v1396 = vrot.slane %v1387, %v1395
      %v1398 = vunpack.c.l.s4 1983009808
      %v1399 = vunpack.c.0.s8 %v1398
      %v1400 = vlaneseq
      %v1401 = vshrl.u32 %v1400, 7
      %v1402 = vsub.s32 %v1399, %v1401
      %v1403 = vrot.slane %v1389, %v1402
      %v1404 = vcombine.high %v1396, %v1396
      %v1406 = vsel %vm395, %v1382, 0
      %v1409 = vsel %vm395, %v1383, 0
      %v1412 = vsel %vm395, %v1384, 0
      %v1415 = vsel %vm395, %v1385, 0
      %v1418 = vsel %vm408, %v1396, 0
      %v1421 = vsel %vm408, %v1404, 0
      %v1424 = vsel %vm408, %v1403, 0
      %1426 = vmatprep.subr.bf16.mxu0 0
      %1427 = vmatpush1.bf16.msra.mxu0 0
      %1428 = vmatprep.subr.bf16.mxu0 0
      %1429 = vmatpush1.bf16.msra.mxu0 0
      %1430 = vmatprep.subr.bf16.mxu0 0
      %1431 = vmatpush1.bf16.msra.mxu0 0
      %1432 = vmatprep.subr.bf16.mxu0 0
      %1433 = vmatpush1.bf16.msra.mxu0 0
      %1434 = vmatprep.subr.bf16.mxu0 0
      %1435 = vmatpush1.bf16.msra.mxu0 0
      %1436 = vmatprep.subr.bf16.mxu0 0
      %1437 = vmatpush1.bf16.msra.mxu0 0
      %1438 = vmatprep.subr.bf16.mxu0 0
      %1439 = vmatpush1.bf16.msra.mxu0 0
      %1440 = vmatprep.subr.bf16.mxu0 %v1421
      %1441 = vmatpush1.bf16.msra.mxu0 %v1418
      %1442 = vmatprep.subr.bf16.mxu0 0
      %1443 = vmatpush2.bf16.msra.mxu0 0
      %1444 = vmatprep.subr.bf16.mxu0 0
      %1445 = vmatpush2.bf16.msra.mxu0 0
      %1446 = vmatprep.subr.bf16.mxu0 0
      %1447 = vmatpush2.bf16.msra.mxu0 0
      %1448 = vmatprep.subr.bf16.mxu0 0
      %1449 = vmatpush2.bf16.msra.mxu0 0
      %1450 = vmatprep.subr.bf16.mxu0 0
      %1451 = vmatpush2.bf16.msra.mxu0 0
      %1452 = vmatprep.subr.bf16.mxu0 0
      %1453 = vmatpush2.bf16.msra.mxu0 0
      %1454 = vmatprep.subr.bf16.mxu0 0
      %1455 = vmatpush2.bf16.msra.mxu0 0
      %1456 = vmatprep.subr.bf16.mxu0 0
      %1457 = vmatpush2.bf16.msra.mxu0 0
      %1458 = vmatprep.mubr.bf16.mxu0 0
      %1459 = vmatmul.mubr.bf16.gmra.mxu0 %v1406
      %v1460 = vpop.f32.mrf.mxu0
      %v1461 = vadd.f32 0.0, %v1460
      %v1462 = vpop.f32.mrf.mxu0
      %v1463 = vadd.f32 0.0, %v1462
      %v1464 = vpop.f32.mrf.mxu0
      %v1465 = vadd.f32 0.0, %v1464
      %v1466 = vpop.f32.mrf.mxu0
      %v1467 = vadd.f32 0.0, %v1466
      %1468 = vmatprep.mubr.bf16.mxu0 0
      %1469 = vmatmul.mubr.bf16.gmra.mxu0 %v1409
      %v1470 = vpop.f32.mrf.mxu0
      %v1471 = vadd.f32 0.0, %v1470
      %v1472 = vpop.f32.mrf.mxu0
      %v1473 = vadd.f32 0.0, %v1472
      %v1474 = vpop.f32.mrf.mxu0
      %v1475 = vadd.f32 0.0, %v1474
      %v1476 = vpop.f32.mrf.mxu0
      %v1477 = vadd.f32 0.0, %v1476
      %1478 = vmatprep.mubr.bf16.mxu0 0
      %1479 = vmatmul.mubr.bf16.gmra.mxu0 %v1412
      %v1480 = vpop.f32.mrf.mxu0
      %v1481 = vadd.f32 0.0, %v1480
      %v1482 = vpop.f32.mrf.mxu0
      %v1483 = vadd.f32 0.0, %v1482
      %v1484 = vpop.f32.mrf.mxu0
      %v1485 = vadd.f32 0.0, %v1484
      %v1486 = vpop.f32.mrf.mxu0
      %v1487 = vadd.f32 0.0, %v1486
      %1488 = vmatprep.mubr.bf16.mxu0 0
      %1489 = vmatmul.mubr.bf16.gmra.mxu0 %v1415
      %v1490 = vpop.f32.mrf.mxu0
      %v1491 = vadd.f32 0.0, %v1490
      %v1492 = vpop.f32.mrf.mxu0
      %v1493 = vadd.f32 0.0, %v1492
      %v1494 = vpop.f32.mrf.mxu0
      %v1495 = vpop.f32.mrf.mxu0
      %1496 = vdwg.mxu0
      %1497 = vmatprep.subr.bf16.mxu0 0
      %1498 = vmatpush1.bf16.msra.mxu0 0
      %1499 = vmatprep.subr.bf16.mxu0 0
      %1500 = vmatpush1.bf16.msra.mxu0 0
      %1501 = vmatprep.subr.bf16.mxu0 0
      %1502 = vmatpush1.bf16.msra.mxu0 0
      %1503 = vmatprep.subr.bf16.mxu0 0
      %1504 = vmatpush1.bf16.msra.mxu0 0
      %1505 = vmatprep.subr.bf16.mxu0 0
      %1506 = vmatpush1.bf16.msra.mxu0 0
      %1507 = vmatprep.subr.bf16.mxu0 0
      %1508 = vmatpush1.bf16.msra.mxu0 0
      %1509 = vmatprep.subr.bf16.mxu0 0
      %1510 = vmatpush1.bf16.msra.mxu0 0
      %1511 = vmatprep.subr.bf16.mxu0 0
      %1512 = vmatpush1.bf16.msra.mxu0 %v1424
      %1513 = vmatprep.subr.bf16.mxu0 0
      %1514 = vmatpush2.bf16.msra.mxu0 0
      %1515 = vmatprep.subr.bf16.mxu0 0
      %1516 = vmatpush2.bf16.msra.mxu0 0
      %1517 = vmatprep.subr.bf16.mxu0 0
      %1518 = vmatpush2.bf16.msra.mxu0 0
      %1519 = vmatprep.subr.bf16.mxu0 0
      %1520 = vmatpush2.bf16.msra.mxu0 0
      %1521 = vmatprep.subr.bf16.mxu0 0
      %1522 = vmatpush2.bf16.msra.mxu0 0
      %1523 = vmatprep.subr.bf16.mxu0 0
      %1524 = vmatpush2.bf16.msra.mxu0 0
      %1525 = vmatprep.subr.bf16.mxu0 0
      %1526 = vmatpush2.bf16.msra.mxu0 0
      %1527 = vmatprep.subr.bf16.mxu0 0
      %1528 = vmatpush2.bf16.msra.mxu0 0
      %1529 = vmatprep.mubr.bf16.mxu0 0
      %1530 = vmatmul.mubr.bf16.gmra.mxu0 %v1406
      %v1531 = vpop.f32.mrf.mxu0
      %v1532 = vadd.f32 0.0, %v1531
      %v1533 = vpop.f32.mrf.mxu0
      %v1534 = vpop.f32.mrf.mxu0
      %v1535 = vadd.f32 0.0, %v1534
      %v1536 = vpop.f32.mrf.mxu0
      %1537 = vmatprep.mubr.bf16.mxu0 0
      %1538 = vmatmul.mubr.bf16.gmra.mxu0 %v1409
      %v1539 = vpop.f32.mrf.mxu0
      %v1540 = vadd.f32 0.0, %v1539
      %v1541 = vpop.f32.mrf.mxu0
      %v1542 = vpop.f32.mrf.mxu0
      %v1543 = vadd.f32 0.0, %v1542
      %v1544 = vpop.f32.mrf.mxu0
      %1545 = vmatprep.mubr.bf16.mxu0 0
      %1546 = vmatmul.mubr.bf16.gmra.mxu0 %v1412
      %v1547 = vpop.f32.mrf.mxu0
      %v1548 = vadd.f32 0.0, %v1547
      %v1549 = vpop.f32.mrf.mxu0
      %v1550 = vpop.f32.mrf.mxu0
      %v1551 = vadd.f32 0.0, %v1550
      %v1552 = vpop.f32.mrf.mxu0
      %1553 = vmatprep.mubr.bf16.mxu0 0
      %1554 = vmatmul.mubr.bf16.gmra.mxu0 %v1415
      %v1555 = vpop.f32.mrf.mxu0
      %v1556 = vadd.f32 0.0, %v1555
      %v1557 = vpop.f32.mrf.mxu0
      %v1558 = vpop.f32.mrf.mxu0
      %v1559 = vpop.f32.mrf.mxu0
      %1560 = vdwg.mxu0
      %v1561 = vadd.f32 %v1347, %v1461
      %v1562 = vadd.f32 %v1348, %v1463
      %v1563 = vadd.f32 %v1349, %v1532
      %v1564 = vadd.f32 %v1350, %v1465
      %v1565 = vadd.f32 %v1351, %v1467
      %v1566 = vadd.f32 %v1352, %v1535
      %v1567 = vadd.f32 %v1353, %v1471
      %v1568 = vadd.f32 %v1354, %v1473
      %v1569 = vadd.f32 %v1355, %v1540
      %v1570 = vadd.f32 %v1356, %v1475
      %v1571 = vadd.f32 %v1357, %v1477
      %v1572 = vadd.f32 %v1358, %v1543
      %v1573 = vadd.f32 %v1359, %v1481
      %v1574 = vadd.f32 %v1360, %v1483
      %v1575 = vadd.f32 %v1361, %v1548
      %v1576 = vadd.f32 %v1362, %v1485
      %v1577 = vadd.f32 %v1363, %v1487
      %v1578 = vadd.f32 %v1364, %v1551
      %v1579 = vadd.f32 %v1365, %v1491
      %v1580 = vadd.f32 %v1366, %v1493
      %v1581 = vadd.f32 %v1367, %v1556
      %v1582 = vmax.f32 %v1368, %v1375
      %v1583 = vmax.f32 %v1369, %v1376
      %v1584 = vmax.f32 %v1370, %v1377
      %v1585 = vmax.f32 %v1371, %v1378
      %v1586 = vmax.f32 %v1372, %v1379
      %v1587 = vmax.f32 %v1373, %v1380
      %v1588 = vmax.f32 %v1374, %v1381
      %v1589 = vld [vmem:[%s326 + $0x8] sm:$0xff]
      %v1590 = vld [vmem:[%s326 + $0x10] sm:$0xff]
      %v1591 = vld [vmem:[%s326 + $0x18] sm:$0xff]
      %v1592 = vld [vmem:[%s326 + $0x20] sm:$0xff]
      %v1593 = vld [vmem:[%s326 + $0x28] sm:$0xff]
      %v1594 = vld [vmem:[%s326 + $0x30] sm:$0xff]
      %v1595 = vld [vmem:[%s326 + $0x38] sm:$0xff]
      %v1596 = vpack.c.bf16 %v1590, %v1589
      %v1597 = vpack.c.bf16 %v1592, %v1591
      %v1598 = vpack.c.bf16 %v1594, %v1593
      %v1599 = vpack.c.bf16 %v1595, %v1595
      %s1600 = scalar_lea.vmem %s4, 36
      %v1601 = vld [vmem:[%s1600] sm:$0x3f]
      %v1603 = vcombine.high %v1601, %v1601
      %v1605 = vunpack.c.l.s4 1983009808
      %v1606 = vunpack.c.0.s8 %v1605
      %v1607 = vlaneseq
      %v1608 = vshrl.u32 %v1607, 7
      %v1609 = vsub.s32 %v1606, %v1608
      %v1610 = vrot.slane %v1601, %v1609
      %v1612 = vunpack.c.l.s4 1983009808
      %v1613 = vunpack.c.0.s8 %v1612
      %v1614 = vlaneseq
      %v1615 = vshrl.u32 %v1614, 7
      %v1616 = vsub.s32 %v1613, %v1615
      %v1617 = vrot.slane %v1603, %v1616
      %v1618 = vcombine.high %v1610, %v1610
      %v1620 = vsel %vm395, %v1596, 0
      %v1623 = vsel %vm395, %v1597, 0
      %v1626 = vsel %vm395, %v1598, 0
      %v1629 = vsel %vm395, %v1599, 0
      %v1632 = vsel %vm408, %v1610, 0
      %v1635 = vsel %vm408, %v1618, 0
      %v1638 = vsel %vm408, %v1617, 0
      %1640 = vmatprep.subr.bf16.mxu0 0
      %1641 = vmatpush1.bf16.msra.mxu0 0
      %1642 = vmatprep.subr.bf16.mxu0 0
      %1643 = vmatpush1.bf16.msra.mxu0 0
      %1644 = vmatprep.subr.bf16.mxu0 0
      %1645 = vmatpush1.bf16.msra.mxu0 0
      %1646 = vmatprep.subr.bf16.mxu0 0
      %1647 = vmatpush1.bf16.msra.mxu0 0
      %1648 = vmatprep.subr.bf16.mxu0 0
      %1649 = vmatpush1.bf16.msra.mxu0 0
      %1650 = vmatprep.subr.bf16.mxu0 0
      %1651 = vmatpush1.bf16.msra.mxu0 0
      %1652 = vmatprep.subr.bf16.mxu0 0
      %1653 = vmatpush1.bf16.msra.mxu0 0
      %1654 = vmatprep.subr.bf16.mxu0 %v1635
      %1655 = vmatpush1.bf16.msra.mxu0 %v1632
      %1656 = vmatprep.subr.bf16.mxu0 0
      %1657 = vmatpush2.bf16.msra.mxu0 0
      %1658 = vmatprep.subr.bf16.mxu0 0
      %1659 = vmatpush2.bf16.msra.mxu0 0
      %1660 = vmatprep.subr.bf16.mxu0 0
      %1661 = vmatpush2.bf16.msra.mxu0 0
      %1662 = vmatprep.subr.bf16.mxu0 0
      %1663 = vmatpush2.bf16.msra.mxu0 0
      %1664 = vmatprep.subr.bf16.mxu0 0
      %1665 = vmatpush2.bf16.msra.mxu0 0
      %1666 = vmatprep.subr.bf16.mxu0 0
      %1667 = vmatpush2.bf16.msra.mxu0 0
      %1668 = vmatprep.subr.bf16.mxu0 0
      %1669 = vmatpush2.bf16.msra.mxu0 0
      %1670 = vmatprep.subr.bf16.mxu0 0
      %1671 = vmatpush2.bf16.msra.mxu0 0
      %1672 = vmatprep.mubr.bf16.mxu0 0
      %1673 = vmatmul.mubr.bf16.gmra.mxu0 %v1620
      %v1674 = vpop.f32.mrf.mxu0
      %v1675 = vadd.f32 0.0, %v1674
      %v1676 = vpop.f32.mrf.mxu0
      %v1677 = vadd.f32 0.0, %v1676
      %v1678 = vpop.f32.mrf.mxu0
      %v1679 = vadd.f32 0.0, %v1678
      %v1680 = vpop.f32.mrf.mxu0
      %v1681 = vadd.f32 0.0, %v1680
      %1682 = vmatprep.mubr.bf16.mxu0 0
      %1683 = vmatmul.mubr.bf16.gmra.mxu0 %v1623
      %v1684 = vpop.f32.mrf.mxu0
      %v1685 = vadd.f32 0.0, %v1684
      %v1686 = vpop.f32.mrf.mxu0
      %v1687 = vadd.f32 0.0, %v1686
      %v1688 = vpop.f32.mrf.mxu0
      %v1689 = vadd.f32 0.0, %v1688
      %v1690 = vpop.f32.mrf.mxu0
      %v1691 = vadd.f32 0.0, %v1690
      %1692 = vmatprep.mubr.bf16.mxu0 0
      %1693 = vmatmul.mubr.bf16.gmra.mxu0 %v1626
      %v1694 = vpop.f32.mrf.mxu0
      %v1695 = vadd.f32 0.0, %v1694
      %v1696 = vpop.f32.mrf.mxu0
      %v1697 = vadd.f32 0.0, %v1696
      %v1698 = vpop.f32.mrf.mxu0
      %v1699 = vadd.f32 0.0, %v1698
      %v1700 = vpop.f32.mrf.mxu0
      %v1701 = vadd.f32 0.0, %v1700
      %1702 = vmatprep.mubr.bf16.mxu0 0
      %1703 = vmatmul.mubr.bf16.gmra.mxu0 %v1629
      %v1704 = vpop.f32.mrf.mxu0
      %v1705 = vadd.f32 0.0, %v1704
      %v1706 = vpop.f32.mrf.mxu0
      %v1707 = vadd.f32 0.0, %v1706
      %v1708 = vpop.f32.mrf.mxu0
      %v1709 = vpop.f32.mrf.mxu0
      %1710 = vdwg.mxu0
      %1711 = vmatprep.subr.bf16.mxu0 0
      %1712 = vmatpush1.bf16.msra.mxu0 0
      %1713 = vmatprep.subr.bf16.mxu0 0
      %1714 = vmatpush1.bf16.msra.mxu0 0
      %1715 = vmatprep.subr.bf16.mxu0 0
      %1716 = vmatpush1.bf16.msra.mxu0 0
      %1717 = vmatprep.subr.bf16.mxu0 0
      %1718 = vmatpush1.bf16.msra.mxu0 0
      %1719 = vmatprep.subr.bf16.mxu0 0
      %1720 = vmatpush1.bf16.msra.mxu0 0
      %1721 = vmatprep.subr.bf16.mxu0 0
      %1722 = vmatpush1.bf16.msra.mxu0 0
      %1723 = vmatprep.subr.bf16.mxu0 0
      %1724 = vmatpush1.bf16.msra.mxu0 0
      %1725 = vmatprep.subr.bf16.mxu0 0
      %1726 = vmatpush1.bf16.msra.mxu0 %v1638
      %1727 = vmatprep.subr.bf16.mxu0 0
      %1728 = vmatpush2.bf16.msra.mxu0 0
      %1729 = vmatprep.subr.bf16.mxu0 0
      %1730 = vmatpush2.bf16.msra.mxu0 0
      %1731 = vmatprep.subr.bf16.mxu0 0
      %1732 = vmatpush2.bf16.msra.mxu0 0
      %1733 = vmatprep.subr.bf16.mxu0 0
      %1734 = vmatpush2.bf16.msra.mxu0 0
      %1735 = vmatprep.subr.bf16.mxu0 0
      %1736 = vmatpush2.bf16.msra.mxu0 0
      %1737 = vmatprep.subr.bf16.mxu0 0
      %1738 = vmatpush2.bf16.msra.mxu0 0
      %1739 = vmatprep.subr.bf16.mxu0 0
      %1740 = vmatpush2.bf16.msra.mxu0 0
      %1741 = vmatprep.subr.bf16.mxu0 0
      %1742 = vmatpush2.bf16.msra.mxu0 0
      %1743 = vmatprep.mubr.bf16.mxu0 0
      %1744 = vmatmul.mubr.bf16.gmra.mxu0 %v1620
      %v1745 = vpop.f32.mrf.mxu0
      %v1746 = vadd.f32 0.0, %v1745
      %v1747 = vpop.f32.mrf.mxu0
      %v1748 = vpop.f32.mrf.mxu0
      %v1749 = vadd.f32 0.0, %v1748
      %v1750 = vpop.f32.mrf.mxu0
      %1751 = vmatprep.mubr.bf16.mxu0 0
      %1752 = vmatmul.mubr.bf16.gmra.mxu0 %v1623
      %v1753 = vpop.f32.mrf.mxu0
      %v1754 = vadd.f32 0.0, %v1753
      %v1755 = vpop.f32.mrf.mxu0
      %v1756 = vpop.f32.mrf.mxu0
      %v1757 = vadd.f32 0.0, %v1756
      %v1758 = vpop.f32.mrf.mxu0
      %1759 = vmatprep.mubr.bf16.mxu0 0
      %1760 = vmatmul.mubr.bf16.gmra.mxu0 %v1626
      %v1761 = vpop.f32.mrf.mxu0
      %v1762 = vadd.f32 0.0, %v1761
      %v1763 = vpop.f32.mrf.mxu0
      %v1764 = vpop.f32.mrf.mxu0
      %v1765 = vadd.f32 0.0, %v1764
      %v1766 = vpop.f32.mrf.mxu0
      %1767 = vmatprep.mubr.bf16.mxu0 0
      %1768 = vmatmul.mubr.bf16.gmra.mxu0 %v1629
      %v1769 = vpop.f32.mrf.mxu0
      %v1770 = vadd.f32 0.0, %v1769
      %v1771 = vpop.f32.mrf.mxu0
      %v1772 = vpop.f32.mrf.mxu0
      %v1773 = vpop.f32.mrf.mxu0
      %1774 = vdwg.mxu0
      %v1775 = vadd.f32 %v1561, %v1675
      %v1776 = vadd.f32 %v1562, %v1677
      %v1777 = vadd.f32 %v1563, %v1746
      %v1778 = vadd.f32 %v1564, %v1679
      %v1779 = vadd.f32 %v1565, %v1681
      %v1780 = vadd.f32 %v1566, %v1749
      %v1781 = vadd.f32 %v1567, %v1685
      %v1782 = vadd.f32 %v1568, %v1687
      %v1783 = vadd.f32 %v1569, %v1754
      %v1784 = vadd.f32 %v1570, %v1689
      %v1785 = vadd.f32 %v1571, %v1691
      %v1786 = vadd.f32 %v1572, %v1757
      %v1787 = vadd.f32 %v1573, %v1695
      %v1788 = vadd.f32 %v1574, %v1697
      %v1789 = vadd.f32 %v1575, %v1762
      %v1790 = vadd.f32 %v1576, %v1699
      %v1791 = vadd.f32 %v1577, %v1701
      %v1792 = vadd.f32 %v1578, %v1765
      %v1793 = vadd.f32 %v1579, %v1705
      %v1794 = vadd.f32 %v1580, %v1707
      %v1795 = vadd.f32 %v1581, %v1770
      %v1796 = vmax.f32 %v1582, %v1589
      %v1797 = vmax.f32 %v1583, %v1590
      %v1798 = vmax.f32 %v1584, %v1591
      %v1799 = vmax.f32 %v1585, %v1592
      %v1800 = vmax.f32 %v1586, %v1593
      %v1801 = vmax.f32 %v1587, %v1594
      %v1802 = vmax.f32 %v1588, %v1595
      %v1803 = vld [vmem:[%s331 + $0x8] sm:$0xff]
      %v1804 = vld [vmem:[%s331 + $0x10] sm:$0xff]
      %v1805 = vld [vmem:[%s331 + $0x18] sm:$0xff]
      %v1806 = vld [vmem:[%s331 + $0x20] sm:$0xff]
      %v1807 = vld [vmem:[%s331 + $0x28] sm:$0xff]
      %v1808 = vld [vmem:[%s331 + $0x30] sm:$0xff]
      %v1809 = vld [vmem:[%s331 + $0x38] sm:$0xff]
      %v1810 = vpack.c.bf16 %v1804, %v1803
      %v1811 = vpack.c.bf16 %v1806, %v1805
      %v1812 = vpack.c.bf16 %v1808, %v1807
      %v1813 = vpack.c.bf16 %v1809, %v1809
      %s1814 = scalar_lea.vmem %s4, 42
      %v1815 = vld [vmem:[%s1814] sm:$0x3f]
      %v1817 = vcombine.high %v1815, %v1815
      %v1819 = vunpack.c.l.s4 1983009808
      %v1820 = vunpack.c.0.s8 %v1819
      %v1821 = vlaneseq
      %v1822 = vshrl.u32 %v1821, 7
      %v1823 = vsub.s32 %v1820, %v1822
      %v1824 = vrot.slane %v1815, %v1823
      %v1826 = vunpack.c.l.s4 1983009808
      %v1827 = vunpack.c.0.s8 %v1826
      %v1828 = vlaneseq
      %v1829 = vshrl.u32 %v1828, 7
      %v1830 = vsub.s32 %v1827, %v1829
      %v1831 = vrot.slane %v1817, %v1830
      %v1832 = vcombine.high %v1824, %v1824
      %v1834 = vsel %vm395, %v1810, 0
      %v1837 = vsel %vm395, %v1811, 0
      %v1840 = vsel %vm395, %v1812, 0
      %v1843 = vsel %vm395, %v1813, 0
      %v1846 = vsel %vm408, %v1824, 0
      %v1849 = vsel %vm408, %v1832, 0
      %v1852 = vsel %vm408, %v1831, 0
      %1854 = vmatprep.subr.bf16.mxu0 0
      %1855 = vmatpush1.bf16.msra.mxu0 0
      %1856 = vmatprep.subr.bf16.mxu0 0
      %1857 = vmatpush1.bf16.msra.mxu0 0
      %1858 = vmatprep.subr.bf16.mxu0 0
      %1859 = vmatpush1.bf16.msra.mxu0 0
      %1860 = vmatprep.subr.bf16.mxu0 0
      %1861 = vmatpush1.bf16.msra.mxu0 0
      %1862 = vmatprep.subr.bf16.mxu0 0
      %1863 = vmatpush1.bf16.msra.mxu0 0
      %1864 = vmatprep.subr.bf16.mxu0 0
      %1865 = vmatpush1.bf16.msra.mxu0 0
      %1866 = vmatprep.subr.bf16.mxu0 0
      %1867 = vmatpush1.bf16.msra.mxu0 0
      %1868 = vmatprep.subr.bf16.mxu0 %v1849
      %1869 = vmatpush1.bf16.msra.mxu0 %v1846
      %1870 = vmatprep.subr.bf16.mxu0 0
      %1871 = vmatpush2.bf16.msra.mxu0 0
      %1872 = vmatprep.subr.bf16.mxu0 0
      %1873 = vmatpush2.bf16.msra.mxu0 0
      %1874 = vmatprep.subr.bf16.mxu0 0
      %1875 = vmatpush2.bf16.msra.mxu0 0
      %1876 = vmatprep.subr.bf16.mxu0 0
      %1877 = vmatpush2.bf16.msra.mxu0 0
      %1878 = vmatprep.subr.bf16.mxu0 0
      %1879 = vmatpush2.bf16.msra.mxu0 0
      %1880 = vmatprep.subr.bf16.mxu0 0
      %1881 = vmatpush2.bf16.msra.mxu0 0
      %1882 = vmatprep.subr.bf16.mxu0 0
      %1883 = vmatpush2.bf16.msra.mxu0 0
      %1884 = vmatprep.subr.bf16.mxu0 0
      %1885 = vmatpush2.bf16.msra.mxu0 0
      %1886 = vmatprep.mubr.bf16.mxu0 0
      %1887 = vmatmul.mubr.bf16.gmra.mxu0 %v1834
      %v1888 = vpop.f32.mrf.mxu0
      %v1889 = vadd.f32 0.0, %v1888
      %v1890 = vpop.f32.mrf.mxu0
      %v1891 = vadd.f32 0.0, %v1890
      %v1892 = vpop.f32.mrf.mxu0
      %v1893 = vadd.f32 0.0, %v1892
      %v1894 = vpop.f32.mrf.mxu0
      %v1895 = vadd.f32 0.0, %v1894
      %1896 = vmatprep.mubr.bf16.mxu0 0
      %1897 = vmatmul.mubr.bf16.gmra.mxu0 %v1837
      %v1898 = vpop.f32.mrf.mxu0
      %v1899 = vadd.f32 0.0, %v1898
      %v1900 = vpop.f32.mrf.mxu0
      %v1901 = vadd.f32 0.0, %v1900
      %v1902 = vpop.f32.mrf.mxu0
      %v1903 = vadd.f32 0.0, %v1902
      %v1904 = vpop.f32.mrf.mxu0
      %v1905 = vadd.f32 0.0, %v1904
      %1906 = vmatprep.mubr.bf16.mxu0 0
      %1907 = vmatmul.mubr.bf16.gmra.mxu0 %v1840
      %v1908 = vpop.f32.mrf.mxu0
      %v1909 = vadd.f32 0.0, %v1908
      %v1910 = vpop.f32.mrf.mxu0
      %v1911 = vadd.f32 0.0, %v1910
      %v1912 = vpop.f32.mrf.mxu0
      %v1913 = vadd.f32 0.0, %v1912
      %v1914 = vpop.f32.mrf.mxu0
      %v1915 = vadd.f32 0.0, %v1914
      %1916 = vmatprep.mubr.bf16.mxu0 0
      %1917 = vmatmul.mubr.bf16.gmra.mxu0 %v1843
      %v1918 = vpop.f32.mrf.mxu0
      %v1919 = vadd.f32 0.0, %v1918
      %v1920 = vpop.f32.mrf.mxu0
      %v1921 = vadd.f32 0.0, %v1920
      %v1922 = vpop.f32.mrf.mxu0
      %v1923 = vpop.f32.mrf.mxu0
      %1924 = vdwg.mxu0
      %1925 = vmatprep.subr.bf16.mxu0 0
      %1926 = vmatpush1.bf16.msra.mxu0 0
      %1927 = vmatprep.subr.bf16.mxu0 0
      %1928 = vmatpush1.bf16.msra.mxu0 0
      %1929 = vmatprep.subr.bf16.mxu0 0
      %1930 = vmatpush1.bf16.msra.mxu0 0
      %1931 = vmatprep.subr.bf16.mxu0 0
      %1932 = vmatpush1.bf16.msra.mxu0 0
      %1933 = vmatprep.subr.bf16.mxu0 0
      %1934 = vmatpush1.bf16.msra.mxu0 0
      %1935 = vmatprep.subr.bf16.mxu0 0
      %1936 = vmatpush1.bf16.msra.mxu0 0
      %1937 = vmatprep.subr.bf16.mxu0 0
      %1938 = vmatpush1.bf16.msra.mxu0 0
      %1939 = vmatprep.subr.bf16.mxu0 0
      %1940 = vmatpush1.bf16.msra.mxu0 %v1852
      %1941 = vmatprep.subr.bf16.mxu0 0
      %1942 = vmatpush2.bf16.msra.mxu0 0
      %1943 = vmatprep.subr.bf16.mxu0 0
      %1944 = vmatpush2.bf16.msra.mxu0 0
      %1945 = vmatprep.subr.bf16.mxu0 0
      %1946 = vmatpush2.bf16.msra.mxu0 0
      %1947 = vmatprep.subr.bf16.mxu0 0
      %1948 = vmatpush2.bf16.msra.mxu0 0
      %1949 = vmatprep.subr.bf16.mxu0 0
      %1950 = vmatpush2.bf16.msra.mxu0 0
      %1951 = vmatprep.subr.bf16.mxu0 0
      %1952 = vmatpush2.bf16.msra.mxu0 0
      %1953 = vmatprep.subr.bf16.mxu0 0
      %1954 = vmatpush2.bf16.msra.mxu0 0
      %1955 = vmatprep.subr.bf16.mxu0 0
      %1956 = vmatpush2.bf16.msra.mxu0 0
      %1957 = vmatprep.mubr.bf16.mxu0 0
      %1958 = vmatmul.mubr.bf16.gmra.mxu0 %v1834
      %v1959 = vpop.f32.mrf.mxu0
      %v1960 = vadd.f32 0.0, %v1959
      %v1961 = vpop.f32.mrf.mxu0
      %v1962 = vpop.f32.mrf.mxu0
      %v1963 = vadd.f32 0.0, %v1962
      %v1964 = vpop.f32.mrf.mxu0
      %1965 = vmatprep.mubr.bf16.mxu0 0
      %1966 = vmatmul.mubr.bf16.gmra.mxu0 %v1837
      %v1967 = vpop.f32.mrf.mxu0
      %v1968 = vadd.f32 0.0, %v1967
      %v1969 = vpop.f32.mrf.mxu0
      %v1970 = vpop.f32.mrf.mxu0
      %v1971 = vadd.f32 0.0, %v1970
      %v1972 = vpop.f32.mrf.mxu0
      %1973 = vmatprep.mubr.bf16.mxu0 0
      %1974 = vmatmul.mubr.bf16.gmra.mxu0 %v1840
      %v1975 = vpop.f32.mrf.mxu0
      %v1976 = vadd.f32 0.0, %v1975
      %v1977 = vpop.f32.mrf.mxu0
      %v1978 = vpop.f32.mrf.mxu0
      %v1979 = vadd.f32 0.0, %v1978
      %v1980 = vpop.f32.mrf.mxu0
      %1981 = vmatprep.mubr.bf16.mxu0 0
      %1982 = vmatmul.mubr.bf16.gmra.mxu0 %v1843
      %v1983 = vpop.f32.mrf.mxu0
      %v1984 = vadd.f32 0.0, %v1983
      %v1985 = vpop.f32.mrf.mxu0
      %v1986 = vpop.f32.mrf.mxu0
      %v1987 = vpop.f32.mrf.mxu0
      %1988 = vdwg.mxu0
      %v1989 = vadd.f32 %v1775, %v1889
      %v1990 = vadd.f32 %v1776, %v1891
      %v1991 = vadd.f32 %v1777, %v1960
      %v1992 = vadd.f32 %v1778, %v1893
      %v1993 = vadd.f32 %v1779, %v1895
      %v1994 = vadd.f32 %v1780, %v1963
      %v1995 = vadd.f32 %v1781, %v1899
      %v1996 = vadd.f32 %v1782, %v1901
      %v1997 = vadd.f32 %v1783, %v1968
      %v1998 = vadd.f32 %v1784, %v1903
      %v1999 = vadd.f32 %v1785, %v1905
      %v2000 = vadd.f32 %v1786, %v1971
      %v2001 = vadd.f32 %v1787, %v1909
      %v2002 = vadd.f32 %v1788, %v1911
      %v2003 = vadd.f32 %v1789, %v1976
      %v2004 = vadd.f32 %v1790, %v1913
      %v2005 = vadd.f32 %v1791, %v1915
      %v2006 = vadd.f32 %v1792, %v1979
      %v2007 = vadd.f32 %v1793, %v1919
      %v2008 = vadd.f32 %v1794, %v1921
      %v2009 = vadd.f32 %v1795, %v1984
      %v2010 = vmax.f32 %v1796, %v1803
      %v2011 = vmax.f32 %v1797, %v1804
      %v2012 = vmax.f32 %v1798, %v1805
      %v2013 = vmax.f32 %v1799, %v1806
      %v2014 = vmax.f32 %v1800, %v1807
      %v2015 = vmax.f32 %v1801, %v1808
      %v2016 = vmax.f32 %v1802, %v1809
      %v2017 = vld [vmem:[%s326 + $0x9] sm:$0xff]
      %v2018 = vld [vmem:[%s326 + $0x11] sm:$0xff]
      %v2019 = vld [vmem:[%s326 + $0x19] sm:$0xff]
      %v2020 = vld [vmem:[%s326 + $0x21] sm:$0xff]
      %v2021 = vld [vmem:[%s326 + $0x29] sm:$0xff]
      %v2022 = vld [vmem:[%s326 + $0x31] sm:$0xff]
      %v2023 = vld [vmem:[%s326 + $0x39] sm:$0xff]
      %v2024 = vpack.c.bf16 %v2018, %v2017
      %v2025 = vpack.c.bf16 %v2020, %v2019
      %v2026 = vpack.c.bf16 %v2022, %v2021
      %v2027 = vpack.c.bf16 %v2023, %v2023
      %s2028 = scalar_lea.vmem %s4, 48
      %v2029 = vld [vmem:[%s2028] sm:$0x3f]
      %v2031 = vcombine.high %v2029, %v2029
      %v2033 = vunpack.c.l.s4 1983009808
      %v2034 = vunpack.c.0.s8 %v2033
      %v2035 = vlaneseq
      %v2036 = vshrl.u32 %v2035, 7
      %v2037 = vsub.s32 %v2034, %v2036
      %v2038 = vrot.slane %v2029, %v2037
      %v2040 = vunpack.c.l.s4 1983009808
      %v2041 = vunpack.c.0.s8 %v2040
      %v2042 = vlaneseq
      %v2043 = vshrl.u32 %v2042, 7
      %v2044 = vsub.s32 %v2041, %v2043
      %v2045 = vrot.slane %v2031, %v2044
      %v2046 = vcombine.high %v2038, %v2038
      %v2048 = vsel %vm395, %v2024, 0
      %v2051 = vsel %vm395, %v2025, 0
      %v2054 = vsel %vm395, %v2026, 0
      %v2057 = vsel %vm395, %v2027, 0
      %v2060 = vsel %vm408, %v2038, 0
      %v2063 = vsel %vm408, %v2046, 0
      %v2066 = vsel %vm408, %v2045, 0
      %2068 = vmatprep.subr.bf16.mxu0 0
      %2069 = vmatpush1.bf16.msra.mxu0 0
      %2070 = vmatprep.subr.bf16.mxu0 0
      %2071 = vmatpush1.bf16.msra.mxu0 0
      %2072 = vmatprep.subr.bf16.mxu0 0
      %2073 = vmatpush1.bf16.msra.mxu0 0
      %2074 = vmatprep.subr.bf16.mxu0 0
      %2075 = vmatpush1.bf16.msra.mxu0 0
      %2076 = vmatprep.subr.bf16.mxu0 0
      %2077 = vmatpush1.bf16.msra.mxu0 0
      %2078 = vmatprep.subr.bf16.mxu0 0
      %2079 = vmatpush1.bf16.msra.mxu0 0
      %2080 = vmatprep.subr.bf16.mxu0 0
      %2081 = vmatpush1.bf16.msra.mxu0 0
      %2082 = vmatprep.subr.bf16.mxu0 %v2063
      %2083 = vmatpush1.bf16.msra.mxu0 %v2060
      %2084 = vmatprep.subr.bf16.mxu0 0
      %2085 = vmatpush2.bf16.msra.mxu0 0
      %2086 = vmatprep.subr.bf16.mxu0 0
      %2087 = vmatpush2.bf16.msra.mxu0 0
      %2088 = vmatprep.subr.bf16.mxu0 0
      %2089 = vmatpush2.bf16.msra.mxu0 0
      %2090 = vmatprep.subr.bf16.mxu0 0
      %2091 = vmatpush2.bf16.msra.mxu0 0
      %2092 = vmatprep.subr.bf16.mxu0 0
      %2093 = vmatpush2.bf16.msra.mxu0 0
      %2094 = vmatprep.subr.bf16.mxu0 0
      %2095 = vmatpush2.bf16.msra.mxu0 0
      %2096 = vmatprep.subr.bf16.mxu0 0
      %2097 = vmatpush2.bf16.msra.mxu0 0
      %2098 = vmatprep.subr.bf16.mxu0 0
      %2099 = vmatpush2.bf16.msra.mxu0 0
      %2100 = vmatprep.mubr.bf16.mxu0 0
      %2101 = vmatmul.mubr.bf16.gmra.mxu0 %v2048
      %v2102 = vpop.f32.mrf.mxu0
      %v2103 = vadd.f32 0.0, %v2102
      %v2104 = vpop.f32.mrf.mxu0
      %v2105 = vadd.f32 0.0, %v2104
      %v2106 = vpop.f32.mrf.mxu0
      %v2107 = vadd.f32 0.0, %v2106
      %v2108 = vpop.f32.mrf.mxu0
      %v2109 = vadd.f32 0.0, %v2108
      %2110 = vmatprep.mubr.bf16.mxu0 0
      %2111 = vmatmul.mubr.bf16.gmra.mxu0 %v2051
      %v2112 = vpop.f32.mrf.mxu0
      %v2113 = vadd.f32 0.0, %v2112
      %v2114 = vpop.f32.mrf.mxu0
      %v2115 = vadd.f32 0.0, %v2114
      %v2116 = vpop.f32.mrf.mxu0
      %v2117 = vadd.f32 0.0, %v2116
      %v2118 = vpop.f32.mrf.mxu0
      %v2119 = vadd.f32 0.0, %v2118
      %2120 = vmatprep.mubr.bf16.mxu0 0
      %2121 = vmatmul.mubr.bf16.gmra.mxu0 %v2054
      %v2122 = vpop.f32.mrf.mxu0
      %v2123 = vadd.f32 0.0, %v2122
      %v2124 = vpop.f32.mrf.mxu0
      %v2125 = vadd.f32 0.0, %v2124
      %v2126 = vpop.f32.mrf.mxu0
      %v2127 = vadd.f32 0.0, %v2126
      %v2128 = vpop.f32.mrf.mxu0
      %v2129 = vadd.f32 0.0, %v2128
      %2130 = vmatprep.mubr.bf16.mxu0 0
      %2131 = vmatmul.mubr.bf16.gmra.mxu0 %v2057
      %v2132 = vpop.f32.mrf.mxu0
      %v2133 = vadd.f32 0.0, %v2132
      %v2134 = vpop.f32.mrf.mxu0
      %v2135 = vadd.f32 0.0, %v2134
      %v2136 = vpop.f32.mrf.mxu0
      %v2137 = vpop.f32.mrf.mxu0
      %2138 = vdwg.mxu0
      %2139 = vmatprep.subr.bf16.mxu0 0
      %2140 = vmatpush1.bf16.msra.mxu0 0
      %2141 = vmatprep.subr.bf16.mxu0 0
      %2142 = vmatpush1.bf16.msra.mxu0 0
      %2143 = vmatprep.subr.bf16.mxu0 0
      %2144 = vmatpush1.bf16.msra.mxu0 0
      %2145 = vmatprep.subr.bf16.mxu0 0
      %2146 = vmatpush1.bf16.msra.mxu0 0
      %2147 = vmatprep.subr.bf16.mxu0 0
      %2148 = vmatpush1.bf16.msra.mxu0 0
      %2149 = vmatprep.subr.bf16.mxu0 0
      %2150 = vmatpush1.bf16.msra.mxu0 0
      %2151 = vmatprep.subr.bf16.mxu0 0
      %2152 = vmatpush1.bf16.msra.mxu0 0
      %2153 = vmatprep.subr.bf16.mxu0 0
      %2154 = vmatpush1.bf16.msra.mxu0 %v2066
      %2155 = vmatprep.subr.bf16.mxu0 0
      %2156 = vmatpush2.bf16.msra.mxu0 0
      %2157 = vmatprep.subr.bf16.mxu0 0
      %2158 = vmatpush2.bf16.msra.mxu0 0
      %2159 = vmatprep.subr.bf16.mxu0 0
      %2160 = vmatpush2.bf16.msra.mxu0 0
      %2161 = vmatprep.subr.bf16.mxu0 0
      %2162 = vmatpush2.bf16.msra.mxu0 0
      %2163 = vmatprep.subr.bf16.mxu0 0
      %2164 = vmatpush2.bf16.msra.mxu0 0
      %2165 = vmatprep.subr.bf16.mxu0 0
      %2166 = vmatpush2.bf16.msra.mxu0 0
      %2167 = vmatprep.subr.bf16.mxu0 0
      %2168 = vmatpush2.bf16.msra.mxu0 0
      %2169 = vmatprep.subr.bf16.mxu0 0
      %2170 = vmatpush2.bf16.msra.mxu0 0
      %2171 = vmatprep.mubr.bf16.mxu0 0
      %2172 = vmatmul.mubr.bf16.gmra.mxu0 %v2048
      %v2173 = vpop.f32.mrf.mxu0
      %v2174 = vadd.f32 0.0, %v2173
      %v2175 = vpop.f32.mrf.mxu0
      %v2176 = vpop.f32.mrf.mxu0
      %v2177 = vadd.f32 0.0, %v2176
      %v2178 = vpop.f32.mrf.mxu0
      %2179 = vmatprep.mubr.bf16.mxu0 0
      %2180 = vmatmul.mubr.bf16.gmra.mxu0 %v2051
      %v2181 = vpop.f32.mrf.mxu0
      %v2182 = vadd.f32 0.0, %v2181
      %v2183 = vpop.f32.mrf.mxu0
      %v2184 = vpop.f32.mrf.mxu0
      %v2185 = vadd.f32 0.0, %v2184
      %v2186 = vpop.f32.mrf.mxu0
      %2187 = vmatprep.mubr.bf16.mxu0 0
      %2188 = vmatmul.mubr.bf16.gmra.mxu0 %v2054
      %v2189 = vpop.f32.mrf.mxu0
      %v2190 = vadd.f32 0.0, %v2189
      %v2191 = vpop.f32.mrf.mxu0
      %v2192 = vpop.f32.mrf.mxu0
      %v2193 = vadd.f32 0.0, %v2192
      %v2194 = vpop.f32.mrf.mxu0
      %2195 = vmatprep.mubr.bf16.mxu0 0
      %2196 = vmatmul.mubr.bf16.gmra.mxu0 %v2057
      %v2197 = vpop.f32.mrf.mxu0
      %v2198 = vadd.f32 0.0, %v2197
      %v2199 = vpop.f32.mrf.mxu0
      %v2200 = vpop.f32.mrf.mxu0
      %v2201 = vpop.f32.mrf.mxu0
      %2202 = vdwg.mxu0
      %v2203 = vadd.f32 %v1989, %v2103
      %v2204 = vadd.f32 %v1990, %v2105
      %v2205 = vadd.f32 %v1991, %v2174
      %v2206 = vadd.f32 %v1992, %v2107
      %v2207 = vadd.f32 %v1993, %v2109
      %v2208 = vadd.f32 %v1994, %v2177
      %v2209 = vadd.f32 %v1995, %v2113
      %v2210 = vadd.f32 %v1996, %v2115
      %v2211 = vadd.f32 %v1997, %v2182
      %v2212 = vadd.f32 %v1998, %v2117
      %v2213 = vadd.f32 %v1999, %v2119
      %v2214 = vadd.f32 %v2000, %v2185
      %v2215 = vadd.f32 %v2001, %v2123
      %v2216 = vadd.f32 %v2002, %v2125
      %v2217 = vadd.f32 %v2003, %v2190
      %v2218 = vadd.f32 %v2004, %v2127
      %v2219 = vadd.f32 %v2005, %v2129
      %v2220 = vadd.f32 %v2006, %v2193
      %v2221 = vadd.f32 %v2007, %v2133
      %v2222 = vadd.f32 %v2008, %v2135
      %v2223 = vadd.f32 %v2009, %v2198
      %v2224 = vmax.f32 %v2010, %v2017
      %v2225 = vmax.f32 %v2011, %v2018
      %v2226 = vmax.f32 %v2012, %v2019
      %v2227 = vmax.f32 %v2013, %v2020
      %v2228 = vmax.f32 %v2014, %v2021
      %v2229 = vmax.f32 %v2015, %v2022
      %v2230 = vmax.f32 %v2016, %v2023
      %v2231 = vld [vmem:[%s5] sm:$0x7]
      %v2233 = vlaneseq
      %v2234 = vshrl.u32 %v2233, 7
      %v2235 = vsub.s32 0, %v2234
      %v2236 = vrot.slane %v2231, %v2235
      %v2237 = vlaneseq
      %v2238 = vshrl.u32 %v2237, 7
      %v2239 = vsub.s32 1, %v2238
      %v2240 = vrot.slane %v2231, %v2239
      %v2241 = vlaneseq
      %v2242 = vshrl.u32 %v2241, 7
      %v2243 = vsub.s32 2, %v2242
      %v2244 = vrot.slane %v2231, %v2243
      %v2248 = vadd.f32 %v2203, %v2236
      %v2249 = vadd.f32 %v2204, %v2240
      %v2250 = vadd.f32 %v2205, %v2244
      %v2251 = vadd.f32 %v2206, %v2236
      %v2252 = vadd.f32 %v2207, %v2240
      %v2253 = vadd.f32 %v2208, %v2244
      %v2254 = vadd.f32 %v2209, %v2236
      %v2255 = vadd.f32 %v2210, %v2240
      %v2256 = vadd.f32 %v2211, %v2244
      %v2257 = vadd.f32 %v2212, %v2236
      %v2258 = vadd.f32 %v2213, %v2240
      %v2259 = vadd.f32 %v2214, %v2244
      %v2260 = vadd.f32 %v2215, %v2236
      %v2261 = vadd.f32 %v2216, %v2240
      %v2262 = vadd.f32 %v2217, %v2244
      %v2263 = vadd.f32 %v2218, %v2236
      %v2264 = vadd.f32 %v2219, %v2240
      %v2265 = vadd.f32 %v2220, %v2244
      %v2266 = vadd.f32 %v2221, %v2236
      %v2267 = vadd.f32 %v2222, %v2240
      %v2268 = vadd.f32 %v2223, %v2244
      %v2269 = vmax.f32 %v2248, 0.0
      %v2270 = vmax.f32 %v2249, 0.0
      %v2271 = vmax.f32 %v2250, 0.0
      %v2272 = vmax.f32 %v2251, 0.0
      %v2273 = vmax.f32 %v2252, 0.0
      %v2274 = vmax.f32 %v2253, 0.0
      %v2275 = vmax.f32 %v2254, 0.0
      %v2276 = vmax.f32 %v2255, 0.0
      %v2277 = vmax.f32 %v2256, 0.0
      %v2278 = vmax.f32 %v2257, 0.0
      %v2279 = vmax.f32 %v2258, 0.0
      %v2280 = vmax.f32 %v2259, 0.0
      %v2281 = vmax.f32 %v2260, 0.0
      %v2282 = vmax.f32 %v2261, 0.0
      %v2283 = vmax.f32 %v2262, 0.0
      %v2284 = vmax.f32 %v2263, 0.0
      %v2285 = vmax.f32 %v2264, 0.0
      %v2286 = vmax.f32 %v2265, 0.0
      %v2287 = vmax.f32 %v2266, 0.0
      %v2288 = vmax.f32 %v2267, 0.0
      %v2289 = vmax.f32 %v2268, 0.0
      %2290 = vst [vmem:[%s346] sm:$0xff] %v2269
      %2291 = vst [vmem:[%s346 + $0x8] sm:$0xff] %v2270
      %2292 = vst [vmem:[%s346 + $0x10] sm:$0xff] %v2271
      %2293 = vst [vmem:[%s346 + $0x18] sm:$0xff] %v2272
      %2294 = vst [vmem:[%s346 + $0x20] sm:$0xff] %v2273
      %2295 = vst [vmem:[%s346 + $0x28] sm:$0xff] %v2274
      %2296 = vst [vmem:[%s346 + $0x30] sm:$0xff] %v2275
      %2297 = vst [vmem:[%s346 + $0x38] sm:$0xff] %v2276
      %2298 = vst [vmem:[%s346 + $0x40] sm:$0xff] %v2277
      %2299 = vst [vmem:[%s346 + $0x48] sm:$0xff] %v2278
      %2300 = vst [vmem:[%s346 + $0x50] sm:$0xff] %v2279
      %2301 = vst [vmem:[%s346 + $0x58] sm:$0xff] %v2280
      %2302 = vst [vmem:[%s346 + $0x60] sm:$0xff] %v2281
      %2303 = vst [vmem:[%s346 + $0x68] sm:$0xff] %v2282
      %2304 = vst [vmem:[%s346 + $0x70] sm:$0xff] %v2283
      %2305 = vst [vmem:[%s346 + $0x78] sm:$0xff] %v2284
      %2306 = vst [vmem:[%s346 + $0x80] sm:$0xff] %v2285
      %2307 = vst [vmem:[%s346 + $0x88] sm:$0xff] %v2286
      %2308 = vst [vmem:[%s346 + $0x90] sm:$0xff] %v2287
      %2309 = vst [vmem:[%s346 + $0x98] sm:$0xff] %v2288
      %2310 = vst [vmem:[%s346 + $0xa0] sm:$0xff] %v2289
      %2311 = vst.msk [vmem:[%s351] sm:$0xff] %vm395, %v2224
      %2312 = vst.msk [vmem:[%s351 + $0x8] sm:$0xff] %vm395, %v2225
      %2313 = vst.msk [vmem:[%s351 + $0x10] sm:$0xff] %vm395, %v2226
      %2314 = vst.msk [vmem:[%s351 + $0x18] sm:$0xff] %vm395, %v2227
      %2315 = vst.msk [vmem:[%s351 + $0x20] sm:$0xff] %vm395, %v2228
      %2316 = vst.msk [vmem:[%s351 + $0x28] sm:$0xff] %vm395, %v2229
      %2317 = vst.msk [vmem:[%s351 + $0x30] sm:$0xff] %vm395, %v2230
      %p2318 = scmp.lt.s32.totalorder %s19, 1
      %s2319 = scalar_select %p2318, %s19, 1
      %s2320 = smul.addr %s2319, 21
      %s2321 = smul.addr %s2320, 8
      %s2322 = scalar_lea.vmem %s6, %s2321
      %p2323 = scmp.lt.s32.totalorder %s19, 1
      %s2324 = scalar_select %p2323, %s19, 1
      %s2325 = smul.addr %s2324, 7
      %s2326 = smul.addr %s2325, 8
      %s2327 = scalar_lea.vmem %s7, %s2326
      // Predicated region
      $region45: #{inception_b_forward.3} parent=43 // pred_check
        %p2328 = pneg %p183
      $region46: #{inception_b_forward.3} parent=43 // pred_check_branch
        %2330 = sbr.rel (%p2328) target = $region48
      $region47: #{inception_b_forward.3} parent=43 // pred_region
        _
      $region48: #{inception_b_forward.3} parent=43 // pred_fallthru
        _
      // Predicated region
      $region49: #{inception_b_forward.3} parent=43 // pred_check
        %p2331 = pneg %p209
      $region50: #{inception_b_forward.3} parent=43 // pred_check_branch
        %2333 = sbr.rel (%p2331) target = $region52
      $region51: #{inception_b_forward.3} parent=43 // pred_region
        _
      $region52: #{inception_b_forward.3} parent=43 // pred_fallthru
        _
    $region44: #{inception_b_forward.3} parent=5 // pred_fallthru
      _
    %p2334 = scmp.le.s32.totalorder 2, %s14
    // Predicated region
    $region53: #{inception_b_forward.3} parent=5 // pred_check
      %p2335 = pneg %p2334
    $region54: #{inception_b_forward.3} parent=5 // pred_check_branch
      %2337 = sbr.rel (%p2335) target = $region56
    $region55: #{inception_b_forward.3} parent=5 // pred_region
      %s2338 = ssub.s32 %s14, 2
      // Predicated region
      $region57: #{inception_b_forward.3} parent=55 // pred_check
        %p2339 = pneg %p189
      $region58: #{inception_b_forward.3} parent=55 // pred_check_branch
        %2341 = sbr.rel (%p2339) target = $region60
      $region59: #{inception_b_forward.3} parent=55 // pred_region
        %p2342 = scmp.lt.s32.totalorder %s20, 1
        %s2343 = scalar_select %p2342, %s20, 1
        %s2344 = smul.addr %s2343, 21
        %s2345 = smul.addr %s2344, 8
        %s2346 = scalar_lea.vmem %s6, %s2345
      $region60: #{inception_b_forward.3} parent=55 // pred_fallthru
        _
      // Predicated region
      $region61: #{inception_b_forward.3} parent=55 // pred_check
        %p2347 = pneg %p215
      $region62: #{inception_b_forward.3} parent=55 // pred_check_branch
        %2349 = sbr.rel (%p2347) target = $region64
      $region63: #{inception_b_forward.3} parent=55 // pred_region
        %p2350 = scmp.lt.s32.totalorder %s20, 1
        %s2351 = scalar_select %p2350, %s20, 1
        %s2352 = smul.addr %s2351, 7
        %s2353 = smul.addr %s2352, 8
        %s2354 = scalar_lea.vmem %s7, %s2353
      $region64: #{inception_b_forward.3} parent=55 // pred_fallthru
        _
    $region56: #{inception_b_forward.3} parent=5 // pred_fallthru
      _
  $region6: #{inception_b_forward.3} parent=0 // loop_footer
    %s18 = sadd.s32 1, %s14
  $region7: #{inception_b_forward.3} parent=0 // loop_footer_branch
    %13 = sbr.rel target = $region3
  $region8: #{inception_b_forward.3} parent=0 // loop_exit
    _

// kernel: inception_b_forward.4
$region0: #{inception_b_forward.4}
  #allocation0 [shape = 'u32[]', space=smem, size = 0x4, offset = 0x4, fixed_abs, tag = 'smem constant byte address 0x4 - core index']
  #allocation1 [shape = 'u32[144,128]{1,0:T(1,128)}', space=vmem, size = 0x12000, scoped, tag = 'internal scratch']
  #allocation2 [shape = 'bf16[320,128]{1,0:T(8,128)(2,1)}', space=vmem, size = 0x14000, scoped, tag = 'scratch operand']
  %s0 = inlined_call_operand.vmem [shape: bf16[2,256,4], index: 0, kind: input, shape index: {}]
  %s1 = inlined_call_operand.vmem [shape: bf16[1,4,128], index: 1, kind: input, shape index: {}]
  %s2 = inlined_call_operand.vmem [shape: f32[1,128], index: 2, kind: input, shape index: {}]
  %s3 = inlined_call_operand.vmem [shape: bf16[9,128,128], index: 3, kind: input, shape index: {}]
  %s4 = inlined_call_operand.vmem [shape: f32[1,128], index: 4, kind: input, shape index: {}]
  %s5 = inlined_call_operand.vmem [shape: bf16[2,256,128], index: 5, kind: output, shape index: {}]
  %s6 = sld [smem:[#allocation0]]
  $region53: #{inception_b_forward.4} parent=0
    _
  %s8 = ssub.s32 1, %s6
  %s9 = scalar_select 0, %s8, %s6
  loop: start=0, step=1, limit=4
  $region2: #{inception_b_forward.4} parent=0 // loop_pre_header
    _
  $region3: #{inception_b_forward.4} parent=0 // loop_header
    %s11 = sphi 0, %s15
    %p12 = scmp.ge.s32.totalorder %s11, 4
    %s21 = sphi 0, %s23
    %s24 = sphi 0, %s21
    %s25 = sphi 0, %s24
    %s41 = sphi 0, %s25
    %s45 = sphi 0, %s45
    %s47 = sphi 0, %s45
    %s48 = sphi 0, %s47
    %s62 = sphi 0, %s48
    %s66 = sphi 0, %s66
    %s68 = sphi 0, %s66
    %s69 = sphi 0, %s68
    %s83 = sphi 0, %s69
    %s87 = sphi 0, %s87
    %s89 = sphi 0, %s87
    %s90 = sphi 0, %s89
    %s104 = sphi 0, %s90
    %s108 = sphi 0, %s108
    %s110 = sphi 0, %s108
    %s111 = sphi 0, %s110
    %s125 = sphi 0, %s111
    %s131 = sphi 0, %s133
    %s134 = sphi 0, %s131
    %s135 = sphi 0, %s134
    %s151 = sphi 0, %s135
  $region4: #{inception_b_forward.4} parent=0 // loop_header_branch
    %14 = sbr.rel (%p12) target = $region8
  $region5: #{inception_b_forward.4} parent=0 // loop_body
    %s16 = ssub.s32 %s11, 1
    %s17 = ssub.s32 %s11, 2
    %s18 = sadd.s32 %s11, 1
    %s19 = ssub.s32 %s11, %s18
    %p20 = scmp.eq.s32.totalorder %s19, 0
    %s22 = sadd.s32 %s21, 1
    %s23 = scalar_select %p20, %s21, %s22
    %p26 = pneg %p20
    %p27 = scmp.eq.s32.totalorder %s11, 1
    %p28 = por %p26, %p27
    %p29 = scmp.ne.s32.totalorder %s21, %s24
    %p30 = scmp.eq.s32.totalorder %s11, 0
    %p31 = por %p29, %p30
    %p32 = scmp.ne.s32.totalorder %s21, %s24
    %p33 = scmp.eq.s32.totalorder %s16, 1
    %p34 = por %p32, %p33
    %p35 = scmp.ne.s32.totalorder %s24, %s25
    %p36 = scmp.eq.s32.totalorder %s16, 0
    %p37 = por %p35, %p36
    %p38 = scmp.ne.s32.totalorder %s24, %s25
    %p39 = scmp.eq.s32.totalorder %s17, 1
    %p40 = por %p38, %p39
    %p42 = scmp.ne.s32.totalorder %s25, %s41
    %p43 = scmp.eq.s32.totalorder %s17, 0
    %p44 = por %p42, %p43
    %s46 = sadd.s32 %s45, 1
    %p49 = scmp.eq.s32.totalorder %s11, 1
    %p50 = scmp.ne.s32.totalorder %s45, %s47
    %p51 = scmp.eq.s32.totalorder %s11, 0
    %p52 = por %p50, %p51
    %p53 = scmp.ne.s32.totalorder %s45, %s47
    %p54 = scmp.eq.s32.totalorder %s16, 1
    %p55 = por %p53, %p54
    %p56 = scmp.ne.s32.totalorder %s47, %s48
    %p57 = scmp.eq.s32.totalorder %s16, 0
    %p58 = por %p56, %p57
    %p59 = scmp.ne.s32.totalorder %s47, %s48
    %p60 = scmp.eq.s32.totalorder %s17, 1
    %p61 = por %p59, %p60
    %p63 = scmp.ne.s32.totalorder %s48, %s62
    %p64 = scmp.eq.s32.totalorder %s17, 0
    %p65 = por %p63, %p64
    %s67 = sadd.s32 %s66, 1
    %p70 = scmp.eq.s32.totalorder %s11, 1
    %p71 = scmp.ne.s32.totalorder %s66, %s68
    %p72 = scmp.eq.s32.totalorder %s11, 0
    %p73 = por %p71, %p72
    %p74 = scmp.ne.s32.totalorder %s66, %s68
    %p75 = scmp.eq.s32.totalorder %s16, 1
    %p76 = por %p74, %p75
    %p77 = scmp.ne.s32.totalorder %s68, %s69
    %p78 = scmp.eq.s32.totalorder %s16, 0
    %p79 = por %p77, %p78
    %p80 = scmp.ne.s32.totalorder %s68, %s69
    %p81 = scmp.eq.s32.totalorder %s17, 1
    %p82 = por %p80, %p81
    %p84 = scmp.ne.s32.totalorder %s69, %s83
    %p85 = scmp.eq.s32.totalorder %s17, 0
    %p86 = por %p84, %p85
    %s88 = sadd.s32 %s87, 1
    %p91 = scmp.eq.s32.totalorder %s11, 1
    %p92 = scmp.ne.s32.totalorder %s87, %s89
    %p93 = scmp.eq.s32.totalorder %s11, 0
    %p94 = por %p92, %p93
    %p95 = scmp.ne.s32.totalorder %s87, %s89
    %p96 = scmp.eq.s32.totalorder %s16, 1
    %p97 = por %p95, %p96
    %p98 = scmp.ne.s32.totalorder %s89, %s90
    %p99 = scmp.eq.s32.totalorder %s16, 0
    %p100 = por %p98, %p99
    %p101 = scmp.ne.s32.totalorder %s89, %s90
    %p102 = scmp.eq.s32.totalorder %s17, 1
    %p103 = por %p101, %p102
    %p105 = scmp.ne.s32.totalorder %s90, %s104
    %p106 = scmp.eq.s32.totalorder %s17, 0
    %p107 = por %p105, %p106
    %s109 = sadd.s32 %s108, 1
    %p112 = scmp.eq.s32.totalorder %s11, 1
    %p113 = scmp.ne.s32.totalorder %s108, %s110
    %p114 = scmp.eq.s32.totalorder %s11, 0
    %p115 = por %p113, %p114
    %p116 = scmp.ne.s32.totalorder %s108, %s110
    %p117 = scmp.eq.s32.totalorder %s16, 1
    %p118 = por %p116, %p117
    %p119 = scmp.ne.s32.totalorder %s110, %s111
    %p120 = scmp.eq.s32.totalorder %s16, 0
    %p121 = por %p119, %p120
    %p122 = scmp.ne.s32.totalorder %s110, %s111
    %p123 = scmp.eq.s32.totalorder %s17, 1
    %p124 = por %p122, %p123
    %p126 = scmp.ne.s32.totalorder %s111, %s125
    %p127 = scmp.eq.s32.totalorder %s17, 0
    %p128 = por %p126, %p127
    %s129 = ssub.s32 %s11, %s18
    %p130 = scmp.eq.s32.totalorder %s129, 0
    %s132 = sadd.s32 %s131, 1
    %s133 = scalar_select %p130, %s131, %s132
    %p136 = pneg %p130
    %p137 = scmp.eq.s32.totalorder %s11, 1
    %p138 = por %p136, %p137
    %p139 = scmp.ne.s32.totalorder %s131, %s134
    %p140 = scmp.eq.s32.totalorder %s11, 0
    %p141 = por %p139, %p140
    %p142 = scmp.ne.s32.totalorder %s131, %s134
    %p143 = scmp.eq.s32.totalorder %s16, 1
    %p144 = por %p142, %p143
    %p145 = scmp.ne.s32.totalorder %s134, %s135
    %p146 = scmp.eq.s32.totalorder %s16, 0
    %p147 = por %p145, %p146
    %p148 = scmp.ne.s32.totalorder %s134, %s135
    %p149 = scmp.eq.s32.totalorder %s17, 1
    %p150 = por %p148, %p149
    %p152 = scmp.ne.s32.totalorder %s135, %s151
    %p153 = scmp.eq.s32.totalorder %s17, 0
    %p154 = por %p152, %p153
    %p155 = scmp.le.s32.totalorder 1, %s11
    %p156 = scmp.lt.s32.totalorder %s11, 3
    %p157 = pnand %p155, %p156
    %p158 = pneg %p157
    // Predicated region
    $region9: #{inception_b_forward.4} parent=5 // pred_check
      _
    $region10: #{inception_b_forward.4} parent=5 // pred_check_branch
      %160 = sbr.rel (%p157) target = $region12
    $region11: #{inception_b_forward.4} parent=5 // pred_region
      %s161 = ssub.s32 %s11, 1
      // Predicated region
      $region13: #{inception_b_forward.4} parent=11 // pred_check
        %p162 = pneg %p58
      $region14: #{inception_b_forward.4} parent=11 // pred_check_branch
        %164 = sbr.rel (%p162) target = $region16
      $region15: #{inception_b_forward.4} parent=11 // pred_region
        _
      $region16: #{inception_b_forward.4} parent=11 // pred_fallthru
        _
      // Predicated region
      $region17: #{inception_b_forward.4} parent=11 // pred_check
        %p165 = pneg %p79
      $region18: #{inception_b_forward.4} parent=11 // pred_check_branch
        %167 = sbr.rel (%p165) target = $region20
      $region19: #{inception_b_forward.4} parent=11 // pred_region
        _
      $region20: #{inception_b_forward.4} parent=11 // pred_fallthru
        _
      // Predicated region
      $region21: #{inception_b_forward.4} parent=11 // pred_check
        %p168 = pneg %p100
      $region22: #{inception_b_forward.4} parent=11 // pred_check_branch
        %170 = sbr.rel (%p168) target = $region24
      $region23: #{inception_b_forward.4} parent=11 // pred_region
        _
      $region24: #{inception_b_forward.4} parent=11 // pred_fallthru
        _
      // Predicated region
      $region25: #{inception_b_forward.4} parent=11 // pred_check
        %p171 = pneg %p121
      $region26: #{inception_b_forward.4} parent=11 // pred_check_branch
        %173 = sbr.rel (%p171) target = $region28
      $region27: #{inception_b_forward.4} parent=11 // pred_region
        _
      $region28: #{inception_b_forward.4} parent=11 // pred_fallthru
        _
    $region12: #{inception_b_forward.4} parent=5 // pred_fallthru
      _
    %p174 = scmp.lt.s32.totalorder %s11, 2
    // Predicated region
    $region29: #{inception_b_forward.4} parent=5 // pred_check
      %p175 = pneg %p174
    $region30: #{inception_b_forward.4} parent=5 // pred_check_branch
      %177 = sbr.rel (%p175) target = $region32
    $region31: #{inception_b_forward.4} parent=5 // pred_region
      // Predicated region
      $region33: #{inception_b_forward.4} parent=31 // pred_check
        %p178 = pneg %p31
      $region34: #{inception_b_forward.4} parent=31 // pred_check_branch
        %180 = sbr.rel (%p178) target = $region36
      $region35: #{inception_b_forward.4} parent=31 // pred_region
        %p181 = scmp.lt.s32.totalorder %s11, 1
        %s182 = scalar_select %p181, %s11, 1
        %s183 = smul.addr %s182, 32
        %s184 = smul.addr %s183, 4
        %s185 = scalar_lea.vmem %s0, %s184
      $region36: #{inception_b_forward.4} parent=31 // pred_fallthru
        _
    $region32: #{inception_b_forward.4} parent=5 // pred_fallthru
      _
    %p186 = scmp.le.s32.totalorder 1, %s11
    %p187 = scmp.lt.s32.totalorder %s11, 3
    %p188 = pnand %p186, %p187
    %p189 = pneg %p188
    // Predicated region
    $region37: #{inception_b_forward.4} parent=5 // pred_check
      _
    $region38: #{inception_b_forward.4} parent=5 // pred_check_branch
      %191 = sbr.rel (%p188) target = $region40
    $region39: #{inception_b_forward.4} parent=5 // pred_region
      %s192 = ssub.s32 %s11, 1
      %p193 = scmp.lt.s32.totalorder %s16, 1
      %s194 = scalar_select %p193, %s16, 1
      %s195 = smul.addr %s194, 32
      %s196 = smul.addr %s195, 4
      %s197 = scalar_lea.vmem %s0, %s196
      %p198 = pneg %p37
      %p199 = pneg %p34
      %p200 = pneg %p58
      %p201 = pneg %p55
      %p202 = pneg %p79
      %p203 = pneg %p76
      %p204 = pneg %p100
      %p205 = pneg %p97
      %p206 = pneg %p121
      %p207 = pneg %p118
      %p208 = pneg %p147
      %p209 = pneg %p144
      %p210 = scmp.lt.s32.totalorder %s16, 1
      %s211 = scalar_select %p210, %s16, 1
      %s212 = smul.addr %s211, 32
      %s213 = smul.addr %s212, 4
      %s214 = scalar_lea.vmem %s5, %s213
      %p215 = scmp.lt.s32.totalorder %s16, 1
      %s216 = scalar_select %p215, %s16, 1
      %s217 = smul.addr %s216, 32
      %s218 = smul.addr %s217, 4
      %s219 = scalar_lea.vmem %s0, %s218
      %p220 = scmp.lt.s32.totalorder %s16, 1
      %s221 = scalar_select %p220, %s16, 1
      %s222 = smul.addr %s221, 32
      %s223 = smul.addr %s222, 4
      %s224 = scalar_lea.vmem %s5, %s223
      %v228 = vld [vmem:[%s219] sm:$0xf]
      %v229 = vld [vmem:[%s219 + $0x4] sm:$0xf]
      %v230 = vld [vmem:[%s219 + $0x8] sm:$0xf]
      %v231 = vld [vmem:[%s219 + $0xc] sm:$0xf]
      %v232 = vld [vmem:[%s219 + $0x10] sm:$0xf]
      %v233 = vld [vmem:[%s219 + $0x14] sm:$0xf]
      %v234 = vld [vmem:[%s219 + $0x18] sm:$0xf]
      %v235 = vld [vmem:[%s219 + $0x1c] sm:$0xf]
      %v236 = vld [vmem:[%s219 + $0x20] sm:$0xf]
      %v237 = vld [vmem:[%s219 + $0x24] sm:$0xf]
      %v238 = vld [vmem:[%s219 + $0x28] sm:$0xf]
      %v239 = vld [vmem:[%s219 + $0x2c] sm:$0xf]
      %v240 = vld [vmem:[%s219 + $0x30] sm:$0xf]
      %v241 = vld [vmem:[%s219 + $0x34] sm:$0xf]
      %v242 = vld [vmem:[%s219 + $0x38] sm:$0xf]
      %v243 = vld [vmem:[%s219 + $0x3c] sm:$0xf]
      %v244 = vld [vmem:[%s219 + $0x40] sm:$0xf]
      %v245 = vld [vmem:[%s219 + $0x44] sm:$0xf]
      %v246 = vld [vmem:[%s219 + $0x48] sm:$0xf]
      %v247 = vld [vmem:[%s219 + $0x4c] sm:$0xf]
      %v248 = vld [vmem:[%s219 + $0x50] sm:$0xf]
      %v249 = vld [vmem:[%s219 + $0x54] sm:$0xf]
      %v250 = vld [vmem:[%s219 + $0x58] sm:$0xf]
      %v251 = vld [vmem:[%s219 + $0x5c] sm:$0xf]
      %v252 = vld [vmem:[%s219 + $0x60] sm:$0xf]
      %v253 = vld [vmem:[%s219 + $0x64] sm:$0xf]
      %v254 = vld [vmem:[%s219 + $0x68] sm:$0xf]
      %v255 = vld [vmem:[%s219 + $0x6c] sm:$0xf]
      %v256 = vld [vmem:[%s219 + $0x70] sm:$0xf]
      %v257 = vld [vmem:[%s219 + $0x74] sm:$0xf]
      %v258 = vld [vmem:[%s219 + $0x78] sm:$0xf]
      %v259 = vld [vmem:[%s219 + $0x7c] sm:$0xf]
      %v260 = vld [vmem:[%s1] sm:$0x3]
      %v261 = vld [vmem:[%s2] sm:$0x1]
      %v263 = vlaneseq
      %v264 = vshrl.u32 %v263, 7
      %v265 = vsub.s32 0, %v264
      %v266 = vrot.slane %v261, %v265
      %v300 = vunpack.c.l.b16 %v228
      %v301 = vunpack.c.l.b16 %v229
      %v302 = vunpack.c.l.b16 %v230
      %v303 = vunpack.c.l.b16 %v231
      %v304 = vunpack.c.l.b16 %v232
      %v305 = vunpack.c.l.b16 %v233
      %v306 = vunpack.c.l.b16 %v234
      %v307 = vunpack.c.l.b16 %v235
      %v308 = vunpack.c.l.b16 %v236
      %v309 = vunpack.c.l.b16 %v237
      %v310 = vunpack.c.l.b16 %v238
      %v311 = vunpack.c.l.b16 %v239
      %v312 = vunpack.c.l.b16 %v240
      %v313 = vunpack.c.l.b16 %v241
      %v314 = vunpack.c.l.b16 %v242
      %v315 = vunpack.c.l.b16 %v243
      %v316 = vunpack.c.l.b16 %v244
      %v317 = vunpack.c.l.b16 %v245
      %v318 = vunpack.c.l.b16 %v246
      %v319 = vunpack.c.l.b16 %v247
      %v320 = vunpack.c.l.b16 %v248
      %v321 = vunpack.c.l.b16 %v249
      %v322 = vunpack.c.l.b16 %v250
      %v323 = vunpack.c.l.b16 %v251
      %v324 = vunpack.c.l.b16 %v252
      %v325 = vunpack.c.l.b16 %v253
      %v326 = vunpack.c.l.b16 %v254
      %v327 = vunpack.c.l.b16 %v255
      %v328 = vunpack.c.l.b16 %v256
      %v329 = vunpack.c.l.b16 %v257
      %v330 = vunpack.c.l.b16 %v258
      %v331 = vunpack.c.l.b16 %v259
      %v332 = vpack.c.b16 %v301, %v300
      %v333 = vpack.c.b16 %v303, %v302
      %v334 = vpack.c.b16 %v305, %v304
      %v335 = vpack.c.b16 %v307, %v306
      %v336 = vpack.c.b16 %v309, %v308
      %v337 = vpack.c.b16 %v311, %v310
      %v338 = vpack.c.b16 %v313, %v312
      %v339 = vpack.c.b16 %v315, %v314
      %v340 = vpack.c.b16 %v317, %v316
      %v341 = vpack.c.b16 %v319, %v318
      %v342 = vpack.c.b16 %v321, %v320
      %v343 = vpack.c.b16 %v323, %v322
      %v344 = vpack.c.b16 %v325, %v324
      %v345 = vpack.c.b16 %v327, %v326
      %v346 = vpack.c.b16 %v329, %v328
      %v347 = vpack.c.b16 %v331, %v330
      %vm348 = vcmask 31744
      %v350 = vsel %vm348, %v332, 0
      %v353 = vsel %vm348, %v333, 0
      %v356 = vsel %vm348, %v334, 0
      %v359 = vsel %vm348, %v335, 0
      %v362 = vsel %vm348, %v336, 0
      %v365 = vsel %vm348, %v337, 0
      %v368 = vsel %vm348, %v338, 0
      %v371 = vsel %vm348, %v339, 0
      %v374 = vsel %vm348, %v340, 0
      %v377 = vsel %vm348, %v341, 0
      %v380 = vsel %vm348, %v342, 0
      %v383 = vsel %vm348, %v343, 0
      %v386 = vsel %vm348, %v344, 0
      %v389 = vsel %vm348, %v345, 0
      %v392 = vsel %vm348, %v346, 0
      %v395 = vsel %vm348, %v347, 0
      %vm397 = vcmask 1041408
      %v399 = vsel %vm397, %v260, 0
      %401 = vmatprep.subr.bf16.mxu0 0
      %402 = vmatpush1.bf16.msra.mxu0 0
      %403 = vmatprep.subr.bf16.mxu0 0
      %404 = vmatpush1.bf16.msra.mxu0 0
      %405 = vmatprep.subr.bf16.mxu0 0
      %406 = vmatpush1.bf16.msra.mxu0 0
      %407 = vmatprep.subr.bf16.mxu0 0
      %408 = vmatpush1.bf16.msra.mxu0 0
      %409 = vmatprep.subr.bf16.mxu0 0
      %410 = vmatpush1.bf16.msra.mxu0 0
      %411 = vmatprep.subr.bf16.mxu0 0
      %412 = vmatpush1.bf16.msra.mxu0 0
      %413 = vmatprep.subr.bf16.mxu0 0
      %414 = vmatpush1.bf16.msra.mxu0 0
      %415 = vmatprep.subr.bf16.mxu0 0
      %416 = vmatpush1.bf16.msra.mxu0 %v399
      %417 = vmatprep.subr.bf16.mxu0 0
      %418 = vmatpush2.bf16.msra.mxu0 0
      %419 = vmatprep.subr.bf16.mxu0 0
      %420 = vmatpush2.bf16.msra.mxu0 0
      %421 = vmatprep.subr.bf16.mxu0 0
      %422 = vmatpush2.bf16.msra.mxu0 0
      %423 = vmatprep.subr.bf16.mxu0 0
      %424 = vmatpush2.bf16.msra.mxu0 0
      %425 = vmatprep.subr.bf16.mxu0 0
      %426 = vmatpush2.bf16.msra.mxu0 0
      %427 = vmatprep.subr.bf16.mxu0 0
      %428 = vmatpush2.bf16.msra.mxu0 0
      %429 = vmatprep.subr.bf16.mxu0 0
      %430 = vmatpush2.bf16.msra.mxu0 0
      %431 = vmatprep.subr.bf16.mxu0 0
      %432 = vmatpush2.bf16.msra.mxu0 0
      %433 = vmatprep.mubr.bf16.mxu0 0
      %434 = vmatmul.mubr.bf16.gmra.mxu0 %v350
      %v435 = vpop.f32.mrf.mxu0
      %v436 = vadd.f32 %v266, %v435
      %v437 = vpop.f32.mrf.mxu0
      %v438 = vpop.f32.mrf.mxu0
      %v439 = vadd.f32 %v266, %v438
      %v440 = vpop.f32.mrf.mxu0
      %441 = vmatprep.mubr.bf16.mxu0 0
      %442 = vmatmul.mubr.bf16.gmra.mxu0 %v353
      %v443 = vpop.f32.mrf.mxu0
      %v444 = vadd.f32 %v266, %v443
      %v445 = vpop.f32.mrf.mxu0
      %v446 = vpop.f32.mrf.mxu0
      %v447 = vadd.f32 %v266, %v446
      %v448 = vpop.f32.mrf.mxu0
      %449 = vmatprep.mubr.bf16.mxu0 0
      %450 = vmatmul.mubr.bf16.gmra.mxu0 %v356
      %v451 = vpop.f32.mrf.mxu0
      %v452 = vadd.f32 %v266, %v451
      %v453 = vpop.f32.mrf.mxu0
      %v454 = vpop.f32.mrf.mxu0
      %v455 = vadd.f32 %v266, %v454
      %v456 = vpop.f32.mrf.mxu0
      %457 = vmatprep.mubr.bf16.mxu0 0
      %458 = vmatmul.mubr.bf16.gmra.mxu0 %v359
      %v459 = vpop.f32.mrf.mxu0
      %v460 = vadd.f32 %v266, %v459
      %v461 = vpop.f32.mrf.mxu0
      %v462 = vpop.f32.mrf.mxu0
      %v463 = vadd.f32 %v266, %v462
      %v464 = vpop.f32.mrf.mxu0
      %465 = vmatprep.mubr.bf16.mxu0 0
      %466 = vmatmul.mubr.bf16.gmra.mxu0 %v362
      %v467 = vpop.f32.mrf.mxu0
      %v468 = vadd.f32 %v266, %v467
      %v469 = vpop.f32.mrf.mxu0
      %v470 = vpop.f32.mrf.mxu0
      %v471 = vadd.f32 %v266, %v470
      %v472 = vpop.f32.mrf.mxu0
      %473 = vmatprep.mubr.bf16.mxu0 0
      %474 = vmatmul.mubr.bf16.gmra.mxu0 %v365
      %v475 = vpop.f32.mrf.mxu0
      %v476 = vadd.f32 %v266, %v475
      %v477 = vpop.f32.mrf.mxu0
      %v478 = vpop.f32.mrf.mxu0
      %v479 = vadd.f32 %v266, %v478
      %v480 = vpop.f32.mrf.mxu0
      %481 = vmatprep.mubr.bf16.mxu0 0
      %482 = vmatmul.mubr.bf16.gmra.mxu0 %v368
      %v483 = vpop.f32.mrf.mxu0
      %v484 = vadd.f32 %v266, %v483
      %v485 = vpop.f32.mrf.mxu0
      %v486 = vpop.f32.mrf.mxu0
      %v487 = vadd.f32 %v266, %v486
      %v488 = vpop.f32.mrf.mxu0
      %489 = vmatprep.mubr.bf16.mxu0 0
      %490 = vmatmul.mubr.bf16.gmra.mxu0 %v371
      %v491 = vpop.f32.mrf.mxu0
      %v492 = vadd.f32 %v266, %v491
      %v493 = vpop.f32.mrf.mxu0
      %v494 = vpop.f32.mrf.mxu0
      %v495 = vadd.f32 %v266, %v494
      %v496 = vpop.f32.mrf.mxu0
      %497 = vmatprep.mubr.bf16.mxu0 0
      %498 = vmatmul.mubr.bf16.gmra.mxu0 %v374
      %v499 = vpop.f32.mrf.mxu0
      %v500 = vadd.f32 %v266, %v499
      %v501 = vpop.f32.mrf.mxu0
      %v502 = vpop.f32.mrf.mxu0
      %v503 = vadd.f32 %v266, %v502
      %v504 = vpop.f32.mrf.mxu0
      %505 = vmatprep.mubr.bf16.mxu0 0
      %506 = vmatmul.mubr.bf16.gmra.mxu0 %v377
      %v507 = vpop.f32.mrf.mxu0
      %v508 = vadd.f32 %v266, %v507
      %v509 = vpop.f32.mrf.mxu0
      %v510 = vpop.f32.mrf.mxu0
      %v511 = vadd.f32 %v266, %v510
      %v512 = vpop.f32.mrf.mxu0
      %513 = vmatprep.mubr.bf16.mxu0 0
      %514 = vmatmul.mubr.bf16.gmra.mxu0 %v380
      %v515 = vpop.f32.mrf.mxu0
      %v516 = vadd.f32 %v266, %v515
      %v517 = vpop.f32.mrf.mxu0
      %v518 = vpop.f32.mrf.mxu0
      %v519 = vadd.f32 %v266, %v518
      %v520 = vpop.f32.mrf.mxu0
      %521 = vmatprep.mubr.bf16.mxu0 0
      %522 = vmatmul.mubr.bf16.gmra.mxu0 %v383
      %v523 = vpop.f32.mrf.mxu0
      %v524 = vadd.f32 %v266, %v523
      %v525 = vpop.f32.mrf.mxu0
      %v526 = vpop.f32.mrf.mxu0
      %v527 = vadd.f32 %v266, %v526
      %v528 = vpop.f32.mrf.mxu0
      %529 = vmatprep.mubr.bf16.mxu0 0
      %530 = vmatmul.mubr.bf16.gmra.mxu0 %v386
      %v531 = vpop.f32.mrf.mxu0
      %v532 = vadd.f32 %v266, %v531
      %v533 = vpop.f32.mrf.mxu0
      %v534 = vpop.f32.mrf.mxu0
      %v535 = vadd.f32 %v266, %v534
      %v536 = vpop.f32.mrf.mxu0
      %537 = vmatprep.mubr.bf16.mxu0 0
      %538 = vmatmul.mubr.bf16.gmra.mxu0 %v389
      %v539 = vpop.f32.mrf.mxu0
      %v540 = vadd.f32 %v266, %v539
      %v541 = vpop.f32.mrf.mxu0
      %v542 = vpop.f32.mrf.mxu0
      %v543 = vadd.f32 %v266, %v542
      %v544 = vpop.f32.mrf.mxu0
      %545 = vmatprep.mubr.bf16.mxu0 0
      %546 = vmatmul.mubr.bf16.gmra.mxu0 %v392
      %v547 = vpop.f32.mrf.mxu0
      %v548 = vadd.f32 %v266, %v547
      %v549 = vpop.f32.mrf.mxu0
      %v550 = vpop.f32.mrf.mxu0
      %v551 = vadd.f32 %v266, %v550
      %v552 = vpop.f32.mrf.mxu0
      %553 = vmatprep.mubr.bf16.mxu0 0
      %554 = vmatmul.mubr.bf16.gmra.mxu0 %v395
      %v555 = vpop.f32.mrf.mxu0
      %v556 = vadd.f32 %v266, %v555
      %v557 = vpop.f32.mrf.mxu0
      %v558 = vpop.f32.mrf.mxu0
      %v559 = vadd.f32 %v266, %v558
      %v560 = vpop.f32.mrf.mxu0
      %561 = vdwg.mxu0
      %v562 = vmax.f32 %v436, 0.0
      %v563 = vmax.f32 %v439, 0.0
      %v564 = vmax.f32 %v444, 0.0
      %v565 = vmax.f32 %v447, 0.0
      %v566 = vmax.f32 %v452, 0.0
      %v567 = vmax.f32 %v455, 0.0
      %v568 = vmax.f32 %v460, 0.0
      %v569 = vmax.f32 %v463, 0.0
      %v570 = vmax.f32 %v468, 0.0
      %v571 = vmax.f32 %v471, 0.0
      %v572 = vmax.f32 %v476, 0.0
      %v573 = vmax.f32 %v479, 0.0
      %v574 = vmax.f32 %v484, 0.0
      %v575 = vmax.f32 %v487, 0.0
      %v576 = vmax.f32 %v492, 0.0
      %v577 = vmax.f32 %v495, 0.0
      %v578 = vmax.f32 %v500, 0.0
      %v579 = vmax.f32 %v503, 0.0
      %v580 = vmax.f32 %v508, 0.0
      %v581 = vmax.f32 %v511, 0.0
      %v582 = vmax.f32 %v516, 0.0
      %v583 = vmax.f32 %v519, 0.0
      %v584 = vmax.f32 %v524, 0.0
      %v585 = vmax.f32 %v527, 0.0
      %v586 = vmax.f32 %v532, 0.0
      %v587 = vmax.f32 %v535, 0.0
      %v588 = vmax.f32 %v540, 0.0
      %v589 = vmax.f32 %v543, 0.0
      %v590 = vmax.f32 %v548, 0.0
      %v591 = vmax.f32 %v551, 0.0
      %v592 = vmax.f32 %v556, 0.0
      %v593 = vmax.f32 %v559, 0.0
      %v594 = vpack.c.bf16 %v563, %v562
      %v595 = vpack.c.bf16 %v565, %v564
      %v596 = vpack.c.bf16 %v567, %v566
      %v597 = vpack.c.bf16 %v569, %v568
      %v598 = vpack.c.bf16 %v571, %v570
      %v599 = vpack.c.bf16 %v573, %v572
      %v600 = vpack.c.bf16 %v575, %v574
      %v601 = vpack.c.bf16 %v577, %v576
      %v602 = vpack.c.bf16 %v579, %v578
      %v603 = vpack.c.bf16 %v581, %v580
      %v604 = vpack.c.bf16 %v583, %v582
      %v605 = vpack.c.bf16 %v585, %v584
      %v606 = vpack.c.bf16 %v587, %v586
      %v607 = vpack.c.bf16 %v589, %v588
      %v608 = vpack.c.bf16 %v591, %v590
      %v609 = vpack.c.bf16 %v593, %v592
      %610 = vst [vmem:[#allocation2] sm:$0xf] 0
      %611 = vst [vmem:[#allocation2 + $0x4] sm:$0xf] 0
      %612 = vst [vmem:[#allocation2 + $0x8] sm:$0xf] 0
      %613 = vst [vmem:[#allocation2 + $0xc] sm:$0xf] 0
      %614 = vst [vmem:[#allocation2 + $0x10] sm:$0xf] 0
      %615 = vst [vmem:[#allocation2 + $0x14] sm:$0xf] 0
      %616 = vst [vmem:[#allocation2 + $0x18] sm:$0xf] 0
      %617 = vst [vmem:[#allocation2 + $0x1c] sm:$0xf] 0
      %618 = vst [vmem:[#allocation2 + $0x20] sm:$0xf] 0
      %619 = vst [vmem:[#allocation2 + $0x24] sm:$0xf] 0
      %620 = vst [vmem:[#allocation2 + $0x28] sm:$0xf] 0
      %621 = vst [vmem:[#allocation2 + $0x2c] sm:$0xf] 0
      %622 = vst [vmem:[#allocation2 + $0x30] sm:$0xf] 0
      %623 = vst [vmem:[#allocation2 + $0x34] sm:$0xf] 0
      %624 = vst [vmem:[#allocation2 + $0x38] sm:$0xf] 0
      %625 = vst [vmem:[#allocation2 + $0x3c] sm:$0xf] 0
      %626 = vst [vmem:[#allocation2 + $0x40] sm:$0xf] 0
      %627 = vst [vmem:[#allocation2 + $0x44] sm:$0xf] 0
      %628 = vst [vmem:[#allocation2 + $0x48] sm:$0xf] 0
      %629 = vst [vmem:[#allocation2 + $0x4c] sm:$0xf] 0
      %630 = vst [vmem:[#allocation2 + $0x50] sm:$0xf] 0
      %631 = vst [vmem:[#allocation2 + $0x54] sm:$0xf] 0
      %632 = vst [vmem:[#allocation2 + $0x58] sm:$0xf] 0
      %633 = vst [vmem:[#allocation2 + $0x5c] sm:$0xf] 0
      %634 = vst [vmem:[#allocation2 + $0x60] sm:$0xf] 0
      %635 = vst [vmem:[#allocation2 + $0x64] sm:$0xf] 0
      %636 = vst [vmem:[#allocation2 + $0x68] sm:$0xf] 0
      %637 = vst [vmem:[#allocation2 + $0x6c] sm:$0xf] 0
      %638 = vst [vmem:[#allocation2 + $0x70] sm:$0xf] 0
      %639 = vst [vmem:[#allocation2 + $0x74] sm:$0xf] 0
      %640 = vst [vmem:[#allocation2 + $0x78] sm:$0xf] 0
      %641 = vst [vmem:[#allocation2 + $0x7c] sm:$0xf] 0
      %642 = vst [vmem:[#allocation2 + $0x80] sm:$0xf] 0
      %643 = vst [vmem:[#allocation2 + $0x84] sm:$0xf] 0
      %644 = vst [vmem:[#allocation2 + $0x88] sm:$0xf] 0
      %645 = vst [vmem:[#allocation2 + $0x8c] sm:$0xf] 0
      %646 = vst [vmem:[#allocation2 + $0x90] sm:$0xf] 0
      %647 = vst [vmem:[#allocation2 + $0x94] sm:$0xf] 0
      %648 = vst [vmem:[#allocation2 + $0x98] sm:$0xf] 0
      %649 = vst [vmem:[#allocation2 + $0x9c] sm:$0xf] 0
      %v666 = vunpack.c.l.b16 %v594
      %v667 = vunpack.c.h.b16 %v594
      %v668 = vunpack.c.l.b16 %v595
      %v669 = vunpack.c.h.b16 %v595
      %v670 = vunpack.c.l.b16 %v596
      %v671 = vunpack.c.h.b16 %v596
      %v672 = vunpack.c.l.b16 %v597
      %v673 = vunpack.c.h.b16 %v597
      %v674 = vunpack.c.l.b16 %v598
      %v675 = vunpack.c.h.b16 %v598
      %v676 = vunpack.c.l.b16 %v599
      %v677 = vunpack.c.h.b16 %v599
      %v678 = vunpack.c.l.b16 %v600
      %v679 = vunpack.c.h.b16 %v600
      %v680 = vunpack.c.l.b16 %v601
      %v681 = vunpack.c.h.b16 %v601
      %v682 = vunpack.c.l.b16 %v602
      %v683 = vunpack.c.h.b16 %v602
      %v684 = vunpack.c.l.b16 %v603
      %v685 = vunpack.c.h.b16 %v603
      %v686 = vunpack.c.l.b16 %v604
      %v687 = vunpack.c.h.b16 %v604
      %v688 = vunpack.c.l.b16 %v605
      %v689 = vunpack.c.h.b16 %v605
      %v690 = vunpack.c.l.b16 %v606
      %v691 = vunpack.c.h.b16 %v606
      %v692 = vunpack.c.l.b16 %v607
      %v693 = vunpack.c.h.b16 %v607
      %v694 = vunpack.c.l.b16 %v608
      %v695 = vunpack.c.h.b16 %v608
      %v696 = vunpack.c.l.b16 %v609
      %v697 = vunpack.c.h.b16 %v609
      %v698 = vpack.c.b16 %v666, %v666
      %v699 = vpack.c.b16 %v667, %v667
      %v700 = vpack.c.b16 %v668, %v668
      %v701 = vpack.c.b16 %v669, %v669
      %v702 = vpack.c.b16 %v670, %v670
      %v703 = vpack.c.b16 %v671, %v671
      %v704 = vpack.c.b16 %v672, %v672
      %v705 = vpack.c.b16 %v673, %v673
      %v706 = vpack.c.b16 %v674, %v674
      %v707 = vpack.c.b16 %v675, %v675
      %v708 = vpack.c.b16 %v676, %v676
      %v709 = vpack.c.b16 %v677, %v677
      %v710 = vpack.c.b16 %v678, %v678
      %v711 = vpack.c.b16 %v679, %v679
      %v712 = vpack.c.b16 %v680, %v680
      %v713 = vpack.c.b16 %v681, %v681
      %v714 = vpack.c.b16 %v682, %v682
      %v715 = vpack.c.b16 %v683, %v683
      %v716 = vpack.c.b16 %v684, %v684
      %v717 = vpack.c.b16 %v685, %v685
      %v718 = vpack.c.b16 %v686, %v686
      %v719 = vpack.c.b16 %v687, %v687
      %v720 = vpack.c.b16 %v688, %v688
      %v721 = vpack.c.b16 %v689, %v689
      %v722 = vpack.c.b16 %v690, %v690
      %v723 = vpack.c.b16 %v691, %v691
      %v724 = vpack.c.b16 %v692, %v692
      %v725 = vpack.c.b16 %v693, %v693
      %v726 = vpack.c.b16 %v694, %v694
      %v727 = vpack.c.b16 %v695, %v695
      %v728 = vpack.c.b16 %v696, %v696
      %v729 = vpack.c.b16 %v697, %v697
      %762 = vst [vmem:[#allocation2 + $0x10] sm:$0xf] %v698
      %763 = vst [vmem:[#allocation2 + $0x14] sm:$0xf] %v699
      %764 = vst [vmem:[#allocation2 + $0x18] sm:$0xf] %v700
      %765 = vst [vmem:[#allocation2 + $0x1c] sm:$0xf] %v701
      %766 = vst [vmem:[#allocation2 + $0x20] sm:$0xf] %v702
      %767 = vst [vmem:[#allocation2 + $0x24] sm:$0xf] %v703
      %768 = vst [vmem:[#allocation2 + $0x28] sm:$0xf] %v704
      %769 = vst [vmem:[#allocation2 + $0x2c] sm:$0xf] %v705
      %770 = vst [vmem:[#allocation2 + $0x30] sm:$0xf] %v706
      %771 = vst [vmem:[#allocation2 + $0x34] sm:$0xf] %v707
      %772 = vst [vmem:[#allocation2 + $0x38] sm:$0xf] %v708
      %773 = vst [vmem:[#allocation2 + $0x3c] sm:$0xf] %v709
      %774 = vst [vmem:[#allocation2 + $0x40] sm:$0xf] %v710
      %775 = vst [vmem:[#allocation2 + $0x44] sm:$0xf] %v711
      %776 = vst [vmem:[#allocation2 + $0x48] sm:$0xf] %v712
      %777 = vst [vmem:[#allocation2 + $0x4c] sm:$0xf] %v713
      %778 = vst [vmem:[#allocation2 + $0x50] sm:$0xf] %v714
      %779 = vst [vmem:[#allocation2 + $0x54] sm:$0xf] %v715
      %780 = vst [vmem:[#allocation2 + $0x58] sm:$0xf] %v716
      %781 = vst [vmem:[#allocation2 + $0x5c] sm:$0xf] %v717
      %782 = vst [vmem:[#allocation2 + $0x60] sm:$0xf] %v718
      %783 = vst [vmem:[#allocation2 + $0x64] sm:$0xf] %v719
      %784 = vst [vmem:[#allocation2 + $0x68] sm:$0xf] %v720
      %785 = vst [vmem:[#allocation2 + $0x6c] sm:$0xf] %v721
      %786 = vst [vmem:[#allocation2 + $0x70] sm:$0xf] %v722
      %787 = vst [vmem:[#allocation2 + $0x74] sm:$0xf] %v723
      %788 = vst [vmem:[#allocation2 + $0x78] sm:$0xf] %v724
      %789 = vst [vmem:[#allocation2 + $0x7c] sm:$0xf] %v725
      %790 = vst [vmem:[#allocation2 + $0x80] sm:$0xf] %v726
      %791 = vst [vmem:[#allocation2 + $0x84] sm:$0xf] %v727
      %792 = vst [vmem:[#allocation2 + $0x88] sm:$0xf] %v728
      %793 = vst [vmem:[#allocation2 + $0x8c] sm:$0xf] %v729
      %v794 = vlaneseq
      %v795 = vshrl.u32 %v794, 7
      %v796 = vadd.s32 %v795, 8
      %v797 = vadd.s32 %v795, 16
      %v798 = vadd.s32 %v795, 24
      %v799 = vadd.s32 %v795, 32
      %v800 = vadd.s32 %v795, 40
      %v801 = vadd.s32 %v795, 48
      %v802 = vadd.s32 %v795, 56
      %v803 = vadd.s32 %v795, 64
      %v804 = vadd.s32 %v795, 72
      %v805 = vadd.s32 %v795, 80
      %v806 = vadd.s32 %v795, 88
      %v807 = vadd.s32 %v795, 96
      %v808 = vadd.s32 %v795, 104
      %v809 = vadd.s32 %v795, 112
      %v810 = vadd.s32 %v795, 120
      %v811 = vadd.s32 %v795, 128
      %v812 = vadd.s32 %v795, 136
      %v813 = vadd.s32 %v795, 144
      %v814 = vadd.s32 %v795, 152
      %v815 = vadd.s32 %v795, 160
      %v816 = vadd.s32 %v795, 168
      %v817 = vadd.s32 %v795, 176
      %v818 = vadd.s32 %v795, 184
      %v819 = vadd.s32 %v795, 192
      %v820 = vadd.s32 %v795, 200
      %v821 = vadd.s32 %v795, 208
      %v822 = vadd.s32 %v795, 216
      %v823 = vadd.s32 %v795, 224
      %v824 = vadd.s32 %v795, 232
      %v825 = vadd.s32 %v795, 240
      %v826 = vadd.s32 %v795, 248
      %vm827 = vcmp.lt.s32.totalorder %v795, 0
      %v828 = vsub.s32 0, %v795
      %v829 = vsel %vm827, %v828, %v795
      %v830 = vshrl.u32 %v829, 4
      %v831 = vand.u32 %v829, 15
      %v832 = vsub.s32 0, %v831
      %v833 = vsel %vm827, %v832, %v831
      %vm834 = vcmp.lt.s32.totalorder %v796, 0
      %v835 = vsub.s32 0, %v796
      %v836 = vsel %vm834, %v835, %v796
      %v837 = vshrl.u32 %v836, 4
      %v838 = vand.u32 %v836, 15
      %v839 = vsub.s32 0, %v838
      %v840 = vsel %vm834, %v839, %v838
      %vm841 = vcmp.lt.s32.totalorder %v797, 0
      %v842 = vsub.s32 0, %v797
      %v843 = vsel %vm841, %v842, %v797
      %v844 = vshrl.u32 %v843, 4
      %v845 = vand.u32 %v843, 15
      %v846 = vsub.s32 0, %v845
      %v847 = vsel %vm841, %v846, %v845
      %vm848 = vcmp.lt.s32.totalorder %v798, 0
      %v849 = vsub.s32 0, %v798
      %v850 = vsel %vm848, %v849, %v798
      %v851 = vshrl.u32 %v850, 4
      %v852 = vand.u32 %v850, 15
      %v853 = vsub.s32 0, %v852
      %v854 = vsel %vm848, %v853, %v852
      %vm855 = vcmp.lt.s32.totalorder %v799, 0
      %v856 = vsub.s32 0, %v799
      %v857 = vsel %vm855, %v856, %v799
      %v858 = vshrl.u32 %v857, 4
      %v859 = vand.u32 %v857, 15
      %v860 = vsub.s32 0, %v859
      %v861 = vsel %vm855, %v860, %v859
      %vm862 = vcmp.lt.s32.totalorder %v800, 0
      %v863 = vsub.s32 0, %v800
      %v864 = vsel %vm862, %v863, %v800
      %v865 = vshrl.u32 %v864, 4
      %v866 = vand.u32 %v864, 15
      %v867 = vsub.s32 0, %v866
      %v868 = vsel %vm862, %v867, %v866
      %vm869 = vcmp.lt.s32.totalorder %v801, 0
      %v870 = vsub.s32 0, %v801
      %v871 = vsel %vm869, %v870, %v801
      %v872 = vshrl.u32 %v871, 4
      %v873 = vand.u32 %v871, 15
      %v874 = vsub.s32 0, %v873
      %v875 = vsel %vm869, %v874, %v873
      %vm876 = vcmp.lt.s32.totalorder %v802, 0
      %v877 = vsub.s32 0, %v802
      %v878 = vsel %vm876, %v877, %v802
      %v879 = vshrl.u32 %v878, 4
      %v880 = vand.u32 %v878, 15
      %v881 = vsub.s32 0, %v880
      %v882 = vsel %vm876, %v881, %v880
      %vm883 = vcmp.lt.s32.totalorder %v803, 0
      %v884 = vsub.s32 0, %v803
      %v885 = vsel %vm883, %v884, %v803
      %v886 = vshrl.u32 %v885, 4
      %v887 = vand.u32 %v885, 15
      %v888 = vsub.s32 0, %v887
      %v889 = vsel %vm883, %v888, %v887
      %vm890 = vcmp.lt.s32.totalorder %v804, 0
      %v891 = vsub.s32 0, %v804
      %v892 = vsel %vm890, %v891, %v804
      %v893 = vshrl.u32 %v892, 4
      %v894 = vand.u32 %v892, 15
      %v895 = vsub.s32 0, %v894
      %v896 = vsel %vm890, %v895, %v894
      %vm897 = vcmp.lt.s32.totalorder %v805, 0
      %v898 = vsub.s32 0, %v805
      %v899 = vsel %vm897, %v898, %v805
      %v900 = vshrl.u32 %v899, 4
      %v901 = vand.u32 %v899, 15
      %v902 = vsub.s32 0, %v901
      %v903 = vsel %vm897, %v902, %v901
      %vm904 = vcmp.lt.s32.totalorder %v806, 0
      %v905 = vsub.s32 0, %v806
      %v906 = vsel %vm904, %v905, %v806
      %v907 = vshrl.u32 %v906, 4
      %v908 = vand.u32 %v906, 15
      %v909 = vsub.s32 0, %v908
      %v910 = vsel %vm904, %v909, %v908
      %vm911 = vcmp.lt.s32.totalorder %v807, 0
      %v912 = vsub.s32 0, %v807
      %v913 = vsel %vm911, %v912, %v807
      %v914 = vshrl.u32 %v913, 4
      %v915 = vand.u32 %v913, 15
      %v916 = vsub.s32 0, %v915
      %v917 = vsel %vm911, %v916, %v915
      %vm918 = vcmp.lt.s32.totalorder %v808, 0
      %v919 = vsub.s32 0, %v808
      %v920 = vsel %vm918, %v919, %v808
      %v921 = vshrl.u32 %v920, 4
      %v922 = vand.u32 %v920, 15
      %v923 = vsub.s32 0, %v922
      %v924 = vsel %vm918, %v923, %v922
      %vm925 = vcmp.lt.s32.totalorder %v809, 0
      %v926 = vsub.s32 0, %v809
      %v927 = vsel %vm925, %v926, %v809
      %v928 = vshrl.u32 %v927, 4
      %v929 = vand.u32 %v927, 15
      %v930 = vsub.s32 0, %v929
      %v931 = vsel %vm925, %v930, %v929
      %vm932 = vcmp.lt.s32.totalorder %v810, 0
      %v933 = vsub.s32 0, %v810
      %v934 = vsel %vm932, %v933, %v810
      %v935 = vshrl.u32 %v934, 4
      %v936 = vand.u32 %v934, 15
      %v937 = vsub.s32 0, %v936
      %v938 = vsel %vm932, %v937, %v936
      %vm939 = vcmp.lt.s32.totalorder %v811, 0
      %v940 = vsub.s32 0, %v811
      %v941 = vsel %vm939, %v940, %v811
      %v942 = vshrl.u32 %v941, 4
      %v943 = vand.u32 %v941, 15
      %v944 = vsub.s32 0, %v943
      %v945 = vsel %vm939, %v944, %v943
      %vm946 = vcmp.lt.s32.totalorder %v812, 0
      %v947 = vsub.s32 0, %v812
      %v948 = vsel %vm946, %v947, %v812
      %v949 = vshrl.u32 %v948, 4
      %v950 = vand.u32 %v948, 15
      %v951 = vsub.s32 0, %v950
      %v952 = vsel %vm946, %v951, %v950
      %vm953 = vcmp.lt.s32.totalorder %v813, 0
      %v954 = vsub.s32 0, %v813
      %v955 = vsel %vm953, %v954, %v813
      %v956 = vshrl.u32 %v955, 4
      %v957 = vand.u32 %v955, 15
      %v958 = vsub.s32 0, %v957
      %v959 = vsel %vm953, %v958, %v957
      %vm960 = vcmp.lt.s32.totalorder %v814, 0
      %v961 = vsub.s32 0, %v814
      %v962 = vsel %vm960, %v961, %v814
      %v963 = vshrl.u32 %v962, 4
      %v964 = vand.u32 %v962, 15
      %v965 = vsub.s32 0, %v964
      %v966 = vsel %vm960, %v965, %v964
      %vm967 = vcmp.lt.s32.totalorder %v815, 0
      %v968 = vsub.s32 0, %v815
      %v969 = vsel %vm967, %v968, %v815
      %v970 = vshrl.u32 %v969, 4
      %v971 = vand.u32 %v969, 15
      %v972 = vsub.s32 0, %v971
      %v973 = vsel %vm967, %v972, %v971
      %vm974 = vcmp.lt.s32.totalorder %v816, 0
      %v975 = vsub.s32 0, %v816
      %v976 = vsel %vm974, %v975, %v816
      %v977 = vshrl.u32 %v976, 4
      %v978 = vand.u32 %v976, 15
      %v979 = vsub.s32 0, %v978
      %v980 = vsel %vm974, %v979, %v978
      %vm981 = vcmp.lt.s32.totalorder %v817, 0
      %v982 = vsub.s32 0, %v817
      %v983 = vsel %vm981, %v982, %v817
      %v984 = vshrl.u32 %v983, 4
      %v985 = vand.u32 %v983, 15
      %v986 = vsub.s32 0, %v985
      %v987 = vsel %vm981, %v986, %v985
      %vm988 = vcmp.lt.s32.totalorder %v818, 0
      %v989 = vsub.s32 0, %v818
      %v990 = vsel %vm988, %v989, %v818
      %v991 = vshrl.u32 %v990, 4
      %v992 = vand.u32 %v990, 15
      %v993 = vsub.s32 0, %v992
      %v994 = vsel %vm988, %v993, %v992
      %vm995 = vcmp.lt.s32.totalorder %v819, 0
      %v996 = vsub.s32 0, %v819
      %v997 = vsel %vm995, %v996, %v819
      %v998 = vshrl.u32 %v997, 4
      %v999 = vand.u32 %v997, 15
      %v1000 = vsub.s32 0, %v999
      %v1001 = vsel %vm995, %v1000, %v999
      %vm1002 = vcmp.lt.s32.totalorder %v820, 0
      %v1003 = vsub.s32 0, %v820
      %v1004 = vsel %vm1002, %v1003, %v820
      %v1005 = vshrl.u32 %v1004, 4
      %v1006 = vand.u32 %v1004, 15
      %v1007 = vsub.s32 0, %v1006
      %v1008 = vsel %vm1002, %v1007, %v1006
      %vm1009 = vcmp.lt.s32.totalorder %v821, 0
      %v1010 = vsub.s32 0, %v821
      %v1011 = vsel %vm1009, %v1010, %v821
      %v1012 = vshrl.u32 %v1011, 4
      %v1013 = vand.u32 %v1011, 15
      %v1014 = vsub.s32 0, %v1013
      %v1015 = vsel %vm1009, %v1014, %v1013
      %vm1016 = vcmp.lt.s32.totalorder %v822, 0
      %v1017 = vsub.s32 0, %v822
      %v1018 = vsel %vm1016, %v1017, %v822
      %v1019 = vshrl.u32 %v1018, 4
      %v1020 = vand.u32 %v1018, 15
      %v1021 = vsub.s32 0, %v1020
      %v1022 = vsel %vm1016, %v1021, %v1020
      %vm1023 = vcmp.lt.s32.totalorder %v823, 0
      %v1024 = vsub.s32 0, %v823
      %v1025 = vsel %vm1023, %v1024, %v823
      %v1026 = vshrl.u32 %v1025, 4
      %v1027 = vand.u32 %v1025, 15
      %v1028 = vsub.s32 0, %v1027
      %v1029 = vsel %vm1023, %v1028, %v1027
      %vm1030 = vcmp.lt.s32.totalorder %v824, 0
      %v1031 = vsub.s32 0, %v824
      %v1032 = vsel %vm1030, %v1031, %v824
      %v1033 = vshrl.u32 %v1032, 4
      %v1034 = vand.u32 %v1032, 15
      %v1035 = vsub.s32 0, %v1034
      %v1036 = vsel %vm1030, %v1035, %v1034
      %vm1037 = vcmp.lt.s32.totalorder %v825, 0
      %v1038 = vsub.s32 0, %v825
      %v1039 = vsel %vm1037, %v1038, %v825
      %v1040 = vshrl.u32 %v1039, 4
      %v1041 = vand.u32 %v1039, 15
      %v1042 = vsub.s32 0, %v1041
      %v1043 = vsel %vm1037, %v1042, %v1041
      %vm1044 = vcmp.lt.s32.totalorder %v826, 0
      %v1045 = vsub.s32 0, %v826
      %v1046 = vsel %vm1044, %v1045, %v826
      %v1047 = vshrl.u32 %v1046, 4
      %v1048 = vand.u32 %v1046, 15
      %v1049 = vsub.s32 0, %v1048
      %v1050 = vsel %vm1044, %v1049, %v1048
      %vm1051 = vcmp.ne.s32.totalorder %v833, 0
      %vm1052 = vcmp.ne.s32.totalorder %v840, 0
      %vm1053 = vcmp.ne.s32.totalorder %v847, 0
      %vm1054 = vcmp.ne.s32.totalorder %v854, 0
      %vm1055 = vcmp.ne.s32.totalorder %v861, 0
      %vm1056 = vcmp.ne.s32.totalorder %v868, 0
      %vm1057 = vcmp.ne.s32.totalorder %v875, 0
      %vm1058 = vcmp.ne.s32.totalorder %v882, 0
      %vm1059 = vcmp.ne.s32.totalorder %v889, 0
      %vm1060 = vcmp.ne.s32.totalorder %v896, 0
      %vm1061 = vcmp.ne.s32.totalorder %v903, 0
      %vm1062 = vcmp.ne.s32.totalorder %v910, 0
      %vm1063 = vcmp.ne.s32.totalorder %v917, 0
      %vm1064 = vcmp.ne.s32.totalorder %v924, 0
      %vm1065 = vcmp.ne.s32.totalorder %v931, 0
      %vm1066 = vcmp.ne.s32.totalorder %v938, 0
      %vm1067 = vcmp.ne.s32.totalorder %v945, 0
      %vm1068 = vcmp.ne.s32.totalorder %v952, 0
      %vm1069 = vcmp.ne.s32.totalorder %v959, 0
      %vm1070 = vcmp.ne.s32.totalorder %v966, 0
      %vm1071 = vcmp.ne.s32.totalorder %v973, 0
      %vm1072 = vcmp.ne.s32.totalorder %v980, 0
      %vm1073 = vcmp.ne.s32.totalorder %v987, 0
      %vm1074 = vcmp.ne.s32.totalorder %v994, 0
      %vm1075 = vcmp.ne.s32.totalorder %v1001, 0
      %vm1076 = vcmp.ne.s32.totalorder %v1008, 0
      %vm1077 = vcmp.ne.s32.totalorder %v1015, 0
      %vm1078 = vcmp.ne.s32.totalorder %v1022, 0
      %vm1079 = vcmp.ne.s32.totalorder %v1029, 0
      %vm1080 = vcmp.ne.s32.totalorder %v1036, 0
      %vm1081 = vcmp.ne.s32.totalorder %v1043, 0
      %vm1082 = vcmp.ne.s32.totalorder %v1050, 0
      %vm1083 = vcmp.lt.s32.totalorder %v833, 0
      %vm1084 = vcmp.lt.s32.totalorder %v840, 0
      %vm1085 = vcmp.lt.s32.totalorder %v847, 0
      %vm1086 = vcmp.lt.s32.totalorder %v854, 0
      %vm1087 = vcmp.lt.s32.totalorder %v861, 0
      %vm1088 = vcmp.lt.s32.totalorder %v868, 0
      %vm1089 = vcmp.lt.s32.totalorder %v875, 0
      %vm1090 = vcmp.lt.s32.totalorder %v882, 0
      %vm1091 = vcmp.lt.s32.totalorder %v889, 0
      %vm1092 = vcmp.lt.s32.totalorder %v896, 0
      %vm1093 = vcmp.lt.s32.totalorder %v903, 0
      %vm1094 = vcmp.lt.s32.totalorder %v910, 0
      %vm1095 = vcmp.lt.s32.totalorder %v917, 0
      %vm1096 = vcmp.lt.s32.totalorder %v924, 0
      %vm1097 = vcmp.lt.s32.totalorder %v931, 0
      %vm1098 = vcmp.lt.s32.totalorder %v938, 0
      %vm1099 = vcmp.lt.s32.totalorder %v945, 0
      %vm1100 = vcmp.lt.s32.totalorder %v952, 0
      %vm1101 = vcmp.lt.s32.totalorder %v959, 0
      %vm1102 = vcmp.lt.s32.totalorder %v966, 0
      %vm1103 = vcmp.lt.s32.totalorder %v973, 0
      %vm1104 = vcmp.lt.s32.totalorder %v980, 0
      %vm1105 = vcmp.lt.s32.totalorder %v987, 0
      %vm1106 = vcmp.lt.s32.totalorder %v994, 0
      %vm1107 = vcmp.lt.s32.totalorder %v1001, 0
      %vm1108 = vcmp.lt.s32.totalorder %v1008, 0
      %vm1109 = vcmp.lt.s32.totalorder %v1015, 0
      %vm1110 = vcmp.lt.s32.totalorder %v1022, 0
      %vm1111 = vcmp.lt.s32.totalorder %v1029, 0
      %vm1112 = vcmp.lt.s32.totalorder %v1036, 0
      %vm1113 = vcmp.lt.s32.totalorder %v1043, 0
      %vm1114 = vcmp.lt.s32.totalorder %v1050, 0
      %vm1115 = vmand %vm1083, %vm1051
      %vm1116 = vmand %vm1084, %vm1052
      %vm1117 = vmand %vm1085, %vm1053
      %vm1118 = vmand %vm1086, %vm1054
      %vm1119 = vmand %vm1087, %vm1055
      %vm1120 = vmand %vm1088, %vm1056
      %vm1121 = vmand %vm1089, %vm1057
      %vm1122 = vmand %vm1090, %vm1058
      %vm1123 = vmand %vm1091, %vm1059
      %vm1124 = vmand %vm1092, %vm1060
      %vm1125 = vmand %vm1093, %vm1061
      %vm1126 = vmand %vm1094, %vm1062
      %vm1127 = vmand %vm1095, %vm1063
      %vm1128 = vmand %vm1096, %vm1064
      %vm1129 = vmand %vm1097, %vm1065
      %vm1130 = vmand %vm1098, %vm1066
      %vm1131 = vmand %vm1099, %vm1067
      %vm1132 = vmand %vm1100, %vm1068
      %vm1133 = vmand %vm1101, %vm1069
      %vm1134 = vmand %vm1102, %vm1070
      %vm1135 = vmand %vm1103, %vm1071
      %vm1136 = vmand %vm1104, %vm1072
      %vm1137 = vmand %vm1105, %vm1073
      %vm1138 = vmand %vm1106, %vm1074
      %vm1139 = vmand %vm1107, %vm1075
      %vm1140 = vmand %vm1108, %vm1076
      %vm1141 = vmand %vm1109, %vm1077
      %vm1142 = vmand %vm1110, %vm1078
      %vm1143 = vmand %vm1111, %vm1079
      %vm1144 = vmand %vm1112, %vm1080
      %vm1145 = vmand %vm1113, %vm1081
      %vm1146 = vmand %vm1114, %vm1082
      %v1147 = vadd.s32 %v833, 16
      %v1148 = vadd.s32 %v840, 16
      %v1149 = vadd.s32 %v847, 16
      %v1150 = vadd.s32 %v854, 16
      %v1151 = vadd.s32 %v861, 16
      %v1152 = vadd.s32 %v868, 16
      %v1153 = vadd.s32 %v875, 16
      %v1154 = vadd.s32 %v882, 16
      %v1155 = vadd.s32 %v889, 16
      %v1156 = vadd.s32 %v896, 16
      %v1157 = vadd.s32 %v903, 16
      %v1158 = vadd.s32 %v910, 16
      %v1159 = vadd.s32 %v917, 16
      %v1160 = vadd.s32 %v924, 16
      %v1161 = vadd.s32 %v931, 16
      %v1162 = vadd.s32 %v938, 16
      %v1163 = vadd.s32 %v945, 16
      %v1164 = vadd.s32 %v952, 16
      %v1165 = vadd.s32 %v959, 16
      %v1166 = vadd.s32 %v966, 16
      %v1167 = vadd.s32 %v973, 16
      %v1168 = vadd.s32 %v980, 16
      %v1169 = vadd.s32 %v987, 16
      %v1170 = vadd.s32 %v994, 16
      %v1171 = vadd.s32 %v1001, 16
      %v1172 = vadd.s32 %v1008, 16
      %v1173 = vadd.s32 %v1015, 16
      %v1174 = vadd.s32 %v1022, 16
      %v1175 = vadd.s32 %v1029, 16
      %v1176 = vadd.s32 %v1036, 16
      %v1177 = vadd.s32 %v1043, 16
      %v1178 = vadd.s32 %v1050, 16
      %v1179 = vsel %vm1115, %v1147, %v833
      %v1180 = vsel %vm1116, %v1148, %v840
      %v1181 = vsel %vm1117, %v1149, %v847
      %v1182 = vsel %vm1118, %v1150, %v854
      %v1183 = vsel %vm1119, %v1151, %v861
      %v1184 = vsel %vm1120, %v1152, %v868
      %v1185 = vsel %vm1121, %v1153, %v875
      %v1186 = vsel %vm1122, %v1154, %v882
      %v1187 = vsel %vm1123, %v1155, %v889
      %v1188 = vsel %vm1124, %v1156, %v896
      %v1189 = vsel %vm1125, %v1157, %v903
      %v1190 = vsel %vm1126, %v1158, %v910
      %v1191 = vsel %vm1127, %v1159, %v917
      %v1192 = vsel %vm1128, %v1160, %v924
      %v1193 = vsel %vm1129, %v1161, %v931
      %v1194 = vsel %vm1130, %v1162, %v938
      %v1195 = vsel %vm1131, %v1163, %v945
      %v1196 = vsel %vm1132, %v1164, %v952
      %v1197 = vsel %vm1133, %v1165, %v959
      %v1198 = vsel %vm1134, %v1166, %v966
      %v1199 = vsel %vm1135, %v1167, %v973
      %v1200 = vsel %vm1136, %v1168, %v980
      %v1201 = vsel %vm1137, %v1169, %v987
      %v1202 = vsel %vm1138, %v1170, %v994
      %v1203 = vsel %vm1139, %v1171, %v1001
      %v1204 = vsel %vm1140, %v1172, %v1008
      %v1205 = vsel %vm1141, %v1173, %v1015
      %v1206 = vsel %vm1142, %v1174, %v1022
      %v1207 = vsel %vm1143, %v1175, %v1029
      %v1208 = vsel %vm1144, %v1176, %v1036
      %v1209 = vsel %vm1145, %v1177, %v1043
      %v1210 = vsel %vm1146, %v1178, %v1050
      %vm1211 = vcmp.ne.s32.totalorder %v1179, 0
      %vm1212 = vcmp.ne.s32.totalorder %v1180, 0
      %vm1213 = vcmp.ne.s32.totalorder %v1181, 0
      %vm1214 = vcmp.ne.s32.totalorder %v1182, 0
      %vm1215 = vcmp.ne.s32.totalorder %v1183, 0
      %vm1216 = vcmp.ne.s32.totalorder %v1184, 0
      %vm1217 = vcmp.ne.s32.totalorder %v1185, 0
      %vm1218 = vcmp.ne.s32.totalorder %v1186, 0
      %vm1219 = vcmp.ne.s32.totalorder %v1187, 0
      %vm1220 = vcmp.ne.s32.totalorder %v1188, 0
      %vm1221 = vcmp.ne.s32.totalorder %v1189, 0
      %vm1222 = vcmp.ne.s32.totalorder %v1190, 0
      %vm1223 = vcmp.ne.s32.totalorder %v1191, 0
      %vm1224 = vcmp.ne.s32.totalorder %v1192, 0
      %vm1225 = vcmp.ne.s32.totalorder %v1193, 0
      %vm1226 = vcmp.ne.s32.totalorder %v1194, 0
      %vm1227 = vcmp.ne.s32.totalorder %v1195, 0
      %vm1228 = vcmp.ne.s32.totalorder %v1196, 0
      %vm1229 = vcmp.ne.s32.totalorder %v1197, 0
      %vm1230 = vcmp.ne.s32.totalorder %v1198, 0
      %vm1231 = vcmp.ne.s32.totalorder %v1199, 0
      %vm1232 = vcmp.ne.s32.totalorder %v1200, 0
      %vm1233 = vcmp.ne.s32.totalorder %v1201, 0
      %vm1234 = vcmp.ne.s32.totalorder %v1202, 0
      %vm1235 = vcmp.ne.s32.totalorder %v1203, 0
      %vm1236 = vcmp.ne.s32.totalorder %v1204, 0
      %vm1237 = vcmp.ne.s32.totalorder %v1205, 0
      %vm1238 = vcmp.ne.s32.totalorder %v1206, 0
      %vm1239 = vcmp.ne.s32.totalorder %v1207, 0
      %vm1240 = vcmp.ne.s32.totalorder %v1208, 0
      %vm1241 = vcmp.ne.s32.totalorder %v1209, 0
      %vm1242 = vcmp.ne.s32.totalorder %v1210, 0
      %vm1243 = vcmp.ne.s32.totalorder %v1179, 15
      %vm1244 = vcmp.ne.s32.totalorder %v1180, 15
      %vm1245 = vcmp.ne.s32.totalorder %v1181, 15
      %vm1246 = vcmp.ne.s32.totalorder %v1182, 15
      %vm1247 = vcmp.ne.s32.totalorder %v1183, 15
      %vm1248 = vcmp.ne.s32.totalorder %v1184, 15
      %vm1249 = vcmp.ne.s32.totalorder %v1185, 15
      %vm1250 = vcmp.ne.s32.totalorder %v1186, 15
      %vm1251 = vcmp.ne.s32.totalorder %v1187, 15
      %vm1252 = vcmp.ne.s32.totalorder %v1188, 15
      %vm1253 = vcmp.ne.s32.totalorder %v1189, 15
      %vm1254 = vcmp.ne.s32.totalorder %v1190, 15
      %vm1255 = vcmp.ne.s32.totalorder %v1191, 15
      %vm1256 = vcmp.ne.s32.totalorder %v1192, 15
      %vm1257 = vcmp.ne.s32.totalorder %v1193, 15
      %vm1258 = vcmp.ne.s32.totalorder %v1194, 15
      %vm1259 = vcmp.ne.s32.totalorder %v1195, 15
      %vm1260 = vcmp.ne.s32.totalorder %v1196, 15
      %vm1261 = vcmp.ne.s32.totalorder %v1197, 15
      %vm1262 = vcmp.ne.s32.totalorder %v1198, 15
      %vm1263 = vcmp.ne.s32.totalorder %v1199, 15
      %vm1264 = vcmp.ne.s32.totalorder %v1200, 15
      %vm1265 = vcmp.ne.s32.totalorder %v1201, 15
      %vm1266 = vcmp.ne.s32.totalorder %v1202, 15
      %vm1267 = vcmp.ne.s32.totalorder %v1203, 15
      %vm1268 = vcmp.ne.s32.totalorder %v1204, 15
      %vm1269 = vcmp.ne.s32.totalorder %v1205, 15
      %vm1270 = vcmp.ne.s32.totalorder %v1206, 15
      %vm1271 = vcmp.ne.s32.totalorder %v1207, 15
      %vm1272 = vcmp.ne.s32.totalorder %v1208, 15
      %vm1273 = vcmp.ne.s32.totalorder %v1209, 15
      %vm1274 = vcmp.ne.s32.totalorder %v1210, 15
      %v1275 = vld [vmem:[#allocation2 + $0x4] sm:$0x8]
      %v1276 = vld [vmem:[#allocation2 + $0x8] sm:$0xf]
      %v1277 = vld [vmem:[#allocation2 + $0xc] sm:$0xf]
      %v1278 = vld [vmem:[#allocation2 + $0x10] sm:$0xf]
      %v1279 = vld [vmem:[#allocation2 + $0x14] sm:$0xf]
      %v1280 = vld [vmem:[#allocation2 + $0x18] sm:$0xf]
      %v1281 = vld [vmem:[#allocation2 + $0x1c] sm:$0xf]
      %v1282 = vld [vmem:[#allocation2 + $0x20] sm:$0xf]
      %v1283 = vld [vmem:[#allocation2 + $0x24] sm:$0xf]
      %v1284 = vld [vmem:[#allocation2 + $0x28] sm:$0xf]
      %v1285 = vld [vmem:[#allocation2 + $0x2c] sm:$0xf]
      %v1286 = vld [vmem:[#allocation2 + $0x30] sm:$0xf]
      %v1287 = vld [vmem:[#allocation2 + $0x34] sm:$0xf]
      %v1288 = vld [vmem:[#allocation2 + $0x38] sm:$0xf]
      %v1289 = vld [vmem:[#allocation2 + $0x3c] sm:$0xf]
      %v1290 = vld [vmem:[#allocation2 + $0x40] sm:$0xf]
      %v1291 = vld [vmem:[#allocation2 + $0x44] sm:$0xf]
      %v1292 = vld [vmem:[#allocation2 + $0x48] sm:$0xf]
      %v1293 = vld [vmem:[#allocation2 + $0x4c] sm:$0xf]
      %v1294 = vld [vmem:[#allocation2 + $0x50] sm:$0xf]
      %v1295 = vld [vmem:[#allocation2 + $0x54] sm:$0xf]
      %v1296 = vld [vmem:[#allocation2 + $0x58] sm:$0xf]
      %v1297 = vld [vmem:[#allocation2 + $0x5c] sm:$0xf]
      %v1298 = vld [vmem:[#allocation2 + $0x60] sm:$0xf]
      %v1299 = vld [vmem:[#allocation2 + $0x64] sm:$0xf]
      %v1300 = vld [vmem:[#allocation2 + $0x68] sm:$0xf]
      %v1301 = vld [vmem:[#allocation2 + $0x6c] sm:$0xf]
      %v1302 = vld [vmem:[#allocation2 + $0x70] sm:$0xf]
      %v1303 = vld [vmem:[#allocation2 + $0x74] sm:$0xf]
      %v1304 = vld [vmem:[#allocation2 + $0x78] sm:$0xf]
      %v1305 = vld [vmem:[#allocation2 + $0x7c] sm:$0xf]
      %v1306 = vld [vmem:[#allocation2 + $0x80] sm:$0xf]
      %v1307 = vld [vmem:[#allocation2 + $0x84] sm:$0xf]
      %v1308 = vsel %vm1211, 1, 0
      %v1309 = vsel %vm1212, 1, 0
      %v1310 = vsel %vm1213, 1, 0
      %v1311 = vsel %vm1214, 1, 0
      %v1312 = vsel %vm1215, 1, 0
      %v1313 = vsel %vm1216, 1, 0
      %v1314 = vsel %vm1217, 1, 0
      %v1315 = vsel %vm1218, 1, 0
      %v1316 = vsel %vm1219, 1, 0
      %v1317 = vsel %vm1220, 1, 0
      %v1318 = vsel %vm1221, 1, 0
      %v1319 = vsel %vm1222, 1, 0
      %v1320 = vsel %vm1223, 1, 0
      %v1321 = vsel %vm1224, 1, 0
      %v1322 = vsel %vm1225, 1, 0
      %v1323 = vsel %vm1226, 1, 0
      %v1324 = vsel %vm1227, 1, 0
      %v1325 = vsel %vm1228, 1, 0
      %v1326 = vsel %vm1229, 1, 0
      %v1327 = vsel %vm1230, 1, 0
      %v1328 = vsel %vm1231, 1, 0
      %v1329 = vsel %vm1232, 1, 0
      %v1330 = vsel %vm1233, 1, 0
      %v1331 = vsel %vm1234, 1, 0
      %v1332 = vsel %vm1235, 1, 0
      %v1333 = vsel %vm1236, 1, 0
      %v1334 = vsel %vm1237, 1, 0
      %v1335 = vsel %vm1238, 1, 0
      %v1336 = vsel %vm1239, 1, 0
      %v1337 = vsel %vm1240, 1, 0
      %v1338 = vsel %vm1241, 1, 0
      %v1339 = vsel %vm1242, 1, 0
      %vm1340 = vcmp.eq.s32.totalorder %v1308, 1
      %vm1341 = vcmp.eq.s32.totalorder %v1309, 1
      %vm1342 = vcmp.eq.s32.totalorder %v1310, 1
      %vm1343 = vcmp.eq.s32.totalorder %v1311, 1
      %vm1344 = vcmp.eq.s32.totalorder %v1312, 1
      %vm1345 = vcmp.eq.s32.totalorder %v1313, 1
      %vm1346 = vcmp.eq.s32.totalorder %v1314, 1
      %vm1347 = vcmp.eq.s32.totalorder %v1315, 1
      %vm1348 = vcmp.eq.s32.totalorder %v1316, 1
      %vm1349 = vcmp.eq.s32.totalorder %v1317, 1
      %vm1350 = vcmp.eq.s32.totalorder %v1318, 1
      %vm1351 = vcmp.eq.s32.totalorder %v1319, 1
      %vm1352 = vcmp.eq.s32.totalorder %v1320, 1
      %vm1353 = vcmp.eq.s32.totalorder %v1321, 1
      %vm1354 = vcmp.eq.s32.totalorder %v1322, 1
      %vm1355 = vcmp.eq.s32.totalorder %v1323, 1
      %vm1356 = vcmp.eq.s32.totalorder %v1324, 1
      %vm1357 = vcmp.eq.s32.totalorder %v1325, 1
      %vm1358 = vcmp.eq.s32.totalorder %v1326, 1
      %vm1359 = vcmp.eq.s32.totalorder %v1327, 1
      %vm1360 = vcmp.eq.s32.totalorder %v1328, 1
      %vm1361 = vcmp.eq.s32.totalorder %v1329, 1
      %vm1362 = vcmp.eq.s32.totalorder %v1330, 1
      %vm1363 = vcmp.eq.s32.totalorder %v1331, 1
      %vm1364 = vcmp.eq.s32.totalorder %v1332, 1
      %vm1365 = vcmp.eq.s32.totalorder %v1333, 1
      %vm1366 = vcmp.eq.s32.totalorder %v1334, 1
      %vm1367 = vcmp.eq.s32.totalorder %v1335, 1
      %vm1368 = vcmp.eq.s32.totalorder %v1336, 1
      %vm1369 = vcmp.eq.s32.totalorder %v1337, 1
      %vm1370 = vcmp.eq.s32.totalorder %v1338, 1
      %vm1371 = vcmp.eq.s32.totalorder %v1339, 1
      %vm1372 = vmpackc.low %vm1340, %vm1340
      %vm1373 = vmpackc.low %vm1341, %vm1341
      %vm1374 = vmpackc.low %vm1342, %vm1342
      %vm1375 = vmpackc.low %vm1343, %vm1343
      %vm1376 = vmpackc.low %vm1344, %vm1344
      %vm1377 = vmpackc.low %vm1345, %vm1345
      %vm1378 = vmpackc.low %vm1346, %vm1346
      %vm1379 = vmpackc.low %vm1347, %vm1347
      %vm1380 = vmpackc.low %vm1348, %vm1348
      %vm1381 = vmpackc.low %vm1349, %vm1349
      %vm1382 = vmpackc.low %vm1350, %vm1350
      %vm1383 = vmpackc.low %vm1351, %vm1351
      %vm1384 = vmpackc.low %vm1352, %vm1352
      %vm1385 = vmpackc.low %vm1353, %vm1353
      %vm1386 = vmpackc.low %vm1354, %vm1354
      %vm1387 = vmpackc.low %vm1355, %vm1355
      %vm1388 = vmpackc.low %vm1356, %vm1356
      %vm1389 = vmpackc.low %vm1357, %vm1357
      %vm1390 = vmpackc.low %vm1358, %vm1358
      %vm1391 = vmpackc.low %vm1359, %vm1359
      %vm1392 = vmpackc.low %vm1360, %vm1360
      %vm1393 = vmpackc.low %vm1361, %vm1361
      %vm1394 = vmpackc.low %vm1362, %vm1362
      %vm1395 = vmpackc.low %vm1363, %vm1363
      %vm1396 = vmpackc.low %vm1364, %vm1364
      %vm1397 = vmpackc.low %vm1365, %vm1365
      %vm1398 = vmpackc.low %vm1366, %vm1366
      %vm1399 = vmpackc.low %vm1367, %vm1367
      %vm1400 = vmpackc.low %vm1368, %vm1368
      %vm1401 = vmpackc.low %vm1369, %vm1369
      %vm1402 = vmpackc.low %vm1370, %vm1370
      %vm1403 = vmpackc.low %vm1371, %vm1371
      %v1404 = vsel %vm1372, 65537, 0
      %v1405 = vsel %vm1373, 65537, 0
      %v1406 = vsel %vm1374, 65537, 0
      %v1407 = vsel %vm1375, 65537, 0
      %v1408 = vsel %vm1376, 65537, 0
      %v1409 = vsel %vm1377, 65537, 0
      %v1410 = vsel %vm1378, 65537, 0
      %v1411 = vsel %vm1379, 65537, 0
      %v1412 = vsel %vm1380, 65537, 0
      %v1413 = vsel %vm1381, 65537, 0
      %v1414 = vsel %vm1382, 65537, 0
      %v1415 = vsel %vm1383, 65537, 0
      %v1416 = vsel %vm1384, 65537, 0
      %v1417 = vsel %vm1385, 65537, 0
      %v1418 = vsel %vm1386, 65537, 0
      %v1419 = vsel %vm1387, 65537, 0
      %v1420 = vsel %vm1388, 65537, 0
      %v1421 = vsel %vm1389, 65537, 0
      %v1422 = vsel %vm1390, 65537, 0
      %v1423 = vsel %vm1391, 65537, 0
      %v1424 = vsel %vm1392, 65537, 0
      %v1425 = vsel %vm1393, 65537, 0
      %v1426 = vsel %vm1394, 65537, 0
      %v1427 = vsel %vm1395, 65537, 0
      %v1428 = vsel %vm1396, 65537, 0
      %v1429 = vsel %vm1397, 65537, 0
      %v1430 = vsel %vm1398, 65537, 0
      %v1431 = vsel %vm1399, 65537, 0
      %v1432 = vsel %vm1400, 65537, 0
      %v1433 = vsel %vm1401, 65537, 0
      %v1434 = vsel %vm1402, 65537, 0
      %v1435 = vsel %vm1403, 65537, 0
      %vm1436 = vsmask.f32 3328
      %vm1437 = vsmask.f32 7440
      %vm1438 = vmor %vm1436, %vm1437
      %v1440 = vshll.u32 %v1404, 16
      %v1442 = vrot.slane %v1440, 5
      %v1443 = vshrl.u32 %v1404, 16
      %v1445 = vrot.slane %v1443, 4
      %v1446 = vor.u32 %v1445, %v1442
      %v1447 = vrot.slane %v1446, 4
      %v1449 = vshll.u32 %v1405, 16
      %v1451 = vrot.slane %v1449, 5
      %v1452 = vsel %vm1438, %v1447, %v1451
      %v1453 = vshrl.u32 %v1405, 16
      %v1455 = vrot.slane %v1453, 4
      %v1456 = vor.u32 %v1455, %v1451
      %v1457 = vrot.slane %v1456, 4
      %v1459 = vshll.u32 %v1406, 16
      %v1461 = vrot.slane %v1459, 5
      %v1462 = vsel %vm1438, %v1457, %v1461
      %v1463 = vshrl.u32 %v1406, 16
      %v1465 = vrot.slane %v1463, 4
      %v1466 = vor.u32 %v1465, %v1461
      %v1467 = vrot.slane %v1466, 4
      %v1469 = vshll.u32 %v1407, 16
      %v1471 = vrot.slane %v1469, 5
      %v1472 = vsel %vm1438, %v1467, %v1471
      %v1473 = vshrl.u32 %v1407, 16
      %v1475 = vrot.slane %v1473, 4
      %v1476 = vor.u32 %v1475, %v1471
      %v1477 = vrot.slane %v1476, 4
      %v1479 = vshll.u32 %v1408, 16
      %v1481 = vrot.slane %v1479, 5
      %v1482 = vsel %vm1438, %v1477, %v1481
      %v1483 = vshrl.u32 %v1408, 16
      %v1485 = vrot.slane %v1483, 4
      %v1486 = vor.u32 %v1485, %v1481
      %v1487 = vrot.slane %v1486, 4
      %v1489 = vshll.u32 %v1409, 16
      %v1491 = vrot.slane %v1489, 5
      %v1492 = vsel %vm1438, %v1487, %v1491
      %v1493 = vshrl.u32 %v1409, 16
      %v1495 = vrot.slane %v1493, 4
      %v1496 = vor.u32 %v1495, %v1491
      %v1497 = vrot.slane %v1496, 4
      %v1499 = vshll.u32 %v1410, 16
      %v1501 = vrot.slane %v1499, 5
      %v1502 = vsel %vm1438, %v1497, %v1501
      %v1503 = vshrl.u32 %v1410, 16
      %v1505 = vrot.slane %v1503, 4
      %v1506 = vor.u32 %v1505, %v1501
      %v1507 = vrot.slane %v1506, 4
      %v1509 = vshll.u32 %v1411, 16
      %v1511 = vrot.slane %v1509, 5
      %v1512 = vsel %vm1438, %v1507, %v1511
      %v1513 = vshrl.u32 %v1411, 16
      %v1515 = vrot.slane %v1513, 4
      %v1516 = vor.u32 %v1515, %v1511
      %v1517 = vrot.slane %v1516, 4
      %v1519 = vshll.u32 %v1412, 16
      %v1521 = vrot.slane %v1519, 5
      %v1522 = vsel %vm1438, %v1517, %v1521
      %v1523 = vshrl.u32 %v1412, 16
      %v1525 = vrot.slane %v1523, 4
      %v1526 = vor.u32 %v1525, %v1521
      %v1527 = vrot.slane %v1526, 4
      %v1529 = vshll.u32 %v1413, 16
      %v1531 = vrot.slane %v1529, 5
      %v1532 = vsel %vm1438, %v1527, %v1531
      %v1533 = vshrl.u32 %v1413, 16
      %v1535 = vrot.slane %v1533, 4
      %v1536 = vor.u32 %v1535, %v1531
      %v1537 = vrot.slane %v1536, 4
      %v1539 = vshll.u32 %v1414, 16
      %v1541 = vrot.slane %v1539, 5
      %v1542 = vsel %vm1438, %v1537, %v1541
      %v1543 = vshrl.u32 %v1414, 16
      %v1545 = vrot.slane %v1543, 4
      %v1546 = vor.u32 %v1545, %v1541
      %v1547 = vrot.slane %v1546, 4
      %v1549 = vshll.u32 %v1415, 16
      %v1551 = vrot.slane %v1549, 5
      %v1552 = vsel %vm1438, %v1547, %v1551
      %v1553 = vshrl.u32 %v1415, 16
      %v1555 = vrot.slane %v1553, 4
      %v1556 = vor.u32 %v1555, %v1551
      %v1557 = vrot.slane %v1556, 4
      %v1559 = vshll.u32 %v1416, 16
      %v1561 = vrot.slane %v1559, 5
      %v1562 = vsel %vm1438, %v1557, %v1561
      %v1563 = vshrl.u32 %v1416, 16
      %v1565 = vrot.slane %v1563, 4
      %v1566 = vor.u32 %v1565, %v1561
      %v1567 = vrot.slane %v1566, 4
      %v1569 = vshll.u32 %v1417, 16
      %v1571 = vrot.slane %v1569, 5
      %v1572 = vsel %vm1438, %v1567, %v1571
      %v1573 = vshrl.u32 %v1417, 16
      %v1575 = vrot.slane %v1573, 4
      %v1576 = vor.u32 %v1575, %v1571
      %v1577 = vrot.slane %v1576, 4
      %v1579 = vshll.u32 %v1418, 16
      %v1581 = vrot.slane %v1579, 5
      %v1582 = vsel %vm1438, %v1577, %v1581
      %v1583 = vshrl.u32 %v1418, 16
      %v1585 = vrot.slane %v1583, 4
      %v1586 = vor.u32 %v1585, %v1581
      %v1587 = vrot.slane %v1586, 4
      %v1589 = vshll.u32 %v1419, 16
      %v1591 = vrot.slane %v1589, 5
      %v1592 = vsel %vm1438, %v1587, %v1591
      %v1593 = vshrl.u32 %v1419, 16
      %v1595 = vrot.slane %v1593, 4
      %v1596 = vor.u32 %v1595, %v1591
      %v1597 = vrot.slane %v1596, 4
      %v1599 = vshll.u32 %v1420, 16
      %v1601 = vrot.slane %v1599, 5
      %v1602 = vsel %vm1438, %v1597, %v1601
      %v1603 = vshrl.u32 %v1420, 16
      %v1605 = vrot.slane %v1603, 4
      %v1606 = vor.u32 %v1605, %v1601
      %v1607 = vrot.slane %v1606, 4
      %v1609 = vshll.u32 %v1421, 16
      %v1611 = vrot.slane %v1609, 5
      %v1612 = vsel %vm1438, %v1607, %v1611
      %v1613 = vshrl.u32 %v1421, 16
      %v1615 = vrot.slane %v1613, 4
      %v1616 = vor.u32 %v1615, %v1611
      %v1617 = vrot.slane %v1616, 4
      %v1619 = vshll.u32 %v1422, 16
      %v1621 = vrot.slane %v1619, 5
      %v1622 = vsel %vm1438, %v1617, %v1621
      %v1623 = vshrl.u32 %v1422, 16
      %v1625 = vrot.slane %v1623, 4
      %v1626 = vor.u32 %v1625, %v1621
      %v1627 = vrot.slane %v1626, 4
      %v1629 = vshll.u32 %v1423, 16
      %v1631 = vrot.slane %v1629, 5
      %v1632 = vsel %vm1438, %v1627, %v1631
      %v1633 = vshrl.u32 %v1423, 16
      %v1635 = vrot.slane %v1633, 4
      %v1636 = vor.u32 %v1635, %v1631
      %v1637 = vrot.slane %v1636, 4
      %v1639 = vshll.u32 %v1424, 16
      %v1641 = vrot.slane %v1639, 5
      %v1642 = vsel %vm1438, %v1637, %v1641
      %v1643 = vshrl.u32 %v1424, 16
      %v1645 = vrot.slane %v1643, 4
      %v1646 = vor.u32 %v1645, %v1641
      %v1647 = vrot.slane %v1646, 4
      %v1649 = vshll.u32 %v1425, 16
      %v1651 = vrot.slane %v1649, 5
      %v1652 = vsel %vm1438, %v1647, %v1651
      %v1653 = vshrl.u32 %v1425, 16
      %v1655 = vrot.slane %v1653, 4
      %v1656 = vor.u32 %v1655, %v1651
      %v1657 = vrot.slane %v1656, 4
      %v1659 = vshll.u32 %v1426, 16
      %v1661 = vrot.slane %v1659, 5
      %v1662 = vsel %vm1438, %v1657, %v1661
      %v1663 = vshrl.u32 %v1426, 16
      %v1665 = vrot.slane %v1663, 4
      %v1666 = vor.u32 %v1665, %v1661
      %v1667 = vrot.slane %v1666, 4
      %v1669 = vshll.u32 %v1427, 16
      %v1671 = vrot.slane %v1669, 5
      %v1672 = vsel %vm1438, %v1667, %v1671
      %v1673 = vshrl.u32 %v1427, 16
      %v1675 = vrot.slane %v1673, 4
      %v1676 = vor.u32 %v1675, %v1671
      %v1677 = vrot.slane %v1676, 4
      %v1679 = vshll.u32 %v1428, 16
      %v1681 = vrot.slane %v1679, 5
      %v1682 = vsel %vm1438, %v1677, %v1681
      %v1683 = vshrl.u32 %v1428, 16
      %v1685 = vrot.slane %v1683, 4
      %v1686 = vor.u32 %v1685, %v1681
      %v1687 = vrot.slane %v1686, 4
      %v1689 = vshll.u32 %v1429, 16
      %v1691 = vrot.slane %v1689, 5
      %v1692 = vsel %vm1438, %v1687, %v1691
      %v1693 = vshrl.u32 %v1429, 16
      %v1695 = vrot.slane %v1693, 4
      %v1696 = vor.u32 %v1695, %v1691
      %v1697 = vrot.slane %v1696, 4
      %v1699 = vshll.u32 %v1430, 16
      %v1701 = vrot.slane %v1699, 5
      %v1702 = vsel %vm1438, %v1697, %v1701
      %v1703 = vshrl.u32 %v1430, 16
      %v1705 = vrot.slane %v1703, 4
      %v1706 = vor.u32 %v1705, %v1701
      %v1707 = vrot.slane %v1706, 4
      %v1709 = vshll.u32 %v1431, 16
      %v1711 = vrot.slane %v1709, 5
      %v1712 = vsel %vm1438, %v1707, %v1711
      %v1713 = vshrl.u32 %v1431, 16
      %v1715 = vrot.slane %v1713, 4
      %v1716 = vor.u32 %v1715, %v1711
      %v1717 = vrot.slane %v1716, 4
      %v1719 = vshll.u32 %v1432, 16
      %v1721 = vrot.slane %v1719, 5
      %v1722 = vsel %vm1438, %v1717, %v1721
      %v1723 = vshrl.u32 %v1432, 16
      %v1725 = vrot.slane %v1723, 4
      %v1726 = vor.u32 %v1725, %v1721
      %v1727 = vrot.slane %v1726, 4
      %v1729 = vshll.u32 %v1433, 16
      %v1731 = vrot.slane %v1729, 5
      %v1732 = vsel %vm1438, %v1727, %v1731
      %v1733 = vshrl.u32 %v1433, 16
      %v1735 = vrot.slane %v1733, 4
      %v1736 = vor.u32 %v1735, %v1731
      %v1737 = vrot.slane %v1736, 4
      %v1739 = vshll.u32 %v1434, 16
      %v1741 = vrot.slane %v1739, 5
      %v1742 = vsel %vm1438, %v1737, %v1741
      %v1743 = vshrl.u32 %v1434, 16
      %v1745 = vrot.slane %v1743, 4
      %v1746 = vor.u32 %v1745, %v1741
      %v1747 = vrot.slane %v1746, 4
      %v1749 = vshll.u32 %v1435, 16
      %v1751 = vrot.slane %v1749, 5
      %v1752 = vsel %vm1438, %v1747, %v1751
      %v1753 = vshrl.u32 %v1435, 16
      %v1755 = vrot.slane %v1753, 4
      %v1756 = vor.u32 %v1755, %v1751
      %v1757 = vrot.slane %v1756, 4
      %vm1758 = vcmp.ne.s16.totalorder %v1442, 0
      %vm1759 = vcmp.ne.s16.totalorder %v1452, 0
      %vm1760 = vcmp.ne.s16.totalorder %v1462, 0
      %vm1761 = vcmp.ne.s16.totalorder %v1472, 0
      %vm1762 = vcmp.ne.s16.totalorder %v1482, 0
      %vm1763 = vcmp.ne.s16.totalorder %v1492, 0
      %vm1764 = vcmp.ne.s16.totalorder %v1502, 0
      %vm1765 = vcmp.ne.s16.totalorder %v1512, 0
      %vm1766 = vcmp.ne.s16.totalorder %v1522, 0
      %vm1767 = vcmp.ne.s16.totalorder %v1532, 0
      %vm1768 = vcmp.ne.s16.totalorder %v1542, 0
      %vm1769 = vcmp.ne.s16.totalorder %v1552, 0
      %vm1770 = vcmp.ne.s16.totalorder %v1562, 0
      %vm1771 = vcmp.ne.s16.totalorder %v1572, 0
      %vm1772 = vcmp.ne.s16.totalorder %v1582, 0
      %vm1773 = vcmp.ne.s16.totalorder %v1592, 0
      %vm1774 = vcmp.ne.s16.totalorder %v1602, 0
      %vm1775 = vcmp.ne.s16.totalorder %v1612, 0
      %vm1776 = vcmp.ne.s16.totalorder %v1622, 0
      %vm1777 = vcmp.ne.s16.totalorder %v1632, 0
      %vm1778 = vcmp.ne.s16.totalorder %v1642, 0
      %vm1779 = vcmp.ne.s16.totalorder %v1652, 0
      %vm1780 = vcmp.ne.s16.totalorder %v1662, 0
      %vm1781 = vcmp.ne.s16.totalorder %v1672, 0
      %vm1782 = vcmp.ne.s16.totalorder %v1682, 0
      %vm1783 = vcmp.ne.s16.totalorder %v1692, 0
      %vm1784 = vcmp.ne.s16.totalorder %v1702, 0
      %vm1785 = vcmp.ne.s16.totalorder %v1712, 0
      %vm1786 = vcmp.ne.s16.totalorder %v1722, 0
      %vm1787 = vcmp.ne.s16.totalorder %v1732, 0
      %vm1788 = vcmp.ne.s16.totalorder %v1742, 0
      %vm1789 = vcmp.ne.s16.totalorder %v1752, 0
      %vm1790 = vcmp.ne.s16.totalorder %v1757, 0
      %v1791 = vsel %vm1758, %v1275, 0
      %v1792 = vsel %vm1759, %v1276, 0
      %v1793 = vsel %vm1760, %v1277, 0
      %v1794 = vsel %vm1761, %v1278, 0
      %v1795 = vsel %vm1762, %v1279, 0
      %v1796 = vsel %vm1763, %v1280, 0
      %v1797 = vsel %vm1764, %v1281, 0
      %v1798 = vsel %vm1765, %v1282, 0
      %v1799 = vsel %vm1766, %v1283, 0
      %v1800 = vsel %vm1767, %v1284, 0
      %v1801 = vsel %vm1768, %v1285, 0
      %v1802 = vsel %vm1769, %v1286, 0
      %v1803 = vsel %vm1770, %v1287, 0
      %v1804 = vsel %vm1771, %v1288, 0
      %v1805 = vsel %vm1772, %v1289, 0
      %v1806 = vsel %vm1773, %v1290, 0
      %v1807 = vsel %vm1774, %v1291, 0
      %v1808 = vsel %vm1775, %v1292, 0
      %v1809 = vsel %vm1776, %v1293, 0
      %v1810 = vsel %vm1777, %v1294, 0
      %v1811 = vsel %vm1778, %v1295, 0
      %v1812 = vsel %vm1779, %v1296, 0
      %v1813 = vsel %vm1780, %v1297, 0
      %v1814 = vsel %vm1781, %v1298, 0
      %v1815 = vsel %vm1782, %v1299, 0
      %v1816 = vsel %vm1783, %v1300, 0
      %v1817 = vsel %vm1784, %v1301, 0
      %v1818 = vsel %vm1785, %v1302, 0
      %v1819 = vsel %vm1786, %v1303, 0
      %v1820 = vsel %vm1787, %v1304, 0
      %v1821 = vsel %vm1788, %v1305, 0
      %v1822 = vsel %vm1789, %v1306, 0
      %v1823 = vsel %vm1790, %v1307, 0
      %v1824 = vld [vmem:[%s3] sm:$0xf]
      %v1825 = vld [vmem:[%s3 + $0x4] sm:$0xf]
      %v1826 = vld [vmem:[%s3 + $0x8] sm:$0xf]
      %v1827 = vld [vmem:[%s3 + $0xc] sm:$0xf]
      %v1828 = vld [vmem:[%s3 + $0x10] sm:$0xf]
      %v1829 = vld [vmem:[%s3 + $0x14] sm:$0xf]
      %v1830 = vld [vmem:[%s3 + $0x18] sm:$0xf]
      %v1831 = vld [vmem:[%s3 + $0x1c] sm:$0xf]
      %v1832 = vld [vmem:[%s3 + $0x20] sm:$0xf]
      %v1833 = vld [vmem:[%s3 + $0x24] sm:$0xf]
      %v1834 = vld [vmem:[%s3 + $0x28] sm:$0xf]
      %v1835 = vld [vmem:[%s3 + $0x2c] sm:$0xf]
      %v1836 = vld [vmem:[%s3 + $0x30] sm:$0xf]
      %v1837 = vld [vmem:[%s3 + $0x34] sm:$0xf]
      %v1838 = vld [vmem:[%s3 + $0x38] sm:$0xf]
      %v1839 = vld [vmem:[%s3 + $0x3c] sm:$0xf]
      %s1840 = scalar_lea.vmem %s3, 64
      %v1841 = vld [vmem:[%s1840] sm:$0xf]
      %v1842 = vld [vmem:[%s1840 + $0x4] sm:$0xf]
      %v1843 = vld [vmem:[%s1840 + $0x8] sm:$0xf]
      %v1844 = vld [vmem:[%s1840 + $0xc] sm:$0xf]
      %v1845 = vld [vmem:[%s1840 + $0x10] sm:$0xf]
      %v1846 = vld [vmem:[%s1840 + $0x14] sm:$0xf]
      %v1847 = vld [vmem:[%s1840 + $0x18] sm:$0xf]
      %v1848 = vld [vmem:[%s1840 + $0x1c] sm:$0xf]
      %v1849 = vld [vmem:[%s1840 + $0x20] sm:$0xf]
      %v1850 = vld [vmem:[%s1840 + $0x24] sm:$0xf]
      %v1851 = vld [vmem:[%s1840 + $0x28] sm:$0xf]
      %v1852 = vld [vmem:[%s1840 + $0x2c] sm:$0xf]
      %v1853 = vld [vmem:[%s1840 + $0x30] sm:$0xf]
      %v1854 = vld [vmem:[%s1840 + $0x34] sm:$0xf]
      %v1855 = vld [vmem:[%s1840 + $0x38] sm:$0xf]
      %v1856 = vld [vmem:[%s1840 + $0x3c] sm:$0xf]
      %v1889 = vunpack.c.l.b16 %v1276
      %v1890 = vunpack.c.l.b16 %v1277
      %v1891 = vunpack.c.l.b16 %v1278
      %v1892 = vunpack.c.l.b16 %v1279
      %v1893 = vunpack.c.l.b16 %v1280
      %v1894 = vunpack.c.l.b16 %v1281
      %v1895 = vunpack.c.l.b16 %v1282
      %v1896 = vunpack.c.l.b16 %v1283
      %v1897 = vunpack.c.l.b16 %v1284
      %v1898 = vunpack.c.l.b16 %v1285
      %v1899 = vunpack.c.l.b16 %v1286
      %v1900 = vunpack.c.l.b16 %v1287
      %v1901 = vunpack.c.l.b16 %v1288
      %v1902 = vunpack.c.l.b16 %v1289
      %v1903 = vunpack.c.l.b16 %v1290
      %v1904 = vunpack.c.l.b16 %v1291
      %v1905 = vunpack.c.l.b16 %v1292
      %v1906 = vunpack.c.l.b16 %v1293
      %v1907 = vunpack.c.l.b16 %v1294
      %v1908 = vunpack.c.l.b16 %v1295
      %v1909 = vunpack.c.l.b16 %v1296
      %v1910 = vunpack.c.l.b16 %v1297
      %v1911 = vunpack.c.l.b16 %v1298
      %v1912 = vunpack.c.l.b16 %v1299
      %v1913 = vunpack.c.l.b16 %v1300
      %v1914 = vunpack.c.l.b16 %v1301
      %v1915 = vunpack.c.l.b16 %v1302
      %v1916 = vunpack.c.l.b16 %v1303
      %v1917 = vunpack.c.l.b16 %v1304
      %v1918 = vunpack.c.l.b16 %v1305
      %v1919 = vunpack.c.l.b16 %v1306
      %v1920 = vunpack.c.l.b16 %v1307
      %v1921 = vpack.c.b16 %v1890, %v1889
      %v1922 = vpack.c.b16 %v1892, %v1891
      %v1923 = vpack.c.b16 %v1894, %v1893
      %v1924 = vpack.c.b16 %v1896, %v1895
      %v1925 = vpack.c.b16 %v1898, %v1897
      %v1926 = vpack.c.b16 %v1900, %v1899
      %v1927 = vpack.c.b16 %v1902, %v1901
      %v1928 = vpack.c.b16 %v1904, %v1903
      %v1929 = vpack.c.b16 %v1906, %v1905
      %v1930 = vpack.c.b16 %v1908, %v1907
      %v1931 = vpack.c.b16 %v1910, %v1909
      %v1932 = vpack.c.b16 %v1912, %v1911
      %v1933 = vpack.c.b16 %v1914, %v1913
      %v1934 = vpack.c.b16 %v1916, %v1915
      %v1935 = vpack.c.b16 %v1918, %v1917
      %v1936 = vpack.c.b16 %v1920, %v1919
      %v1969 = vunpack.c.l.b16 %v1841
      %v1970 = vunpack.c.l.b16 %v1842
      %v1971 = vunpack.c.l.b16 %v1843
      %v1972 = vunpack.c.l.b16 %v1844
      %v1973 = vunpack.c.l.b16 %v1845
      %v1974 = vunpack.c.l.b16 %v1846
      %v1975 = vunpack.c.l.b16 %v1847
      %v1976 = vunpack.c.l.b16 %v1848
      %v1977 = vunpack.c.l.b16 %v1849
      %v1978 = vunpack.c.l.b16 %v1850
      %v1979 = vunpack.c.l.b16 %v1851
      %v1980 = vunpack.c.l.b16 %v1852
      %v1981 = vunpack.c.l.b16 %v1853
      %v1982 = vunpack.c.l.b16 %v1854
      %v1983 = vunpack.c.l.b16 %v1855
      %v1984 = vunpack.c.l.b16 %v1856
      %v1985 = vpack.c.b16 %v1970, %v1969
      %v1986 = vpack.c.b16 %v1972, %v1971
      %v1987 = vpack.c.b16 %v1974, %v1973
      %v1988 = vpack.c.b16 %v1976, %v1975
      %v1989 = vpack.c.b16 %v1978, %v1977
      %v1990 = vpack.c.b16 %v1980, %v1979
      %v1991 = vpack.c.b16 %v1982, %v1981
      %v1992 = vpack.c.b16 %v1984, %v1983
      %2001 = vmatprep.subr.bf16.mxu0 0
      %2002 = vmatpush1.bf16.msra.mxu0 %v1992
      %2003 = vmatprep.subr.bf16.mxu0 0
      %2004 = vmatpush1.bf16.msra.mxu0 %v1991
      %2005 = vmatprep.subr.bf16.mxu0 0
      %2006 = vmatpush1.bf16.msra.mxu0 %v1990
      %2007 = vmatprep.subr.bf16.mxu0 0
      %2008 = vmatpush1.bf16.msra.mxu0 %v1989
      %2009 = vmatprep.subr.bf16.mxu0 0
      %2010 = vmatpush1.bf16.msra.mxu0 %v1988
      %2011 = vmatprep.subr.bf16.mxu0 0
      %2012 = vmatpush1.bf16.msra.mxu0 %v1987
      %2013 = vmatprep.subr.bf16.mxu0 0
      %2014 = vmatpush1.bf16.msra.mxu0 %v1986
      %2015 = vmatprep.subr.bf16.mxu0 0
      %2016 = vmatpush1.bf16.msra.mxu0 %v1985
      %2017 = vmatprep.subr.bf16.mxu0 0
      %2018 = vmatpush2.bf16.msra.mxu0 0
      %2019 = vmatprep.subr.bf16.mxu0 0
      %2020 = vmatpush2.bf16.msra.mxu0 0
      %2021 = vmatprep.subr.bf16.mxu0 0
      %2022 = vmatpush2.bf16.msra.mxu0 0
      %2023 = vmatprep.subr.bf16.mxu0 0
      %2024 = vmatpush2.bf16.msra.mxu0 0
      %2025 = vmatprep.subr.bf16.mxu0 0
      %2026 = vmatpush2.bf16.msra.mxu0 0
      %2027 = vmatprep.subr.bf16.mxu0 0
      %2028 = vmatpush2.bf16.msra.mxu0 0
      %2029 = vmatprep.subr.bf16.mxu0 0
      %2030 = vmatpush2.bf16.msra.mxu0 0
      %2031 = vmatprep.subr.bf16.mxu0 0
      %2032 = vmatpush2.bf16.msra.mxu0 0
      %2033 = vmatprep.mubr.bf16.mxu0 0
      %2034 = vmatmul.mubr.bf16.gmra.mxu0 %v1921
      %v2035 = vpop.f32.mrf.mxu0
      %v2036 = vadd.f32 0.0, %v2035
      %v2037 = vpop.f32.mrf.mxu0
      %v2038 = vpop.f32.mrf.mxu0
      %v2039 = vadd.f32 0.0, %v2038
      %v2040 = vpop.f32.mrf.mxu0
      %2041 = vmatprep.mubr.bf16.mxu0 0
      %2042 = vmatmul.mubr.bf16.gmra.mxu0 %v1922
      %v2043 = vpop.f32.mrf.mxu0
      %v2044 = vadd.f32 0.0, %v2043
      %v2045 = vpop.f32.mrf.mxu0
      %v2046 = vpop.f32.mrf.mxu0
      %v2047 = vadd.f32 0.0, %v2046
      %v2048 = vpop.f32.mrf.mxu0
      %2049 = vmatprep.mubr.bf16.mxu0 0
      %2050 = vmatmul.mubr.bf16.gmra.mxu0 %v1923
      %v2051 = vpop.f32.mrf.mxu0
      %v2052 = vadd.f32 0.0, %v2051
      %v2053 = vpop.f32.mrf.mxu0
      %v2054 = vpop.f32.mrf.mxu0
      %v2055 = vadd.f32 0.0, %v2054
      %v2056 = vpop.f32.mrf.mxu0
      %2057 = vmatprep.mubr.bf16.mxu0 0
      %2058 = vmatmul.mubr.bf16.gmra.mxu0 %v1924
      %v2059 = vpop.f32.mrf.mxu0
      %v2060 = vadd.f32 0.0, %v2059
      %v2061 = vpop.f32.mrf.mxu0
      %v2062 = vpop.f32.mrf.mxu0
      %v2063 = vadd.f32 0.0, %v2062
      %v2064 = vpop.f32.mrf.mxu0
      %2065 = vmatprep.mubr.bf16.mxu0 0
      %2066 = vmatmul.mubr.bf16.gmra.mxu0 %v1925
      %v2067 = vpop.f32.mrf.mxu0
      %v2068 = vadd.f32 0.0, %v2067
      %v2069 = vpop.f32.mrf.mxu0
      %v2070 = vpop.f32.mrf.mxu0
      %v2071 = vadd.f32 0.0, %v2070
      %v2072 = vpop.f32.mrf.mxu0
      %2073 = vmatprep.mubr.bf16.mxu0 0
      %2074 = vmatmul.mubr.bf16.gmra.mxu0 %v1926
      %v2075 = vpop.f32.mrf.mxu0
      %v2076 = vadd.f32 0.0, %v2075
      %v2077 = vpop.f32.mrf.mxu0
      %v2078 = vpop.f32.mrf.mxu0
      %v2079 = vadd.f32 0.0, %v2078
      %v2080 = vpop.f32.mrf.mxu0
      %2081 = vmatprep.mubr.bf16.mxu0 0
      %2082 = vmatmul.mubr.bf16.gmra.mxu0 %v1927
      %v2083 = vpop.f32.mrf.mxu0
      %v2084 = vadd.f32 0.0, %v2083
      %v2085 = vpop.f32.mrf.mxu0
      %v2086 = vpop.f32.mrf.mxu0
      %v2087 = vadd.f32 0.0, %v2086
      %v2088 = vpop.f32.mrf.mxu0
      %2089 = vmatprep.mubr.bf16.mxu0 0
      %2090 = vmatmul.mubr.bf16.gmra.mxu0 %v1928
      %v2091 = vpop.f32.mrf.mxu0
      %v2092 = vadd.f32 0.0, %v2091
      %v2093 = vpop.f32.mrf.mxu0
      %v2094 = vpop.f32.mrf.mxu0
      %v2095 = vadd.f32 0.0, %v2094
      %v2096 = vpop.f32.mrf.mxu0
      %2097 = vmatprep.mubr.bf16.mxu0 0
      %2098 = vmatmul.mubr.bf16.gmra.mxu0 %v1929
      %v2099 = vpop.f32.mrf.mxu0
      %v2100 = vadd.f32 0.0, %v2099
      %v2101 = vpop.f32.mrf.mxu0
      %v2102 = vpop.f32.mrf.mxu0
      %v2103 = vadd.f32 0.0, %v2102
      %v2104 = vpop.f32.mrf.mxu0
      %2105 = vmatprep.mubr.bf16.mxu0 0
      %2106 = vmatmul.mubr.bf16.gmra.mxu0 %v1930
      %v2107 = vpop.f32.mrf.mxu0
      %v2108 = vadd.f32 0.0, %v2107
      %v2109 = vpop.f32.mrf.mxu0
      %v2110 = vpop.f32.mrf.mxu0
      %v2111 = vadd.f32 0.0, %v2110
      %v2112 = vpop.f32.mrf.mxu0
      %2113 = vmatprep.mubr.bf16.mxu0 0
      %2114 = vmatmul.mubr.bf16.gmra.mxu0 %v1931
      %v2115 = vpop.f32.mrf.mxu0
      %v2116 = vadd.f32 0.0, %v2115
      %v2117 = vpop.f32.mrf.mxu0
      %v2118 = vpop.f32.mrf.mxu0
      %v2119 = vadd.f32 0.0, %v2118
      %v2120 = vpop.f32.mrf.mxu0
      %2121 = vmatprep.mubr.bf16.mxu0 0
      %2122 = vmatmul.mubr.bf16.gmra.mxu0 %v1932
      %v2123 = vpop.f32.mrf.mxu0
      %v2124 = vadd.f32 0.0, %v2123
      %v2125 = vpop.f32.mrf.mxu0
      %v2126 = vpop.f32.mrf.mxu0
      %v2127 = vadd.f32 0.0, %v2126
      %v2128 = vpop.f32.mrf.mxu0
      %2129 = vmatprep.mubr.bf16.mxu0 0
      %2130 = vmatmul.mubr.bf16.gmra.mxu0 %v1933
      %v2131 = vpop.f32.mrf.mxu0
      %v2132 = vadd.f32 0.0, %v2131
      %v2133 = vpop.f32.mrf.mxu0
      %v2134 = vpop.f32.mrf.mxu0
      %v2135 = vadd.f32 0.0, %v2134
      %v2136 = vpop.f32.mrf.mxu0
      %2137 = vmatprep.mubr.bf16.mxu0 0
      %2138 = vmatmul.mubr.bf16.gmra.mxu0 %v1934
      %v2139 = vpop.f32.mrf.mxu0
      %v2140 = vadd.f32 0.0, %v2139
      %v2141 = vpop.f32.mrf.mxu0
      %v2142 = vpop.f32.mrf.mxu0
      %v2143 = vadd.f32 0.0, %v2142
      %v2144 = vpop.f32.mrf.mxu0
      %2145 = vmatprep.mubr.bf16.mxu0 0
      %2146 = vmatmul.mubr.bf16.gmra.mxu0 %v1935
      %v2147 = vpop.f32.mrf.mxu0
      %v2148 = vadd.f32 0.0, %v2147
      %v2149 = vpop.f32.mrf.mxu0
      %v2150 = vpop.f32.mrf.mxu0
      %v2151 = vadd.f32 0.0, %v2150
      %v2152 = vpop.f32.mrf.mxu0
      %2153 = vmatprep.mubr.bf16.mxu0 0
      %2154 = vmatmul.mubr.bf16.gmra.mxu0 %v1936
      %v2155 = vpop.f32.mrf.mxu0
      %v2156 = vadd.f32 0.0, %v2155
      %v2157 = vpop.f32.mrf.mxu0
      %v2158 = vpop.f32.mrf.mxu0
      %v2159 = vadd.f32 0.0, %v2158
      %v2160 = vpop.f32.mrf.mxu0
      %2161 = vdwg.mxu0
      %v2195 = vunpack.c.l.b16 %v1791
      %v2196 = vunpack.c.l.b16 %v1792
      %v2197 = vunpack.c.l.b16 %v1793
      %v2198 = vunpack.c.l.b16 %v1794
      %v2199 = vunpack.c.l.b16 %v1795
      %v2200 = vunpack.c.l.b16 %v1796
      %v2201 = vunpack.c.l.b16 %v1797
      %v2202 = vunpack.c.l.b16 %v1798
      %v2203 = vunpack.c.l.b16 %v1799
      %v2204 = vunpack.c.l.b16 %v1800
      %v2205 = vunpack.c.l.b16 %v1801
      %v2206 = vunpack.c.l.b16 %v1802
      %v2207 = vunpack.c.l.b16 %v1803
      %v2208 = vunpack.c.l.b16 %v1804
      %v2209 = vunpack.c.l.b16 %v1805
      %v2210 = vunpack.c.l.b16 %v1806
      %v2211 = vunpack.c.l.b16 %v1807
      %v2212 = vunpack.c.l.b16 %v1808
      %v2213 = vunpack.c.l.b16 %v1809
      %v2214 = vunpack.c.l.b16 %v1810
      %v2215 = vunpack.c.l.b16 %v1811
      %v2216 = vunpack.c.l.b16 %v1812
      %v2217 = vunpack.c.l.b16 %v1813
      %v2218 = vunpack.c.l.b16 %v1814
      %v2219 = vunpack.c.l.b16 %v1815
      %v2220 = vunpack.c.l.b16 %v1816
      %v2221 = vunpack.c.l.b16 %v1817
      %v2222 = vunpack.c.l.b16 %v1818
      %v2223 = vunpack.c.l.b16 %v1819
      %v2224 = vunpack.c.l.b16 %v1820
      %v2225 = vunpack.c.l.b16 %v1821
      %v2226 = vunpack.c.l.b16 %v1822
      %v2227 = vunpack.c.l.b16 %v1823
      %v2228 = vpack.c.b16 %v2196, %v2195
      %v2229 = vpack.c.b16 %v2198, %v2197
      %v2230 = vpack.c.b16 %v2200, %v2199
      %v2231 = vpack.c.b16 %v2202, %v2201
      %v2232 = vpack.c.b16 %v2204, %v2203
      %v2233 = vpack.c.b16 %v2206, %v2205
      %v2234 = vpack.c.b16 %v2208, %v2207
      %v2235 = vpack.c.b16 %v2210, %v2209
      %v2236 = vpack.c.b16 %v2212, %v2211
      %v2237 = vpack.c.b16 %v2214, %v2213
      %v2238 = vpack.c.b16 %v2216, %v2215
      %v2239 = vpack.c.b16 %v2218, %v2217
      %v2240 = vpack.c.b16 %v2220, %v2219
      %v2241 = vpack.c.b16 %v2222, %v2221
      %v2242 = vpack.c.b16 %v2224, %v2223
      %v2243 = vpack.c.b16 %v2226, %v2225
      %v2244 = vpack.c.b16 %v2227, %v2227
      %vm2245 = vsmask.f32 4352
      %v2247 = vshrl.u32 %v2228, 16
      %v2249 = vrot.slane %v2247, 3
      %v2250 = vshll.u32 %v2228, 16
      %v2252 = vrot.slane %v2250, 4
      %v2253 = vor.u32 %v2249, %v2252
      %v2255 = vshrl.u32 %v2229, 16
      %v2257 = vrot.slane %v2255, 3
      %v2258 = vshll.u32 %v2229, 16
      %v2260 = vrot.slane %v2258, 4
      %v2261 = vor.u32 %v2257, %v2260
      %v2262 = vsel %vm2245, %v2253, %v2261
      %v2264 = vshrl.u32 %v2230, 16
      %v2266 = vrot.slane %v2264, 3
      %v2267 = vshll.u32 %v2230, 16
      %v2269 = vrot.slane %v2267, 4
      %v2270 = vor.u32 %v2266, %v2269
      %v2271 = vsel %vm2245, %v2261, %v2270
      %v2273 = vshrl.u32 %v2231, 16
      %v2275 = vrot.slane %v2273, 3
      %v2276 = vshll.u32 %v2231, 16
      %v2278 = vrot.slane %v2276, 4
      %v2279 = vor.u32 %v2275, %v2278
      %v2280 = vsel %vm2245, %v2270, %v2279
      %v2282 = vshrl.u32 %v2232, 16
      %v2284 = vrot.slane %v2282, 3
      %v2285 = vshll.u32 %v2232, 16
      %v2287 = vrot.slane %v2285, 4
      %v2288 = vor.u32 %v2284, %v2287
      %v2289 = vsel %vm2245, %v2279, %v2288
      %v2291 = vshrl.u32 %v2233, 16
      %v2293 = vrot.slane %v2291, 3
      %v2294 = vshll.u32 %v2233, 16
      %v2296 = vrot.slane %v2294, 4
      %v2297 = vor.u32 %v2293, %v2296
      %v2298 = vsel %vm2245, %v2288, %v2297
      %v2300 = vshrl.u32 %v2234, 16
      %v2302 = vrot.slane %v2300, 3
      %v2303 = vshll.u32 %v2234, 16
      %v2305 = vrot.slane %v2303, 4
      %v2306 = vor.u32 %v2302, %v2305
      %v2307 = vsel %vm2245, %v2297, %v2306
      %v2309 = vshrl.u32 %v2235, 16
      %v2311 = vrot.slane %v2309, 3
      %v2312 = vshll.u32 %v2235, 16
      %v2314 = vrot.slane %v2312, 4
      %v2315 = vor.u32 %v2311, %v2314
      %v2316 = vsel %vm2245, %v2306, %v2315
      %v2318 = vshrl.u32 %v2236, 16
      %v2320 = vrot.slane %v2318, 3
      %v2321 = vshll.u32 %v2236, 16
      %v2323 = vrot.slane %v2321, 4
      %v2324 = vor.u32 %v2320, %v2323
      %v2325 = vsel %vm2245, %v2315, %v2324
      %v2327 = vshrl.u32 %v2237, 16
      %v2329 = vrot.slane %v2327, 3
      %v2330 = vshll.u32 %v2237, 16
      %v2332 = vrot.slane %v2330, 4
      %v2333 = vor.u32 %v2329, %v2332
      %v2334 = vsel %vm2245, %v2324, %v2333
      %v2336 = vshrl.u32 %v2238, 16
      %v2338 = vrot.slane %v2336, 3
      %v2339 = vshll.u32 %v2238, 16
      %v2341 = vrot.slane %v2339, 4
      %v2342 = vor.u32 %v2338, %v2341
      %v2343 = vsel %vm2245, %v2333, %v2342
      %v2345 = vshrl.u32 %v2239, 16
      %v2347 = vrot.slane %v2345, 3
      %v2348 = vshll.u32 %v2239, 16
      %v2350 = vrot.slane %v2348, 4
      %v2351 = vor.u32 %v2347, %v2350
      %v2352 = vsel %vm2245, %v2342, %v2351
      %v2354 = vshrl.u32 %v2240, 16
      %v2356 = vrot.slane %v2354, 3
      %v2357 = vshll.u32 %v2240, 16
      %v2359 = vrot.slane %v2357, 4
      %v2360 = vor.u32 %v2356, %v2359
      %v2361 = vsel %vm2245, %v2351, %v2360
      %v2363 = vshrl.u32 %v2241, 16
      %v2365 = vrot.slane %v2363, 3
      %v2366 = vshll.u32 %v2241, 16
      %v2368 = vrot.slane %v2366, 4
      %v2369 = vor.u32 %v2365, %v2368
      %v2370 = vsel %vm2245, %v2360, %v2369
      %v2372 = vshrl.u32 %v2242, 16
      %v2374 = vrot.slane %v2372, 3
      %v2375 = vshll.u32 %v2242, 16
      %v2377 = vrot.slane %v2375, 4
      %v2378 = vor.u32 %v2374, %v2377
      %v2379 = vsel %vm2245, %v2369, %v2378
      %v2381 = vshrl.u32 %v2243, 16
      %v2383 = vrot.slane %v2381, 3
      %v2384 = vshll.u32 %v2243, 16
      %v2386 = vrot.slane %v2384, 4
      %v2387 = vor.u32 %v2383, %v2386
      %v2388 = vsel %vm2245, %v2378, %v2387
      %v2390 = vshrl.u32 %v2244, 16
      %v2392 = vrot.slane %v2390, 3
      %v2393 = vshll.u32 %v2244, 16
      %v2395 = vrot.slane %v2393, 4
      %v2396 = vor.u32 %v2392, %v2395
      %v2397 = vsel %vm2245, %v2387, %v2396
      %v2430 = vunpack.c.l.b16 %v1824
      %v2431 = vunpack.c.l.b16 %v1825
      %v2432 = vunpack.c.l.b16 %v1826
      %v2433 = vunpack.c.l.b16 %v1827
      %v2434 = vunpack.c.l.b16 %v1828
      %v2435 = vunpack.c.l.b16 %v1829
      %v2436 = vunpack.c.l.b16 %v1830
      %v2437 = vunpack.c.l.b16 %v1831
      %v2438 = vunpack.c.l.b16 %v1832
      %v2439 = vunpack.c.l.b16 %v1833
      %v2440 = vunpack.c.l.b16 %v1834
      %v2441 = vunpack.c.l.b16 %v1835
      %v2442 = vunpack.c.l.b16 %v1836
      %v2443 = vunpack.c.l.b16 %v1837
      %v2444 = vunpack.c.l.b16 %v1838
      %v2445 = vunpack.c.l.b16 %v1839
      %v2446 = vpack.c.b16 %v2431, %v2430
      %v2447 = vpack.c.b16 %v2433, %v2432
      %v2448 = vpack.c.b16 %v2435, %v2434
      %v2449 = vpack.c.b16 %v2437, %v2436
      %v2450 = vpack.c.b16 %v2439, %v2438
      %v2451 = vpack.c.b16 %v2441, %v2440
      %v2452 = vpack.c.b16 %v2443, %v2442
      %v2453 = vpack.c.b16 %v2445, %v2444
      %2462 = vmatprep.subr.bf16.mxu0 0
      %2463 = vmatpush1.bf16.msra.mxu0 %v2453
      %2464 = vmatprep.subr.bf16.mxu0 0
      %2465 = vmatpush1.bf16.msra.mxu0 %v2452
      %2466 = vmatprep.subr.bf16.mxu0 0
      %2467 = vmatpush1.bf16.msra.mxu0 %v2451
      %2468 = vmatprep.subr.bf16.mxu0 0
      %2469 = vmatpush1.bf16.msra.mxu0 %v2450
      %2470 = vmatprep.subr.bf16.mxu0 0
      %2471 = vmatpush1.bf16.msra.mxu0 %v2449
      %2472 = vmatprep.subr.bf16.mxu0 0
      %2473 = vmatpush1.bf16.msra.mxu0 %v2448
      %2474 = vmatprep.subr.bf16.mxu0 0
      %2475 = vmatpush1.bf16.msra.mxu0 %v2447
      %2476 = vmatprep.subr.bf16.mxu0 0
      %2477 = vmatpush1.bf16.msra.mxu0 %v2446
      %2478 = vmatprep.subr.bf16.mxu0 0
      %2479 = vmatpush2.bf16.msra.mxu0 0
      %2480 = vmatprep.subr.bf16.mxu0 0
      %2481 = vmatpush2.bf16.msra.mxu0 0
      %2482 = vmatprep.subr.bf16.mxu0 0
      %2483 = vmatpush2.bf16.msra.mxu0 0
      %2484 = vmatprep.subr.bf16.mxu0 0
      %2485 = vmatpush2.bf16.msra.mxu0 0
      %2486 = vmatprep.subr.bf16.mxu0 0
      %2487 = vmatpush2.bf16.msra.mxu0 0
      %2488 = vmatprep.subr.bf16.mxu0 0
      %2489 = vmatpush2.bf16.msra.mxu0 0
      %2490 = vmatprep.subr.bf16.mxu0 0
      %2491 = vmatpush2.bf16.msra.mxu0 0
      %2492 = vmatprep.subr.bf16.mxu0 0
      %2493 = vmatpush2.bf16.msra.mxu0 0
      %2494 = vmatprep.mubr.bf16.mxu0 0
      %2495 = vmatmul.mubr.bf16.gmra.mxu0 %v2262
      %v2496 = vpop.f32.mrf.mxu0
      %v2497 = vadd.f32 %v2036, %v2496
      %v2498 = vpop.f32.mrf.mxu0
      %v2499 = vpop.f32.mrf.mxu0
      %v2500 = vadd.f32 %v2039, %v2499
      %v2501 = vpop.f32.mrf.mxu0
      %2502 = vmatprep.mubr.bf16.mxu0 0
      %2503 = vmatmul.mubr.bf16.gmra.mxu0 %v2271
      %v2504 = vpop.f32.mrf.mxu0
      %v2505 = vadd.f32 %v2044, %v2504
      %v2506 = vpop.f32.mrf.mxu0
      %v2507 = vpop.f32.mrf.mxu0
      %v2508 = vadd.f32 %v2047, %v2507
      %v2509 = vpop.f32.mrf.mxu0
      %2510 = vmatprep.mubr.bf16.mxu0 0
      %2511 = vmatmul.mubr.bf16.gmra.mxu0 %v2280
      %v2512 = vpop.f32.mrf.mxu0
      %v2513 = vadd.f32 %v2052, %v2512
      %v2514 = vpop.f32.mrf.mxu0
      %v2515 = vpop.f32.mrf.mxu0
      %v2516 = vadd.f32 %v2055, %v2515
      %v2517 = vpop.f32.mrf.mxu0
      %2518 = vmatprep.mubr.bf16.mxu0 0
      %2519 = vmatmul.mubr.bf16.gmra.mxu0 %v2289
      %v2520 = vpop.f32.mrf.mxu0
      %v2521 = vadd.f32 %v2060, %v2520
      %v2522 = vpop.f32.mrf.mxu0
      %v2523 = vpop.f32.mrf.mxu0
      %v2524 = vadd.f32 %v2063, %v2523
      %v2525 = vpop.f32.mrf.mxu0
      %2526 = vmatprep.mubr.bf16.mxu0 0
      %2527 = vmatmul.mubr.bf16.gmra.mxu0 %v2298
      %v2528 = vpop.f32.mrf.mxu0
      %v2529 = vadd.f32 %v2068, %v2528
      %v2530 = vpop.f32.mrf.mxu0
      %v2531 = vpop.f32.mrf.mxu0
      %v2532 = vadd.f32 %v2071, %v2531
      %v2533 = vpop.f32.mrf.mxu0
      %2534 = vmatprep.mubr.bf16.mxu0 0
      %2535 = vmatmul.mubr.bf16.gmra.mxu0 %v2307
      %v2536 = vpop.f32.mrf.mxu0
      %v2537 = vadd.f32 %v2076, %v2536
      %v2538 = vpop.f32.mrf.mxu0
      %v2539 = vpop.f32.mrf.mxu0
      %v2540 = vadd.f32 %v2079, %v2539
      %v2541 = vpop.f32.mrf.mxu0
      %2542 = vmatprep.mubr.bf16.mxu0 0
      %2543 = vmatmul.mubr.bf16.gmra.mxu0 %v2316
      %v2544 = vpop.f32.mrf.mxu0
      %v2545 = vadd.f32 %v2084, %v2544
      %v2546 = vpop.f32.mrf.mxu0
      %v2547 = vpop.f32.mrf.mxu0
      %v2548 = vadd.f32 %v2087, %v2547
      %v2549 = vpop.f32.mrf.mxu0
      %2550 = vmatprep.mubr.bf16.mxu0 0
      %2551 = vmatmul.mubr.bf16.gmra.mxu0 %v2325
      %v2552 = vpop.f32.mrf.mxu0
      %v2553 = vadd.f32 %v2092, %v2552
      %v2554 = vpop.f32.mrf.mxu0
      %v2555 = vpop.f32.mrf.mxu0
      %v2556 = vadd.f32 %v2095, %v2555
      %v2557 = vpop.f32.mrf.mxu0
      %2558 = vmatprep.mubr.bf16.mxu0 0
      %2559 = vmatmul.mubr.bf16.gmra.mxu0 %v2334
      %v2560 = vpop.f32.mrf.mxu0
      %v2561 = vadd.f32 %v2100, %v2560
      %v2562 = vpop.f32.mrf.mxu0
      %v2563 = vpop.f32.mrf.mxu0
      %v2564 = vadd.f32 %v2103, %v2563
      %v2565 = vpop.f32.mrf.mxu0
      %2566 = vmatprep.mubr.bf16.mxu0 0
      %2567 = vmatmul.mubr.bf16.gmra.mxu0 %v2343
      %v2568 = vpop.f32.mrf.mxu0
      %v2569 = vadd.f32 %v2108, %v2568
      %v2570 = vpop.f32.mrf.mxu0
      %v2571 = vpop.f32.mrf.mxu0
      %v2572 = vadd.f32 %v2111, %v2571
      %v2573 = vpop.f32.mrf.mxu0
      %2574 = vmatprep.mubr.bf16.mxu0 0
      %2575 = vmatmul.mubr.bf16.gmra.mxu0 %v2352
      %v2576 = vpop.f32.mrf.mxu0
      %v2577 = vadd.f32 %v2116, %v2576
      %v2578 = vpop.f32.mrf.mxu0
      %v2579 = vpop.f32.mrf.mxu0
      %v2580 = vadd.f32 %v2119, %v2579
      %v2581 = vpop.f32.mrf.mxu0
      %2582 = vmatprep.mubr.bf16.mxu0 0
      %2583 = vmatmul.mubr.bf16.gmra.mxu0 %v2361
      %v2584 = vpop.f32.mrf.mxu0
      %v2585 = vadd.f32 %v2124, %v2584
      %v2586 = vpop.f32.mrf.mxu0
      %v2587 = vpop.f32.mrf.mxu0
      %v2588 = vadd.f32 %v2127, %v2587
      %v2589 = vpop.f32.mrf.mxu0
      %2590 = vmatprep.mubr.bf16.mxu0 0
      %2591 = vmatmul.mubr.bf16.gmra.mxu0 %v2370
      %v2592 = vpop.f32.mrf.mxu0
      %v2593 = vadd.f32 %v2132, %v2592
      %v2594 = vpop.f32.mrf.mxu0
      %v2595 = vpop.f32.mrf.mxu0
      %v2596 = vadd.f32 %v2135, %v2595
      %v2597 = vpop.f32.mrf.mxu0
      %2598 = vmatprep.mubr.bf16.mxu0 0
      %2599 = vmatmul.mubr.bf16.gmra.mxu0 %v2379
      %v2600 = vpop.f32.mrf.mxu0
      %v2601 = vadd.f32 %v2140, %v2600
      %v2602 = vpop.f32.mrf.mxu0
      %v2603 = vpop.f32.mrf.mxu0
      %v2604 = vadd.f32 %v2143, %v2603
      %v2605 = vpop.f32.mrf.mxu0
      %2606 = vmatprep.mubr.bf16.mxu0 0
      %2607 = vmatmul.mubr.bf16.gmra.mxu0 %v2388
      %v2608 = vpop.f32.mrf.mxu0
      %v2609 = vadd.f32 %v2148, %v2608
      %v2610 = vpop.f32.mrf.mxu0
      %v2611 = vpop.f32.mrf.mxu0
      %v2612 = vadd.f32 %v2151, %v2611
      %v2613 = vpop.f32.mrf.mxu0
      %2614 = vmatprep.mubr.bf16.mxu0 0
      %2615 = vmatmul.mubr.bf16.gmra.mxu0 %v2397
      %v2616 = vpop.f32.mrf.mxu0
      %v2617 = vadd.f32 %v2156, %v2616
      %v2618 = vpop.f32.mrf.mxu0
      %v2619 = vpop.f32.mrf.mxu0
      %v2620 = vadd.f32 %v2159, %v2619
      %v2621 = vpop.f32.mrf.mxu0
      %2622 = vdwg.mxu0
      %v2623 = vld [vmem:[#allocation2 + $0x8] sm:$0xf]
      %v2624 = vld [vmem:[#allocation2 + $0xc] sm:$0xf]
      %v2625 = vld [vmem:[#allocation2 + $0x10] sm:$0xf]
      %v2626 = vld [vmem:[#allocation2 + $0x14] sm:$0xf]
      %v2627 = vld [vmem:[#allocation2 + $0x18] sm:$0xf]
      %v2628 = vld [vmem:[#allocation2 + $0x1c] sm:$0xf]
      %v2629 = vld [vmem:[#allocation2 + $0x20] sm:$0xf]
      %v2630 = vld [vmem:[#allocation2 + $0x24] sm:$0xf]
      %v2631 = vld [vmem:[#allocation2 + $0x28] sm:$0xf]
      %v2632 = vld [vmem:[#allocation2 + $0x2c] sm:$0xf]
      %v2633 = vld [vmem:[#allocation2 + $0x30] sm:$0xf]
      %v2634 = vld [vmem:[#allocation2 + $0x34] sm:$0xf]
      %v2635 = vld [vmem:[#allocation2 + $0x38] sm:$0xf]
      %v2636 = vld [vmem:[#allocation2 + $0x3c] sm:$0xf]
      %v2637 = vld [vmem:[#allocation2 + $0x40] sm:$0xf]
      %v2638 = vld [vmem:[#allocation2 + $0x44] sm:$0xf]
      %v2639 = vld [vmem:[#allocation2 + $0x48] sm:$0xf]
      %v2640 = vld [vmem:[#allocation2 + $0x4c] sm:$0xf]
      %v2641 = vld [vmem:[#allocation2 + $0x50] sm:$0xf]
      %v2642 = vld [vmem:[#allocation2 + $0x54] sm:$0xf]
      %v2643 = vld [vmem:[#allocation2 + $0x58] sm:$0xf]
      %v2644 = vld [vmem:[#allocation2 + $0x5c] sm:$0xf]
      %v2645 = vld [vmem:[#allocation2 + $0x60] sm:$0xf]
      %v2646 = vld [vmem:[#allocation2 + $0x64] sm:$0xf]
      %v2647 = vld [vmem:[#allocation2 + $0x68] sm:$0xf]
      %v2648 = vld [vmem:[#allocation2 + $0x6c] sm:$0xf]
      %v2649 = vld [vmem:[#allocation2 + $0x70] sm:$0xf]
      %v2650 = vld [vmem:[#allocation2 + $0x74] sm:$0xf]
      %v2651 = vld [vmem:[#allocation2 + $0x78] sm:$0xf]
      %v2652 = vld [vmem:[#allocation2 + $0x7c] sm:$0xf]
      %v2653 = vld [vmem:[#allocation2 + $0x80] sm:$0xf]
      %v2654 = vld [vmem:[#allocation2 + $0x84] sm:$0xf]
      %v2655 = vld [vmem:[#allocation2 + $0x88] sm:$0x1]
      %v2656 = vsel %vm1243, 1, 0
      %v2657 = vsel %vm1244, 1, 0
      %v2658 = vsel %vm1245, 1, 0
      %v2659 = vsel %vm1246, 1, 0
      %v2660 = vsel %vm1247, 1, 0
      %v2661 = vsel %vm1248, 1, 0
      %v2662 = vsel %vm1249, 1, 0
      %v2663 = vsel %vm1250, 1, 0
      %v2664 = vsel %vm1251, 1, 0
      %v2665 = vsel %vm1252, 1, 0
      %v2666 = vsel %vm1253, 1, 0
      %v2667 = vsel %vm1254, 1, 0
      %v2668 = vsel %vm1255, 1, 0
      %v2669 = vsel %vm1256, 1, 0
      %v2670 = vsel %vm1257, 1, 0
      %v2671 = vsel %vm1258, 1, 0
      %v2672 = vsel %vm1259, 1, 0
      %v2673 = vsel %vm1260, 1, 0
      %v2674 = vsel %vm1261, 1, 0
      %v2675 = vsel %vm1262, 1, 0
      %v2676 = vsel %vm1263, 1, 0
      %v2677 = vsel %vm1264, 1, 0
      %v2678 = vsel %vm1265, 1, 0
      %v2679 = vsel %vm1266, 1, 0
      %v2680 = vsel %vm1267, 1, 0
      %v2681 = vsel %vm1268, 1, 0
      %v2682 = vsel %vm1269, 1, 0
      %v2683 = vsel %vm1270, 1, 0
      %v2684 = vsel %vm1271, 1, 0
      %v2685 = vsel %vm1272, 1, 0
      %v2686 = vsel %vm1273, 1, 0
      %v2687 = vsel %vm1274, 1, 0
      %vm2688 = vcmp.eq.s32.totalorder %v2656, 1
      %vm2689 = vcmp.eq.s32.totalorder %v2657, 1
      %vm2690 = vcmp.eq.s32.totalorder %v2658, 1
      %vm2691 = vcmp.eq.s32.totalorder %v2659, 1
      %vm2692 = vcmp.eq.s32.totalorder %v2660, 1
      %vm2693 = vcmp.eq.s32.totalorder %v2661, 1
      %vm2694 = vcmp.eq.s32.totalorder %v2662, 1
      %vm2695 = vcmp.eq.s32.totalorder %v2663, 1
      %vm2696 = vcmp.eq.s32.totalorder %v2664, 1
      %vm2697 = vcmp.eq.s32.totalorder %v2665, 1
      %vm2698 = vcmp.eq.s32.totalorder %v2666, 1
      %vm2699 = vcmp.eq.s32.totalorder %v2667, 1
      %vm2700 = vcmp.eq.s32.totalorder %v2668, 1
      %vm2701 = vcmp.eq.s32.totalorder %v2669, 1
      %vm2702 = vcmp.eq.s32.totalorder %v2670, 1
      %vm2703 = vcmp.eq.s32.totalorder %v2671, 1
      %vm2704 = vcmp.eq.s32.totalorder %v2672, 1
      %vm2705 = vcmp.eq.s32.totalorder %v2673, 1
      %vm2706 = vcmp.eq.s32.totalorder %v2674, 1
      %vm2707 = vcmp.eq.s32.totalorder %v2675, 1
      %vm2708 = vcmp.eq.s32.totalorder %v2676, 1
      %vm2709 = vcmp.eq.s32.totalorder %v2677, 1
      %vm2710 = vcmp.eq.s32.totalorder %v2678, 1
      %vm2711 = vcmp.eq.s32.totalorder %v2679, 1
      %vm2712 = vcmp.eq.s32.totalorder %v2680, 1
      %vm2713 = vcmp.eq.s32.totalorder %v2681, 1
      %vm2714 = vcmp.eq.s32.totalorder %v2682, 1
      %vm2715 = vcmp.eq.s32.totalorder %v2683, 1
      %vm2716 = vcmp.eq.s32.totalorder %v2684, 1
      %vm2717 = vcmp.eq.s32.totalorder %v2685, 1
      %vm2718 = vcmp.eq.s32.totalorder %v2686, 1
      %vm2719 = vcmp.eq.s32.totalorder %v2687, 1
      %vm2720 = vmpackc.low %vm2688, %vm2688
      %vm2721 = vmpackc.low %vm2689, %vm2689
      %vm2722 = vmpackc.low %vm2690, %vm2690
      %vm2723 = vmpackc.low %vm2691, %vm2691
      %vm2724 = vmpackc.low %vm2692, %vm2692
      %vm2725 = vmpackc.low %vm2693, %vm2693
      %vm2726 = vmpackc.low %vm2694, %vm2694
      %vm2727 = vmpackc.low %vm2695, %vm2695
      %vm2728 = vmpackc.low %vm2696, %vm2696
      %vm2729 = vmpackc.low %vm2697, %vm2697
      %vm2730 = vmpackc.low %vm2698, %vm2698
      %vm2731 = vmpackc.low %vm2699, %vm2699
      %vm2732 = vmpackc.low %vm2700, %vm2700
      %vm2733 = vmpackc.low %vm2701, %vm2701
      %vm2734 = vmpackc.low %vm2702, %vm2702
      %vm2735 = vmpackc.low %vm2703, %vm2703
      %vm2736 = vmpackc.low %vm2704, %vm2704
      %vm2737 = vmpackc.low %vm2705, %vm2705
      %vm2738 = vmpackc.low %vm2706, %vm2706
      %vm2739 = vmpackc.low %vm2707, %vm2707
      %vm2740 = vmpackc.low %vm2708, %vm2708
      %vm2741 = vmpackc.low %vm2709, %vm2709
      %vm2742 = vmpackc.low %vm2710, %vm2710
      %vm2743 = vmpackc.low %vm2711, %vm2711
      %vm2744 = vmpackc.low %vm2712, %vm2712
      %vm2745 = vmpackc.low %vm2713, %vm2713
      %vm2746 = vmpackc.low %vm2714, %vm2714
      %vm2747 = vmpackc.low %vm2715, %vm2715
      %vm2748 = vmpackc.low %vm2716, %vm2716
      %vm2749 = vmpackc.low %vm2717, %vm2717
      %vm2750 = vmpackc.low %vm2718, %vm2718
      %vm2751 = vmpackc.low %vm2719, %vm2719
      %v2752 = vsel %vm2720, 65537, 0
      %v2753 = vsel %vm2721, 65537, 0
      %v2754 = vsel %vm2722, 65537, 0
      %v2755 = vsel %vm2723, 65537, 0
      %v2756 = vsel %vm2724, 65537, 0
      %v2757 = vsel %vm2725, 65537, 0
      %v2758 = vsel %vm2726, 65537, 0
      %v2759 = vsel %vm2727, 65537, 0
      %v2760 = vsel %vm2728, 65537, 0
      %v2761 = vsel %vm2729, 65537, 0
      %v2762 = vsel %vm2730, 65537, 0
      %v2763 = vsel %vm2731, 65537, 0
      %v2764 = vsel %vm2732, 65537, 0
      %v2765 = vsel %vm2733, 65537, 0
      %v2766 = vsel %vm2734, 65537, 0
      %v2767 = vsel %vm2735, 65537, 0
      %v2768 = vsel %vm2736, 65537, 0
      %v2769 = vsel %vm2737, 65537, 0
      %v2770 = vsel %vm2738, 65537, 0
      %v2771 = vsel %vm2739, 65537, 0
      %v2772 = vsel %vm2740, 65537, 0
      %v2773 = vsel %vm2741, 65537, 0
      %v2774 = vsel %vm2742, 65537, 0
      %v2775 = vsel %vm2743, 65537, 0
      %v2776 = vsel %vm2744, 65537, 0
      %v2777 = vsel %vm2745, 65537, 0
      %v2778 = vsel %vm2746, 65537, 0
      %v2779 = vsel %vm2747, 65537, 0
      %v2780 = vsel %vm2748, 65537, 0
      %v2781 = vsel %vm2749, 65537, 0
      %v2782 = vsel %vm2750, 65537, 0
      %v2783 = vsel %vm2751, 65537, 0
      %vm2784 = vsmask.f32 256
      %vm2785 = vsmask.f32 4368
      %vm2786 = vmor %vm2784, %vm2785
      %v2788 = vshrl.u32 %v2752, 16
      %v2790 = vrot.slane %v2788, 7
      %v2791 = vshll.u32 %v2752, 16
      %v2793 = vor.u32 %v2790, %v2791
      %v2794 = vrot.slane %v2790, 4
      %v2796 = vshrl.u32 %v2753, 16
      %v2798 = vrot.slane %v2796, 7
      %v2799 = vshll.u32 %v2753, 16
      %v2801 = vor.u32 %v2798, %v2799
      %v2802 = vsel %vm2786, %v2794, %v2801
      %v2803 = vrot.slane %v2798, 4
      %v2805 = vshrl.u32 %v2754, 16
      %v2807 = vrot.slane %v2805, 7
      %v2808 = vshll.u32 %v2754, 16
      %v2810 = vor.u32 %v2807, %v2808
      %v2811 = vsel %vm2786, %v2803, %v2810
      %v2812 = vrot.slane %v2807, 4
      %v2814 = vshrl.u32 %v2755, 16
      %v2816 = vrot.slane %v2814, 7
      %v2817 = vshll.u32 %v2755, 16
      %v2819 = vor.u32 %v2816, %v2817
      %v2820 = vsel %vm2786, %v2812, %v2819
      %v2821 = vrot.slane %v2816, 4
      %v2823 = vshrl.u32 %v2756, 16
      %v2825 = vrot.slane %v2823, 7
      %v2826 = vshll.u32 %v2756, 16
      %v2828 = vor.u32 %v2825, %v2826
      %v2829 = vsel %vm2786, %v2821, %v2828
      %v2830 = vrot.slane %v2825, 4
      %v2832 = vshrl.u32 %v2757, 16
      %v2834 = vrot.slane %v2832, 7
      %v2835 = vshll.u32 %v2757, 16
      %v2837 = vor.u32 %v2834, %v2835
      %v2838 = vsel %vm2786, %v2830, %v2837
      %v2839 = vrot.slane %v2834, 4
      %v2841 = vshrl.u32 %v2758, 16
      %v2843 = vrot.slane %v2841, 7
      %v2844 = vshll.u32 %v2758, 16
      %v2846 = vor.u32 %v2843, %v2844
      %v2847 = vsel %vm2786, %v2839, %v2846
      %v2848 = vrot.slane %v2843, 4
      %v2850 = vshrl.u32 %v2759, 16
      %v2852 = vrot.slane %v2850, 7
      %v2853 = vshll.u32 %v2759, 16
      %v2855 = vor.u32 %v2852, %v2853
      %v2856 = vsel %vm2786, %v2848, %v2855
      %v2857 = vrot.slane %v2852, 4
      %v2859 = vshrl.u32 %v2760, 16
      %v2861 = vrot.slane %v2859, 7
      %v2862 = vshll.u32 %v2760, 16
      %v2864 = vor.u32 %v2861, %v2862
      %v2865 = vsel %vm2786, %v2857, %v2864
      %v2866 = vrot.slane %v2861, 4
      %v2868 = vshrl.u32 %v2761, 16
      %v2870 = vrot.slane %v2868, 7
      %v2871 = vshll.u32 %v2761, 16
      %v2873 = vor.u32 %v2870, %v2871
      %v2874 = vsel %vm2786, %v2866, %v2873
      %v2875 = vrot.slane %v2870, 4
      %v2877 = vshrl.u32 %v2762, 16
      %v2879 = vrot.slane %v2877, 7
      %v2880 = vshll.u32 %v2762, 16
      %v2882 = vor.u32 %v2879, %v2880
      %v2883 = vsel %vm2786, %v2875, %v2882
      %v2884 = vrot.slane %v2879, 4
      %v2886 = vshrl.u32 %v2763, 16
      %v2888 = vrot.slane %v2886, 7
      %v2889 = vshll.u32 %v2763, 16
      %v2891 = vor.u32 %v2888, %v2889
      %v2892 = vsel %vm2786, %v2884, %v2891
      %v2893 = vrot.slane %v2888, 4
      %v2895 = vshrl.u32 %v2764, 16
      %v2897 = vrot.slane %v2895, 7
      %v2898 = vshll.u32 %v2764, 16
      %v2900 = vor.u32 %v2897, %v2898
      %v2901 = vsel %vm2786, %v2893, %v2900
      %v2902 = vrot.slane %v2897, 4
      %v2904 = vshrl.u32 %v2765, 16
      %v2906 = vrot.slane %v2904, 7
      %v2907 = vshll.u32 %v2765, 16
      %v2909 = vor.u32 %v2906, %v2907
      %v2910 = vsel %vm2786, %v2902, %v2909
      %v2911 = vrot.slane %v2906, 4
      %v2913 = vshrl.u32 %v2766, 16
      %v2915 = vrot.slane %v2913, 7
      %v2916 = vshll.u32 %v2766, 16
      %v2918 = vor.u32 %v2915, %v2916
      %v2919 = vsel %vm2786, %v2911, %v2918
      %v2920 = vrot.slane %v2915, 4
      %v2922 = vshrl.u32 %v2767, 16
      %v2924 = vrot.slane %v2922, 7
      %v2925 = vshll.u32 %v2767, 16
      %v2927 = vor.u32 %v2924, %v2925
      %v2928 = vsel %vm2786, %v2920, %v2927
      %v2929 = vrot.slane %v2924, 4
      %v2931 = vshrl.u32 %v2768, 16
      %v2933 = vrot.slane %v2931, 7
      %v2934 = vshll.u32 %v2768, 16
      %v2936 = vor.u32 %v2933, %v2934
      %v2937 = vsel %vm2786, %v2929, %v2936
      %v2938 = vrot.slane %v2933, 4
      %v2940 = vshrl.u32 %v2769, 16
      %v2942 = vrot.slane %v2940, 7
      %v2943 = vshll.u32 %v2769, 16
      %v2945 = vor.u32 %v2942, %v2943
      %v2946 = vsel %vm2786, %v2938, %v2945
      %v2947 = vrot.slane %v2942, 4
      %v2949 = vshrl.u32 %v2770, 16
      %v2951 = vrot.slane %v2949, 7
      %v2952 = vshll.u32 %v2770, 16
      %v2954 = vor.u32 %v2951, %v2952
      %v2955 = vsel %vm2786, %v2947, %v2954
      %v2956 = vrot.slane %v2951, 4
      %v2958 = vshrl.u32 %v2771, 16
      %v2960 = vrot.slane %v2958, 7
      %v2961 = vshll.u32 %v2771, 16
      %v2963 = vor.u32 %v2960, %v2961
      %v2964 = vsel %vm2786, %v2956, %v2963
      %v2965 = vrot.slane %v2960, 4
      %v2967 = vshrl.u32 %v2772, 16
      %v2969 = vrot.slane %v2967, 7
      %v2970 = vshll.u32 %v2772, 16
      %v2972 = vor.u32 %v2969, %v2970
      %v2973 = vsel %vm2786, %v2965, %v2972
      %v2974 = vrot.slane %v2969, 4
      %v2976 = vshrl.u32 %v2773, 16
      %v2978 = vrot.slane %v2976, 7
      %v2979 = vshll.u32 %v2773, 16
      %v2981 = vor.u32 %v2978, %v2979
      %v2982 = vsel %vm2786, %v2974, %v2981
      %v2983 = vrot.slane %v2978, 4
      %v2985 = vshrl.u32 %v2774, 16
      %v2987 = vrot.slane %v2985, 7
      %v2988 = vshll.u32 %v2774, 16
      %v2990 = vor.u32 %v2987, %v2988
      %v2991 = vsel %vm2786, %v2983, %v2990
      %v2992 = vrot.slane %v2987, 4
      %v2994 = vshrl.u32 %v2775, 16
      %v2996 = vrot.slane %v2994, 7
      %v2997 = vshll.u32 %v2775, 16
      %v2999 = vor.u32 %v2996, %v2997
      %v3000 = vsel %vm2786, %v2992, %v2999
      %v3001 = vrot.slane %v2996, 4
      %v3003 = vshrl.u32 %v2776, 16
      %v3005 = vrot.slane %v3003, 7
      %v3006 = vshll.u32 %v2776, 16
      %v3008 = vor.u32 %v3005, %v3006
      %v3009 = vsel %vm2786, %v3001, %v3008
      %v3010 = vrot.slane %v3005, 4
      %v3012 = vshrl.u32 %v2777, 16
      %v3014 = vrot.slane %v3012, 7
      %v3015 = vshll.u32 %v2777, 16
      %v3017 = vor.u32 %v3014, %v3015
      %v3018 = vsel %vm2786, %v3010, %v3017
      %v3019 = vrot.slane %v3014, 4
      %v3021 = vshrl.u32 %v2778, 16
      %v3023 = vrot.slane %v3021, 7
      %v3024 = vshll.u32 %v2778, 16
      %v3026 = vor.u32 %v3023, %v3024
      %v3027 = vsel %vm2786, %v3019, %v3026
      %v3028 = vrot.slane %v3023, 4
      %v3030 = vshrl.u32 %v2779, 16
      %v3032 = vrot.slane %v3030, 7
      %v3033 = vshll.u32 %v2779, 16
      %v3035 = vor.u32 %v3032, %v3033
      %v3036 = vsel %vm2786, %v3028, %v3035
      %v3037 = vrot.slane %v3032, 4
      %v3039 = vshrl.u32 %v2780, 16
      %v3041 = vrot.slane %v3039, 7
      %v3042 = vshll.u32 %v2780, 16
      %v3044 = vor.u32 %v3041, %v3042
      %v3045 = vsel %vm2786, %v3037, %v3044
      %v3046 = vrot.slane %v3041, 4
      %v3048 = vshrl.u32 %v2781, 16
      %v3050 = vrot.slane %v3048, 7
      %v3051 = vshll.u32 %v2781, 16
      %v3053 = vor.u32 %v3050, %v3051
      %v3054 = vsel %vm2786, %v3046, %v3053
      %v3055 = vrot.slane %v3050, 4
      %v3057 = vshrl.u32 %v2782, 16
      %v3059 = vrot.slane %v3057, 7
      %v3060 = vshll.u32 %v2782, 16
      %v3062 = vor.u32 %v3059, %v3060
      %v3063 = vsel %vm2786, %v3055, %v3062
      %v3064 = vrot.slane %v3059, 4
      %v3066 = vshrl.u32 %v2783, 16
      %v3068 = vrot.slane %v3066, 7
      %v3069 = vshll.u32 %v2783, 16
      %v3071 = vor.u32 %v3068, %v3069
      %v3072 = vsel %vm2786, %v3064, %v3071
      %v3073 = vrot.slane %v3068, 4
      %vm3074 = vcmp.ne.s16.totalorder %v2793, 0
      %vm3075 = vcmp.ne.s16.totalorder %v2802, 0
      %vm3076 = vcmp.ne.s16.totalorder %v2811, 0
      %vm3077 = vcmp.ne.s16.totalorder %v2820, 0
      %vm3078 = vcmp.ne.s16.totalorder %v2829, 0
      %vm3079 = vcmp.ne.s16.totalorder %v2838, 0
      %vm3080 = vcmp.ne.s16.totalorder %v2847, 0
      %vm3081 = vcmp.ne.s16.totalorder %v2856, 0
      %vm3082 = vcmp.ne.s16.totalorder %v2865, 0
      %vm3083 = vcmp.ne.s16.totalorder %v2874, 0
      %vm3084 = vcmp.ne.s16.totalorder %v2883, 0
      %vm3085 = vcmp.ne.s16.totalorder %v2892, 0
      %vm3086 = vcmp.ne.s16.totalorder %v2901, 0
      %vm3087 = vcmp.ne.s16.totalorder %v2910, 0
      %vm3088 = vcmp.ne.s16.totalorder %v2919, 0
      %vm3089 = vcmp.ne.s16.totalorder %v2928, 0
      %vm3090 = vcmp.ne.s16.totalorder %v2937, 0
      %vm3091 = vcmp.ne.s16.totalorder %v2946, 0
      %vm3092 = vcmp.ne.s16.totalorder %v2955, 0
      %vm3093 = vcmp.ne.s16.totalorder %v2964, 0
      %vm3094 = vcmp.ne.s16.totalorder %v2973, 0
      %vm3095 = vcmp.ne.s16.totalorder %v2982, 0
      %vm3096 = vcmp.ne.s16.totalorder %v2991, 0
      %vm3097 = vcmp.ne.s16.totalorder %v3000, 0
      %vm3098 = vcmp.ne.s16.totalorder %v3009, 0
      %vm3099 = vcmp.ne.s16.totalorder %v3018, 0
      %vm3100 = vcmp.ne.s16.totalorder %v3027, 0
      %vm3101 = vcmp.ne.s16.totalorder %v3036, 0
      %vm3102 = vcmp.ne.s16.totalorder %v3045, 0
      %vm3103 = vcmp.ne.s16.totalorder %v3054, 0
      %vm3104 = vcmp.ne.s16.totalorder %v3063, 0
      %vm3105 = vcmp.ne.s16.totalorder %v3072, 0
      %vm3106 = vcmp.ne.s16.totalorder %v3073, 0
      %v3107 = vsel %vm3074, %v2623, 0
      %v3108 = vsel %vm3075, %v2624, 0
      %v3109 = vsel %vm3076, %v2625, 0
      %v3110 = vsel %vm3077, %v2626, 0
      %v3111 = vsel %vm3078, %v2627, 0
      %v3112 = vsel %vm3079, %v2628, 0
      %v3113 = vsel %vm3080, %v2629, 0
      %v3114 = vsel %vm3081, %v2630, 0
      %v3115 = vsel %vm3082, %v2631, 0
      %v3116 = vsel %vm3083, %v2632, 0
      %v3117 = vsel %vm3084, %v2633, 0
      %v3118 = vsel %vm3085, %v2634, 0
      %v3119 = vsel %vm3086, %v2635, 0
      %v3120 = vsel %vm3087, %v2636, 0
      %v3121 = vsel %vm3088, %v2637, 0
      %v3122 = vsel %vm3089, %v2638, 0
      %v3123 = vsel %vm3090, %v2639, 0
      %v3124 = vsel %vm3091, %v2640, 0
      %v3125 = vsel %vm3092, %v2641, 0
      %v3126 = vsel %vm3093, %v2642, 0
      %v3127 = vsel %vm3094, %v2643, 0
      %v3128 = vsel %vm3095, %v2644, 0
      %v3129 = vsel %vm3096, %v2645, 0
      %v3130 = vsel %vm3097, %v2646, 0
      %v3131 = vsel %vm3098, %v2647, 0
      %v3132 = vsel %vm3099, %v2648, 0
      %v3133 = vsel %vm3100, %v2649, 0
      %v3134 = vsel %vm3101, %v2650, 0
      %v3135 = vsel %vm3102, %v2651, 0
      %v3136 = vsel %vm3103, %v2652, 0
      %v3137 = vsel %vm3104, %v2653, 0
      %v3138 = vsel %vm3105, %v2654, 0
      %v3139 = vsel %vm3106, %v2655, 0
      %s3140 = scalar_lea.vmem %s3, 128
      %v3141 = vld [vmem:[%s3140] sm:$0xf]
      %v3142 = vld [vmem:[%s3140 + $0x4] sm:$0xf]
      %v3143 = vld [vmem:[%s3140 + $0x8] sm:$0xf]
      %v3144 = vld [vmem:[%s3140 + $0xc] sm:$0xf]
      %v3145 = vld [vmem:[%s3140 + $0x10] sm:$0xf]
      %v3146 = vld [vmem:[%s3140 + $0x14] sm:$0xf]
      %v3147 = vld [vmem:[%s3140 + $0x18] sm:$0xf]
      %v3148 = vld [vmem:[%s3140 + $0x1c] sm:$0xf]
      %v3149 = vld [vmem:[%s3140 + $0x20] sm:$0xf]
      %v3150 = vld [vmem:[%s3140 + $0x24] sm:$0xf]
      %v3151 = vld [vmem:[%s3140 + $0x28] sm:$0xf]
      %v3152 = vld [vmem:[%s3140 + $0x2c] sm:$0xf]
      %v3153 = vld [vmem:[%s3140 + $0x30] sm:$0xf]
      %v3154 = vld [vmem:[%s3140 + $0x34] sm:$0xf]
      %v3155 = vld [vmem:[%s3140 + $0x38] sm:$0xf]
      %v3156 = vld [vmem:[%s3140 + $0x3c] sm:$0xf]
      %v3190 = vunpack.c.l.b16 %v3107
      %v3191 = vunpack.c.l.b16 %v3108
      %v3192 = vunpack.c.l.b16 %v3109
      %v3193 = vunpack.c.l.b16 %v3110
      %v3194 = vunpack.c.l.b16 %v3111
      %v3195 = vunpack.c.l.b16 %v3112
      %v3196 = vunpack.c.l.b16 %v3113
      %v3197 = vunpack.c.l.b16 %v3114
      %v3198 = vunpack.c.l.b16 %v3115
      %v3199 = vunpack.c.l.b16 %v3116
      %v3200 = vunpack.c.l.b16 %v3117
      %v3201 = vunpack.c.l.b16 %v3118
      %v3202 = vunpack.c.l.b16 %v3119
      %v3203 = vunpack.c.l.b16 %v3120
      %v3204 = vunpack.c.l.b16 %v3121
      %v3205 = vunpack.c.l.b16 %v3122
      %v3206 = vunpack.c.l.b16 %v3123
      %v3207 = vunpack.c.l.b16 %v3124
      %v3208 = vunpack.c.l.b16 %v3125
      %v3209 = vunpack.c.l.b16 %v3126
      %v3210 = vunpack.c.l.b16 %v3127
      %v3211 = vunpack.c.l.b16 %v3128
      %v3212 = vunpack.c.l.b16 %v3129
      %v3213 = vunpack.c.l.b16 %v3130
      %v3214 = vunpack.c.l.b16 %v3131
      %v3215 = vunpack.c.l.b16 %v3132
      %v3216 = vunpack.c.l.b16 %v3133
      %v3217 = vunpack.c.l.b16 %v3134
      %v3218 = vunpack.c.l.b16 %v3135
      %v3219 = vunpack.c.l.b16 %v3136
      %v3220 = vunpack.c.l.b16 %v3137
      %v3221 = vunpack.c.l.b16 %v3138
      %v3222 = vunpack.c.l.b16 %v3139
      %v3223 = vpack.c.b16 %v3191, %v3190
      %v3224 = vpack.c.b16 %v3193, %v3192
      %v3225 = vpack.c.b16 %v3195, %v3194
      %v3226 = vpack.c.b16 %v3197, %v3196
      %v3227 = vpack.c.b16 %v3199, %v3198
      %v3228 = vpack.c.b16 %v3201, %v3200
      %v3229 = vpack.c.b16 %v3203, %v3202
      %v3230 = vpack.c.b16 %v3205, %v3204
      %v3231 = vpack.c.b16 %v3207, %v3206
      %v3232 = vpack.c.b16 %v3209, %v3208
      %v3233 = vpack.c.b16 %v3211, %v3210
      %v3234 = vpack.c.b16 %v3213, %v3212
      %v3235 = vpack.c.b16 %v3215, %v3214
      %v3236 = vpack.c.b16 %v3217, %v3216
      %v3237 = vpack.c.b16 %v3219, %v3218
      %v3238 = vpack.c.b16 %v3221, %v3220
      %v3239 = vpack.c.b16 %v3222, %v3222
      %vm3240 = vsmask.f32 7424
      %v3242 = vshrl.u32 %v3223, 16
      %v3244 = vshll.u32 %v3223, 16
      %v3246 = vrot.slane %v3244, 1
      %v3247 = vor.u32 %v3242, %v3246
      %v3249 = vshll.u32 %v3224, 16
      %v3251 = vrot.slane %v3249, 1
      %v3252 = vsel %vm3240, %v3247, %v3251
      %v3253 = vshrl.u32 %v3224, 16
      %v3255 = vor.u32 %v3253, %v3251
      %v3257 = vshll.u32 %v3225, 16
      %v3259 = vrot.slane %v3257, 1
      %v3260 = vsel %vm3240, %v3255, %v3259
      %v3261 = vshrl.u32 %v3225, 16
      %v3263 = vor.u32 %v3261, %v3259
      %v3265 = vshll.u32 %v3226, 16
      %v3267 = vrot.slane %v3265, 1
      %v3268 = vsel %vm3240, %v3263, %v3267
      %v3269 = vshrl.u32 %v3226, 16
      %v3271 = vor.u32 %v3269, %v3267
      %v3273 = vshll.u32 %v3227, 16
      %v3275 = vrot.slane %v3273, 1
      %v3276 = vsel %vm3240, %v3271, %v3275
      %v3277 = vshrl.u32 %v3227, 16
      %v3279 = vor.u32 %v3277, %v3275
      %v3281 = vshll.u32 %v3228, 16
      %v3283 = vrot.slane %v3281, 1
      %v3284 = vsel %vm3240, %v3279, %v3283
      %v3285 = vshrl.u32 %v3228, 16
      %v3287 = vor.u32 %v3285, %v3283
      %v3289 = vshll.u32 %v3229, 16
      %v3291 = vrot.slane %v3289, 1
      %v3292 = vsel %vm3240, %v3287, %v3291
      %v3293 = vshrl.u32 %v3229, 16
      %v3295 = vor.u32 %v3293, %v3291
      %v3297 = vshll.u32 %v3230, 16
      %v3299 = vrot.slane %v3297, 1
      %v3300 = vsel %vm3240, %v3295, %v3299
      %v3301 = vshrl.u32 %v3230, 16
      %v3303 = vor.u32 %v3301, %v3299
      %v3305 = vshll.u32 %v3231, 16
      %v3307 = vrot.slane %v3305, 1
      %v3308 = vsel %vm3240, %v3303, %v3307
      %v3309 = vshrl.u32 %v3231, 16
      %v3311 = vor.u32 %v3309, %v3307
      %v3313 = vshll.u32 %v3232, 16
      %v3315 = vrot.slane %v3313, 1
      %v3316 = vsel %vm3240, %v3311, %v3315
      %v3317 = vshrl.u32 %v3232, 16
      %v3319 = vor.u32 %v3317, %v3315
      %v3321 = vshll.u32 %v3233, 16
      %v3323 = vrot.slane %v3321, 1
      %v3324 = vsel %vm3240, %v3319, %v3323
      %v3325 = vshrl.u32 %v3233, 16
      %v3327 = vor.u32 %v3325, %v3323
      %v3329 = vshll.u32 %v3234, 16
      %v3331 = vrot.slane %v3329, 1
      %v3332 = vsel %vm3240, %v3327, %v3331
      %v3333 = vshrl.u32 %v3234, 16
      %v3335 = vor.u32 %v3333, %v3331
      %v3337 = vshll.u32 %v3235, 16
      %v3339 = vrot.slane %v3337, 1
      %v3340 = vsel %vm3240, %v3335, %v3339
      %v3341 = vshrl.u32 %v3235, 16
      %v3343 = vor.u32 %v3341, %v3339
      %v3345 = vshll.u32 %v3236, 16
      %v3347 = vrot.slane %v3345, 1
      %v3348 = vsel %vm3240, %v3343, %v3347
      %v3349 = vshrl.u32 %v3236, 16
      %v3351 = vor.u32 %v3349, %v3347
      %v3353 = vshll.u32 %v3237, 16
      %v3355 = vrot.slane %v3353, 1
      %v3356 = vsel %vm3240, %v3351, %v3355
      %v3357 = vshrl.u32 %v3237, 16
      %v3359 = vor.u32 %v3357, %v3355
      %v3361 = vshll.u32 %v3238, 16
      %v3363 = vrot.slane %v3361, 1
      %v3364 = vsel %vm3240, %v3359, %v3363
      %v3365 = vshrl.u32 %v3238, 16
      %v3367 = vor.u32 %v3365, %v3363
      %v3369 = vshll.u32 %v3239, 16
      %v3371 = vrot.slane %v3369, 1
      %v3372 = vsel %vm3240, %v3367, %v3371
      %v3405 = vunpack.c.l.b16 %v3141
      %v3406 = vunpack.c.l.b16 %v3142
      %v3407 = vunpack.c.l.b16 %v3143
      %v3408 = vunpack.c.l.b16 %v3144
      %v3409 = vunpack.c.l.b16 %v3145
      %v3410 = vunpack.c.l.b16 %v3146
      %v3411 = vunpack.c.l.b16 %v3147
      %v3412 = vunpack.c.l.b16 %v3148
      %v3413 = vunpack.c.l.b16 %v3149
      %v3414 = vunpack.c.l.b16 %v3150
      %v3415 = vunpack.c.l.b16 %v3151
      %v3416 = vunpack.c.l.b16 %v3152
      %v3417 = vunpack.c.l.b16 %v3153
      %v3418 = vunpack.c.l.b16 %v3154
      %v3419 = vunpack.c.l.b16 %v3155
      %v3420 = vunpack.c.l.b16 %v3156
      %v3421 = vpack.c.b16 %v3406, %v3405
      %v3422 = vpack.c.b16 %v3408, %v3407
      %v3423 = vpack.c.b16 %v3410, %v3409
      %v3424 = vpack.c.b16 %v3412, %v3411
      %v3425 = vpack.c.b16 %v3414, %v3413
      %v3426 = vpack.c.b16 %v3416, %v3415
      %v3427 = vpack.c.b16 %v3418, %v3417
      %v3428 = vpack.c.b16 %v3420, %v3419
      %3437 = vmatprep.subr.bf16.mxu0 0
      %3438 = vmatpush1.bf16.msra.mxu0 %v3428
      %3439 = vmatprep.subr.bf16.mxu0 0
      %3440 = vmatpush1.bf16.msra.mxu0 %v3427
      %3441 = vmatprep.subr.bf16.mxu0 0
      %3442 = vmatpush1.bf16.msra.mxu0 %v3426
      %3443 = vmatprep.subr.bf16.mxu0 0
      %3444 = vmatpush1.bf16.msra.mxu0 %v3425
      %3445 = vmatprep.subr.bf16.mxu0 0
      %3446 = vmatpush1.bf16.msra.mxu0 %v3424
      %3447 = vmatprep.subr.bf16.mxu0 0
      %3448 = vmatpush1.bf16.msra.mxu0 %v3423
      %3449 = vmatprep.subr.bf16.mxu0 0
      %3450 = vmatpush1.bf16.msra.mxu0 %v3422
      %3451 = vmatprep.subr.bf16.mxu0 0
      %3452 = vmatpush1.bf16.msra.mxu0 %v3421
      %3453 = vmatprep.subr.bf16.mxu0 0
      %3454 = vmatpush2.bf16.msra.mxu0 0
      %3455 = vmatprep.subr.bf16.mxu0 0
      %3456 = vmatpush2.bf16.msra.mxu0 0
      %3457 = vmatprep.subr.bf16.mxu0 0
      %3458 = vmatpush2.bf16.msra.mxu0 0
      %3459 = vmatprep.subr.bf16.mxu0 0
      %3460 = vmatpush2.bf16.msra.mxu0 0
      %3461 = vmatprep.subr.bf16.mxu0 0
      %3462 = vmatpush2.bf16.msra.mxu0 0
      %3463 = vmatprep.subr.bf16.mxu0 0
      %3464 = vmatpush2.bf16.msra.mxu0 0
      %3465 = vmatprep.subr.bf16.mxu0 0
      %3466 = vmatpush2.bf16.msra.mxu0 0
      %3467 = vmatprep.subr.bf16.mxu0 0
      %3468 = vmatpush2.bf16.msra.mxu0 0
      %3469 = vmatprep.mubr.bf16.mxu0 0
      %3470 = vmatmul.mubr.bf16.gmra.mxu0 %v3252
      %v3471 = vpop.f32.mrf.mxu0
      %v3472 = vadd.f32 0.0, %v3471
      %v3473 = vpop.f32.mrf.mxu0
      %v3474 = vpop.f32.mrf.mxu0
      %v3475 = vadd.f32 0.0, %v3474
      %v3476 = vpop.f32.mrf.mxu0
      %3477 = vmatprep.mubr.bf16.mxu0 0
      %3478 = vmatmul.mubr.bf16.gmra.mxu0 %v3260
      %v3479 = vpop.f32.mrf.mxu0
      %v3480 = vadd.f32 0.0, %v3479
      %v3481 = vpop.f32.mrf.mxu0
      %v3482 = vpop.f32.mrf.mxu0
      %v3483 = vadd.f32 0.0, %v3482
      %v3484 = vpop.f32.mrf.mxu0
      %3485 = vmatprep.mubr.bf16.mxu0 0
      %3486 = vmatmul.mubr.bf16.gmra.mxu0 %v3268
      %v3487 = vpop.f32.mrf.mxu0
      %v3488 = vadd.f32 0.0, %v3487
      %v3489 = vpop.f32.mrf.mxu0
      %v3490 = vpop.f32.mrf.mxu0
      %v3491 = vadd.f32 0.0, %v3490
      %v3492 = vpop.f32.mrf.mxu0
      %3493 = vmatprep.mubr.bf16.mxu0 0
      %3494 = vmatmul.mubr.bf16.gmra.mxu0 %v3276
      %v3495 = vpop.f32.mrf.mxu0
      %v3496 = vadd.f32 0.0, %v3495
      %v3497 = vpop.f32.mrf.mxu0
      %v3498 = vpop.f32.mrf.mxu0
      %v3499 = vadd.f32 0.0, %v3498
      %v3500 = vpop.f32.mrf.mxu0
      %3501 = vmatprep.mubr.bf16.mxu0 0
      %3502 = vmatmul.mubr.bf16.gmra.mxu0 %v3284
      %v3503 = vpop.f32.mrf.mxu0
      %v3504 = vadd.f32 0.0, %v3503
      %v3505 = vpop.f32.mrf.mxu0
      %v3506 = vpop.f32.mrf.mxu0
      %v3507 = vadd.f32 0.0, %v3506
      %v3508 = vpop.f32.mrf.mxu0
      %3509 = vmatprep.mubr.bf16.mxu0 0
      %3510 = vmatmul.mubr.bf16.gmra.mxu0 %v3292
      %v3511 = vpop.f32.mrf.mxu0
      %v3512 = vadd.f32 0.0, %v3511
      %v3513 = vpop.f32.mrf.mxu0
      %v3514 = vpop.f32.mrf.mxu0
      %v3515 = vadd.f32 0.0, %v3514
      %v3516 = vpop.f32.mrf.mxu0
      %3517 = vmatprep.mubr.bf16.mxu0 0
      %3518 = vmatmul.mubr.bf16.gmra.mxu0 %v3300
      %v3519 = vpop.f32.mrf.mxu0
      %v3520 = vadd.f32 0.0, %v3519
      %v3521 = vpop.f32.mrf.mxu0
      %v3522 = vpop.f32.mrf.mxu0
      %v3523 = vadd.f32 0.0, %v3522
      %v3524 = vpop.f32.mrf.mxu0
      %3525 = vmatprep.mubr.bf16.mxu0 0
      %3526 = vmatmul.mubr.bf16.gmra.mxu0 %v3308
      %v3527 = vpop.f32.mrf.mxu0
      %v3528 = vadd.f32 0.0, %v3527
      %v3529 = vpop.f32.mrf.mxu0
      %v3530 = vpop.f32.mrf.mxu0
      %v3531 = vadd.f32 0.0, %v3530
      %v3532 = vpop.f32.mrf.mxu0
      %3533 = vmatprep.mubr.bf16.mxu0 0
      %3534 = vmatmul.mubr.bf16.gmra.mxu0 %v3316
      %v3535 = vpop.f32.mrf.mxu0
      %v3536 = vadd.f32 0.0, %v3535
      %v3537 = vpop.f32.mrf.mxu0
      %v3538 = vpop.f32.mrf.mxu0
      %v3539 = vadd.f32 0.0, %v3538
      %v3540 = vpop.f32.mrf.mxu0
      %3541 = vmatprep.mubr.bf16.mxu0 0
      %3542 = vmatmul.mubr.bf16.gmra.mxu0 %v3324
      %v3543 = vpop.f32.mrf.mxu0
      %v3544 = vadd.f32 0.0, %v3543
      %v3545 = vpop.f32.mrf.mxu0
      %v3546 = vpop.f32.mrf.mxu0
      %v3547 = vadd.f32 0.0, %v3546
      %v3548 = vpop.f32.mrf.mxu0
      %3549 = vmatprep.mubr.bf16.mxu0 0
      %3550 = vmatmul.mubr.bf16.gmra.mxu0 %v3332
      %v3551 = vpop.f32.mrf.mxu0
      %v3552 = vadd.f32 0.0, %v3551
      %v3553 = vpop.f32.mrf.mxu0
      %v3554 = vpop.f32.mrf.mxu0
      %v3555 = vadd.f32 0.0, %v3554
      %v3556 = vpop.f32.mrf.mxu0
      %3557 = vmatprep.mubr.bf16.mxu0 0
      %3558 = vmatmul.mubr.bf16.gmra.mxu0 %v3340
      %v3559 = vpop.f32.mrf.mxu0
      %v3560 = vadd.f32 0.0, %v3559
      %v3561 = vpop.f32.mrf.mxu0
      %v3562 = vpop.f32.mrf.mxu0
      %v3563 = vadd.f32 0.0, %v3562
      %v3564 = vpop.f32.mrf.mxu0
      %3565 = vmatprep.mubr.bf16.mxu0 0
      %3566 = vmatmul.mubr.bf16.gmra.mxu0 %v3348
      %v3567 = vpop.f32.mrf.mxu0
      %v3568 = vadd.f32 0.0, %v3567
      %v3569 = vpop.f32.mrf.mxu0
      %v3570 = vpop.f32.mrf.mxu0
      %v3571 = vadd.f32 0.0, %v3570
      %v3572 = vpop.f32.mrf.mxu0
      %3573 = vmatprep.mubr.bf16.mxu0 0
      %3574 = vmatmul.mubr.bf16.gmra.mxu0 %v3356
      %v3575 = vpop.f32.mrf.mxu0
      %v3576 = vadd.f32 0.0, %v3575
      %v3577 = vpop.f32.mrf.mxu0
      %v3578 = vpop.f32.mrf.mxu0
      %v3579 = vadd.f32 0.0, %v3578
      %v3580 = vpop.f32.mrf.mxu0
      %3581 = vmatprep.mubr.bf16.mxu0 0
      %3582 = vmatmul.mubr.bf16.gmra.mxu0 %v3364
      %v3583 = vpop.f32.mrf.mxu0
      %v3584 = vadd.f32 0.0, %v3583
      %v3585 = vpop.f32.mrf.mxu0
      %v3586 = vpop.f32.mrf.mxu0
      %v3587 = vadd.f32 0.0, %v3586
      %v3588 = vpop.f32.mrf.mxu0
      %3589 = vmatprep.mubr.bf16.mxu0 0
      %3590 = vmatmul.mubr.bf16.gmra.mxu0 %v3372
      %v3591 = vpop.f32.mrf.mxu0
      %v3592 = vadd.f32 0.0, %v3591
      %v3593 = vpop.f32.mrf.mxu0
      %v3594 = vpop.f32.mrf.mxu0
      %v3595 = vadd.f32 0.0, %v3594
      %v3596 = vpop.f32.mrf.mxu0
      %3597 = vdwg.mxu0
      %v3598 = vadd.f32 %v2497, %v3472
      %v3599 = vadd.f32 %v2500, %v3475
      %v3600 = vadd.f32 %v2505, %v3480
      %v3601 = vadd.f32 %v2508, %v3483
      %v3602 = vadd.f32 %v2513, %v3488
      %v3603 = vadd.f32 %v2516, %v3491
      %v3604 = vadd.f32 %v2521, %v3496
      %v3605 = vadd.f32 %v2524, %v3499
      %v3606 = vadd.f32 %v2529, %v3504
      %v3607 = vadd.f32 %v2532, %v3507
      %v3608 = vadd.f32 %v2537, %v3512
      %v3609 = vadd.f32 %v2540, %v3515
      %v3610 = vadd.f32 %v2545, %v3520
      %v3611 = vadd.f32 %v2548, %v3523
      %v3612 = vadd.f32 %v2553, %v3528
      %v3613 = vadd.f32 %v2556, %v3531
      %v3614 = vadd.f32 %v2561, %v3536
      %v3615 = vadd.f32 %v2564, %v3539
      %v3616 = vadd.f32 %v2569, %v3544
      %v3617 = vadd.f32 %v2572, %v3547
      %v3618 = vadd.f32 %v2577, %v3552
      %v3619 = vadd.f32 %v2580, %v3555
      %v3620 = vadd.f32 %v2585, %v3560
      %v3621 = vadd.f32 %v2588, %v3563
      %v3622 = vadd.f32 %v2593, %v3568
      %v3623 = vadd.f32 %v2596, %v3571
      %v3624 = vadd.f32 %v2601, %v3576
      %v3625 = vadd.f32 %v2604, %v3579
      %v3626 = vadd.f32 %v2609, %v3584
      %v3627 = vadd.f32 %v2612, %v3587
      %v3628 = vadd.f32 %v2617, %v3592
      %v3629 = vadd.f32 %v2620, %v3595
      %v3630 = vld [vmem:[#allocation2 + $0xc] sm:$0x8]
      %v3631 = vld [vmem:[#allocation2 + $0x10] sm:$0xf]
      %v3632 = vld [vmem:[#allocation2 + $0x14] sm:$0xf]
      %v3633 = vld [vmem:[#allocation2 + $0x18] sm:$0xf]
      %v3634 = vld [vmem:[#allocation2 + $0x1c] sm:$0xf]
      %v3635 = vld [vmem:[#allocation2 + $0x20] sm:$0xf]
      %v3636 = vld [vmem:[#allocation2 + $0x24] sm:$0xf]
      %v3637 = vld [vmem:[#allocation2 + $0x28] sm:$0xf]
      %v3638 = vld [vmem:[#allocation2 + $0x2c] sm:$0xf]
      %v3639 = vld [vmem:[#allocation2 + $0x30] sm:$0xf]
      %v3640 = vld [vmem:[#allocation2 + $0x34] sm:$0xf]
      %v3641 = vld [vmem:[#allocation2 + $0x38] sm:$0xf]
      %v3642 = vld [vmem:[#allocation2 + $0x3c] sm:$0xf]
      %v3643 = vld [vmem:[#allocation2 + $0x40] sm:$0xf]
      %v3644 = vld [vmem:[#allocation2 + $0x44] sm:$0xf]
      %v3645 = vld [vmem:[#allocation2 + $0x48] sm:$0xf]
      %v3646 = vld [vmem:[#allocation2 + $0x4c] sm:$0xf]
      %v3647 = vld [vmem:[#allocation2 + $0x50] sm:$0xf]
      %v3648 = vld [vmem:[#allocation2 + $0x54] sm:$0xf]
      %v3649 = vld [vmem:[#allocation2 + $0x58] sm:$0xf]
      %v3650 = vld [vmem:[#allocation2 + $0x5c] sm:$0xf]
      %v3651 = vld [vmem:[#allocation2 + $0x60] sm:$0xf]
      %v3652 = vld [vmem:[#allocation2 + $0x64] sm:$0xf]
      %v3653 = vld [vmem:[#allocation2 + $0x68] sm:$0xf]
      %v3654 = vld [vmem:[#allocation2 + $0x6c] sm:$0xf]
      %v3655 = vld [vmem:[#allocation2 + $0x70] sm:$0xf]
      %v3656 = vld [vmem:[#allocation2 + $0x74] sm:$0xf]
      %v3657 = vld [vmem:[#allocation2 + $0x78] sm:$0xf]
      %v3658 = vld [vmem:[#allocation2 + $0x7c] sm:$0xf]
      %v3659 = vld [vmem:[#allocation2 + $0x80] sm:$0xf]
      %v3660 = vld [vmem:[#allocation2 + $0x84] sm:$0xf]
      %v3661 = vld [vmem:[#allocation2 + $0x88] sm:$0xf]
      %v3662 = vld [vmem:[#allocation2 + $0x8c] sm:$0xf]
      %v3663 = vsel %vm1758, %v3630, 0
      %v3664 = vsel %vm1759, %v3631, 0
      %v3665 = vsel %vm1760, %v3632, 0
      %v3666 = vsel %vm1761, %v3633, 0
      %v3667 = vsel %vm1762, %v3634, 0
      %v3668 = vsel %vm1763, %v3635, 0
      %v3669 = vsel %vm1764, %v3636, 0
      %v3670 = vsel %vm1765, %v3637, 0
      %v3671 = vsel %vm1766, %v3638, 0
      %v3672 = vsel %vm1767, %v3639, 0
      %v3673 = vsel %vm1768, %v3640, 0
      %v3674 = vsel %vm1769, %v3641, 0
      %v3675 = vsel %vm1770, %v3642, 0
      %v3676 = vsel %vm1771, %v3643, 0
      %v3677 = vsel %vm1772, %v3644, 0
      %v3678 = vsel %vm1773, %v3645, 0
      %v3679 = vsel %vm1774, %v3646, 0
      %v3680 = vsel %vm1775, %v3647, 0
      %v3681 = vsel %vm1776, %v3648, 0
      %v3682 = vsel %vm1777, %v3649, 0
      %v3683 = vsel %vm1778, %v3650, 0
      %v3684 = vsel %vm1779, %v3651, 0
      %v3685 = vsel %vm1780, %v3652, 0
      %v3686 = vsel %vm1781, %v3653, 0
      %v3687 = vsel %vm1782, %v3654, 0
      %v3688 = vsel %vm1783, %v3655, 0
      %v3689 = vsel %vm1784, %v3656, 0
      %v3690 = vsel %vm1785, %v3657, 0
      %v3691 = vsel %vm1786, %v3658, 0
      %v3692 = vsel %vm1787, %v3659, 0
      %v3693 = vsel %vm1788, %v3660, 0
      %v3694 = vsel %vm1789, %v3661, 0
      %v3695 = vsel %vm1790, %v3662, 0
      %s3696 = scalar_lea.vmem %s3, 192
      %v3697 = vld [vmem:[%s3696] sm:$0xf]
      %v3698 = vld [vmem:[%s3696 + $0x4] sm:$0xf]
      %v3699 = vld [vmem:[%s3696 + $0x8] sm:$0xf]
      %v3700 = vld [vmem:[%s3696 + $0xc] sm:$0xf]
      %v3701 = vld [vmem:[%s3696 + $0x10] sm:$0xf]
      %v3702 = vld [vmem:[%s3696 + $0x14] sm:$0xf]
      %v3703 = vld [vmem:[%s3696 + $0x18] sm:$0xf]
      %v3704 = vld [vmem:[%s3696 + $0x1c] sm:$0xf]
      %v3705 = vld [vmem:[%s3696 + $0x20] sm:$0xf]
      %v3706 = vld [vmem:[%s3696 + $0x24] sm:$0xf]
      %v3707 = vld [vmem:[%s3696 + $0x28] sm:$0xf]
      %v3708 = vld [vmem:[%s3696 + $0x2c] sm:$0xf]
      %v3709 = vld [vmem:[%s3696 + $0x30] sm:$0xf]
      %v3710 = vld [vmem:[%s3696 + $0x34] sm:$0xf]
      %v3711 = vld [vmem:[%s3696 + $0x38] sm:$0xf]
      %v3712 = vld [vmem:[%s3696 + $0x3c] sm:$0xf]
      %v3746 = vunpack.c.l.b16 %v3663
      %v3747 = vunpack.c.l.b16 %v3664
      %v3748 = vunpack.c.l.b16 %v3665
      %v3749 = vunpack.c.l.b16 %v3666
      %v3750 = vunpack.c.l.b16 %v3667
      %v3751 = vunpack.c.l.b16 %v3668
      %v3752 = vunpack.c.l.b16 %v3669
      %v3753 = vunpack.c.l.b16 %v3670
      %v3754 = vunpack.c.l.b16 %v3671
      %v3755 = vunpack.c.l.b16 %v3672
      %v3756 = vunpack.c.l.b16 %v3673
      %v3757 = vunpack.c.l.b16 %v3674
      %v3758 = vunpack.c.l.b16 %v3675
      %v3759 = vunpack.c.l.b16 %v3676
      %v3760 = vunpack.c.l.b16 %v3677
      %v3761 = vunpack.c.l.b16 %v3678
      %v3762 = vunpack.c.l.b16 %v3679
      %v3763 = vunpack.c.l.b16 %v3680
      %v3764 = vunpack.c.l.b16 %v3681
      %v3765 = vunpack.c.l.b16 %v3682
      %v3766 = vunpack.c.l.b16 %v3683
      %v3767 = vunpack.c.l.b16 %v3684
      %v3768 = vunpack.c.l.b16 %v3685
      %v3769 = vunpack.c.l.b16 %v3686
      %v3770 = vunpack.c.l.b16 %v3687
      %v3771 = vunpack.c.l.b16 %v3688
      %v3772 = vunpack.c.l.b16 %v3689
      %v3773 = vunpack.c.l.b16 %v3690
      %v3774 = vunpack.c.l.b16 %v3691
      %v3775 = vunpack.c.l.b16 %v3692
      %v3776 = vunpack.c.l.b16 %v3693
      %v3777 = vunpack.c.l.b16 %v3694
      %v3778 = vunpack.c.l.b16 %v3695
      %v3779 = vpack.c.b16 %v3747, %v3746
      %v3780 = vpack.c.b16 %v3749, %v3748
      %v3781 = vpack.c.b16 %v3751, %v3750
      %v3782 = vpack.c.b16 %v3753, %v3752
      %v3783 = vpack.c.b16 %v3755, %v3754
      %v3784 = vpack.c.b16 %v3757, %v3756
      %v3785 = vpack.c.b16 %v3759, %v3758
      %v3786 = vpack.c.b16 %v3761, %v3760
      %v3787 = vpack.c.b16 %v3763, %v3762
      %v3788 = vpack.c.b16 %v3765, %v3764
      %v3789 = vpack.c.b16 %v3767, %v3766
      %v3790 = vpack.c.b16 %v3769, %v3768
      %v3791 = vpack.c.b16 %v3771, %v3770
      %v3792 = vpack.c.b16 %v3773, %v3772
      %v3793 = vpack.c.b16 %v3775, %v3774
      %v3794 = vpack.c.b16 %v3777, %v3776
      %v3795 = vpack.c.b16 %v3778, %v3778
      %v3797 = vshrl.u32 %v3779, 16
      %v3799 = vrot.slane %v3797, 3
      %v3800 = vshll.u32 %v3779, 16
      %v3802 = vrot.slane %v3800, 4
      %v3803 = vor.u32 %v3799, %v3802
      %v3805 = vshrl.u32 %v3780, 16
      %v3807 = vrot.slane %v3805, 3
      %v3808 = vshll.u32 %v3780, 16
      %v3810 = vrot.slane %v3808, 4
      %v3811 = vor.u32 %v3807, %v3810
      %v3812 = vsel %vm2245, %v3803, %v3811
      %v3814 = vshrl.u32 %v3781, 16
      %v3816 = vrot.slane %v3814, 3
      %v3817 = vshll.u32 %v3781, 16
      %v3819 = vrot.slane %v3817, 4
      %v3820 = vor.u32 %v3816, %v3819
      %v3821 = vsel %vm2245, %v3811, %v3820
      %v3823 = vshrl.u32 %v3782, 16
      %v3825 = vrot.slane %v3823, 3
      %v3826 = vshll.u32 %v3782, 16
      %v3828 = vrot.slane %v3826, 4
      %v3829 = vor.u32 %v3825, %v3828
      %v3830 = vsel %vm2245, %v3820, %v3829
      %v3832 = vshrl.u32 %v3783, 16
      %v3834 = vrot.slane %v3832, 3
      %v3835 = vshll.u32 %v3783, 16
      %v3837 = vrot.slane %v3835, 4
      %v3838 = vor.u32 %v3834, %v3837
      %v3839 = vsel %vm2245, %v3829, %v3838
      %v3841 = vshrl.u32 %v3784, 16
      %v3843 = vrot.slane %v3841, 3
      %v3844 = vshll.u32 %v3784, 16
      %v3846 = vrot.slane %v3844, 4
      %v3847 = vor.u32 %v3843, %v3846
      %v3848 = vsel %vm2245, %v3838, %v3847
      %v3850 = vshrl.u32 %v3785, 16
      %v3852 = vrot.slane %v3850, 3
      %v3853 = vshll.u32 %v3785, 16
      %v3855 = vrot.slane %v3853, 4
      %v3856 = vor.u32 %v3852, %v3855
      %v3857 = vsel %vm2245, %v3847, %v3856
      %v3859 = vshrl.u32 %v3786, 16
      %v3861 = vrot.slane %v3859, 3
      %v3862 = vshll.u32 %v3786, 16
      %v3864 = vrot.slane %v3862, 4
      %v3865 = vor.u32 %v3861, %v3864
      %v3866 = vsel %vm2245, %v3856, %v3865
      %v3868 = vshrl.u32 %v3787, 16
      %v3870 = vrot.slane %v3868, 3
      %v3871 = vshll.u32 %v3787, 16
      %v3873 = vrot.slane %v3871, 4
      %v3874 = vor.u32 %v3870, %v3873
      %v3875 = vsel %vm2245, %v3865, %v3874
      %v3877 = vshrl.u32 %v3788, 16
      %v3879 = vrot.slane %v3877, 3
      %v3880 = vshll.u32 %v3788, 16
      %v3882 = vrot.slane %v3880, 4
      %v3883 = vor.u32 %v3879, %v3882
      %v3884 = vsel %vm2245, %v3874, %v3883
      %v3886 = vshrl.u32 %v3789, 16
      %v3888 = vrot.slane %v3886, 3
      %v3889 = vshll.u32 %v3789, 16
      %v3891 = vrot.slane %v3889, 4
      %v3892 = vor.u32 %v3888, %v3891
      %v3893 = vsel %vm2245, %v3883, %v3892
      %v3895 = vshrl.u32 %v3790, 16
      %v3897 = vrot.slane %v3895, 3
      %v3898 = vshll.u32 %v3790, 16
      %v3900 = vrot.slane %v3898, 4
      %v3901 = vor.u32 %v3897, %v3900
      %v3902 = vsel %vm2245, %v3892, %v3901
      %v3904 = vshrl.u32 %v3791, 16
      %v3906 = vrot.slane %v3904, 3
      %v3907 = vshll.u32 %v3791, 16
      %v3909 = vrot.slane %v3907, 4
      %v3910 = vor.u32 %v3906, %v3909
      %v3911 = vsel %vm2245, %v3901, %v3910
      %v3913 = vshrl.u32 %v3792, 16
      %v3915 = vrot.slane %v3913, 3
      %v3916 = vshll.u32 %v3792, 16
      %v3918 = vrot.slane %v3916, 4
      %v3919 = vor.u32 %v3915, %v3918
      %v3920 = vsel %vm2245, %v3910, %v3919
      %v3922 = vshrl.u32 %v3793, 16
      %v3924 = vrot.slane %v3922, 3
      %v3925 = vshll.u32 %v3793, 16
      %v3927 = vrot.slane %v3925, 4
      %v3928 = vor.u32 %v3924, %v3927
      %v3929 = vsel %vm2245, %v3919, %v3928
      %v3931 = vshrl.u32 %v3794, 16
      %v3933 = vrot.slane %v3931, 3
      %v3934 = vshll.u32 %v3794, 16
      %v3936 = vrot.slane %v3934, 4
      %v3937 = vor.u32 %v3933, %v3936
      %v3938 = vsel %vm2245, %v3928, %v3937
      %v3940 = vshrl.u32 %v3795, 16
      %v3942 = vrot.slane %v3940, 3
      %v3943 = vshll.u32 %v3795, 16
      %v3945 = vrot.slane %v3943, 4
      %v3946 = vor.u32 %v3942, %v3945
      %v3947 = vsel %vm2245, %v3937, %v3946
      %v3980 = vunpack.c.l.b16 %v3697
      %v3981 = vunpack.c.l.b16 %v3698
      %v3982 = vunpack.c.l.b16 %v3699
      %v3983 = vunpack.c.l.b16 %v3700
      %v3984 = vunpack.c.l.b16 %v3701
      %v3985 = vunpack.c.l.b16 %v3702
      %v3986 = vunpack.c.l.b16 %v3703
      %v3987 = vunpack.c.l.b16 %v3704
      %v3988 = vunpack.c.l.b16 %v3705
      %v3989 = vunpack.c.l.b16 %v3706
      %v3990 = vunpack.c.l.b16 %v3707
      %v3991 = vunpack.c.l.b16 %v3708
      %v3992 = vunpack.c.l.b16 %v3709
      %v3993 = vunpack.c.l.b16 %v3710
      %v3994 = vunpack.c.l.b16 %v3711
      %v3995 = vunpack.c.l.b16 %v3712
      %v3996 = vpack.c.b16 %v3981, %v3980
      %v3997 = vpack.c.b16 %v3983, %v3982
      %v3998 = vpack.c.b16 %v3985, %v3984
      %v3999 = vpack.c.b16 %v3987, %v3986
      %v4000 = vpack.c.b16 %v3989, %v3988
      %v4001 = vpack.c.b16 %v3991, %v3990
      %v4002 = vpack.c.b16 %v3993, %v3992
      %v4003 = vpack.c.b16 %v3995, %v3994
      %4012 = vmatprep.subr.bf16.mxu0 0
      %4013 = vmatpush1.bf16.msra.mxu0 %v4003
      %4014 = vmatprep.subr.bf16.mxu0 0
      %4015 = vmatpush1.bf16.msra.mxu0 %v4002
      %4016 = vmatprep.subr.bf16.mxu0 0
      %4017 = vmatpush1.bf16.msra.mxu0 %v4001
      %4018 = vmatprep.subr.bf16.mxu0 0
      %4019 = vmatpush1.bf16.msra.mxu0 %v4000
      %4020 = vmatprep.subr.bf16.mxu0 0
      %4021 = vmatpush1.bf16.msra.mxu0 %v3999
      %4022 = vmatprep.subr.bf16.mxu0 0
      %4023 = vmatpush1.bf16.msra.mxu0 %v3998
      %4024 = vmatprep.subr.bf16.mxu0 0
      %4025 = vmatpush1.bf16.msra.mxu0 %v3997
      %4026 = vmatprep.subr.bf16.mxu0 0
      %4027 = vmatpush1.bf16.msra.mxu0 %v3996
      %4028 = vmatprep.subr.bf16.mxu0 0
      %4029 = vmatpush2.bf16.msra.mxu0 0
      %4030 = vmatprep.subr.bf16.mxu0 0
      %4031 = vmatpush2.bf16.msra.mxu0 0
      %4032 = vmatprep.subr.bf16.mxu0 0
      %4033 = vmatpush2.bf16.msra.mxu0 0
      %4034 = vmatprep.subr.bf16.mxu0 0
      %4035 = vmatpush2.bf16.msra.mxu0 0
      %4036 = vmatprep.subr.bf16.mxu0 0
      %4037 = vmatpush2.bf16.msra.mxu0 0
      %4038 = vmatprep.subr.bf16.mxu0 0
      %4039 = vmatpush2.bf16.msra.mxu0 0
      %4040 = vmatprep.subr.bf16.mxu0 0
      %4041 = vmatpush2.bf16.msra.mxu0 0
      %4042 = vmatprep.subr.bf16.mxu0 0
      %4043 = vmatpush2.bf16.msra.mxu0 0
      %4044 = vmatprep.mubr.bf16.mxu0 0
      %4045 = vmatmul.mubr.bf16.gmra.mxu0 %v3812
      %v4046 = vpop.f32.mrf.mxu0
      %v4047 = vadd.f32 0.0, %v4046
      %v4048 = vpop.f32.mrf.mxu0
      %v4049 = vpop.f32.mrf.mxu0
      %v4050 = vadd.f32 0.0, %v4049
      %v4051 = vpop.f32.mrf.mxu0
      %4052 = vmatprep.mubr.bf16.mxu0 0
      %4053 = vmatmul.mubr.bf16.gmra.mxu0 %v3821
      %v4054 = vpop.f32.mrf.mxu0
      %v4055 = vadd.f32 0.0, %v4054
      %v4056 = vpop.f32.mrf.mxu0
      %v4057 = vpop.f32.mrf.mxu0
      %v4058 = vadd.f32 0.0, %v4057
      %v4059 = vpop.f32.mrf.mxu0
      %4060 = vmatprep.mubr.bf16.mxu0 0
      %4061 = vmatmul.mubr.bf16.gmra.mxu0 %v3830
      %v4062 = vpop.f32.mrf.mxu0
      %v4063 = vadd.f32 0.0, %v4062
      %v4064 = vpop.f32.mrf.mxu0
      %v4065 = vpop.f32.mrf.mxu0
      %v4066 = vadd.f32 0.0, %v4065
      %v4067 = vpop.f32.mrf.mxu0
      %4068 = vmatprep.mubr.bf16.mxu0 0
      %4069 = vmatmul.mubr.bf16.gmra.mxu0 %v3839
      %v4070 = vpop.f32.mrf.mxu0
      %v4071 = vadd.f32 0.0, %v4070
      %v4072 = vpop.f32.mrf.mxu0
      %v4073 = vpop.f32.mrf.mxu0
      %v4074 = vadd.f32 0.0, %v4073
      %v4075 = vpop.f32.mrf.mxu0
      %4076 = vmatprep.mubr.bf16.mxu0 0
      %4077 = vmatmul.mubr.bf16.gmra.mxu0 %v3848
      %v4078 = vpop.f32.mrf.mxu0
      %v4079 = vadd.f32 0.0, %v4078
      %v4080 = vpop.f32.mrf.mxu0
      %v4081 = vpop.f32.mrf.mxu0
      %v4082 = vadd.f32 0.0, %v4081
      %v4083 = vpop.f32.mrf.mxu0
      %4084 = vmatprep.mubr.bf16.mxu0 0
      %4085 = vmatmul.mubr.bf16.gmra.mxu0 %v3857
      %v4086 = vpop.f32.mrf.mxu0
      %v4087 = vadd.f32 0.0, %v4086
      %v4088 = vpop.f32.mrf.mxu0
      %v4089 = vpop.f32.mrf.mxu0
      %v4090 = vadd.f32 0.0, %v4089
      %v4091 = vpop.f32.mrf.mxu0
      %4092 = vmatprep.mubr.bf16.mxu0 0
      %4093 = vmatmul.mubr.bf16.gmra.mxu0 %v3866
      %v4094 = vpop.f32.mrf.mxu0
      %v4095 = vadd.f32 0.0, %v4094
      %v4096 = vpop.f32.mrf.mxu0
      %v4097 = vpop.f32.mrf.mxu0
      %v4098 = vadd.f32 0.0, %v4097
      %v4099 = vpop.f32.mrf.mxu0
      %4100 = vmatprep.mubr.bf16.mxu0 0
      %4101 = vmatmul.mubr.bf16.gmra.mxu0 %v3875
      %v4102 = vpop.f32.mrf.mxu0
      %v4103 = vadd.f32 0.0, %v4102
      %v4104 = vpop.f32.mrf.mxu0
      %v4105 = vpop.f32.mrf.mxu0
      %v4106 = vadd.f32 0.0, %v4105
      %v4107 = vpop.f32.mrf.mxu0
      %4108 = vmatprep.mubr.bf16.mxu0 0
      %4109 = vmatmul.mubr.bf16.gmra.mxu0 %v3884
      %v4110 = vpop.f32.mrf.mxu0
      %v4111 = vadd.f32 0.0, %v4110
      %v4112 = vpop.f32.mrf.mxu0
      %v4113 = vpop.f32.mrf.mxu0
      %v4114 = vadd.f32 0.0, %v4113
      %v4115 = vpop.f32.mrf.mxu0
      %4116 = vmatprep.mubr.bf16.mxu0 0
      %4117 = vmatmul.mubr.bf16.gmra.mxu0 %v3893
      %v4118 = vpop.f32.mrf.mxu0
      %v4119 = vadd.f32 0.0, %v4118
      %v4120 = vpop.f32.mrf.mxu0
      %v4121 = vpop.f32.mrf.mxu0
      %v4122 = vadd.f32 0.0, %v4121
      %v4123 = vpop.f32.mrf.mxu0
      %4124 = vmatprep.mubr.bf16.mxu0 0
      %4125 = vmatmul.mubr.bf16.gmra.mxu0 %v3902
      %v4126 = vpop.f32.mrf.mxu0
      %v4127 = vadd.f32 0.0, %v4126
      %v4128 = vpop.f32.mrf.mxu0
      %v4129 = vpop.f32.mrf.mxu0
      %v4130 = vadd.f32 0.0, %v4129
      %v4131 = vpop.f32.mrf.mxu0
      %4132 = vmatprep.mubr.bf16.mxu0 0
      %4133 = vmatmul.mubr.bf16.gmra.mxu0 %v3911
      %v4134 = vpop.f32.mrf.mxu0
      %v4135 = vadd.f32 0.0, %v4134
      %v4136 = vpop.f32.mrf.mxu0
      %v4137 = vpop.f32.mrf.mxu0
      %v4138 = vadd.f32 0.0, %v4137
      %v4139 = vpop.f32.mrf.mxu0
      %4140 = vmatprep.mubr.bf16.mxu0 0
      %4141 = vmatmul.mubr.bf16.gmra.mxu0 %v3920
      %v4142 = vpop.f32.mrf.mxu0
      %v4143 = vadd.f32 0.0, %v4142
      %v4144 = vpop.f32.mrf.mxu0
      %v4145 = vpop.f32.mrf.mxu0
      %v4146 = vadd.f32 0.0, %v4145
      %v4147 = vpop.f32.mrf.mxu0
      %4148 = vmatprep.mubr.bf16.mxu0 0
      %4149 = vmatmul.mubr.bf16.gmra.mxu0 %v3929
      %v4150 = vpop.f32.mrf.mxu0
      %v4151 = vadd.f32 0.0, %v4150
      %v4152 = vpop.f32.mrf.mxu0
      %v4153 = vpop.f32.mrf.mxu0
      %v4154 = vadd.f32 0.0, %v4153
      %v4155 = vpop.f32.mrf.mxu0
      %4156 = vmatprep.mubr.bf16.mxu0 0
      %4157 = vmatmul.mubr.bf16.gmra.mxu0 %v3938
      %v4158 = vpop.f32.mrf.mxu0
      %v4159 = vadd.f32 0.0, %v4158
      %v4160 = vpop.f32.mrf.mxu0
      %v4161 = vpop.f32.mrf.mxu0
      %v4162 = vadd.f32 0.0, %v4161
      %v4163 = vpop.f32.mrf.mxu0
      %4164 = vmatprep.mubr.bf16.mxu0 0
      %4165 = vmatmul.mubr.bf16.gmra.mxu0 %v3947
      %v4166 = vpop.f32.mrf.mxu0
      %v4167 = vadd.f32 0.0, %v4166
      %v4168 = vpop.f32.mrf.mxu0
      %v4169 = vpop.f32.mrf.mxu0
      %v4170 = vadd.f32 0.0, %v4169
      %v4171 = vpop.f32.mrf.mxu0
      %4172 = vdwg.mxu0
      %v4173 = vadd.f32 %v3598, %v4047
      %v4174 = vadd.f32 %v3599, %v4050
      %v4175 = vadd.f32 %v3600, %v4055
      %v4176 = vadd.f32 %v3601, %v4058
      %v4177 = vadd.f32 %v3602, %v4063
      %v4178 = vadd.f32 %v3603, %v4066
      %v4179 = vadd.f32 %v3604, %v4071
      %v4180 = vadd.f32 %v3605, %v4074
      %v4181 = vadd.f32 %v3606, %v4079
      %v4182 = vadd.f32 %v3607, %v4082
      %v4183 = vadd.f32 %v3608, %v4087
      %v4184 = vadd.f32 %v3609, %v4090
      %v4185 = vadd.f32 %v3610, %v4095
      %v4186 = vadd.f32 %v3611, %v4098
      %v4187 = vadd.f32 %v3612, %v4103
      %v4188 = vadd.f32 %v3613, %v4106
      %v4189 = vadd.f32 %v3614, %v4111
      %v4190 = vadd.f32 %v3615, %v4114
      %v4191 = vadd.f32 %v3616, %v4119
      %v4192 = vadd.f32 %v3617, %v4122
      %v4193 = vadd.f32 %v3618, %v4127
      %v4194 = vadd.f32 %v3619, %v4130
      %v4195 = vadd.f32 %v3620, %v4135
      %v4196 = vadd.f32 %v3621, %v4138
      %v4197 = vadd.f32 %v3622, %v4143
      %v4198 = vadd.f32 %v3623, %v4146
      %v4199 = vadd.f32 %v3624, %v4151
      %v4200 = vadd.f32 %v3625, %v4154
      %v4201 = vadd.f32 %v3626, %v4159
      %v4202 = vadd.f32 %v3627, %v4162
      %v4203 = vadd.f32 %v3628, %v4167
      %v4204 = vadd.f32 %v3629, %v4170
      %s4205 = scalar_lea.vmem %s3, 256
      %v4206 = vld [vmem:[%s4205] sm:$0xf]
      %v4207 = vld [vmem:[%s4205 + $0x4] sm:$0xf]
      %v4208 = vld [vmem:[%s4205 + $0x8] sm:$0xf]
      %v4209 = vld [vmem:[%s4205 + $0xc] sm:$0xf]
      %v4210 = vld [vmem:[%s4205 + $0x10] sm:$0xf]
      %v4211 = vld [vmem:[%s4205 + $0x14] sm:$0xf]
      %v4212 = vld [vmem:[%s4205 + $0x18] sm:$0xf]
      %v4213 = vld [vmem:[%s4205 + $0x1c] sm:$0xf]
      %v4214 = vld [vmem:[%s4205 + $0x20] sm:$0xf]
      %v4215 = vld [vmem:[%s4205 + $0x24] sm:$0xf]
      %v4216 = vld [vmem:[%s4205 + $0x28] sm:$0xf]
      %v4217 = vld [vmem:[%s4205 + $0x2c] sm:$0xf]
      %v4218 = vld [vmem:[%s4205 + $0x30] sm:$0xf]
      %v4219 = vld [vmem:[%s4205 + $0x34] sm:$0xf]
      %v4220 = vld [vmem:[%s4205 + $0x38] sm:$0xf]
      %v4221 = vld [vmem:[%s4205 + $0x3c] sm:$0xf]
      %v4254 = vunpack.c.l.b16 %v3631
      %v4255 = vunpack.c.l.b16 %v3632
      %v4256 = vunpack.c.l.b16 %v3633
      %v4257 = vunpack.c.l.b16 %v3634
      %v4258 = vunpack.c.l.b16 %v3635
      %v4259 = vunpack.c.l.b16 %v3636
      %v4260 = vunpack.c.l.b16 %v3637
      %v4261 = vunpack.c.l.b16 %v3638
      %v4262 = vunpack.c.l.b16 %v3639
      %v4263 = vunpack.c.l.b16 %v3640
      %v4264 = vunpack.c.l.b16 %v3641
      %v4265 = vunpack.c.l.b16 %v3642
      %v4266 = vunpack.c.l.b16 %v3643
      %v4267 = vunpack.c.l.b16 %v3644
      %v4268 = vunpack.c.l.b16 %v3645
      %v4269 = vunpack.c.l.b16 %v3646
      %v4270 = vunpack.c.l.b16 %v3647
      %v4271 = vunpack.c.l.b16 %v3648
      %v4272 = vunpack.c.l.b16 %v3649
      %v4273 = vunpack.c.l.b16 %v3650
      %v4274 = vunpack.c.l.b16 %v3651
      %v4275 = vunpack.c.l.b16 %v3652
      %v4276 = vunpack.c.l.b16 %v3653
      %v4277 = vunpack.c.l.b16 %v3654
      %v4278 = vunpack.c.l.b16 %v3655
      %v4279 = vunpack.c.l.b16 %v3656
      %v4280 = vunpack.c.l.b16 %v3657
      %v4281 = vunpack.c.l.b16 %v3658
      %v4282 = vunpack.c.l.b16 %v3659
      %v4283 = vunpack.c.l.b16 %v3660
      %v4284 = vunpack.c.l.b16 %v3661
      %v4285 = vunpack.c.l.b16 %v3662
      %v4286 = vpack.c.b16 %v4255, %v4254
      %v4287 = vpack.c.b16 %v4257, %v4256
      %v4288 = vpack.c.b16 %v4259, %v4258
      %v4289 = vpack.c.b16 %v4261, %v4260
      %v4290 = vpack.c.b16 %v4263, %v4262
      %v4291 = vpack.c.b16 %v4265, %v4264
      %v4292 = vpack.c.b16 %v4267, %v4266
      %v4293 = vpack.c.b16 %v4269, %v4268
      %v4294 = vpack.c.b16 %v4271, %v4270
      %v4295 = vpack.c.b16 %v4273, %v4272
      %v4296 = vpack.c.b16 %v4275, %v4274
      %v4297 = vpack.c.b16 %v4277, %v4276
      %v4298 = vpack.c.b16 %v4279, %v4278
      %v4299 = vpack.c.b16 %v4281, %v4280
      %v4300 = vpack.c.b16 %v4283, %v4282
      %v4301 = vpack.c.b16 %v4285, %v4284
      %v4334 = vunpack.c.l.b16 %v4206
      %v4335 = vunpack.c.l.b16 %v4207
      %v4336 = vunpack.c.l.b16 %v4208
      %v4337 = vunpack.c.l.b16 %v4209
      %v4338 = vunpack.c.l.b16 %v4210
      %v4339 = vunpack.c.l.b16 %v4211
      %v4340 = vunpack.c.l.b16 %v4212
      %v4341 = vunpack.c.l.b16 %v4213
      %v4342 = vunpack.c.l.b16 %v4214
      %v4343 = vunpack.c.l.b16 %v4215
      %v4344 = vunpack.c.l.b16 %v4216
      %v4345 = vunpack.c.l.b16 %v4217
      %v4346 = vunpack.c.l.b16 %v4218
      %v4347 = vunpack.c.l.b16 %v4219
      %v4348 = vunpack.c.l.b16 %v4220
      %v4349 = vunpack.c.l.b16 %v4221
      %v4350 = vpack.c.b16 %v4335, %v4334
      %v4351 = vpack.c.b16 %v4337, %v4336
      %v4352 = vpack.c.b16 %v4339, %v4338
      %v4353 = vpack.c.b16 %v4341, %v4340
      %v4354 = vpack.c.b16 %v4343, %v4342
      %v4355 = vpack.c.b16 %v4345, %v4344
      %v4356 = vpack.c.b16 %v4347, %v4346
      %v4357 = vpack.c.b16 %v4349, %v4348
      %4366 = vmatprep.subr.bf16.mxu0 0
      %4367 = vmatpush1.bf16.msra.mxu0 %v4357
      %4368 = vmatprep.subr.bf16.mxu0 0
      %4369 = vmatpush1.bf16.msra.mxu0 %v4356
      %4370 = vmatprep.subr.bf16.mxu0 0
      %4371 = vmatpush1.bf16.msra.mxu0 %v4355
      %4372 = vmatprep.subr.bf16.mxu0 0
      %4373 = vmatpush1.bf16.msra.mxu0 %v4354
      %4374 = vmatprep.subr.bf16.mxu0 0
      %4375 = vmatpush1.bf16.msra.mxu0 %v4353
      %4376 = vmatprep.subr.bf16.mxu0 0
      %4377 = vmatpush1.bf16.msra.mxu0 %v4352
      %4378 = vmatprep.subr.bf16.mxu0 0
      %4379 = vmatpush1.bf16.msra.mxu0 %v4351
      %4380 = vmatprep.subr.bf16.mxu0 0
      %4381 = vmatpush1.bf16.msra.mxu0 %v4350
      %4382 = vmatprep.subr.bf16.mxu0 0
      %4383 = vmatpush2.bf16.msra.mxu0 0
      %4384 = vmatprep.subr.bf16.mxu0 0
      %4385 = vmatpush2.bf16.msra.mxu0 0
      %4386 = vmatprep.subr.bf16.mxu0 0
      %4387 = vmatpush2.bf16.msra.mxu0 0
      %4388 = vmatprep.subr.bf16.mxu0 0
      %4389 = vmatpush2.bf16.msra.mxu0 0
      %4390 = vmatprep.subr.bf16.mxu0 0
      %4391 = vmatpush2.bf16.msra.mxu0 0
      %4392 = vmatprep.subr.bf16.mxu0 0
      %4393 = vmatpush2.bf16.msra.mxu0 0
      %4394 = vmatprep.subr.bf16.mxu0 0
      %4395 = vmatpush2.bf16.msra.mxu0 0
      %4396 = vmatprep.subr.bf16.mxu0 0
      %4397 = vmatpush2.bf16.msra.mxu0 0
      %4398 = vmatprep.mubr.bf16.mxu0 0
      %4399 = vmatmul.mubr.bf16.gmra.mxu0 %v4286
      %v4400 = vpop.f32.mrf.mxu0
      %v4401 = vadd.f32 0.0, %v4400
      %v4402 = vpop.f32.mrf.mxu0
      %v4403 = vpop.f32.mrf.mxu0
      %v4404 = vadd.f32 0.0, %v4403
      %v4405 = vpop.f32.mrf.mxu0
      %4406 = vmatprep.mubr.bf16.mxu0 0
      %4407 = vmatmul.mubr.bf16.gmra.mxu0 %v4287
      %v4408 = vpop.f32.mrf.mxu0
      %v4409 = vadd.f32 0.0, %v4408
      %v4410 = vpop.f32.mrf.mxu0
      %v4411 = vpop.f32.mrf.mxu0
      %v4412 = vadd.f32 0.0, %v4411
      %v4413 = vpop.f32.mrf.mxu0
      %4414 = vmatprep.mubr.bf16.mxu0 0
      %4415 = vmatmul.mubr.bf16.gmra.mxu0 %v4288
      %v4416 = vpop.f32.mrf.mxu0
      %v4417 = vadd.f32 0.0, %v4416
      %v4418 = vpop.f32.mrf.mxu0
      %v4419 = vpop.f32.mrf.mxu0
      %v4420 = vadd.f32 0.0, %v4419
      %v4421 = vpop.f32.mrf.mxu0
      %4422 = vmatprep.mubr.bf16.mxu0 0
      %4423 = vmatmul.mubr.bf16.gmra.mxu0 %v4289
      %v4424 = vpop.f32.mrf.mxu0
      %v4425 = vadd.f32 0.0, %v4424
      %v4426 = vpop.f32.mrf.mxu0
      %v4427 = vpop.f32.mrf.mxu0
      %v4428 = vadd.f32 0.0, %v4427
      %v4429 = vpop.f32.mrf.mxu0
      %4430 = vmatprep.mubr.bf16.mxu0 0
      %4431 = vmatmul.mubr.bf16.gmra.mxu0 %v4290
      %v4432 = vpop.f32.mrf.mxu0
      %v4433 = vadd.f32 0.0, %v4432
      %v4434 = vpop.f32.mrf.mxu0
      %v4435 = vpop.f32.mrf.mxu0
      %v4436 = vadd.f32 0.0, %v4435
      %v4437 = vpop.f32.mrf.mxu0
      %4438 = vmatprep.mubr.bf16.mxu0 0
      %4439 = vmatmul.mubr.bf16.gmra.mxu0 %v4291
      %v4440 = vpop.f32.mrf.mxu0
      %v4441 = vadd.f32 0.0, %v4440
      %v4442 = vpop.f32.mrf.mxu0
      %v4443 = vpop.f32.mrf.mxu0
      %v4444 = vadd.f32 0.0, %v4443
      %v4445 = vpop.f32.mrf.mxu0
      %4446 = vmatprep.mubr.bf16.mxu0 0
      %4447 = vmatmul.mubr.bf16.gmra.mxu0 %v4292
      %v4448 = vpop.f32.mrf.mxu0
      %v4449 = vadd.f32 0.0, %v4448
      %v4450 = vpop.f32.mrf.mxu0
      %v4451 = vpop.f32.mrf.mxu0
      %v4452 = vadd.f32 0.0, %v4451
      %v4453 = vpop.f32.mrf.mxu0
      %4454 = vmatprep.mubr.bf16.mxu0 0
      %4455 = vmatmul.mubr.bf16.gmra.mxu0 %v4293
      %v4456 = vpop.f32.mrf.mxu0
      %v4457 = vadd.f32 0.0, %v4456
      %v4458 = vpop.f32.mrf.mxu0
      %v4459 = vpop.f32.mrf.mxu0
      %v4460 = vadd.f32 0.0, %v4459
      %v4461 = vpop.f32.mrf.mxu0
      %4462 = vmatprep.mubr.bf16.mxu0 0
      %4463 = vmatmul.mubr.bf16.gmra.mxu0 %v4294
      %v4464 = vpop.f32.mrf.mxu0
      %v4465 = vadd.f32 0.0, %v4464
      %v4466 = vpop.f32.mrf.mxu0
      %v4467 = vpop.f32.mrf.mxu0
      %v4468 = vadd.f32 0.0, %v4467
      %v4469 = vpop.f32.mrf.mxu0
      %4470 = vmatprep.mubr.bf16.mxu0 0
      %4471 = vmatmul.mubr.bf16.gmra.mxu0 %v4295
      %v4472 = vpop.f32.mrf.mxu0
      %v4473 = vadd.f32 0.0, %v4472
      %v4474 = vpop.f32.mrf.mxu0
      %v4475 = vpop.f32.mrf.mxu0
      %v4476 = vadd.f32 0.0, %v4475
      %v4477 = vpop.f32.mrf.mxu0
      %4478 = vmatprep.mubr.bf16.mxu0 0
      %4479 = vmatmul.mubr.bf16.gmra.mxu0 %v4296
      %v4480 = vpop.f32.mrf.mxu0
      %v4481 = vadd.f32 0.0, %v4480
      %v4482 = vpop.f32.mrf.mxu0
      %v4483 = vpop.f32.mrf.mxu0
      %v4484 = vadd.f32 0.0, %v4483
      %v4485 = vpop.f32.mrf.mxu0
      %4486 = vmatprep.mubr.bf16.mxu0 0
      %4487 = vmatmul.mubr.bf16.gmra.mxu0 %v4297
      %v4488 = vpop.f32.mrf.mxu0
      %v4489 = vadd.f32 0.0, %v4488
      %v4490 = vpop.f32.mrf.mxu0
      %v4491 = vpop.f32.mrf.mxu0
      %v4492 = vadd.f32 0.0, %v4491
      %v4493 = vpop.f32.mrf.mxu0
      %4494 = vmatprep.mubr.bf16.mxu0 0
      %4495 = vmatmul.mubr.bf16.gmra.mxu0 %v4298
      %v4496 = vpop.f32.mrf.mxu0
      %v4497 = vadd.f32 0.0, %v4496
      %v4498 = vpop.f32.mrf.mxu0
      %v4499 = vpop.f32.mrf.mxu0
      %v4500 = vadd.f32 0.0, %v4499
      %v4501 = vpop.f32.mrf.mxu0
      %4502 = vmatprep.mubr.bf16.mxu0 0
      %4503 = vmatmul.mubr.bf16.gmra.mxu0 %v4299
      %v4504 = vpop.f32.mrf.mxu0
      %v4505 = vadd.f32 0.0, %v4504
      %v4506 = vpop.f32.mrf.mxu0
      %v4507 = vpop.f32.mrf.mxu0
      %v4508 = vadd.f32 0.0, %v4507
      %v4509 = vpop.f32.mrf.mxu0
      %4510 = vmatprep.mubr.bf16.mxu0 0
      %4511 = vmatmul.mubr.bf16.gmra.mxu0 %v4300
      %v4512 = vpop.f32.mrf.mxu0
      %v4513 = vadd.f32 0.0, %v4512
      %v4514 = vpop.f32.mrf.mxu0
      %v4515 = vpop.f32.mrf.mxu0
      %v4516 = vadd.f32 0.0, %v4515
      %v4517 = vpop.f32.mrf.mxu0
      %4518 = vmatprep.mubr.bf16.mxu0 0
      %4519 = vmatmul.mubr.bf16.gmra.mxu0 %v4301
      %v4520 = vpop.f32.mrf.mxu0
      %v4521 = vadd.f32 0.0, %v4520
      %v4522 = vpop.f32.mrf.mxu0
      %v4523 = vpop.f32.mrf.mxu0
      %v4524 = vadd.f32 0.0, %v4523
      %v4525 = vpop.f32.mrf.mxu0
      %4526 = vdwg.mxu0
      %v4527 = vadd.f32 %v4173, %v4401
      %v4528 = vadd.f32 %v4174, %v4404
      %v4529 = vadd.f32 %v4175, %v4409
      %v4530 = vadd.f32 %v4176, %v4412
      %v4531 = vadd.f32 %v4177, %v4417
      %v4532 = vadd.f32 %v4178, %v4420
      %v4533 = vadd.f32 %v4179, %v4425
      %v4534 = vadd.f32 %v4180, %v4428
      %v4535 = vadd.f32 %v4181, %v4433
      %v4536 = vadd.f32 %v4182, %v4436
      %v4537 = vadd.f32 %v4183, %v4441
      %v4538 = vadd.f32 %v4184, %v4444
      %v4539 = vadd.f32 %v4185, %v4449
      %v4540 = vadd.f32 %v4186, %v4452
      %v4541 = vadd.f32 %v4187, %v4457
      %v4542 = vadd.f32 %v4188, %v4460
      %v4543 = vadd.f32 %v4189, %v4465
      %v4544 = vadd.f32 %v4190, %v4468
      %v4545 = vadd.f32 %v4191, %v4473
      %v4546 = vadd.f32 %v4192, %v4476
      %v4547 = vadd.f32 %v4193, %v4481
      %v4548 = vadd.f32 %v4194, %v4484
      %v4549 = vadd.f32 %v4195, %v4489
      %v4550 = vadd.f32 %v4196, %v4492
      %v4551 = vadd.f32 %v4197, %v4497
      %v4552 = vadd.f32 %v4198, %v4500
      %v4553 = vadd.f32 %v4199, %v4505
      %v4554 = vadd.f32 %v4200, %v4508
      %v4555 = vadd.f32 %v4201, %v4513
      %v4556 = vadd.f32 %v4202, %v4516
      %v4557 = vadd.f32 %v4203, %v4521
      %v4558 = vadd.f32 %v4204, %v4524
      %v4559 = vld [vmem:[#allocation2 + $0x10] sm:$0xf]
      %v4560 = vld [vmem:[#allocation2 + $0x14] sm:$0xf]
      %v4561 = vld [vmem:[#allocation2 + $0x18] sm:$0xf]
      %v4562 = vld [vmem:[#allocation2 + $0x1c] sm:$0xf]
      %v4563 = vld [vmem:[#allocation2 + $0x20] sm:$0xf]
      %v4564 = vld [vmem:[#allocation2 + $0x24] sm:$0xf]
      %v4565 = vld [vmem:[#allocation2 + $0x28] sm:$0xf]
      %v4566 = vld [vmem:[#allocation2 + $0x2c] sm:$0xf]
      %v4567 = vld [vmem:[#allocation2 + $0x30] sm:$0xf]
      %v4568 = vld [vmem:[#allocation2 + $0x34] sm:$0xf]
      %v4569 = vld [vmem:[#allocation2 + $0x38] sm:$0xf]
      %v4570 = vld [vmem:[#allocation2 + $0x3c] sm:$0xf]
      %v4571 = vld [vmem:[#allocation2 + $0x40] sm:$0xf]
      %v4572 = vld [vmem:[#allocation2 + $0x44] sm:$0xf]
      %v4573 = vld [vmem:[#allocation2 + $0x48] sm:$0xf]
      %v4574 = vld [vmem:[#allocation2 + $0x4c] sm:$0xf]
      %v4575 = vld [vmem:[#allocation2 + $0x50] sm:$0xf]
      %v4576 = vld [vmem:[#allocation2 + $0x54] sm:$0xf]
      %v4577 = vld [vmem:[#allocation2 + $0x58] sm:$0xf]
      %v4578 = vld [vmem:[#allocation2 + $0x5c] sm:$0xf]
      %v4579 = vld [vmem:[#allocation2 + $0x60] sm:$0xf]
      %v4580 = vld [vmem:[#allocation2 + $0x64] sm:$0xf]
      %v4581 = vld [vmem:[#allocation2 + $0x68] sm:$0xf]
      %v4582 = vld [vmem:[#allocation2 + $0x6c] sm:$0xf]
      %v4583 = vld [vmem:[#allocation2 + $0x70] sm:$0xf]
      %v4584 = vld [vmem:[#allocation2 + $0x74] sm:$0xf]
      %v4585 = vld [vmem:[#allocation2 + $0x78] sm:$0xf]
      %v4586 = vld [vmem:[#allocation2 + $0x7c] sm:$0xf]
      %v4587 = vld [vmem:[#allocation2 + $0x80] sm:$0xf]
      %v4588 = vld [vmem:[#allocation2 + $0x84] sm:$0xf]
      %v4589 = vld [vmem:[#allocation2 + $0x88] sm:$0xf]
      %v4590 = vld [vmem:[#allocation2 + $0x8c] sm:$0xf]
      %v4591 = vld [vmem:[#allocation2 + $0x90] sm:$0x1]
      %v4592 = vsel %vm3074, %v4559, 0
      %v4593 = vsel %vm3075, %v4560, 0
      %v4594 = vsel %vm3076, %v4561, 0
      %v4595 = vsel %vm3077, %v4562, 0
      %v4596 = vsel %vm3078, %v4563, 0
      %v4597 = vsel %vm3079, %v4564, 0
      %v4598 = vsel %vm3080, %v4565, 0
      %v4599 = vsel %vm3081, %v4566, 0
      %v4600 = vsel %vm3082, %v4567, 0
      %v4601 = vsel %vm3083, %v4568, 0
      %v4602 = vsel %vm3084, %v4569, 0
      %v4603 = vsel %vm3085, %v4570, 0
      %v4604 = vsel %vm3086, %v4571, 0
      %v4605 = vsel %vm3087, %v4572, 0
      %v4606 = vsel %vm3088, %v4573, 0
      %v4607 = vsel %vm3089, %v4574, 0
      %v4608 = vsel %vm3090, %v4575, 0
      %v4609 = vsel %vm3091, %v4576, 0
      %v4610 = vsel %vm3092, %v4577, 0
      %v4611 = vsel %vm3093, %v4578, 0
      %v4612 = vsel %vm3094, %v4579, 0
      %v4613 = vsel %vm3095, %v4580, 0
      %v4614 = vsel %vm3096, %v4581, 0
      %v4615 = vsel %vm3097, %v4582, 0
      %v4616 = vsel %vm3098, %v4583, 0
      %v4617 = vsel %vm3099, %v4584, 0
      %v4618 = vsel %vm3100, %v4585, 0
      %v4619 = vsel %vm3101, %v4586, 0
      %v4620 = vsel %vm3102, %v4587, 0
      %v4621 = vsel %vm3103, %v4588, 0
      %v4622 = vsel %vm3104, %v4589, 0
      %v4623 = vsel %vm3105, %v4590, 0
      %v4624 = vsel %vm3106, %v4591, 0
      %s4625 = scalar_lea.vmem %s3, 320
      %v4626 = vld [vmem:[%s4625] sm:$0xf]
      %v4627 = vld [vmem:[%s4625 + $0x4] sm:$0xf]
      %v4628 = vld [vmem:[%s4625 + $0x8] sm:$0xf]
      %v4629 = vld [vmem:[%s4625 + $0xc] sm:$0xf]
      %v4630 = vld [vmem:[%s4625 + $0x10] sm:$0xf]
      %v4631 = vld [vmem:[%s4625 + $0x14] sm:$0xf]
      %v4632 = vld [vmem:[%s4625 + $0x18] sm:$0xf]
      %v4633 = vld [vmem:[%s4625 + $0x1c] sm:$0xf]
      %v4634 = vld [vmem:[%s4625 + $0x20] sm:$0xf]
      %v4635 = vld [vmem:[%s4625 + $0x24] sm:$0xf]
      %v4636 = vld [vmem:[%s4625 + $0x28] sm:$0xf]
      %v4637 = vld [vmem:[%s4625 + $0x2c] sm:$0xf]
      %v4638 = vld [vmem:[%s4625 + $0x30] sm:$0xf]
      %v4639 = vld [vmem:[%s4625 + $0x34] sm:$0xf]
      %v4640 = vld [vmem:[%s4625 + $0x38] sm:$0xf]
      %v4641 = vld [vmem:[%s4625 + $0x3c] sm:$0xf]
      %v4675 = vunpack.c.l.b16 %v4592
      %v4676 = vunpack.c.l.b16 %v4593
      %v4677 = vunpack.c.l.b16 %v4594
      %v4678 = vunpack.c.l.b16 %v4595
      %v4679 = vunpack.c.l.b16 %v4596
      %v4680 = vunpack.c.l.b16 %v4597
      %v4681 = vunpack.c.l.b16 %v4598
      %v4682 = vunpack.c.l.b16 %v4599
      %v4683 = vunpack.c.l.b16 %v4600
      %v4684 = vunpack.c.l.b16 %v4601
      %v4685 = vunpack.c.l.b16 %v4602
      %v4686 = vunpack.c.l.b16 %v4603
      %v4687 = vunpack.c.l.b16 %v4604
      %v4688 = vunpack.c.l.b16 %v4605
      %v4689 = vunpack.c.l.b16 %v4606
      %v4690 = vunpack.c.l.b16 %v4607
      %v4691 = vunpack.c.l.b16 %v4608
      %v4692 = vunpack.c.l.b16 %v4609
      %v4693 = vunpack.c.l.b16 %v4610
      %v4694 = vunpack.c.l.b16 %v4611
      %v4695 = vunpack.c.l.b16 %v4612
      %v4696 = vunpack.c.l.b16 %v4613
      %v4697 = vunpack.c.l.b16 %v4614
      %v4698 = vunpack.c.l.b16 %v4615
      %v4699 = vunpack.c.l.b16 %v4616
      %v4700 = vunpack.c.l.b16 %v4617
      %v4701 = vunpack.c.l.b16 %v4618
      %v4702 = vunpack.c.l.b16 %v4619
      %v4703 = vunpack.c.l.b16 %v4620
      %v4704 = vunpack.c.l.b16 %v4621
      %v4705 = vunpack.c.l.b16 %v4622
      %v4706 = vunpack.c.l.b16 %v4623
      %v4707 = vunpack.c.l.b16 %v4624
      %v4708 = vpack.c.b16 %v4676, %v4675
      %v4709 = vpack.c.b16 %v4678, %v4677
      %v4710 = vpack.c.b16 %v4680, %v4679
      %v4711 = vpack.c.b16 %v4682, %v4681
      %v4712 = vpack.c.b16 %v4684, %v4683
      %v4713 = vpack.c.b16 %v4686, %v4685
      %v4714 = vpack.c.b16 %v4688, %v4687
      %v4715 = vpack.c.b16 %v4690, %v4689
      %v4716 = vpack.c.b16 %v4692, %v4691
      %v4717 = vpack.c.b16 %v4694, %v4693
      %v4718 = vpack.c.b16 %v4696, %v4695
      %v4719 = vpack.c.b16 %v4698, %v4697
      %v4720 = vpack.c.b16 %v4700, %v4699
      %v4721 = vpack.c.b16 %v4702, %v4701
      %v4722 = vpack.c.b16 %v4704, %v4703
      %v4723 = vpack.c.b16 %v4706, %v4705
      %v4724 = vpack.c.b16 %v4707, %v4707
      %v4726 = vshrl.u32 %v4708, 16
      %v4728 = vshll.u32 %v4708, 16
      %v4730 = vrot.slane %v4728, 1
      %v4731 = vor.u32 %v4726, %v4730
      %v4733 = vshll.u32 %v4709, 16
      %v4735 = vrot.slane %v4733, 1
      %v4736 = vsel %vm3240, %v4731, %v4735
      %v4737 = vshrl.u32 %v4709, 16
      %v4739 = vor.u32 %v4737, %v4735
      %v4741 = vshll.u32 %v4710, 16
      %v4743 = vrot.slane %v4741, 1
      %v4744 = vsel %vm3240, %v4739, %v4743
      %v4745 = vshrl.u32 %v4710, 16
      %v4747 = vor.u32 %v4745, %v4743
      %v4749 = vshll.u32 %v4711, 16
      %v4751 = vrot.slane %v4749, 1
      %v4752 = vsel %vm3240, %v4747, %v4751
      %v4753 = vshrl.u32 %v4711, 16
      %v4755 = vor.u32 %v4753, %v4751
      %v4757 = vshll.u32 %v4712, 16
      %v4759 = vrot.slane %v4757, 1
      %v4760 = vsel %vm3240, %v4755, %v4759
      %v4761 = vshrl.u32 %v4712, 16
      %v4763 = vor.u32 %v4761, %v4759
      %v4765 = vshll.u32 %v4713, 16
      %v4767 = vrot.slane %v4765, 1
      %v4768 = vsel %vm3240, %v4763, %v4767
      %v4769 = vshrl.u32 %v4713, 16
      %v4771 = vor.u32 %v4769, %v4767
      %v4773 = vshll.u32 %v4714, 16
      %v4775 = vrot.slane %v4773, 1
      %v4776 = vsel %vm3240, %v4771, %v4775
      %v4777 = vshrl.u32 %v4714, 16
      %v4779 = vor.u32 %v4777, %v4775
      %v4781 = vshll.u32 %v4715, 16
      %v4783 = vrot.slane %v4781, 1
      %v4784 = vsel %vm3240, %v4779, %v4783
      %v4785 = vshrl.u32 %v4715, 16
      %v4787 = vor.u32 %v4785, %v4783
      %v4789 = vshll.u32 %v4716, 16
      %v4791 = vrot.slane %v4789, 1
      %v4792 = vsel %vm3240, %v4787, %v4791
      %v4793 = vshrl.u32 %v4716, 16
      %v4795 = vor.u32 %v4793, %v4791
      %v4797 = vshll.u32 %v4717, 16
      %v4799 = vrot.slane %v4797, 1
      %v4800 = vsel %vm3240, %v4795, %v4799
      %v4801 = vshrl.u32 %v4717, 16
      %v4803 = vor.u32 %v4801, %v4799
      %v4805 = vshll.u32 %v4718, 16
      %v4807 = vrot.slane %v4805, 1
      %v4808 = vsel %vm3240, %v4803, %v4807
      %v4809 = vshrl.u32 %v4718, 16
      %v4811 = vor.u32 %v4809, %v4807
      %v4813 = vshll.u32 %v4719, 16
      %v4815 = vrot.slane %v4813, 1
      %v4816 = vsel %vm3240, %v4811, %v4815
      %v4817 = vshrl.u32 %v4719, 16
      %v4819 = vor.u32 %v4817, %v4815
      %v4821 = vshll.u32 %v4720, 16
      %v4823 = vrot.slane %v4821, 1
      %v4824 = vsel %vm3240, %v4819, %v4823
      %v4825 = vshrl.u32 %v4720, 16
      %v4827 = vor.u32 %v4825, %v4823
      %v4829 = vshll.u32 %v4721, 16
      %v4831 = vrot.slane %v4829, 1
      %v4832 = vsel %vm3240, %v4827, %v4831
      %v4833 = vshrl.u32 %v4721, 16
      %v4835 = vor.u32 %v4833, %v4831
      %v4837 = vshll.u32 %v4722, 16
      %v4839 = vrot.slane %v4837, 1
      %v4840 = vsel %vm3240, %v4835, %v4839
      %v4841 = vshrl.u32 %v4722, 16
      %v4843 = vor.u32 %v4841, %v4839
      %v4845 = vshll.u32 %v4723, 16
      %v4847 = vrot.slane %v4845, 1
      %v4848 = vsel %vm3240, %v4843, %v4847
      %v4849 = vshrl.u32 %v4723, 16
      %v4851 = vor.u32 %v4849, %v4847
      %v4853 = vshll.u32 %v4724, 16
      %v4855 = vrot.slane %v4853, 1
      %v4856 = vsel %vm3240, %v4851, %v4855
      %v4889 = vunpack.c.l.b16 %v4626
      %v4890 = vunpack.c.l.b16 %v4627
      %v4891 = vunpack.c.l.b16 %v4628
      %v4892 = vunpack.c.l.b16 %v4629
      %v4893 = vunpack.c.l.b16 %v4630
      %v4894 = vunpack.c.l.b16 %v4631
      %v4895 = vunpack.c.l.b16 %v4632
      %v4896 = vunpack.c.l.b16 %v4633
      %v4897 = vunpack.c.l.b16 %v4634
      %v4898 = vunpack.c.l.b16 %v4635
      %v4899 = vunpack.c.l.b16 %v4636
      %v4900 = vunpack.c.l.b16 %v4637
      %v4901 = vunpack.c.l.b16 %v4638
      %v4902 = vunpack.c.l.b16 %v4639
      %v4903 = vunpack.c.l.b16 %v4640
      %v4904 = vunpack.c.l.b16 %v4641
      %v4905 = vpack.c.b16 %v4890, %v4889
      %v4906 = vpack.c.b16 %v4892, %v4891
      %v4907 = vpack.c.b16 %v4894, %v4893
      %v4908 = vpack.c.b16 %v4896, %v4895
      %v4909 = vpack.c.b16 %v4898, %v4897
      %v4910 = vpack.c.b16 %v4900, %v4899
      %v4911 = vpack.c.b16 %v4902, %v4901
      %v4912 = vpack.c.b16 %v4904, %v4903
      %4921 = vmatprep.subr.bf16.mxu0 0
      %4922 = vmatpush1.bf16.msra.mxu0 %v4912
      %4923 = vmatprep.subr.bf16.mxu0 0
      %4924 = vmatpush1.bf16.msra.mxu0 %v4911
      %4925 = vmatprep.subr.bf16.mxu0 0
      %4926 = vmatpush1.bf16.msra.mxu0 %v4910
      %4927 = vmatprep.subr.bf16.mxu0 0
      %4928 = vmatpush1.bf16.msra.mxu0 %v4909
      %4929 = vmatprep.subr.bf16.mxu0 0
      %4930 = vmatpush1.bf16.msra.mxu0 %v4908
      %4931 = vmatprep.subr.bf16.mxu0 0
      %4932 = vmatpush1.bf16.msra.mxu0 %v4907
      %4933 = vmatprep.subr.bf16.mxu0 0
      %4934 = vmatpush1.bf16.msra.mxu0 %v4906
      %4935 = vmatprep.subr.bf16.mxu0 0
      %4936 = vmatpush1.bf16.msra.mxu0 %v4905
      %4937 = vmatprep.subr.bf16.mxu0 0
      %4938 = vmatpush2.bf16.msra.mxu0 0
      %4939 = vmatprep.subr.bf16.mxu0 0
      %4940 = vmatpush2.bf16.msra.mxu0 0
      %4941 = vmatprep.subr.bf16.mxu0 0
      %4942 = vmatpush2.bf16.msra.mxu0 0
      %4943 = vmatprep.subr.bf16.mxu0 0
      %4944 = vmatpush2.bf16.msra.mxu0 0
      %4945 = vmatprep.subr.bf16.mxu0 0
      %4946 = vmatpush2.bf16.msra.mxu0 0
      %4947 = vmatprep.subr.bf16.mxu0 0
      %4948 = vmatpush2.bf16.msra.mxu0 0
      %4949 = vmatprep.subr.bf16.mxu0 0
      %4950 = vmatpush2.bf16.msra.mxu0 0
      %4951 = vmatprep.subr.bf16.mxu0 0
      %4952 = vmatpush2.bf16.msra.mxu0 0
      %4953 = vmatprep.mubr.bf16.mxu0 0
      %4954 = vmatmul.mubr.bf16.gmra.mxu0 %v4736
      %v4955 = vpop.f32.mrf.mxu0
      %v4956 = vadd.f32 0.0, %v4955
      %v4957 = vpop.f32.mrf.mxu0
      %v4958 = vpop.f32.mrf.mxu0
      %v4959 = vadd.f32 0.0, %v4958
      %v4960 = vpop.f32.mrf.mxu0
      %4961 = vmatprep.mubr.bf16.mxu0 0
      %4962 = vmatmul.mubr.bf16.gmra.mxu0 %v4744
      %v4963 = vpop.f32.mrf.mxu0
      %v4964 = vadd.f32 0.0, %v4963
      %v4965 = vpop.f32.mrf.mxu0
      %v4966 = vpop.f32.mrf.mxu0
      %v4967 = vadd.f32 0.0, %v4966
      %v4968 = vpop.f32.mrf.mxu0
      %4969 = vmatprep.mubr.bf16.mxu0 0
      %4970 = vmatmul.mubr.bf16.gmra.mxu0 %v4752
      %v4971 = vpop.f32.mrf.mxu0
      %v4972 = vadd.f32 0.0, %v4971
      %v4973 = vpop.f32.mrf.mxu0
      %v4974 = vpop.f32.mrf.mxu0
      %v4975 = vadd.f32 0.0, %v4974
      %v4976 = vpop.f32.mrf.mxu0
      %4977 = vmatprep.mubr.bf16.mxu0 0
      %4978 = vmatmul.mubr.bf16.gmra.mxu0 %v4760
      %v4979 = vpop.f32.mrf.mxu0
      %v4980 = vadd.f32 0.0, %v4979
      %v4981 = vpop.f32.mrf.mxu0
      %v4982 = vpop.f32.mrf.mxu0
      %v4983 = vadd.f32 0.0, %v4982
      %v4984 = vpop.f32.mrf.mxu0
      %4985 = vmatprep.mubr.bf16.mxu0 0
      %4986 = vmatmul.mubr.bf16.gmra.mxu0 %v4768
      %v4987 = vpop.f32.mrf.mxu0
      %v4988 = vadd.f32 0.0, %v4987
      %v4989 = vpop.f32.mrf.mxu0
      %v4990 = vpop.f32.mrf.mxu0
      %v4991 = vadd.f32 0.0, %v4990
      %v4992 = vpop.f32.mrf.mxu0
      %4993 = vmatprep.mubr.bf16.mxu0 0
      %4994 = vmatmul.mubr.bf16.gmra.mxu0 %v4776
      %v4995 = vpop.f32.mrf.mxu0
      %v4996 = vadd.f32 0.0, %v4995
      %v4997 = vpop.f32.mrf.mxu0
      %v4998 = vpop.f32.mrf.mxu0
      %v4999 = vadd.f32 0.0, %v4998
      %v5000 = vpop.f32.mrf.mxu0
      %5001 = vmatprep.mubr.bf16.mxu0 0
      %5002 = vmatmul.mubr.bf16.gmra.mxu0 %v4784
      %v5003 = vpop.f32.mrf.mxu0
      %v5004 = vadd.f32 0.0, %v5003
      %v5005 = vpop.f32.mrf.mxu0
      %v5006 = vpop.f32.mrf.mxu0
      %v5007 = vadd.f32 0.0, %v5006
      %v5008 = vpop.f32.mrf.mxu0
      %5009 = vmatprep.mubr.bf16.mxu0 0
      %5010 = vmatmul.mubr.bf16.gmra.mxu0 %v4792
      %v5011 = vpop.f32.mrf.mxu0
      %v5012 = vadd.f32 0.0, %v5011
      %v5013 = vpop.f32.mrf.mxu0
      %v5014 = vpop.f32.mrf.mxu0
      %v5015 = vadd.f32 0.0, %v5014
      %v5016 = vpop.f32.mrf.mxu0
      %5017 = vmatprep.mubr.bf16.mxu0 0
      %5018 = vmatmul.mubr.bf16.gmra.mxu0 %v4800
      %v5019 = vpop.f32.mrf.mxu0
      %v5020 = vadd.f32 0.0, %v5019
      %v5021 = vpop.f32.mrf.mxu0
      %v5022 = vpop.f32.mrf.mxu0
      %v5023 = vadd.f32 0.0, %v5022
      %v5024 = vpop.f32.mrf.mxu0
      %5025 = vmatprep.mubr.bf16.mxu0 0
      %5026 = vmatmul.mubr.bf16.gmra.mxu0 %v4808
      %v5027 = vpop.f32.mrf.mxu0
      %v5028 = vadd.f32 0.0, %v5027
      %v5029 = vpop.f32.mrf.mxu0
      %v5030 = vpop.f32.mrf.mxu0
      %v5031 = vadd.f32 0.0, %v5030
      %v5032 = vpop.f32.mrf.mxu0
      %5033 = vmatprep.mubr.bf16.mxu0 0
      %5034 = vmatmul.mubr.bf16.gmra.mxu0 %v4816
      %v5035 = vpop.f32.mrf.mxu0
      %v5036 = vadd.f32 0.0, %v5035
      %v5037 = vpop.f32.mrf.mxu0
      %v5038 = vpop.f32.mrf.mxu0
      %v5039 = vadd.f32 0.0, %v5038
      %v5040 = vpop.f32.mrf.mxu0
      %5041 = vmatprep.mubr.bf16.mxu0 0
      %5042 = vmatmul.mubr.bf16.gmra.mxu0 %v4824
      %v5043 = vpop.f32.mrf.mxu0
      %v5044 = vadd.f32 0.0, %v5043
      %v5045 = vpop.f32.mrf.mxu0
      %v5046 = vpop.f32.mrf.mxu0
      %v5047 = vadd.f32 0.0, %v5046
      %v5048 = vpop.f32.mrf.mxu0
      %5049 = vmatprep.mubr.bf16.mxu0 0
      %5050 = vmatmul.mubr.bf16.gmra.mxu0 %v4832
      %v5051 = vpop.f32.mrf.mxu0
      %v5052 = vadd.f32 0.0, %v5051
      %v5053 = vpop.f32.mrf.mxu0
      %v5054 = vpop.f32.mrf.mxu0
      %v5055 = vadd.f32 0.0, %v5054
      %v5056 = vpop.f32.mrf.mxu0
      %5057 = vmatprep.mubr.bf16.mxu0 0
      %5058 = vmatmul.mubr.bf16.gmra.mxu0 %v4840
      %v5059 = vpop.f32.mrf.mxu0
      %v5060 = vadd.f32 0.0, %v5059
      %v5061 = vpop.f32.mrf.mxu0
      %v5062 = vpop.f32.mrf.mxu0
      %v5063 = vadd.f32 0.0, %v5062
      %v5064 = vpop.f32.mrf.mxu0
      %5065 = vmatprep.mubr.bf16.mxu0 0
      %5066 = vmatmul.mubr.bf16.gmra.mxu0 %v4848
      %v5067 = vpop.f32.mrf.mxu0
      %v5068 = vadd.f32 0.0, %v5067
      %v5069 = vpop.f32.mrf.mxu0
      %v5070 = vpop.f32.mrf.mxu0
      %v5071 = vadd.f32 0.0, %v5070
      %v5072 = vpop.f32.mrf.mxu0
      %5073 = vmatprep.mubr.bf16.mxu0 0
      %5074 = vmatmul.mubr.bf16.gmra.mxu0 %v4856
      %v5075 = vpop.f32.mrf.mxu0
      %v5076 = vadd.f32 0.0, %v5075
      %v5077 = vpop.f32.mrf.mxu0
      %v5078 = vpop.f32.mrf.mxu0
      %v5079 = vadd.f32 0.0, %v5078
      %v5080 = vpop.f32.mrf.mxu0
      %5081 = vdwg.mxu0
      %v5082 = vadd.f32 %v4527, %v4956
      %v5083 = vadd.f32 %v4528, %v4959
      %v5084 = vadd.f32 %v4529, %v4964
      %v5085 = vadd.f32 %v4530, %v4967
      %v5086 = vadd.f32 %v4531, %v4972
      %v5087 = vadd.f32 %v4532, %v4975
      %v5088 = vadd.f32 %v4533, %v4980
      %v5089 = vadd.f32 %v4534, %v4983
      %v5090 = vadd.f32 %v4535, %v4988
      %v5091 = vadd.f32 %v4536, %v4991
      %v5092 = vadd.f32 %v4537, %v4996
      %v5093 = vadd.f32 %v4538, %v4999
      %v5094 = vadd.f32 %v4539, %v5004
      %v5095 = vadd.f32 %v4540, %v5007
      %v5096 = vadd.f32 %v4541, %v5012
      %v5097 = vadd.f32 %v4542, %v5015
      %v5098 = vadd.f32 %v4543, %v5020
      %v5099 = vadd.f32 %v4544, %v5023
      %v5100 = vadd.f32 %v4545, %v5028
      %v5101 = vadd.f32 %v4546, %v5031
      %v5102 = vadd.f32 %v4547, %v5036
      %v5103 = vadd.f32 %v4548, %v5039
      %v5104 = vadd.f32 %v4549, %v5044
      %v5105 = vadd.f32 %v4550, %v5047
      %v5106 = vadd.f32 %v4551, %v5052
      %v5107 = vadd.f32 %v4552, %v5055
      %v5108 = vadd.f32 %v4553, %v5060
      %v5109 = vadd.f32 %v4554, %v5063
      %v5110 = vadd.f32 %v4555, %v5068
      %v5111 = vadd.f32 %v4556, %v5071
      %v5112 = vadd.f32 %v4557, %v5076
      %v5113 = vadd.f32 %v4558, %v5079
      %v5114 = vld [vmem:[#allocation2 + $0x14] sm:$0x8]
      %v5115 = vld [vmem:[#allocation2 + $0x18] sm:$0xf]
      %v5116 = vld [vmem:[#allocation2 + $0x1c] sm:$0xf]
      %v5117 = vld [vmem:[#allocation2 + $0x20] sm:$0xf]
      %v5118 = vld [vmem:[#allocation2 + $0x24] sm:$0xf]
      %v5119 = vld [vmem:[#allocation2 + $0x28] sm:$0xf]
      %v5120 = vld [vmem:[#allocation2 + $0x2c] sm:$0xf]
      %v5121 = vld [vmem:[#allocation2 + $0x30] sm:$0xf]
      %v5122 = vld [vmem:[#allocation2 + $0x34] sm:$0xf]
      %v5123 = vld [vmem:[#allocation2 + $0x38] sm:$0xf]
      %v5124 = vld [vmem:[#allocation2 + $0x3c] sm:$0xf]
      %v5125 = vld [vmem:[#allocation2 + $0x40] sm:$0xf]
      %v5126 = vld [vmem:[#allocation2 + $0x44] sm:$0xf]
      %v5127 = vld [vmem:[#allocation2 + $0x48] sm:$0xf]
      %v5128 = vld [vmem:[#allocation2 + $0x4c] sm:$0xf]
      %v5129 = vld [vmem:[#allocation2 + $0x50] sm:$0xf]
      %v5130 = vld [vmem:[#allocation2 + $0x54] sm:$0xf]
      %v5131 = vld [vmem:[#allocation2 + $0x58] sm:$0xf]
      %v5132 = vld [vmem:[#allocation2 + $0x5c] sm:$0xf]
      %v5133 = vld [vmem:[#allocation2 + $0x60] sm:$0xf]
      %v5134 = vld [vmem:[#allocation2 + $0x64] sm:$0xf]
      %v5135 = vld [vmem:[#allocation2 + $0x68] sm:$0xf]
      %v5136 = vld [vmem:[#allocation2 + $0x6c] sm:$0xf]
      %v5137 = vld [vmem:[#allocation2 + $0x70] sm:$0xf]
      %v5138 = vld [vmem:[#allocation2 + $0x74] sm:$0xf]
      %v5139 = vld [vmem:[#allocation2 + $0x78] sm:$0xf]
      %v5140 = vld [vmem:[#allocation2 + $0x7c] sm:$0xf]
      %v5141 = vld [vmem:[#allocation2 + $0x80] sm:$0xf]
      %v5142 = vld [vmem:[#allocation2 + $0x84] sm:$0xf]
      %v5143 = vld [vmem:[#allocation2 + $0x88] sm:$0xf]
      %v5144 = vld [vmem:[#allocation2 + $0x8c] sm:$0xf]
      %v5145 = vld [vmem:[#allocation2 + $0x90] sm:$0xf]
      %v5146 = vld [vmem:[#allocation2 + $0x94] sm:$0xf]
      %v5147 = vsel %vm1758, %v5114, 0
      %v5148 = vsel %vm1759, %v5115, 0
      %v5149 = vsel %vm1760, %v5116, 0
      %v5150 = vsel %vm1761, %v5117, 0
      %v5151 = vsel %vm1762, %v5118, 0
      %v5152 = vsel %vm1763, %v5119, 0
      %v5153 = vsel %vm1764, %v5120, 0
      %v5154 = vsel %vm1765, %v5121, 0
      %v5155 = vsel %vm1766, %v5122, 0
      %v5156 = vsel %vm1767, %v5123, 0
      %v5157 = vsel %vm1768, %v5124, 0
      %v5158 = vsel %vm1769, %v5125, 0
      %v5159 = vsel %vm1770, %v5126, 0
      %v5160 = vsel %vm1771, %v5127, 0
      %v5161 = vsel %vm1772, %v5128, 0
      %v5162 = vsel %vm1773, %v5129, 0
      %v5163 = vsel %vm1774, %v5130, 0
      %v5164 = vsel %vm1775, %v5131, 0
      %v5165 = vsel %vm1776, %v5132, 0
      %v5166 = vsel %vm1777, %v5133, 0
      %v5167 = vsel %vm1778, %v5134, 0
      %v5168 = vsel %vm1779, %v5135, 0
      %v5169 = vsel %vm1780, %v5136, 0
      %v5170 = vsel %vm1781, %v5137, 0
      %v5171 = vsel %vm1782, %v5138, 0
      %v5172 = vsel %vm1783, %v5139, 0
      %v5173 = vsel %vm1784, %v5140, 0
      %v5174 = vsel %vm1785, %v5141, 0
      %v5175 = vsel %vm1786, %v5142, 0
      %v5176 = vsel %vm1787, %v5143, 0
      %v5177 = vsel %vm1788, %v5144, 0
      %v5178 = vsel %vm1789, %v5145, 0
      %v5179 = vsel %vm1790, %v5146, 0
      %s5180 = scalar_lea.vmem %s3, 384
      %v5181 = vld [vmem:[%s5180] sm:$0xf]
      %v5182 = vld [vmem:[%s5180 + $0x4] sm:$0xf]
      %v5183 = vld [vmem:[%s5180 + $0x8] sm:$0xf]
      %v5184 = vld [vmem:[%s5180 + $0xc] sm:$0xf]
      %v5185 = vld [vmem:[%s5180 + $0x10] sm:$0xf]
      %v5186 = vld [vmem:[%s5180 + $0x14] sm:$0xf]
      %v5187 = vld [vmem:[%s5180 + $0x18] sm:$0xf]
      %v5188 = vld [vmem:[%s5180 + $0x1c] sm:$0xf]
      %v5189 = vld [vmem:[%s5180 + $0x20] sm:$0xf]
      %v5190 = vld [vmem:[%s5180 + $0x24] sm:$0xf]
      %v5191 = vld [vmem:[%s5180 + $0x28] sm:$0xf]
      %v5192 = vld [vmem:[%s5180 + $0x2c] sm:$0xf]
      %v5193 = vld [vmem:[%s5180 + $0x30] sm:$0xf]
      %v5194 = vld [vmem:[%s5180 + $0x34] sm:$0xf]
      %v5195 = vld [vmem:[%s5180 + $0x38] sm:$0xf]
      %v5196 = vld [vmem:[%s5180 + $0x3c] sm:$0xf]
      %v5230 = vunpack.c.l.b16 %v5147
      %v5231 = vunpack.c.l.b16 %v5148
      %v5232 = vunpack.c.l.b16 %v5149
      %v5233 = vunpack.c.l.b16 %v5150
      %v5234 = vunpack.c.l.b16 %v5151
      %v5235 = vunpack.c.l.b16 %v5152
      %v5236 = vunpack.c.l.b16 %v5153
      %v5237 = vunpack.c.l.b16 %v5154
      %v5238 = vunpack.c.l.b16 %v5155
      %v5239 = vunpack.c.l.b16 %v5156
      %v5240 = vunpack.c.l.b16 %v5157
      %v5241 = vunpack.c.l.b16 %v5158
      %v5242 = vunpack.c.l.b16 %v5159
      %v5243 = vunpack.c.l.b16 %v5160
      %v5244 = vunpack.c.l.b16 %v5161
      %v5245 = vunpack.c.l.b16 %v5162
      %v5246 = vunpack.c.l.b16 %v5163
      %v5247 = vunpack.c.l.b16 %v5164
      %v5248 = vunpack.c.l.b16 %v5165
      %v5249 = vunpack.c.l.b16 %v5166
      %v5250 = vunpack.c.l.b16 %v5167
      %v5251 = vunpack.c.l.b16 %v5168
      %v5252 = vunpack.c.l.b16 %v5169
      %v5253 = vunpack.c.l.b16 %v5170
      %v5254 = vunpack.c.l.b16 %v5171
      %v5255 = vunpack.c.l.b16 %v5172
      %v5256 = vunpack.c.l.b16 %v5173
      %v5257 = vunpack.c.l.b16 %v5174
      %v5258 = vunpack.c.l.b16 %v5175
      %v5259 = vunpack.c.l.b16 %v5176
      %v5260 = vunpack.c.l.b16 %v5177
      %v5261 = vunpack.c.l.b16 %v5178
      %v5262 = vunpack.c.l.b16 %v5179
      %v5263 = vpack.c.b16 %v5231, %v5230
      %v5264 = vpack.c.b16 %v5233, %v5232
      %v5265 = vpack.c.b16 %v5235, %v5234
      %v5266 = vpack.c.b16 %v5237, %v5236
      %v5267 = vpack.c.b16 %v5239, %v5238
      %v5268 = vpack.c.b16 %v5241, %v5240
      %v5269 = vpack.c.b16 %v5243, %v5242
      %v5270 = vpack.c.b16 %v5245, %v5244
      %v5271 = vpack.c.b16 %v5247, %v5246
      %v5272 = vpack.c.b16 %v5249, %v5248
      %v5273 = vpack.c.b16 %v5251, %v5250
      %v5274 = vpack.c.b16 %v5253, %v5252
      %v5275 = vpack.c.b16 %v5255, %v5254
      %v5276 = vpack.c.b16 %v5257, %v5256
      %v5277 = vpack.c.b16 %v5259, %v5258
      %v5278 = vpack.c.b16 %v5261, %v5260
      %v5279 = vpack.c.b16 %v5262, %v5262
      %v5281 = vshrl.u32 %v5263, 16
      %v5283 = vrot.slane %v5281, 3
      %v5284 = vshll.u32 %v5263, 16
      %v5286 = vrot.slane %v5284, 4
      %v5287 = vor.u32 %v5283, %v5286
      %v5289 = vshrl.u32 %v5264, 16
      %v5291 = vrot.slane %v5289, 3
      %v5292 = vshll.u32 %v5264, 16
      %v5294 = vrot.slane %v5292, 4
      %v5295 = vor.u32 %v5291, %v5294
      %v5296 = vsel %vm2245, %v5287, %v5295
      %v5298 = vshrl.u32 %v5265, 16
      %v5300 = vrot.slane %v5298, 3
      %v5301 = vshll.u32 %v5265, 16
      %v5303 = vrot.slane %v5301, 4
      %v5304 = vor.u32 %v5300, %v5303
      %v5305 = vsel %vm2245, %v5295, %v5304
      %v5307 = vshrl.u32 %v5266, 16
      %v5309 = vrot.slane %v5307, 3
      %v5310 = vshll.u32 %v5266, 16
      %v5312 = vrot.slane %v5310, 4
      %v5313 = vor.u32 %v5309, %v5312
      %v5314 = vsel %vm2245, %v5304, %v5313
      %v5316 = vshrl.u32 %v5267, 16
      %v5318 = vrot.slane %v5316, 3
      %v5319 = vshll.u32 %v5267, 16
      %v5321 = vrot.slane %v5319, 4
      %v5322 = vor.u32 %v5318, %v5321
      %v5323 = vsel %vm2245, %v5313, %v5322
      %v5325 = vshrl.u32 %v5268, 16
      %v5327 = vrot.slane %v5325, 3
      %v5328 = vshll.u32 %v5268, 16
      %v5330 = vrot.slane %v5328, 4
      %v5331 = vor.u32 %v5327, %v5330
      %v5332 = vsel %vm2245, %v5322, %v5331
      %v5334 = vshrl.u32 %v5269, 16
      %v5336 = vrot.slane %v5334, 3
      %v5337 = vshll.u32 %v5269, 16
      %v5339 = vrot.slane %v5337, 4
      %v5340 = vor.u32 %v5336, %v5339
      %v5341 = vsel %vm2245, %v5331, %v5340
      %v5343 = vshrl.u32 %v5270, 16
      %v5345 = vrot.slane %v5343, 3
      %v5346 = vshll.u32 %v5270, 16
      %v5348 = vrot.slane %v5346, 4
      %v5349 = vor.u32 %v5345, %v5348
      %v5350 = vsel %vm2245, %v5340, %v5349
      %v5352 = vshrl.u32 %v5271, 16
      %v5354 = vrot.slane %v5352, 3
      %v5355 = vshll.u32 %v5271, 16
      %v5357 = vrot.slane %v5355, 4
      %v5358 = vor.u32 %v5354, %v5357
      %v5359 = vsel %vm2245, %v5349, %v5358
      %v5361 = vshrl.u32 %v5272, 16
      %v5363 = vrot.slane %v5361, 3
      %v5364 = vshll.u32 %v5272, 16
      %v5366 = vrot.slane %v5364, 4
      %v5367 = vor.u32 %v5363, %v5366
      %v5368 = vsel %vm2245, %v5358, %v5367
      %v5370 = vshrl.u32 %v5273, 16
      %v5372 = vrot.slane %v5370, 3
      %v5373 = vshll.u32 %v5273, 16
      %v5375 = vrot.slane %v5373, 4
      %v5376 = vor.u32 %v5372, %v5375
      %v5377 = vsel %vm2245, %v5367, %v5376
      %v5379 = vshrl.u32 %v5274, 16
      %v5381 = vrot.slane %v5379, 3
      %v5382 = vshll.u32 %v5274, 16
      %v5384 = vrot.slane %v5382, 4
      %v5385 = vor.u32 %v5381, %v5384
      %v5386 = vsel %vm2245, %v5376, %v5385
      %v5388 = vshrl.u32 %v5275, 16
      %v5390 = vrot.slane %v5388, 3
      %v5391 = vshll.u32 %v5275, 16
      %v5393 = vrot.slane %v5391, 4
      %v5394 = vor.u32 %v5390, %v5393
      %v5395 = vsel %vm2245, %v5385, %v5394
      %v5397 = vshrl.u32 %v5276, 16
      %v5399 = vrot.slane %v5397, 3
      %v5400 = vshll.u32 %v5276, 16
      %v5402 = vrot.slane %v5400, 4
      %v5403 = vor.u32 %v5399, %v5402
      %v5404 = vsel %vm2245, %v5394, %v5403
      %v5406 = vshrl.u32 %v5277, 16
      %v5408 = vrot.slane %v5406, 3
      %v5409 = vshll.u32 %v5277, 16
      %v5411 = vrot.slane %v5409, 4
      %v5412 = vor.u32 %v5408, %v5411
      %v5413 = vsel %vm2245, %v5403, %v5412
      %v5415 = vshrl.u32 %v5278, 16
      %v5417 = vrot.slane %v5415, 3
      %v5418 = vshll.u32 %v5278, 16
      %v5420 = vrot.slane %v5418, 4
      %v5421 = vor.u32 %v5417, %v5420
      %v5422 = vsel %vm2245, %v5412, %v5421
      %v5424 = vshrl.u32 %v5279, 16
      %v5426 = vrot.slane %v5424, 3
      %v5427 = vshll.u32 %v5279, 16
      %v5429 = vrot.slane %v5427, 4
      %v5430 = vor.u32 %v5426, %v5429
      %v5431 = vsel %vm2245, %v5421, %v5430
      %v5464 = vunpack.c.l.b16 %v5181
      %v5465 = vunpack.c.l.b16 %v5182
      %v5466 = vunpack.c.l.b16 %v5183
      %v5467 = vunpack.c.l.b16 %v5184
      %v5468 = vunpack.c.l.b16 %v5185
      %v5469 = vunpack.c.l.b16 %v5186
      %v5470 = vunpack.c.l.b16 %v5187
      %v5471 = vunpack.c.l.b16 %v5188
      %v5472 = vunpack.c.l.b16 %v5189
      %v5473 = vunpack.c.l.b16 %v5190
      %v5474 = vunpack.c.l.b16 %v5191
      %v5475 = vunpack.c.l.b16 %v5192
      %v5476 = vunpack.c.l.b16 %v5193
      %v5477 = vunpack.c.l.b16 %v5194
      %v5478 = vunpack.c.l.b16 %v5195
      %v5479 = vunpack.c.l.b16 %v5196
      %v5480 = vpack.c.b16 %v5465, %v5464
      %v5481 = vpack.c.b16 %v5467, %v5466
      %v5482 = vpack.c.b16 %v5469, %v5468
      %v5483 = vpack.c.b16 %v5471, %v5470
      %v5484 = vpack.c.b16 %v5473, %v5472
      %v5485 = vpack.c.b16 %v5475, %v5474
      %v5486 = vpack.c.b16 %v5477, %v5476
      %v5487 = vpack.c.b16 %v5479, %v5478
      %5496 = vmatprep.subr.bf16.mxu0 0
      %5497 = vmatpush1.bf16.msra.mxu0 %v5487
      %5498 = vmatprep.subr.bf16.mxu0 0
      %5499 = vmatpush1.bf16.msra.mxu0 %v5486
      %5500 = vmatprep.subr.bf16.mxu0 0
      %5501 = vmatpush1.bf16.msra.mxu0 %v5485
      %5502 = vmatprep.subr.bf16.mxu0 0
      %5503 = vmatpush1.bf16.msra.mxu0 %v5484
      %5504 = vmatprep.subr.bf16.mxu0 0
      %5505 = vmatpush1.bf16.msra.mxu0 %v5483
      %5506 = vmatprep.subr.bf16.mxu0 0
      %5507 = vmatpush1.bf16.msra.mxu0 %v5482
      %5508 = vmatprep.subr.bf16.mxu0 0
      %5509 = vmatpush1.bf16.msra.mxu0 %v5481
      %5510 = vmatprep.subr.bf16.mxu0 0
      %5511 = vmatpush1.bf16.msra.mxu0 %v5480
      %5512 = vmatprep.subr.bf16.mxu0 0
      %5513 = vmatpush2.bf16.msra.mxu0 0
      %5514 = vmatprep.subr.bf16.mxu0 0
      %5515 = vmatpush2.bf16.msra.mxu0 0
      %5516 = vmatprep.subr.bf16.mxu0 0
      %5517 = vmatpush2.bf16.msra.mxu0 0
      %5518 = vmatprep.subr.bf16.mxu0 0
      %5519 = vmatpush2.bf16.msra.mxu0 0
      %5520 = vmatprep.subr.bf16.mxu0 0
      %5521 = vmatpush2.bf16.msra.mxu0 0
      %5522 = vmatprep.subr.bf16.mxu0 0
      %5523 = vmatpush2.bf16.msra.mxu0 0
      %5524 = vmatprep.subr.bf16.mxu0 0
      %5525 = vmatpush2.bf16.msra.mxu0 0
      %5526 = vmatprep.subr.bf16.mxu0 0
      %5527 = vmatpush2.bf16.msra.mxu0 0
      %5528 = vmatprep.mubr.bf16.mxu0 0
      %5529 = vmatmul.mubr.bf16.gmra.mxu0 %v5296
      %v5530 = vpop.f32.mrf.mxu0
      %v5531 = vadd.f32 0.0, %v5530
      %v5532 = vpop.f32.mrf.mxu0
      %v5533 = vpop.f32.mrf.mxu0
      %v5534 = vadd.f32 0.0, %v5533
      %v5535 = vpop.f32.mrf.mxu0
      %5536 = vmatprep.mubr.bf16.mxu0 0
      %5537 = vmatmul.mubr.bf16.gmra.mxu0 %v5305
      %v5538 = vpop.f32.mrf.mxu0
      %v5539 = vadd.f32 0.0, %v5538
      %v5540 = vpop.f32.mrf.mxu0
      %v5541 = vpop.f32.mrf.mxu0
      %v5542 = vadd.f32 0.0, %v5541
      %v5543 = vpop.f32.mrf.mxu0
      %5544 = vmatprep.mubr.bf16.mxu0 0
      %5545 = vmatmul.mubr.bf16.gmra.mxu0 %v5314
      %v5546 = vpop.f32.mrf.mxu0
      %v5547 = vadd.f32 0.0, %v5546
      %v5548 = vpop.f32.mrf.mxu0
      %v5549 = vpop.f32.mrf.mxu0
      %v5550 = vadd.f32 0.0, %v5549
      %v5551 = vpop.f32.mrf.mxu0
      %5552 = vmatprep.mubr.bf16.mxu0 0
      %5553 = vmatmul.mubr.bf16.gmra.mxu0 %v5323
      %v5554 = vpop.f32.mrf.mxu0
      %v5555 = vadd.f32 0.0, %v5554
      %v5556 = vpop.f32.mrf.mxu0
      %v5557 = vpop.f32.mrf.mxu0
      %v5558 = vadd.f32 0.0, %v5557
      %v5559 = vpop.f32.mrf.mxu0
      %5560 = vmatprep.mubr.bf16.mxu0 0
      %5561 = vmatmul.mubr.bf16.gmra.mxu0 %v5332
      %v5562 = vpop.f32.mrf.mxu0
      %v5563 = vadd.f32 0.0, %v5562
      %v5564 = vpop.f32.mrf.mxu0
      %v5565 = vpop.f32.mrf.mxu0
      %v5566 = vadd.f32 0.0, %v5565
      %v5567 = vpop.f32.mrf.mxu0
      %5568 = vmatprep.mubr.bf16.mxu0 0
      %5569 = vmatmul.mubr.bf16.gmra.mxu0 %v5341
      %v5570 = vpop.f32.mrf.mxu0
      %v5571 = vadd.f32 0.0, %v5570
      %v5572 = vpop.f32.mrf.mxu0
      %v5573 = vpop.f32.mrf.mxu0
      %v5574 = vadd.f32 0.0, %v5573
      %v5575 = vpop.f32.mrf.mxu0
      %5576 = vmatprep.mubr.bf16.mxu0 0
      %5577 = vmatmul.mubr.bf16.gmra.mxu0 %v5350
      %v5578 = vpop.f32.mrf.mxu0
      %v5579 = vadd.f32 0.0, %v5578
      %v5580 = vpop.f32.mrf.mxu0
      %v5581 = vpop.f32.mrf.mxu0
      %v5582 = vadd.f32 0.0, %v5581
      %v5583 = vpop.f32.mrf.mxu0
      %5584 = vmatprep.mubr.bf16.mxu0 0
      %5585 = vmatmul.mubr.bf16.gmra.mxu0 %v5359
      %v5586 = vpop.f32.mrf.mxu0
      %v5587 = vadd.f32 0.0, %v5586
      %v5588 = vpop.f32.mrf.mxu0
      %v5589 = vpop.f32.mrf.mxu0
      %v5590 = vadd.f32 0.0, %v5589
      %v5591 = vpop.f32.mrf.mxu0
      %5592 = vmatprep.mubr.bf16.mxu0 0
      %5593 = vmatmul.mubr.bf16.gmra.mxu0 %v5368
      %v5594 = vpop.f32.mrf.mxu0
      %v5595 = vadd.f32 0.0, %v5594
      %v5596 = vpop.f32.mrf.mxu0
      %v5597 = vpop.f32.mrf.mxu0
      %v5598 = vadd.f32 0.0, %v5597
      %v5599 = vpop.f32.mrf.mxu0
      %5600 = vmatprep.mubr.bf16.mxu0 0
      %5601 = vmatmul.mubr.bf16.gmra.mxu0 %v5377
      %v5602 = vpop.f32.mrf.mxu0
      %v5603 = vadd.f32 0.0, %v5602
      %v5604 = vpop.f32.mrf.mxu0
      %v5605 = vpop.f32.mrf.mxu0
      %v5606 = vadd.f32 0.0, %v5605
      %v5607 = vpop.f32.mrf.mxu0
      %5608 = vmatprep.mubr.bf16.mxu0 0
      %5609 = vmatmul.mubr.bf16.gmra.mxu0 %v5386
      %v5610 = vpop.f32.mrf.mxu0
      %v5611 = vadd.f32 0.0, %v5610
      %v5612 = vpop.f32.mrf.mxu0
      %v5613 = vpop.f32.mrf.mxu0
      %v5614 = vadd.f32 0.0, %v5613
      %v5615 = vpop.f32.mrf.mxu0
      %5616 = vmatprep.mubr.bf16.mxu0 0
      %5617 = vmatmul.mubr.bf16.gmra.mxu0 %v5395
      %v5618 = vpop.f32.mrf.mxu0
      %v5619 = vadd.f32 0.0, %v5618
      %v5620 = vpop.f32.mrf.mxu0
      %v5621 = vpop.f32.mrf.mxu0
      %v5622 = vadd.f32 0.0, %v5621
      %v5623 = vpop.f32.mrf.mxu0
      %5624 = vmatprep.mubr.bf16.mxu0 0
      %5625 = vmatmul.mubr.bf16.gmra.mxu0 %v5404
      %v5626 = vpop.f32.mrf.mxu0
      %v5627 = vadd.f32 0.0, %v5626
      %v5628 = vpop.f32.mrf.mxu0
      %v5629 = vpop.f32.mrf.mxu0
      %v5630 = vadd.f32 0.0, %v5629
      %v5631 = vpop.f32.mrf.mxu0
      %5632 = vmatprep.mubr.bf16.mxu0 0
      %5633 = vmatmul.mubr.bf16.gmra.mxu0 %v5413
      %v5634 = vpop.f32.mrf.mxu0
      %v5635 = vadd.f32 0.0, %v5634
      %v5636 = vpop.f32.mrf.mxu0
      %v5637 = vpop.f32.mrf.mxu0
      %v5638 = vadd.f32 0.0, %v5637
      %v5639 = vpop.f32.mrf.mxu0
      %5640 = vmatprep.mubr.bf16.mxu0 0
      %5641 = vmatmul.mubr.bf16.gmra.mxu0 %v5422
      %v5642 = vpop.f32.mrf.mxu0
      %v5643 = vadd.f32 0.0, %v5642
      %v5644 = vpop.f32.mrf.mxu0
      %v5645 = vpop.f32.mrf.mxu0
      %v5646 = vadd.f32 0.0, %v5645
      %v5647 = vpop.f32.mrf.mxu0
      %5648 = vmatprep.mubr.bf16.mxu0 0
      %5649 = vmatmul.mubr.bf16.gmra.mxu0 %v5431
      %v5650 = vpop.f32.mrf.mxu0
      %v5651 = vadd.f32 0.0, %v5650
      %v5652 = vpop.f32.mrf.mxu0
      %v5653 = vpop.f32.mrf.mxu0
      %v5654 = vadd.f32 0.0, %v5653
      %v5655 = vpop.f32.mrf.mxu0
      %5656 = vdwg.mxu0
      %v5657 = vadd.f32 %v5082, %v5531
      %v5658 = vadd.f32 %v5083, %v5534
      %v5659 = vadd.f32 %v5084, %v5539
      %v5660 = vadd.f32 %v5085, %v5542
      %v5661 = vadd.f32 %v5086, %v5547
      %v5662 = vadd.f32 %v5087, %v5550
      %v5663 = vadd.f32 %v5088, %v5555
      %v5664 = vadd.f32 %v5089, %v5558
      %v5665 = vadd.f32 %v5090, %v5563
      %v5666 = vadd.f32 %v5091, %v5566
      %v5667 = vadd.f32 %v5092, %v5571
      %v5668 = vadd.f32 %v5093, %v5574
      %v5669 = vadd.f32 %v5094, %v5579
      %v5670 = vadd.f32 %v5095, %v5582
      %v5671 = vadd.f32 %v5096, %v5587
      %v5672 = vadd.f32 %v5097, %v5590
      %v5673 = vadd.f32 %v5098, %v5595
      %v5674 = vadd.f32 %v5099, %v5598
      %v5675 = vadd.f32 %v5100, %v5603
      %v5676 = vadd.f32 %v5101, %v5606
      %v5677 = vadd.f32 %v5102, %v5611
      %v5678 = vadd.f32 %v5103, %v5614
      %v5679 = vadd.f32 %v5104, %v5619
      %v5680 = vadd.f32 %v5105, %v5622
      %v5681 = vadd.f32 %v5106, %v5627
      %v5682 = vadd.f32 %v5107, %v5630
      %v5683 = vadd.f32 %v5108, %v5635
      %v5684 = vadd.f32 %v5109, %v5638
      %v5685 = vadd.f32 %v5110, %v5643
      %v5686 = vadd.f32 %v5111, %v5646
      %v5687 = vadd.f32 %v5112, %v5651
      %v5688 = vadd.f32 %v5113, %v5654
      %s5689 = scalar_lea.vmem %s3, 448
      %v5690 = vld [vmem:[%s5689] sm:$0xf]
      %v5691 = vld [vmem:[%s5689 + $0x4] sm:$0xf]
      %v5692 = vld [vmem:[%s5689 + $0x8] sm:$0xf]
      %v5693 = vld [vmem:[%s5689 + $0xc] sm:$0xf]
      %v5694 = vld [vmem:[%s5689 + $0x10] sm:$0xf]
      %v5695 = vld [vmem:[%s5689 + $0x14] sm:$0xf]
      %v5696 = vld [vmem:[%s5689 + $0x18] sm:$0xf]
      %v5697 = vld [vmem:[%s5689 + $0x1c] sm:$0xf]
      %v5698 = vld [vmem:[%s5689 + $0x20] sm:$0xf]
      %v5699 = vld [vmem:[%s5689 + $0x24] sm:$0xf]
      %v5700 = vld [vmem:[%s5689 + $0x28] sm:$0xf]
      %v5701 = vld [vmem:[%s5689 + $0x2c] sm:$0xf]
      %v5702 = vld [vmem:[%s5689 + $0x30] sm:$0xf]
      %v5703 = vld [vmem:[%s5689 + $0x34] sm:$0xf]
      %v5704 = vld [vmem:[%s5689 + $0x38] sm:$0xf]
      %v5705 = vld [vmem:[%s5689 + $0x3c] sm:$0xf]
      %v5738 = vunpack.c.l.b16 %v5115
      %v5739 = vunpack.c.l.b16 %v5116
      %v5740 = vunpack.c.l.b16 %v5117
      %v5741 = vunpack.c.l.b16 %v5118
      %v5742 = vunpack.c.l.b16 %v5119
      %v5743 = vunpack.c.l.b16 %v5120
      %v5744 = vunpack.c.l.b16 %v5121
      %v5745 = vunpack.c.l.b16 %v5122
      %v5746 = vunpack.c.l.b16 %v5123
      %v5747 = vunpack.c.l.b16 %v5124
      %v5748 = vunpack.c.l.b16 %v5125
      %v5749 = vunpack.c.l.b16 %v5126
      %v5750 = vunpack.c.l.b16 %v5127
      %v5751 = vunpack.c.l.b16 %v5128
      %v5752 = vunpack.c.l.b16 %v5129
      %v5753 = vunpack.c.l.b16 %v5130
      %v5754 = vunpack.c.l.b16 %v5131
      %v5755 = vunpack.c.l.b16 %v5132
      %v5756 = vunpack.c.l.b16 %v5133
      %v5757 = vunpack.c.l.b16 %v5134
      %v5758 = vunpack.c.l.b16 %v5135
      %v5759 = vunpack.c.l.b16 %v5136
      %v5760 = vunpack.c.l.b16 %v5137
      %v5761 = vunpack.c.l.b16 %v5138
      %v5762 = vunpack.c.l.b16 %v5139
      %v5763 = vunpack.c.l.b16 %v5140
      %v5764 = vunpack.c.l.b16 %v5141
      %v5765 = vunpack.c.l.b16 %v5142
      %v5766 = vunpack.c.l.b16 %v5143
      %v5767 = vunpack.c.l.b16 %v5144
      %v5768 = vunpack.c.l.b16 %v5145
      %v5769 = vunpack.c.l.b16 %v5146
      %v5770 = vpack.c.b16 %v5739, %v5738
      %v5771 = vpack.c.b16 %v5741, %v5740
      %v5772 = vpack.c.b16 %v5743, %v5742
      %v5773 = vpack.c.b16 %v5745, %v5744
      %v5774 = vpack.c.b16 %v5747, %v5746
      %v5775 = vpack.c.b16 %v5749, %v5748
      %v5776 = vpack.c.b16 %v5751, %v5750
      %v5777 = vpack.c.b16 %v5753, %v5752
      %v5778 = vpack.c.b16 %v5755, %v5754
      %v5779 = vpack.c.b16 %v5757, %v5756
      %v5780 = vpack.c.b16 %v5759, %v5758
      %v5781 = vpack.c.b16 %v5761, %v5760
      %v5782 = vpack.c.b16 %v5763, %v5762
      %v5783 = vpack.c.b16 %v5765, %v5764
      %v5784 = vpack.c.b16 %v5767, %v5766
      %v5785 = vpack.c.b16 %v5769, %v5768
      %v5818 = vunpack.c.l.b16 %v5690
      %v5819 = vunpack.c.l.b16 %v5691
      %v5820 = vunpack.c.l.b16 %v5692
      %v5821 = vunpack.c.l.b16 %v5693
      %v5822 = vunpack.c.l.b16 %v5694
      %v5823 = vunpack.c.l.b16 %v5695
      %v5824 = vunpack.c.l.b16 %v5696
      %v5825 = vunpack.c.l.b16 %v5697
      %v5826 = vunpack.c.l.b16 %v5698
      %v5827 = vunpack.c.l.b16 %v5699
      %v5828 = vunpack.c.l.b16 %v5700
      %v5829 = vunpack.c.l.b16 %v5701
      %v5830 = vunpack.c.l.b16 %v5702
      %v5831 = vunpack.c.l.b16 %v5703
      %v5832 = vunpack.c.l.b16 %v5704
      %v5833 = vunpack.c.l.b16 %v5705
      %v5834 = vpack.c.b16 %v5819, %v5818
      %v5835 = vpack.c.b16 %v5821, %v5820
      %v5836 = vpack.c.b16 %v5823, %v5822
      %v5837 = vpack.c.b16 %v5825, %v5824
      %v5838 = vpack.c.b16 %v5827, %v5826
      %v5839 = vpack.c.b16 %v5829, %v5828
      %v5840 = vpack.c.b16 %v5831, %v5830
      %v5841 = vpack.c.b16 %v5833, %v5832
      %5850 = vmatprep.subr.bf16.mxu0 0
      %5851 = vmatpush1.bf16.msra.mxu0 %v5841
      %5852 = vmatprep.subr.bf16.mxu0 0
      %5853 = vmatpush1.bf16.msra.mxu0 %v5840
      %5854 = vmatprep.subr.bf16.mxu0 0
      %5855 = vmatpush1.bf16.msra.mxu0 %v5839
      %5856 = vmatprep.subr.bf16.mxu0 0
      %5857 = vmatpush1.bf16.msra.mxu0 %v5838
      %5858 = vmatprep.subr.bf16.mxu0 0
      %5859 = vmatpush1.bf16.msra.mxu0 %v5837
      %5860 = vmatprep.subr.bf16.mxu0 0
      %5861 = vmatpush1.bf16.msra.mxu0 %v5836
      %5862 = vmatprep.subr.bf16.mxu0 0
      %5863 = vmatpush1.bf16.msra.mxu0 %v5835
      %5864 = vmatprep.subr.bf16.mxu0 0
      %5865 = vmatpush1.bf16.msra.mxu0 %v5834
      %5866 = vmatprep.subr.bf16.mxu0 0
      %5867 = vmatpush2.bf16.msra.mxu0 0
      %5868 = vmatprep.subr.bf16.mxu0 0
      %5869 = vmatpush2.bf16.msra.mxu0 0
      %5870 = vmatprep.subr.bf16.mxu0 0
      %5871 = vmatpush2.bf16.msra.mxu0 0
      %5872 = vmatprep.subr.bf16.mxu0 0
      %5873 = vmatpush2.bf16.msra.mxu0 0
      %5874 = vmatprep.subr.bf16.mxu0 0
      %5875 = vmatpush2.bf16.msra.mxu0 0
      %5876 = vmatprep.subr.bf16.mxu0 0
      %5877 = vmatpush2.bf16.msra.mxu0 0
      %5878 = vmatprep.subr.bf16.mxu0 0
      %5879 = vmatpush2.bf16.msra.mxu0 0
      %5880 = vmatprep.subr.bf16.mxu0 0
      %5881 = vmatpush2.bf16.msra.mxu0 0
      %5882 = vmatprep.mubr.bf16.mxu0 0
      %5883 = vmatmul.mubr.bf16.gmra.mxu0 %v5770
      %v5884 = vpop.f32.mrf.mxu0
      %v5885 = vadd.f32 0.0, %v5884
      %v5886 = vpop.f32.mrf.mxu0
      %v5887 = vpop.f32.mrf.mxu0
      %v5888 = vadd.f32 0.0, %v5887
      %v5889 = vpop.f32.mrf.mxu0
      %5890 = vmatprep.mubr.bf16.mxu0 0
      %5891 = vmatmul.mubr.bf16.gmra.mxu0 %v5771
      %v5892 = vpop.f32.mrf.mxu0
      %v5893 = vadd.f32 0.0, %v5892
      %v5894 = vpop.f32.mrf.mxu0
      %v5895 = vpop.f32.mrf.mxu0
      %v5896 = vadd.f32 0.0, %v5895
      %v5897 = vpop.f32.mrf.mxu0
      %5898 = vmatprep.mubr.bf16.mxu0 0
      %5899 = vmatmul.mubr.bf16.gmra.mxu0 %v5772
      %v5900 = vpop.f32.mrf.mxu0
      %v5901 = vadd.f32 0.0, %v5900
      %v5902 = vpop.f32.mrf.mxu0
      %v5903 = vpop.f32.mrf.mxu0
      %v5904 = vadd.f32 0.0, %v5903
      %v5905 = vpop.f32.mrf.mxu0
      %5906 = vmatprep.mubr.bf16.mxu0 0
      %5907 = vmatmul.mubr.bf16.gmra.mxu0 %v5773
      %v5908 = vpop.f32.mrf.mxu0
      %v5909 = vadd.f32 0.0, %v5908
      %v5910 = vpop.f32.mrf.mxu0
      %v5911 = vpop.f32.mrf.mxu0
      %v5912 = vadd.f32 0.0, %v5911
      %v5913 = vpop.f32.mrf.mxu0
      %5914 = vmatprep.mubr.bf16.mxu0 0
      %5915 = vmatmul.mubr.bf16.gmra.mxu0 %v5774
      %v5916 = vpop.f32.mrf.mxu0
      %v5917 = vadd.f32 0.0, %v5916
      %v5918 = vpop.f32.mrf.mxu0
      %v5919 = vpop.f32.mrf.mxu0
      %v5920 = vadd.f32 0.0, %v5919
      %v5921 = vpop.f32.mrf.mxu0
      %5922 = vmatprep.mubr.bf16.mxu0 0
      %5923 = vmatmul.mubr.bf16.gmra.mxu0 %v5775
      %v5924 = vpop.f32.mrf.mxu0
      %v5925 = vadd.f32 0.0, %v5924
      %v5926 = vpop.f32.mrf.mxu0
      %v5927 = vpop.f32.mrf.mxu0
      %v5928 = vadd.f32 0.0, %v5927
      %v5929 = vpop.f32.mrf.mxu0
      %5930 = vmatprep.mubr.bf16.mxu0 0
      %5931 = vmatmul.mubr.bf16.gmra.mxu0 %v5776
      %v5932 = vpop.f32.mrf.mxu0
      %v5933 = vadd.f32 0.0, %v5932
      %v5934 = vpop.f32.mrf.mxu0
      %v5935 = vpop.f32.mrf.mxu0
      %v5936 = vadd.f32 0.0, %v5935
      %v5937 = vpop.f32.mrf.mxu0
      %5938 = vmatprep.mubr.bf16.mxu0 0
      %5939 = vmatmul.mubr.bf16.gmra.mxu0 %v5777
      %v5940 = vpop.f32.mrf.mxu0
      %v5941 = vadd.f32 0.0, %v5940
      %v5942 = vpop.f32.mrf.mxu0
      %v5943 = vpop.f32.mrf.mxu0
      %v5944 = vadd.f32 0.0, %v5943
      %v5945 = vpop.f32.mrf.mxu0
      %5946 = vmatprep.mubr.bf16.mxu0 0
      %5947 = vmatmul.mubr.bf16.gmra.mxu0 %v5778
      %v5948 = vpop.f32.mrf.mxu0
      %v5949 = vadd.f32 0.0, %v5948
      %v5950 = vpop.f32.mrf.mxu0
      %v5951 = vpop.f32.mrf.mxu0
      %v5952 = vadd.f32 0.0, %v5951
      %v5953 = vpop.f32.mrf.mxu0
      %5954 = vmatprep.mubr.bf16.mxu0 0
      %5955 = vmatmul.mubr.bf16.gmra.mxu0 %v5779
      %v5956 = vpop.f32.mrf.mxu0
      %v5957 = vadd.f32 0.0, %v5956
      %v5958 = vpop.f32.mrf.mxu0
      %v5959 = vpop.f32.mrf.mxu0
      %v5960 = vadd.f32 0.0, %v5959
      %v5961 = vpop.f32.mrf.mxu0
      %5962 = vmatprep.mubr.bf16.mxu0 0
      %5963 = vmatmul.mubr.bf16.gmra.mxu0 %v5780
      %v5964 = vpop.f32.mrf.mxu0
      %v5965 = vadd.f32 0.0, %v5964
      %v5966 = vpop.f32.mrf.mxu0
      %v5967 = vpop.f32.mrf.mxu0
      %v5968 = vadd.f32 0.0, %v5967
      %v5969 = vpop.f32.mrf.mxu0
      %5970 = vmatprep.mubr.bf16.mxu0 0
      %5971 = vmatmul.mubr.bf16.gmra.mxu0 %v5781
      %v5972 = vpop.f32.mrf.mxu0
      %v5973 = vadd.f32 0.0, %v5972
      %v5974 = vpop.f32.mrf.mxu0
      %v5975 = vpop.f32.mrf.mxu0
      %v5976 = vadd.f32 0.0, %v5975
      %v5977 = vpop.f32.mrf.mxu0
      %5978 = vmatprep.mubr.bf16.mxu0 0
      %5979 = vmatmul.mubr.bf16.gmra.mxu0 %v5782
      %v5980 = vpop.f32.mrf.mxu0
      %v5981 = vadd.f32 0.0, %v5980
      %v5982 = vpop.f32.mrf.mxu0
      %v5983 = vpop.f32.mrf.mxu0
      %v5984 = vadd.f32 0.0, %v5983
      %v5985 = vpop.f32.mrf.mxu0
      %5986 = vmatprep.mubr.bf16.mxu0 0
      %5987 = vmatmul.mubr.bf16.gmra.mxu0 %v5783
      %v5988 = vpop.f32.mrf.mxu0
      %v5989 = vadd.f32 0.0, %v5988
      %v5990 = vpop.f32.mrf.mxu0
      %v5991 = vpop.f32.mrf.mxu0
      %v5992 = vadd.f32 0.0, %v5991
      %v5993 = vpop.f32.mrf.mxu0
      %5994 = vmatprep.mubr.bf16.mxu0 0
      %5995 = vmatmul.mubr.bf16.gmra.mxu0 %v5784
      %v5996 = vpop.f32.mrf.mxu0
      %v5997 = vadd.f32 0.0, %v5996
      %v5998 = vpop.f32.mrf.mxu0
      %v5999 = vpop.f32.mrf.mxu0
      %v6000 = vadd.f32 0.0, %v5999
      %v6001 = vpop.f32.mrf.mxu0
      %6002 = vmatprep.mubr.bf16.mxu0 0
      %6003 = vmatmul.mubr.bf16.gmra.mxu0 %v5785
      %v6004 = vpop.f32.mrf.mxu0
      %v6005 = vadd.f32 0.0, %v6004
      %v6006 = vpop.f32.mrf.mxu0
      %v6007 = vpop.f32.mrf.mxu0
      %v6008 = vadd.f32 0.0, %v6007
      %v6009 = vpop.f32.mrf.mxu0
      %6010 = vdwg.mxu0
      %v6011 = vadd.f32 %v5657, %v5885
      %v6012 = vadd.f32 %v5658, %v5888
      %v6013 = vadd.f32 %v5659, %v5893
      %v6014 = vadd.f32 %v5660, %v5896
      %v6015 = vadd.f32 %v5661, %v5901
      %v6016 = vadd.f32 %v5662, %v5904
      %v6017 = vadd.f32 %v5663, %v5909
      %v6018 = vadd.f32 %v5664, %v5912
      %v6019 = vadd.f32 %v5665, %v5917
      %v6020 = vadd.f32 %v5666, %v5920
      %v6021 = vadd.f32 %v5667, %v5925
      %v6022 = vadd.f32 %v5668, %v5928
      %v6023 = vadd.f32 %v5669, %v5933
      %v6024 = vadd.f32 %v5670, %v5936
      %v6025 = vadd.f32 %v5671, %v5941
      %v6026 = vadd.f32 %v5672, %v5944
      %v6027 = vadd.f32 %v5673, %v5949
      %v6028 = vadd.f32 %v5674, %v5952
      %v6029 = vadd.f32 %v5675, %v5957
      %v6030 = vadd.f32 %v5676, %v5960
      %v6031 = vadd.f32 %v5677, %v5965
      %v6032 = vadd.f32 %v5678, %v5968
      %v6033 = vadd.f32 %v5679, %v5973
      %v6034 = vadd.f32 %v5680, %v5976
      %v6035 = vadd.f32 %v5681, %v5981
      %v6036 = vadd.f32 %v5682, %v5984
      %v6037 = vadd.f32 %v5683, %v5989
      %v6038 = vadd.f32 %v5684, %v5992
      %v6039 = vadd.f32 %v5685, %v5997
      %v6040 = vadd.f32 %v5686, %v6000
      %v6041 = vadd.f32 %v5687, %v6005
      %v6042 = vadd.f32 %v5688, %v6008
      %v6043 = vld [vmem:[#allocation2 + $0x18] sm:$0xf]
      %v6044 = vld [vmem:[#allocation2 + $0x1c] sm:$0xf]
      %v6045 = vld [vmem:[#allocation2 + $0x20] sm:$0xf]
      %v6046 = vld [vmem:[#allocation2 + $0x24] sm:$0xf]
      %v6047 = vld [vmem:[#allocation2 + $0x28] sm:$0xf]
      %v6048 = vld [vmem:[#allocation2 + $0x2c] sm:$0xf]
      %v6049 = vld [vmem:[#allocation2 + $0x30] sm:$0xf]
      %v6050 = vld [vmem:[#allocation2 + $0x34] sm:$0xf]
      %v6051 = vld [vmem:[#allocation2 + $0x38] sm:$0xf]
      %v6052 = vld [vmem:[#allocation2 + $0x3c] sm:$0xf]
      %v6053 = vld [vmem:[#allocation2 + $0x40] sm:$0xf]
      %v6054 = vld [vmem:[#allocation2 + $0x44] sm:$0xf]
      %v6055 = vld [vmem:[#allocation2 + $0x48] sm:$0xf]
      %v6056 = vld [vmem:[#allocation2 + $0x4c] sm:$0xf]
      %v6057 = vld [vmem:[#allocation2 + $0x50] sm:$0xf]
      %v6058 = vld [vmem:[#allocation2 + $0x54] sm:$0xf]
      %v6059 = vld [vmem:[#allocation2 + $0x58] sm:$0xf]
      %v6060 = vld [vmem:[#allocation2 + $0x5c] sm:$0xf]
      %v6061 = vld [vmem:[#allocation2 + $0x60] sm:$0xf]
      %v6062 = vld [vmem:[#allocation2 + $0x64] sm:$0xf]
      %v6063 = vld [vmem:[#allocation2 + $0x68] sm:$0xf]
      %v6064 = vld [vmem:[#allocation2 + $0x6c] sm:$0xf]
      %v6065 = vld [vmem:[#allocation2 + $0x70] sm:$0xf]
      %v6066 = vld [vmem:[#allocation2 + $0x74] sm:$0xf]
      %v6067 = vld [vmem:[#allocation2 + $0x78] sm:$0xf]
      %v6068 = vld [vmem:[#allocation2 + $0x7c] sm:$0xf]
      %v6069 = vld [vmem:[#allocation2 + $0x80] sm:$0xf]
      %v6070 = vld [vmem:[#allocation2 + $0x84] sm:$0xf]
      %v6071 = vld [vmem:[#allocation2 + $0x88] sm:$0xf]
      %v6072 = vld [vmem:[#allocation2 + $0x8c] sm:$0xf]
      %v6073 = vld [vmem:[#allocation2 + $0x90] sm:$0xf]
      %v6074 = vld [vmem:[#allocation2 + $0x94] sm:$0xf]
      %v6075 = vld [vmem:[#allocation2 + $0x98] sm:$0x1]
      %v6076 = vsel %vm3074, %v6043, 0
      %v6077 = vsel %vm3075, %v6044, 0
      %v6078 = vsel %vm3076, %v6045, 0
      %v6079 = vsel %vm3077, %v6046, 0
      %v6080 = vsel %vm3078, %v6047, 0
      %v6081 = vsel %vm3079, %v6048, 0
      %v6082 = vsel %vm3080, %v6049, 0
      %v6083 = vsel %vm3081, %v6050, 0
      %v6084 = vsel %vm3082, %v6051, 0
      %v6085 = vsel %vm3083, %v6052, 0
      %v6086 = vsel %vm3084, %v6053, 0
      %v6087 = vsel %vm3085, %v6054, 0
      %v6088 = vsel %vm3086, %v6055, 0
      %v6089 = vsel %vm3087, %v6056, 0
      %v6090 = vsel %vm3088, %v6057, 0
      %v6091 = vsel %vm3089, %v6058, 0
      %v6092 = vsel %vm3090, %v6059, 0
      %v6093 = vsel %vm3091, %v6060, 0
      %v6094 = vsel %vm3092, %v6061, 0
      %v6095 = vsel %vm3093, %v6062, 0
      %v6096 = vsel %vm3094, %v6063, 0
      %v6097 = vsel %vm3095, %v6064, 0
      %v6098 = vsel %vm3096, %v6065, 0
      %v6099 = vsel %vm3097, %v6066, 0
      %v6100 = vsel %vm3098, %v6067, 0
      %v6101 = vsel %vm3099, %v6068, 0
      %v6102 = vsel %vm3100, %v6069, 0
      %v6103 = vsel %vm3101, %v6070, 0
      %v6104 = vsel %vm3102, %v6071, 0
      %v6105 = vsel %vm3103, %v6072, 0
      %v6106 = vsel %vm3104, %v6073, 0
      %v6107 = vsel %vm3105, %v6074, 0
      %v6108 = vsel %vm3106, %v6075, 0
      %s6109 = scalar_lea.vmem %s3, 512
      %v6110 = vld [vmem:[%s6109] sm:$0xf]
      %v6111 = vld [vmem:[%s6109 + $0x4] sm:$0xf]
      %v6112 = vld [vmem:[%s6109 + $0x8] sm:$0xf]
      %v6113 = vld [vmem:[%s6109 + $0xc] sm:$0xf]
      %v6114 = vld [vmem:[%s6109 + $0x10] sm:$0xf]
      %v6115 = vld [vmem:[%s6109 + $0x14] sm:$0xf]
      %v6116 = vld [vmem:[%s6109 + $0x18] sm:$0xf]
      %v6117 = vld [vmem:[%s6109 + $0x1c] sm:$0xf]
      %v6118 = vld [vmem:[%s6109 + $0x20] sm:$0xf]
      %v6119 = vld [vmem:[%s6109 + $0x24] sm:$0xf]
      %v6120 = vld [vmem:[%s6109 + $0x28] sm:$0xf]
      %v6121 = vld [vmem:[%s6109 + $0x2c] sm:$0xf]
      %v6122 = vld [vmem:[%s6109 + $0x30] sm:$0xf]
      %v6123 = vld [vmem:[%s6109 + $0x34] sm:$0xf]
      %v6124 = vld [vmem:[%s6109 + $0x38] sm:$0xf]
      %v6125 = vld [vmem:[%s6109 + $0x3c] sm:$0xf]
      %v6159 = vunpack.c.l.b16 %v6076
      %v6160 = vunpack.c.l.b16 %v6077
      %v6161 = vunpack.c.l.b16 %v6078
      %v6162 = vunpack.c.l.b16 %v6079
      %v6163 = vunpack.c.l.b16 %v6080
      %v6164 = vunpack.c.l.b16 %v6081
      %v6165 = vunpack.c.l.b16 %v6082
      %v6166 = vunpack.c.l.b16 %v6083
      %v6167 = vunpack.c.l.b16 %v6084
      %v6168 = vunpack.c.l.b16 %v6085
      %v6169 = vunpack.c.l.b16 %v6086
      %v6170 = vunpack.c.l.b16 %v6087
      %v6171 = vunpack.c.l.b16 %v6088
      %v6172 = vunpack.c.l.b16 %v6089
      %v6173 = vunpack.c.l.b16 %v6090
      %v6174 = vunpack.c.l.b16 %v6091
      %v6175 = vunpack.c.l.b16 %v6092
      %v6176 = vunpack.c.l.b16 %v6093
      %v6177 = vunpack.c.l.b16 %v6094
      %v6178 = vunpack.c.l.b16 %v6095
      %v6179 = vunpack.c.l.b16 %v6096
      %v6180 = vunpack.c.l.b16 %v6097
      %v6181 = vunpack.c.l.b16 %v6098
      %v6182 = vunpack.c.l.b16 %v6099
      %v6183 = vunpack.c.l.b16 %v6100
      %v6184 = vunpack.c.l.b16 %v6101
      %v6185 = vunpack.c.l.b16 %v6102
      %v6186 = vunpack.c.l.b16 %v6103
      %v6187 = vunpack.c.l.b16 %v6104
      %v6188 = vunpack.c.l.b16 %v6105
      %v6189 = vunpack.c.l.b16 %v6106
      %v6190 = vunpack.c.l.b16 %v6107
      %v6191 = vunpack.c.l.b16 %v6108
      %v6192 = vpack.c.b16 %v6160, %v6159
      %v6193 = vpack.c.b16 %v6162, %v6161
      %v6194 = vpack.c.b16 %v6164, %v6163
      %v6195 = vpack.c.b16 %v6166, %v6165
      %v6196 = vpack.c.b16 %v6168, %v6167
      %v6197 = vpack.c.b16 %v6170, %v6169
      %v6198 = vpack.c.b16 %v6172, %v6171
      %v6199 = vpack.c.b16 %v6174, %v6173
      %v6200 = vpack.c.b16 %v6176, %v6175
      %v6201 = vpack.c.b16 %v6178, %v6177
      %v6202 = vpack.c.b16 %v6180, %v6179
      %v6203 = vpack.c.b16 %v6182, %v6181
      %v6204 = vpack.c.b16 %v6184, %v6183
      %v6205 = vpack.c.b16 %v6186, %v6185
      %v6206 = vpack.c.b16 %v6188, %v6187
      %v6207 = vpack.c.b16 %v6190, %v6189
      %v6208 = vpack.c.b16 %v6191, %v6191
      %v6210 = vshrl.u32 %v6192, 16
      %v6212 = vshll.u32 %v6192, 16
      %v6214 = vrot.slane %v6212, 1
      %v6215 = vor.u32 %v6210, %v6214
      %v6217 = vshll.u32 %v6193, 16
      %v6219 = vrot.slane %v6217, 1
      %v6220 = vsel %vm3240, %v6215, %v6219
      %v6221 = vshrl.u32 %v6193, 16
      %v6223 = vor.u32 %v6221, %v6219
      %v6225 = vshll.u32 %v6194, 16
      %v6227 = vrot.slane %v6225, 1
      %v6228 = vsel %vm3240, %v6223, %v6227
      %v6229 = vshrl.u32 %v6194, 16
      %v6231 = vor.u32 %v6229, %v6227
      %v6233 = vshll.u32 %v6195, 16
      %v6235 = vrot.slane %v6233, 1
      %v6236 = vsel %vm3240, %v6231, %v6235
      %v6237 = vshrl.u32 %v6195, 16
      %v6239 = vor.u32 %v6237, %v6235
      %v6241 = vshll.u32 %v6196, 16
      %v6243 = vrot.slane %v6241, 1
      %v6244 = vsel %vm3240, %v6239, %v6243
      %v6245 = vshrl.u32 %v6196, 16
      %v6247 = vor.u32 %v6245, %v6243
      %v6249 = vshll.u32 %v6197, 16
      %v6251 = vrot.slane %v6249, 1
      %v6252 = vsel %vm3240, %v6247, %v6251
      %v6253 = vshrl.u32 %v6197, 16
      %v6255 = vor.u32 %v6253, %v6251
      %v6257 = vshll.u32 %v6198, 16
      %v6259 = vrot.slane %v6257, 1
      %v6260 = vsel %vm3240, %v6255, %v6259
      %v6261 = vshrl.u32 %v6198, 16
      %v6263 = vor.u32 %v6261, %v6259
      %v6265 = vshll.u32 %v6199, 16
      %v6267 = vrot.slane %v6265, 1
      %v6268 = vsel %vm3240, %v6263, %v6267
      %v6269 = vshrl.u32 %v6199, 16
      %v6271 = vor.u32 %v6269, %v6267
      %v6273 = vshll.u32 %v6200, 16
      %v6275 = vrot.slane %v6273, 1
      %v6276 = vsel %vm3240, %v6271, %v6275
      %v6277 = vshrl.u32 %v6200, 16
      %v6279 = vor.u32 %v6277, %v6275
      %v6281 = vshll.u32 %v6201, 16
      %v6283 = vrot.slane %v6281, 1
      %v6284 = vsel %vm3240, %v6279, %v6283
      %v6285 = vshrl.u32 %v6201, 16
      %v6287 = vor.u32 %v6285, %v6283
      %v6289 = vshll.u32 %v6202, 16
      %v6291 = vrot.slane %v6289, 1
      %v6292 = vsel %vm3240, %v6287, %v6291
      %v6293 = vshrl.u32 %v6202, 16
      %v6295 = vor.u32 %v6293, %v6291
      %v6297 = vshll.u32 %v6203, 16
      %v6299 = vrot.slane %v6297, 1
      %v6300 = vsel %vm3240, %v6295, %v6299
      %v6301 = vshrl.u32 %v6203, 16
      %v6303 = vor.u32 %v6301, %v6299
      %v6305 = vshll.u32 %v6204, 16
      %v6307 = vrot.slane %v6305, 1
      %v6308 = vsel %vm3240, %v6303, %v6307
      %v6309 = vshrl.u32 %v6204, 16
      %v6311 = vor.u32 %v6309, %v6307
      %v6313 = vshll.u32 %v6205, 16
      %v6315 = vrot.slane %v6313, 1
      %v6316 = vsel %vm3240, %v6311, %v6315
      %v6317 = vshrl.u32 %v6205, 16
      %v6319 = vor.u32 %v6317, %v6315
      %v6321 = vshll.u32 %v6206, 16
      %v6323 = vrot.slane %v6321, 1
      %v6324 = vsel %vm3240, %v6319, %v6323
      %v6325 = vshrl.u32 %v6206, 16
      %v6327 = vor.u32 %v6325, %v6323
      %v6329 = vshll.u32 %v6207, 16
      %v6331 = vrot.slane %v6329, 1
      %v6332 = vsel %vm3240, %v6327, %v6331
      %v6333 = vshrl.u32 %v6207, 16
      %v6335 = vor.u32 %v6333, %v6331
      %v6337 = vshll.u32 %v6208, 16
      %v6339 = vrot.slane %v6337, 1
      %v6340 = vsel %vm3240, %v6335, %v6339
      %v6373 = vunpack.c.l.b16 %v6110
      %v6374 = vunpack.c.l.b16 %v6111
      %v6375 = vunpack.c.l.b16 %v6112
      %v6376 = vunpack.c.l.b16 %v6113
      %v6377 = vunpack.c.l.b16 %v6114
      %v6378 = vunpack.c.l.b16 %v6115
      %v6379 = vunpack.c.l.b16 %v6116
      %v6380 = vunpack.c.l.b16 %v6117
      %v6381 = vunpack.c.l.b16 %v6118
      %v6382 = vunpack.c.l.b16 %v6119
      %v6383 = vunpack.c.l.b16 %v6120
      %v6384 = vunpack.c.l.b16 %v6121
      %v6385 = vunpack.c.l.b16 %v6122
      %v6386 = vunpack.c.l.b16 %v6123
      %v6387 = vunpack.c.l.b16 %v6124
      %v6388 = vunpack.c.l.b16 %v6125
      %v6389 = vpack.c.b16 %v6374, %v6373
      %v6390 = vpack.c.b16 %v6376, %v6375
      %v6391 = vpack.c.b16 %v6378, %v6377
      %v6392 = vpack.c.b16 %v6380, %v6379
      %v6393 = vpack.c.b16 %v6382, %v6381
      %v6394 = vpack.c.b16 %v6384, %v6383
      %v6395 = vpack.c.b16 %v6386, %v6385
      %v6396 = vpack.c.b16 %v6388, %v6387
      %6405 = vmatprep.subr.bf16.mxu0 0
      %6406 = vmatpush1.bf16.msra.mxu0 %v6396
      %6407 = vmatprep.subr.bf16.mxu0 0
      %6408 = vmatpush1.bf16.msra.mxu0 %v6395
      %6409 = vmatprep.subr.bf16.mxu0 0
      %6410 = vmatpush1.bf16.msra.mxu0 %v6394
      %6411 = vmatprep.subr.bf16.mxu0 0
      %6412 = vmatpush1.bf16.msra.mxu0 %v6393
      %6413 = vmatprep.subr.bf16.mxu0 0
      %6414 = vmatpush1.bf16.msra.mxu0 %v6392
      %6415 = vmatprep.subr.bf16.mxu0 0
      %6416 = vmatpush1.bf16.msra.mxu0 %v6391
      %6417 = vmatprep.subr.bf16.mxu0 0
      %6418 = vmatpush1.bf16.msra.mxu0 %v6390
      %6419 = vmatprep.subr.bf16.mxu0 0
      %6420 = vmatpush1.bf16.msra.mxu0 %v6389
      %6421 = vmatprep.subr.bf16.mxu0 0
      %6422 = vmatpush2.bf16.msra.mxu0 0
      %6423 = vmatprep.subr.bf16.mxu0 0
      %6424 = vmatpush2.bf16.msra.mxu0 0
      %6425 = vmatprep.subr.bf16.mxu0 0
      %6426 = vmatpush2.bf16.msra.mxu0 0
      %6427 = vmatprep.subr.bf16.mxu0 0
      %6428 = vmatpush2.bf16.msra.mxu0 0
      %6429 = vmatprep.subr.bf16.mxu0 0
      %6430 = vmatpush2.bf16.msra.mxu0 0
      %6431 = vmatprep.subr.bf16.mxu0 0
      %6432 = vmatpush2.bf16.msra.mxu0 0
      %6433 = vmatprep.subr.bf16.mxu0 0
      %6434 = vmatpush2.bf16.msra.mxu0 0
      %6435 = vmatprep.subr.bf16.mxu0 0
      %6436 = vmatpush2.bf16.msra.mxu0 0
      %6437 = vmatprep.mubr.bf16.mxu0 0
      %6438 = vmatmul.mubr.bf16.gmra.mxu0 %v6220
      %v6439 = vpop.f32.mrf.mxu0
      %v6440 = vadd.f32 0.0, %v6439
      %v6441 = vpop.f32.mrf.mxu0
      %v6442 = vpop.f32.mrf.mxu0
      %v6443 = vadd.f32 0.0, %v6442
      %v6444 = vpop.f32.mrf.mxu0
      %6445 = vmatprep.mubr.bf16.mxu0 0
      %6446 = vmatmul.mubr.bf16.gmra.mxu0 %v6228
      %v6447 = vpop.f32.mrf.mxu0
      %v6448 = vadd.f32 0.0, %v6447
      %v6449 = vpop.f32.mrf.mxu0
      %v6450 = vpop.f32.mrf.mxu0
      %v6451 = vadd.f32 0.0, %v6450
      %v6452 = vpop.f32.mrf.mxu0
      %6453 = vmatprep.mubr.bf16.mxu0 0
      %6454 = vmatmul.mubr.bf16.gmra.mxu0 %v6236
      %v6455 = vpop.f32.mrf.mxu0
      %v6456 = vadd.f32 0.0, %v6455
      %v6457 = vpop.f32.mrf.mxu0
      %v6458 = vpop.f32.mrf.mxu0
      %v6459 = vadd.f32 0.0, %v6458
      %v6460 = vpop.f32.mrf.mxu0
      %6461 = vmatprep.mubr.bf16.mxu0 0
      %6462 = vmatmul.mubr.bf16.gmra.mxu0 %v6244
      %v6463 = vpop.f32.mrf.mxu0
      %v6464 = vadd.f32 0.0, %v6463
      %v6465 = vpop.f32.mrf.mxu0
      %v6466 = vpop.f32.mrf.mxu0
      %v6467 = vadd.f32 0.0, %v6466
      %v6468 = vpop.f32.mrf.mxu0
      %6469 = vmatprep.mubr.bf16.mxu0 0
      %6470 = vmatmul.mubr.bf16.gmra.mxu0 %v6252
      %v6471 = vpop.f32.mrf.mxu0
      %v6472 = vadd.f32 0.0, %v6471
      %v6473 = vpop.f32.mrf.mxu0
      %v6474 = vpop.f32.mrf.mxu0
      %v6475 = vadd.f32 0.0, %v6474
      %v6476 = vpop.f32.mrf.mxu0
      %6477 = vmatprep.mubr.bf16.mxu0 0
      %6478 = vmatmul.mubr.bf16.gmra.mxu0 %v6260
      %v6479 = vpop.f32.mrf.mxu0
      %v6480 = vadd.f32 0.0, %v6479
      %v6481 = vpop.f32.mrf.mxu0
      %v6482 = vpop.f32.mrf.mxu0
      %v6483 = vadd.f32 0.0, %v6482
      %v6484 = vpop.f32.mrf.mxu0
      %6485 = vmatprep.mubr.bf16.mxu0 0
      %6486 = vmatmul.mubr.bf16.gmra.mxu0 %v6268
      %v6487 = vpop.f32.mrf.mxu0
      %v6488 = vadd.f32 0.0, %v6487
      %v6489 = vpop.f32.mrf.mxu0
      %v6490 = vpop.f32.mrf.mxu0
      %v6491 = vadd.f32 0.0, %v6490
      %v6492 = vpop.f32.mrf.mxu0
      %6493 = vmatprep.mubr.bf16.mxu0 0
      %6494 = vmatmul.mubr.bf16.gmra.mxu0 %v6276
      %v6495 = vpop.f32.mrf.mxu0
      %v6496 = vadd.f32 0.0, %v6495
      %v6497 = vpop.f32.mrf.mxu0
      %v6498 = vpop.f32.mrf.mxu0
      %v6499 = vadd.f32 0.0, %v6498
      %v6500 = vpop.f32.mrf.mxu0
      %6501 = vmatprep.mubr.bf16.mxu0 0
      %6502 = vmatmul.mubr.bf16.gmra.mxu0 %v6284
      %v6503 = vpop.f32.mrf.mxu0
      %v6504 = vadd.f32 0.0, %v6503
      %v6505 = vpop.f32.mrf.mxu0
      %v6506 = vpop.f32.mrf.mxu0
      %v6507 = vadd.f32 0.0, %v6506
      %v6508 = vpop.f32.mrf.mxu0
      %6509 = vmatprep.mubr.bf16.mxu0 0
      %6510 = vmatmul.mubr.bf16.gmra.mxu0 %v6292
      %v6511 = vpop.f32.mrf.mxu0
      %v6512 = vadd.f32 0.0, %v6511
      %v6513 = vpop.f32.mrf.mxu0
      %v6514 = vpop.f32.mrf.mxu0
      %v6515 = vadd.f32 0.0, %v6514
      %v6516 = vpop.f32.mrf.mxu0
      %6517 = vmatprep.mubr.bf16.mxu0 0
      %6518 = vmatmul.mubr.bf16.gmra.mxu0 %v6300
      %v6519 = vpop.f32.mrf.mxu0
      %v6520 = vadd.f32 0.0, %v6519
      %v6521 = vpop.f32.mrf.mxu0
      %v6522 = vpop.f32.mrf.mxu0
      %v6523 = vadd.f32 0.0, %v6522
      %v6524 = vpop.f32.mrf.mxu0
      %6525 = vmatprep.mubr.bf16.mxu0 0
      %6526 = vmatmul.mubr.bf16.gmra.mxu0 %v6308
      %v6527 = vpop.f32.mrf.mxu0
      %v6528 = vadd.f32 0.0, %v6527
      %v6529 = vpop.f32.mrf.mxu0
      %v6530 = vpop.f32.mrf.mxu0
      %v6531 = vadd.f32 0.0, %v6530
      %v6532 = vpop.f32.mrf.mxu0
      %6533 = vmatprep.mubr.bf16.mxu0 0
      %6534 = vmatmul.mubr.bf16.gmra.mxu0 %v6316
      %v6535 = vpop.f32.mrf.mxu0
      %v6536 = vadd.f32 0.0, %v6535
      %v6537 = vpop.f32.mrf.mxu0
      %v6538 = vpop.f32.mrf.mxu0
      %v6539 = vadd.f32 0.0, %v6538
      %v6540 = vpop.f32.mrf.mxu0
      %6541 = vmatprep.mubr.bf16.mxu0 0
      %6542 = vmatmul.mubr.bf16.gmra.mxu0 %v6324
      %v6543 = vpop.f32.mrf.mxu0
      %v6544 = vadd.f32 0.0, %v6543
      %v6545 = vpop.f32.mrf.mxu0
      %v6546 = vpop.f32.mrf.mxu0
      %v6547 = vadd.f32 0.0, %v6546
      %v6548 = vpop.f32.mrf.mxu0
      %6549 = vmatprep.mubr.bf16.mxu0 0
      %6550 = vmatmul.mubr.bf16.gmra.mxu0 %v6332
      %v6551 = vpop.f32.mrf.mxu0
      %v6552 = vadd.f32 0.0, %v6551
      %v6553 = vpop.f32.mrf.mxu0
      %v6554 = vpop.f32.mrf.mxu0
      %v6555 = vadd.f32 0.0, %v6554
      %v6556 = vpop.f32.mrf.mxu0
      %6557 = vmatprep.mubr.bf16.mxu0 0
      %6558 = vmatmul.mubr.bf16.gmra.mxu0 %v6340
      %v6559 = vpop.f32.mrf.mxu0
      %v6560 = vadd.f32 0.0, %v6559
      %v6561 = vpop.f32.mrf.mxu0
      %v6562 = vpop.f32.mrf.mxu0
      %v6563 = vadd.f32 0.0, %v6562
      %v6564 = vpop.f32.mrf.mxu0
      %6565 = vdwg.mxu0
      %v6566 = vadd.f32 %v6011, %v6440
      %v6567 = vadd.f32 %v6012, %v6443
      %v6568 = vadd.f32 %v6013, %v6448
      %v6569 = vadd.f32 %v6014, %v6451
      %v6570 = vadd.f32 %v6015, %v6456
      %v6571 = vadd.f32 %v6016, %v6459
      %v6572 = vadd.f32 %v6017, %v6464
      %v6573 = vadd.f32 %v6018, %v6467
      %v6574 = vadd.f32 %v6019, %v6472
      %v6575 = vadd.f32 %v6020, %v6475
      %v6576 = vadd.f32 %v6021, %v6480
      %v6577 = vadd.f32 %v6022, %v6483
      %v6578 = vadd.f32 %v6023, %v6488
      %v6579 = vadd.f32 %v6024, %v6491
      %v6580 = vadd.f32 %v6025, %v6496
      %v6581 = vadd.f32 %v6026, %v6499
      %v6582 = vadd.f32 %v6027, %v6504
      %v6583 = vadd.f32 %v6028, %v6507
      %v6584 = vadd.f32 %v6029, %v6512
      %v6585 = vadd.f32 %v6030, %v6515
      %v6586 = vadd.f32 %v6031, %v6520
      %v6587 = vadd.f32 %v6032, %v6523
      %v6588 = vadd.f32 %v6033, %v6528
      %v6589 = vadd.f32 %v6034, %v6531
      %v6590 = vadd.f32 %v6035, %v6536
      %v6591 = vadd.f32 %v6036, %v6539
      %v6592 = vadd.f32 %v6037, %v6544
      %v6593 = vadd.f32 %v6038, %v6547
      %v6594 = vadd.f32 %v6039, %v6552
      %v6595 = vadd.f32 %v6040, %v6555
      %v6596 = vadd.f32 %v6041, %v6560
      %v6597 = vadd.f32 %v6042, %v6563
      %v6598 = vld [vmem:[%s4] sm:$0x1]
      %v6600 = vlaneseq
      %v6601 = vshrl.u32 %v6600, 7
      %v6602 = vsub.s32 0, %v6601
      %v6603 = vrot.slane %v6598, %v6602
      %v6605 = vadd.f32 %v6566, %v6603
      %v6606 = vadd.f32 %v6567, %v6603
      %v6607 = vadd.f32 %v6568, %v6603
      %v6608 = vadd.f32 %v6569, %v6603
      %v6609 = vadd.f32 %v6570, %v6603
      %v6610 = vadd.f32 %v6571, %v6603
      %v6611 = vadd.f32 %v6572, %v6603
      %v6612 = vadd.f32 %v6573, %v6603
      %v6613 = vadd.f32 %v6574, %v6603
      %v6614 = vadd.f32 %v6575, %v6603
      %v6615 = vadd.f32 %v6576, %v6603
      %v6616 = vadd.f32 %v6577, %v6603
      %v6617 = vadd.f32 %v6578, %v6603
      %v6618 = vadd.f32 %v6579, %v6603
      %v6619 = vadd.f32 %v6580, %v6603
      %v6620 = vadd.f32 %v6581, %v6603
      %v6621 = vadd.f32 %v6582, %v6603
      %v6622 = vadd.f32 %v6583, %v6603
      %v6623 = vadd.f32 %v6584, %v6603
      %v6624 = vadd.f32 %v6585, %v6603
      %v6625 = vadd.f32 %v6586, %v6603
      %v6626 = vadd.f32 %v6587, %v6603
      %v6627 = vadd.f32 %v6588, %v6603
      %v6628 = vadd.f32 %v6589, %v6603
      %v6629 = vadd.f32 %v6590, %v6603
      %v6630 = vadd.f32 %v6591, %v6603
      %v6631 = vadd.f32 %v6592, %v6603
      %v6632 = vadd.f32 %v6593, %v6603
      %v6633 = vadd.f32 %v6594, %v6603
      %v6634 = vadd.f32 %v6595, %v6603
      %v6635 = vadd.f32 %v6596, %v6603
      %v6636 = vadd.f32 %v6597, %v6603
      %v6637 = vmax.f32 %v6605, 0.0
      %v6638 = vmax.f32 %v6606, 0.0
      %v6639 = vmax.f32 %v6607, 0.0
      %v6640 = vmax.f32 %v6608, 0.0
      %v6641 = vmax.f32 %v6609, 0.0
      %v6642 = vmax.f32 %v6610, 0.0
      %v6643 = vmax.f32 %v6611, 0.0
      %v6644 = vmax.f32 %v6612, 0.0
      %v6645 = vmax.f32 %v6613, 0.0
      %v6646 = vmax.f32 %v6614, 0.0
      %v6647 = vmax.f32 %v6615, 0.0
      %v6648 = vmax.f32 %v6616, 0.0
      %v6649 = vmax.f32 %v6617, 0.0
      %v6650 = vmax.f32 %v6618, 0.0
      %v6651 = vmax.f32 %v6619, 0.0
      %v6652 = vmax.f32 %v6620, 0.0
      %v6653 = vmax.f32 %v6621, 0.0
      %v6654 = vmax.f32 %v6622, 0.0
      %v6655 = vmax.f32 %v6623, 0.0
      %v6656 = vmax.f32 %v6624, 0.0
      %v6657 = vmax.f32 %v6625, 0.0
      %v6658 = vmax.f32 %v6626, 0.0
      %v6659 = vmax.f32 %v6627, 0.0
      %v6660 = vmax.f32 %v6628, 0.0
      %v6661 = vmax.f32 %v6629, 0.0
      %v6662 = vmax.f32 %v6630, 0.0
      %v6663 = vmax.f32 %v6631, 0.0
      %v6664 = vmax.f32 %v6632, 0.0
      %v6665 = vmax.f32 %v6633, 0.0
      %v6666 = vmax.f32 %v6634, 0.0
      %v6667 = vmax.f32 %v6635, 0.0
      %v6668 = vmax.f32 %v6636, 0.0
      %v6669 = vpack.c.bf16 %v6638, %v6637
      %v6670 = vpack.c.bf16 %v6640, %v6639
      %v6671 = vpack.c.bf16 %v6642, %v6641
      %v6672 = vpack.c.bf16 %v6644, %v6643
      %v6673 = vpack.c.bf16 %v6646, %v6645
      %v6674 = vpack.c.bf16 %v6648, %v6647
      %v6675 = vpack.c.bf16 %v6650, %v6649
      %v6676 = vpack.c.bf16 %v6652, %v6651
      %v6677 = vpack.c.bf16 %v6654, %v6653
      %v6678 = vpack.c.bf16 %v6656, %v6655
      %v6679 = vpack.c.bf16 %v6658, %v6657
      %v6680 = vpack.c.bf16 %v6660, %v6659
      %v6681 = vpack.c.bf16 %v6662, %v6661
      %v6682 = vpack.c.bf16 %v6664, %v6663
      %v6683 = vpack.c.bf16 %v6666, %v6665
      %v6684 = vpack.c.bf16 %v6668, %v6667
      %v6701 = vunpack.c.l.b16 %v6669
      %v6702 = vunpack.c.h.b16 %v6669
      %v6703 = vunpack.c.l.b16 %v6670
      %v6704 = vunpack.c.h.b16 %v6670
      %v6705 = vunpack.c.l.b16 %v6671
      %v6706 = vunpack.c.h.b16 %v6671
      %v6707 = vunpack.c.l.b16 %v6672
      %v6708 = vunpack.c.h.b16 %v6672
      %v6709 = vunpack.c.l.b16 %v6673
      %v6710 = vunpack.c.h.b16 %v6673
      %v6711 = vunpack.c.l.b16 %v6674
      %v6712 = vunpack.c.h.b16 %v6674
      %v6713 = vunpack.c.l.b16 %v6675
      %v6714 = vunpack.c.h.b16 %v6675
      %v6715 = vunpack.c.l.b16 %v6676
      %v6716 = vunpack.c.h.b16 %v6676
      %v6717 = vunpack.c.l.b16 %v6677
      %v6718 = vunpack.c.h.b16 %v6677
      %v6719 = vunpack.c.l.b16 %v6678
      %v6720 = vunpack.c.h.b16 %v6678
      %v6721 = vunpack.c.l.b16 %v6679
      %v6722 = vunpack.c.h.b16 %v6679
      %v6723 = vunpack.c.l.b16 %v6680
      %v6724 = vunpack.c.h.b16 %v6680
      %v6725 = vunpack.c.l.b16 %v6681
      %v6726 = vunpack.c.h.b16 %v6681
      %v6727 = vunpack.c.l.b16 %v6682
      %v6728 = vunpack.c.h.b16 %v6682
      %v6729 = vunpack.c.l.b16 %v6683
      %v6730 = vunpack.c.h.b16 %v6683
      %v6731 = vunpack.c.l.b16 %v6684
      %v6732 = vunpack.c.h.b16 %v6684
      %v6733 = vpack.c.b16 %v6701, %v6701
      %v6734 = vpack.c.b16 %v6702, %v6702
      %v6735 = vpack.c.b16 %v6703, %v6703
      %v6736 = vpack.c.b16 %v6704, %v6704
      %v6737 = vpack.c.b16 %v6705, %v6705
      %v6738 = vpack.c.b16 %v6706, %v6706
      %v6739 = vpack.c.b16 %v6707, %v6707
      %v6740 = vpack.c.b16 %v6708, %v6708
      %v6741 = vpack.c.b16 %v6709, %v6709
      %v6742 = vpack.c.b16 %v6710, %v6710
      %v6743 = vpack.c.b16 %v6711, %v6711
      %v6744 = vpack.c.b16 %v6712, %v6712
      %v6745 = vpack.c.b16 %v6713, %v6713
      %v6746 = vpack.c.b16 %v6714, %v6714
      %v6747 = vpack.c.b16 %v6715, %v6715
      %v6748 = vpack.c.b16 %v6716, %v6716
      %v6749 = vpack.c.b16 %v6717, %v6717
      %v6750 = vpack.c.b16 %v6718, %v6718
      %v6751 = vpack.c.b16 %v6719, %v6719
      %v6752 = vpack.c.b16 %v6720, %v6720
      %v6753 = vpack.c.b16 %v6721, %v6721
      %v6754 = vpack.c.b16 %v6722, %v6722
      %v6755 = vpack.c.b16 %v6723, %v6723
      %v6756 = vpack.c.b16 %v6724, %v6724
      %v6757 = vpack.c.b16 %v6725, %v6725
      %v6758 = vpack.c.b16 %v6726, %v6726
      %v6759 = vpack.c.b16 %v6727, %v6727
      %v6760 = vpack.c.b16 %v6728, %v6728
      %v6761 = vpack.c.b16 %v6729, %v6729
      %v6762 = vpack.c.b16 %v6730, %v6730
      %v6763 = vpack.c.b16 %v6731, %v6731
      %v6764 = vpack.c.b16 %v6732, %v6732
      %6797 = vst [vmem:[%s224] sm:$0xf] %v6733
      %6798 = vst [vmem:[%s224 + $0x4] sm:$0xf] %v6734
      %6799 = vst [vmem:[%s224 + $0x8] sm:$0xf] %v6735
      %6800 = vst [vmem:[%s224 + $0xc] sm:$0xf] %v6736
      %6801 = vst [vmem:[%s224 + $0x10] sm:$0xf] %v6737
      %6802 = vst [vmem:[%s224 + $0x14] sm:$0xf] %v6738
      %6803 = vst [vmem:[%s224 + $0x18] sm:$0xf] %v6739
      %6804 = vst [vmem:[%s224 + $0x1c] sm:$0xf] %v6740
      %6805 = vst [vmem:[%s224 + $0x20] sm:$0xf] %v6741
      %6806 = vst [vmem:[%s224 + $0x24] sm:$0xf] %v6742
      %6807 = vst [vmem:[%s224 + $0x28] sm:$0xf] %v6743
      %6808 = vst [vmem:[%s224 + $0x2c] sm:$0xf] %v6744
      %6809 = vst [vmem:[%s224 + $0x30] sm:$0xf] %v6745
      %6810 = vst [vmem:[%s224 + $0x34] sm:$0xf] %v6746
      %6811 = vst [vmem:[%s224 + $0x38] sm:$0xf] %v6747
      %6812 = vst [vmem:[%s224 + $0x3c] sm:$0xf] %v6748
      %6813 = vst [vmem:[%s224 + $0x40] sm:$0xf] %v6749
      %6814 = vst [vmem:[%s224 + $0x44] sm:$0xf] %v6750
      %6815 = vst [vmem:[%s224 + $0x48] sm:$0xf] %v6751
      %6816 = vst [vmem:[%s224 + $0x4c] sm:$0xf] %v6752
      %6817 = vst [vmem:[%s224 + $0x50] sm:$0xf] %v6753
      %6818 = vst [vmem:[%s224 + $0x54] sm:$0xf] %v6754
      %6819 = vst [vmem:[%s224 + $0x58] sm:$0xf] %v6755
      %6820 = vst [vmem:[%s224 + $0x5c] sm:$0xf] %v6756
      %6821 = vst [vmem:[%s224 + $0x60] sm:$0xf] %v6757
      %6822 = vst [vmem:[%s224 + $0x64] sm:$0xf] %v6758
      %6823 = vst [vmem:[%s224 + $0x68] sm:$0xf] %v6759
      %6824 = vst [vmem:[%s224 + $0x6c] sm:$0xf] %v6760
      %6825 = vst [vmem:[%s224 + $0x70] sm:$0xf] %v6761
      %6826 = vst [vmem:[%s224 + $0x74] sm:$0xf] %v6762
      %6827 = vst [vmem:[%s224 + $0x78] sm:$0xf] %v6763
      %6828 = vst [vmem:[%s224 + $0x7c] sm:$0xf] %v6764
      %p6829 = scmp.lt.s32.totalorder %s16, 1
      %s6830 = scalar_select %p6829, %s16, 1
      %s6831 = smul.addr %s6830, 32
      %s6832 = smul.addr %s6831, 4
      %s6833 = scalar_lea.vmem %s5, %s6832
      // Predicated region
      $region41: #{inception_b_forward.4} parent=39 // pred_check
        %p6834 = pneg %p144
      $region42: #{inception_b_forward.4} parent=39 // pred_check_branch
        %6836 = sbr.rel (%p6834) target = $region44
      $region43: #{inception_b_forward.4} parent=39 // pred_region
        _
      $region44: #{inception_b_forward.4} parent=39 // pred_fallthru
        _
    $region40: #{inception_b_forward.4} parent=5 // pred_fallthru
      _
    %p6837 = scmp.le.s32.totalorder 2, %s11
    // Predicated region
    $region45: #{inception_b_forward.4} parent=5 // pred_check
      %p6838 = pneg %p6837
    $region46: #{inception_b_forward.4} parent=5 // pred_check_branch
      %6840 = sbr.rel (%p6838) target = $region48
    $region47: #{inception_b_forward.4} parent=5 // pred_region
      %s6841 = ssub.s32 %s11, 2
      // Predicated region
      $region49: #{inception_b_forward.4} parent=47 // pred_check
        %p6842 = pneg %p150
      $region50: #{inception_b_forward.4} parent=47 // pred_check_branch
        %6844 = sbr.rel (%p6842) target = $region52
      $region51: #{inception_b_forward.4} parent=47 // pred_region
        %p6845 = scmp.lt.s32.totalorder %s17, 1
        %s6846 = scalar_select %p6845, %s17, 1
        %s6847 = smul.addr %s6846, 32
        %s6848 = smul.addr %s6847, 4
        %s6849 = scalar_lea.vmem %s5, %s6848
      $region52: #{inception_b_forward.4} parent=47 // pred_fallthru
        _
    $region48: #{inception_b_forward.4} parent=5 // pred_fallthru
      _
  $region6: #{inception_b_forward.4} parent=0 // loop_footer
    %s15 = sadd.s32 1, %s11
  $region7: #{inception_b_forward.4} parent=0 // loop_footer_branch
    %10 = sbr.rel target = $region3
  $region8: #{inception_b_forward.4} parent=0 // loop_exit
    _

</llo_original>
